<compile_context>
chip_gen: v7x
topology: tpu7x:2x2x1
jax: 0.10.0
libtpu: 0.0.40
codegen_flags: <defaults>
</compile_context>

<pallas_src>
import functools

import jax
import jax.numpy as jnp
from jax import lax
from jax.experimental import pallas as pl
from jax.experimental.pallas import tpu as pltpu


# ---------------------------------------------------------------------------
# Stage 1: conv1 (1 -> 32 channels, 2x2, stride 1) + bias + ReLU.
# Computed as 32 channel planes in the natural (H sublanes, W lanes) layout.
# Both halves of the following 2x2 max-pool are deferred to the stage-2 kernel
# (they become cheap aligned maxes there), so this kernel is pure VPU work.
# ---------------------------------------------------------------------------
def _conv1_kernel(x_ref, w_ref, b_ref, o_ref):
    x = x_ref[...]                                        # (64, 64)
    x01 = jnp.concatenate([x[:, 1:], x[:, :1]], axis=1)   # x[h, w+1]
    x10 = jnp.concatenate([x[1:, :], x[:1, :]], axis=0)   # x[h+1, w]
    x11 = jnp.concatenate([x10[:, 1:], x10[:, :1]], axis=1)
    # Wrapped columns/rows are harmless garbage: they only feed conv outputs
    # at h == 63 or w == 63, which the later pooling never consumes.
    for c in range(32):                                   # 32 output channels
        y = (x * w_ref[0, c] + x01 * w_ref[1, c]
             + x10 * w_ref[2, c] + x11 * w_ref[3, c] + b_ref[c])
        o_ref[c, :, :] = jnp.maximum(y, 0.0)


def conv1_call(x_img, w_taps, bias):
    n = x_img.shape[0]
    return pl.pallas_call(
        _conv1_kernel,
        out_shape=jax.ShapeDtypeStruct((n, 32, 64, 64), jnp.float32),
        grid=(n,),
        in_specs=[
            pl.BlockSpec((None, 64, 64), lambda i: (i, 0, 0)),
            pl.BlockSpec(memory_space=pltpu.MemorySpace.SMEM),   # (4, 32) taps
            pl.BlockSpec(memory_space=pltpu.MemorySpace.SMEM),   # (32,) bias
        ],
        out_specs=pl.BlockSpec((None, 32, 64, 64), lambda i: (i, 0, 0, 0)),
        compiler_params=pltpu.CompilerParams(dimension_semantics=("parallel",)),
    )(x_img, w_taps, bias)


# ---------------------------------------------------------------------------
# Generic conv stage (stages 2 and 3): finish the producer's 2x2 pool, then
# conv(2x2, stride 1) via ONE whole-image matmul with the 4 taps concatenated
# along K, then bias + ReLU + H-pool of this stage's own output.
#
# Input x_ref: (rows, 2*cin) where each row packs the channels of an adjacent
# column pair of the producer's conv output in its two lane halves (a free HBM
# reshape of the producer's output).  A lane-half max finishes the producer's
# W-pool; if h_pool_input, an aligned slice max also finishes its H-pool.
# Output: (h_in // 2, w_in, cout) -- this stage's conv output, H-pooled, with
# its own W-pool deferred to the next consumer.
# ---------------------------------------------------------------------------
def _conv_stage_kernel(x_ref, w_ref, b_ref, o_ref, *, w_in, h_in, cin, cout,
                       h_pool_input):
    xp = x_ref[...]                                          # (rows, 2*cin)
    x = jnp.maximum(xp[:, :cin], xp[:, cin:])                # producer W-pool
    if h_pool_input:
        x3 = x.reshape(h_in, 2 * w_in, cin)
        x = jnp.maximum(x3[:, :w_in, :], x3[:, w_in:, :])    # producer H-pool
        x = x.reshape(h_in * w_in, cin)
    # x: flat input image, rows = h * w_in + w, channels in lanes.
    # Shifted copies for the 4 taps (aligned +w_in slice; one +1 sublane shift).
    xw = jnp.concatenate([x[w_in:], x[:w_in]], axis=0)       # x[h+1, w]
    p0 = jnp.concatenate([x, xw], axis=1)                    # taps (0,0),(1,0)
    p1 = jnp.concatenate([p0[1:], p0[:1]], axis=0)           # taps (0,1),(1,1)
    x4 = jnp.concatenate([p0, p1], axis=1)                   # (R, 4*cin)
    y = jnp.dot(x4, w_ref[...], preferred_element_type=jnp.float32)
    y = jnp.maximum(y + b_ref[...], 0.0)                     # (R, cout)
    # H-pool this stage's own output (aligned middle-axis slice max).
    y3 = y.reshape(h_in // 2, 2 * w_in, cout)
    o_ref[...] = jnp.maximum(y3[:, :w_in, :], y3[:, w_in:, :])


def conv_stage_call(x_packed, w_cat, bias, *, w_in, h_in, cin, cout,
                    h_pool_input):
    n, rows, lanes = x_packed.shape
    assert lanes == 2 * cin, (lanes, cin)
    assert rows == (2 if h_pool_input else 1) * h_in * w_in, (rows, h_in, w_in)
    hp = h_in // 2
    kern = functools.partial(_conv_stage_kernel, w_in=w_in, h_in=h_in,
                             cin=cin, cout=cout, h_pool_input=h_pool_input)
    return pl.pallas_call(
        kern,
        out_shape=jax.ShapeDtypeStruct((n, hp, w_in, cout), jnp.float32),
        grid=(n,),
        in_specs=[
            pl.BlockSpec((None, rows, lanes), lambda i: (i, 0, 0)),
            pl.BlockSpec((4 * cin, cout), lambda i: (0, 0)),
            pl.BlockSpec((1, cout), lambda i: (0, 0)),
        ],
        out_specs=pl.BlockSpec((None, hp, w_in, cout), lambda i: (i, 0, 0, 0)),
        compiler_params=pltpu.CompilerParams(dimension_semantics=("parallel",)),
    )(x_packed, w_cat, bias.reshape(1, cout))


# ---------------------------------------------------------------------------
# Fused FC head: fc1 + ReLU + fc2, all widths zero-padded to 128 lanes
# (lane-dense stores); the 10 logits are sliced out by the caller.
# ---------------------------------------------------------------------------
def _fc_kernel(x_ref, w1_ref, b1_ref, w2_ref, b2_ref, o_ref):
    h = jnp.dot(x_ref[...], w1_ref[...],
                preferred_element_type=jnp.float32) + b1_ref[...]
    h = jnp.maximum(h, 0.0)
    o_ref[...] = jnp.dot(h, w2_ref[...],
                         preferred_element_type=jnp.float32) + b2_ref[...]


def fc_call(x, w1p, b1p, w2p, b2p):
    n, k1 = x.shape
    n1 = w1p.shape[1]
    n2 = w2p.shape[1]
    return pl.pallas_call(
        _fc_kernel,
        out_shape=jax.ShapeDtypeStruct((n, n2), jnp.float32),
        grid=(1,),
        in_specs=[
            pl.BlockSpec((n, k1), lambda i: (0, 0)),
            pl.BlockSpec((k1, n1), lambda i: (0, 0)),
            pl.BlockSpec((1, n1), lambda i: (0, 0)),
            pl.BlockSpec((n1, n2), lambda i: (0, 0)),
            pl.BlockSpec((1, n2), lambda i: (0, 0)),
        ],
        out_specs=pl.BlockSpec((n, n2), lambda i: (0, 0)),
        compiler_params=pltpu.CompilerParams(dimension_semantics=("arbitrary",)),
    )(x, w1p, b1p, w2p, b2p)


# ---------------------------------------------------------------------------
# Parameters (PyTorch-shaped) and the one-time kernel-layout preparation.
# ---------------------------------------------------------------------------
def init_params(key):
    def uinit(k, shape, fan_in):
        bound = 1.0 / jnp.sqrt(float(fan_in))
        return jax.random.uniform(k, shape, jnp.float32, -bound, bound)

    ks = jax.random.split(key, 10)
    return {
        "conv1_w": uinit(ks[0], (32, 1, 2, 2), 1 * 4),
        "conv1_b": uinit(ks[1], (32,), 1 * 4),
        "conv2_w": uinit(ks[2], (64, 32, 2, 2), 32 * 4),
        "conv2_b": uinit(ks[3], (64,), 32 * 4),
        "conv3_w": uinit(ks[4], (16, 64, 2, 2), 64 * 4),
        "conv3_b": uinit(ks[5], (16,), 64 * 4),
        "fc1_w": uinit(ks[6], (100, 784), 784),
        "fc1_b": uinit(ks[7], (100,), 784),
        "fc2_w": uinit(ks[8], (10, 100), 100),
        "fc2_b": uinit(ks[9], (10,), 100),
    }


def prepare_params(p):
    """One-time weight layout prep (hoisted out of the forward pass)."""
    def conv_cat(w):
        # (O, I, 2, 2) -> (4*I, O); K blocks ordered (kh,kw)=(0,0),(1,0),(0,1),(1,1)
        o, i, _, _ = w.shape
        return jnp.transpose(w, (3, 2, 1, 0)).reshape(4 * i, o)

    # conv1 as per-tap scalars, tap index = kh*2 + kw.
    w1_taps = jnp.transpose(p["conv1_w"].reshape(32, 4), (1, 0))     # (4, 32)

    # fc1 permuted to the kernel's feature order (p, q, c) padded to (8, 8, 16),
    # and zero-padded to 128 output lanes.  Garbage feature rows (p==7 or q==7)
    # hit zero weights, so they never affect the result.
    w1 = p["fc1_w"].reshape(100, 16, 7, 7)                           # (out, c, p, q)
    w1 = jnp.transpose(w1, (2, 3, 1, 0))                             # (p, q, c, out)
    w1p = jnp.zeros((8, 8, 16, 128), jnp.float32).at[:7, :7, :, :100].set(w1)
    w1p = w1p.reshape(1024, 128)
    b1p = jnp.zeros((1, 128), jnp.float32).at[0, :100].set(p["fc1_b"])
    w2p = jnp.zeros((128, 128), jnp.float32).at[:100, :10].set(p["fc2_w"].T)
    b2p = jnp.zeros((1, 128), jnp.float32).at[0, :10].set(p["fc2_b"])

    return {
        "conv1_taps": w1_taps, "conv1_b": p["conv1_b"],
        "conv2_cat": conv_cat(p["conv2_w"]), "conv2_b": p["conv2_b"],
        "conv3_cat": conv_cat(p["conv3_w"]), "conv3_b": p["conv3_b"],
        "fc1_wp": w1p, "fc1_bp": b1p, "fc2_wp": w2p, "fc2_bp": b2p,
    }


# ---------------------------------------------------------------------------
# Forward pass.
# ---------------------------------------------------------------------------
def net_forward(pp, x_nchw):
    n = x_nchw.shape[0]

    # Stage 1: conv1 + ReLU as channel planes (N, 32, 64, 64), un-pooled.
    x0 = x_nchw.reshape(n, 64, 64)
    a1 = conv1_call(x0, pp["conv1_taps"], pp["conv1_b"])

    # TODO(synk): this HWC transpose (512 KiB/img of XLA glue) could be folded
    # into the stage-2 kernel as an in-kernel 2D transpose.
    a1_hwc = jnp.transpose(a1, (0, 2, 3, 1)).reshape(n, 64 * 32, 64)

    # Stage 2: finishes conv1's 2x2 pool, conv2 + ReLU + H-pool.
    a2 = conv_stage_call(a1_hwc, pp["conv2_cat"], pp["conv2_b"],
                         w_in=32, h_in=32, cin=32, cout=64, h_pool_input=True)
    # a2: (N, 16, 32, 64): 15 valid pooled rows, 30 valid conv cols.

    # Stage 3: finishes conv2's W-pool, conv3 + ReLU + H-pool.
    a3 = conv_stage_call(a2.reshape(n, 16 * 16, 128), pp["conv3_cat"],
                         pp["conv3_b"], w_in=16, h_in=16, cin=64, cout=16,
                         h_pool_input=False)
    # a3: (N, 8, 16, 16): 7 valid pooled rows, 14 valid conv cols.

    # Final W-pool + flatten (tiny: ~4 KiB/img of XLA glue).  fc1's weights are
    # pre-permuted to this (p, q, c) order, so no activation transpose is needed.
    feats = jnp.max(a3.reshape(n, 8, 8, 2, 16), axis=3).reshape(n, 1024)

    # TODO(synk): dropout1/dropout2 are identity at inference; no RNG mask.
    out = fc_call(feats, pp["fc1_wp"], pp["fc1_bp"], pp["fc2_wp"], pp["fc2_bp"])
    return out[:, :10]


# Pure-JAX reference (numerical sanity check only).
def net_forward_ref(params, x_nchw):
    hi = lax.Precision.HIGHEST
    x = jnp.transpose(x_nchw, (0, 2, 3, 1))

    def conv(x, w, b):
        y = lax.conv_general_dilated(
            x, jnp.transpose(w, (2, 3, 1, 0)), (1, 1), "VALID",
            dimension_numbers=("NHWC", "HWIO", "NHWC"), precision=hi)
        return jnp.maximum(y + b, 0.0)

    def pool(x):
        return lax.reduce_window(x, -jnp.inf, lax.max,
                                 (1, 2, 2, 1), (1, 2, 2, 1), "VALID")

    x = pool(conv(x, params["conv1_w"], params["conv1_b"]))
    x = pool(conv(x, params["conv2_w"], params["conv2_b"]))
    x = pool(conv(x, params["conv3_w"], params["conv3_b"]))
    n = x.shape[0]
    x = jnp.transpose(x, (0, 3, 1, 2)).reshape(n, -1)
    x = jnp.maximum(jnp.dot(x, params["fc1_w"].T, precision=hi)
                    + params["fc1_b"], 0.0)
    return jnp.dot(x, params["fc2_w"].T, precision=hi) + params["fc2_b"]


if __name__ == "__main__":
    key = jax.random.PRNGKey(0)
    pkey, xkey = jax.random.split(key)
    params = init_params(pkey)
    pp = prepare_params(params)          # weight prep hoisted: runs once
    # fc1 expects 784 = 16*7*7 features => 64x64 single-channel input.
    x = jax.random.normal(xkey, (2, 1, 64, 64), jnp.float32)

    fwd = jax.jit(net_forward)
    out = jax.block_until_ready(fwd(pp, x))

    ref = net_forward_ref(params, x)
    assert out.shape == (2, 10), out.shape
    assert jnp.allclose(out, ref, rtol=1e-2, atol=1e-2), "mismatch vs reference"
    print("KERNEL_OK")
</pallas_src>

<mosaic_0001>
module attributes {stable_mosaic.version = 11 : i64} {
  func.func @_conv1_kernel(%arg0: i32, %arg1: memref<1x64x64xf32, #tpu.memory_space<vmem>>, %arg2: memref<4x32xf32, #tpu.memory_space<smem>>, %arg3: memref<32xf32, #tpu.memory_space<smem>>, %arg4: memref<1x32x64x64xf32, #tpu.memory_space<vmem>>) attributes {dimension_semantics = [#tpu.dimension_semantics<parallel>], iteration_bounds = array<i64: 2>, scalar_prefetch = 0 : i64, scratch_operands = 0 : i64, tpu.core_type = #tpu.core_type<tc>, window_params = [{transform_indices = @transform_0, window_bounds = array<i64: 1, 64, 64>}, {transform_indices = @transform_1, window_bounds = array<i64: 4, 32>}, {transform_indices = @transform_2, window_bounds = array<i64: 32>}, {transform_indices = @transform_3, window_bounds = array<i64: 1, 32, 64, 64>}]} {
    %c0 = arith.constant 0 : index
    %c0_0 = arith.constant 0 : index
    %c0_1 = arith.constant 0 : index
    %0 = vector.load %arg1[%c0, %c0_0, %c0_1] : memref<1x64x64xf32, #tpu.memory_space<vmem>>, vector<1x64x64xf32>
    %1 = vector.shape_cast %0 : vector<1x64x64xf32> to vector<64x64xf32>
    %2 = vector.extract_strided_slice %1 {offsets = [0, 1], sizes = [64, 63], strides = [1, 1]} : vector<64x64xf32> to vector<64x63xf32>
    %3 = vector.extract_strided_slice %1 {offsets = [0, 0], sizes = [64, 1], strides = [1, 1]} : vector<64x64xf32> to vector<64x1xf32>
    %4 = tpu.concatenate %2, %3 in 1 : vector<64x63xf32>, vector<64x1xf32> -> vector<64x64xf32>
    %5 = vector.extract_strided_slice %1 {offsets = [1, 0], sizes = [63, 64], strides = [1, 1]} : vector<64x64xf32> to vector<63x64xf32>
    %6 = vector.extract_strided_slice %1 {offsets = [0, 0], sizes = [1, 64], strides = [1, 1]} : vector<64x64xf32> to vector<1x64xf32>
    %7 = tpu.concatenate %5, %6 in 0 : vector<63x64xf32>, vector<1x64xf32> -> vector<64x64xf32>
    %8 = vector.extract_strided_slice %7 {offsets = [0, 1], sizes = [64, 63], strides = [1, 1]} : vector<64x64xf32> to vector<64x63xf32>
    %9 = vector.extract_strided_slice %7 {offsets = [0, 0], sizes = [64, 1], strides = [1, 1]} : vector<64x64xf32> to vector<64x1xf32>
    %10 = tpu.concatenate %8, %9 in 1 : vector<64x63xf32>, vector<64x1xf32> -> vector<64x64xf32>
    %c0_2 = arith.constant 0 : index
    %c0_3 = arith.constant 0 : index
    %11 = memref.load %arg2[%c0_2, %c0_3] : memref<4x32xf32, #tpu.memory_space<smem>>
    %12 = vector.broadcast %11 : f32 to vector<64x64xf32>
    %13 = arith.mulf %1, %12 : vector<64x64xf32>
    %c1 = arith.constant 1 : index
    %c0_4 = arith.constant 0 : index
    %14 = memref.load %arg2[%c1, %c0_4] : memref<4x32xf32, #tpu.memory_space<smem>>
    %15 = vector.broadcast %14 : f32 to vector<64x64xf32>
    %16 = arith.mulf %4, %15 : vector<64x64xf32>
    %17 = arith.addf %13, %16 : vector<64x64xf32>
    %c2 = arith.constant 2 : index
    %c0_5 = arith.constant 0 : index
    %18 = memref.load %arg2[%c2, %c0_5] : memref<4x32xf32, #tpu.memory_space<smem>>
    %19 = vector.broadcast %18 : f32 to vector<64x64xf32>
    %20 = arith.mulf %7, %19 : vector<64x64xf32>
    %21 = arith.addf %17, %20 : vector<64x64xf32>
    %c3 = arith.constant 3 : index
    %c0_6 = arith.constant 0 : index
    %22 = memref.load %arg2[%c3, %c0_6] : memref<4x32xf32, #tpu.memory_space<smem>>
    %23 = vector.broadcast %22 : f32 to vector<64x64xf32>
    %24 = arith.mulf %10, %23 : vector<64x64xf32>
    %25 = arith.addf %21, %24 : vector<64x64xf32>
    %c0_7 = arith.constant 0 : index
    %26 = memref.load %arg3[%c0_7] : memref<32xf32, #tpu.memory_space<smem>>
    %27 = vector.broadcast %26 : f32 to vector<64x64xf32>
    %28 = arith.addf %25, %27 : vector<64x64xf32>
    %cst = arith.constant 0.000000e+00 : f32
    %29 = vector.broadcast %cst : f32 to vector<64x64xf32>
    %30 = arith.maximumf %28, %29 : vector<64x64xf32>
    %c0_8 = arith.constant 0 : index
    %c0_9 = arith.constant 0 : index
    %c0_10 = arith.constant 0 : index
    %c0_11 = arith.constant 0 : index
    %31 = vector.load %arg4[%c0_8, %c0_9, %c0_10, %c0_11] : memref<1x32x64x64xf32, #tpu.memory_space<vmem>>, vector<1x1x64x64xf32>
    %32 = vector.shape_cast %31 : vector<1x1x64x64xf32> to vector<64x64xf32>
    %33 = vector.shape_cast %30 : vector<64x64xf32> to vector<1x1x64x64xf32>
    tpu.vector_store %arg4[%c0_8, %c0_9, %c0_10, %c0_11], %33 {strides = array<i32>} : memref<1x32x64x64xf32, #tpu.memory_space<vmem>>, vector<1x1x64x64xf32>,
    %c0_12 = arith.constant 0 : index
    %c1_13 = arith.constant 1 : index
    %34 = memref.load %arg2[%c0_12, %c1_13] : memref<4x32xf32, #tpu.memory_space<smem>>
    %35 = vector.broadcast %34 : f32 to vector<64x64xf32>
    %36 = arith.mulf %1, %35 : vector<64x64xf32>
    %c1_14 = arith.constant 1 : index
    %c1_15 = arith.constant 1 : index
    %37 = memref.load %arg2[%c1_14, %c1_15] : memref<4x32xf32, #tpu.memory_space<smem>>
    %38 = vector.broadcast %37 : f32 to vector<64x64xf32>
    %39 = arith.mulf %4, %38 : vector<64x64xf32>
    %40 = arith.addf %36, %39 : vector<64x64xf32>
    %c2_16 = arith.constant 2 : index
    %c1_17 = arith.constant 1 : index
    %41 = memref.load %arg2[%c2_16, %c1_17] : memref<4x32xf32, #tpu.memory_space<smem>>
    %42 = vector.broadcast %41 : f32 to vector<64x64xf32>
    %43 = arith.mulf %7, %42 : vector<64x64xf32>
    %44 = arith.addf %40, %43 : vector<64x64xf32>
    %c3_18 = arith.constant 3 : index
    %c1_19 = arith.constant 1 : index
    %45 = memref.load %arg2[%c3_18, %c1_19] : memref<4x32xf32, #tpu.memory_space<smem>>
    %46 = vector.broadcast %45 : f32 to vector<64x64xf32>
    %47 = arith.mulf %10, %46 : vector<64x64xf32>
    %48 = arith.addf %44, %47 : vector<64x64xf32>
    %c1_20 = arith.constant 1 : index
    %49 = memref.load %arg3[%c1_20] : memref<32xf32, #tpu.memory_space<smem>>
    %50 = vector.broadcast %49 : f32 to vector<64x64xf32>
    %51 = arith.addf %48, %50 : vector<64x64xf32>
    %cst_21 = arith.constant 0.000000e+00 : f32
    %52 = vector.broadcast %cst_21 : f32 to vector<64x64xf32>
    %53 = arith.maximumf %51, %52 : vector<64x64xf32>
    %c0_22 = arith.constant 0 : index
    %c1_23 = arith.constant 1 : index
    %c0_24 = arith.constant 0 : index
    %c0_25 = arith.constant 0 : index
    %54 = vector.load %arg4[%c0_22, %c1_23, %c0_24, %c0_25] : memref<1x32x64x64xf32, #tpu.memory_space<vmem>>, vector<1x1x64x64xf32>
    %55 = vector.shape_cast %54 : vector<1x1x64x64xf32> to vector<64x64xf32>
    %56 = vector.shape_cast %53 : vector<64x64xf32> to vector<1x1x64x64xf32>
    tpu.vector_store %arg4[%c0_22, %c1_23, %c0_24, %c0_25], %56 {strides = array<i32>} : memref<1x32x64x64xf32, #tpu.memory_space<vmem>>, vector<1x1x64x64xf32>,
    %c0_26 = arith.constant 0 : index
    %c2_27 = arith.constant 2 : index
    %57 = memref.load %arg2[%c0_26, %c2_27] : memref<4x32xf32, #tpu.memory_space<smem>>
    %58 = vector.broadcast %57 : f32 to vector<64x64xf32>
    %59 = arith.mulf %1, %58 : vector<64x64xf32>
    %c1_28 = arith.constant 1 : index
    %c2_29 = arith.constant 2 : index
    %60 = memref.load %arg2[%c1_28, %c2_29] : memref<4x32xf32, #tpu.memory_space<smem>>
    %61 = vector.broadcast %60 : f32 to vector<64x64xf32>
    %62 = arith.mulf %4, %61 : vector<64x64xf32>
    %63 = arith.addf %59, %62 : vector<64x64xf32>
    %c2_30 = arith.constant 2 : index
    %c2_31 = arith.constant 2 : index
    %64 = memref.load %arg2[%c2_30, %c2_31] : memref<4x32xf32, #tpu.memory_space<smem>>
    %65 = vector.broadcast %64 : f32 to vector<64x64xf32>
    %66 = arith.mulf %7, %65 : vector<64x64xf32>
    %67 = arith.addf %63, %66 : vector<64x64xf32>
    %c3_32 = arith.constant 3 : index
    %c2_33 = arith.constant 2 : index
    %68 = memref.load %arg2[%c3_32, %c2_33] : memref<4x32xf32, #tpu.memory_space<smem>>
    %69 = vector.broadcast %68 : f32 to vector<64x64xf32>
    %70 = arith.mulf %10, %69 : vector<64x64xf32>
    %71 = arith.addf %67, %70 : vector<64x64xf32>
    %c2_34 = arith.constant 2 : index
    %72 = memref.load %arg3[%c2_34] : memref<32xf32, #tpu.memory_space<smem>>
    %73 = vector.broadcast %72 : f32 to vector<64x64xf32>
    %74 = arith.addf %71, %73 : vector<64x64xf32>
    %cst_35 = arith.constant 0.000000e+00 : f32
    %75 = vector.broadcast %cst_35 : f32 to vector<64x64xf32>
    %76 = arith.maximumf %74, %75 : vector<64x64xf32>
    %c0_36 = arith.constant 0 : index
    %c2_37 = arith.constant 2 : index
    %c0_38 = arith.constant 0 : index
    %c0_39 = arith.constant 0 : index
    %77 = vector.load %arg4[%c0_36, %c2_37, %c0_38, %c0_39] : memref<1x32x64x64xf32, #tpu.memory_space<vmem>>, vector<1x1x64x64xf32>
    %78 = vector.shape_cast %77 : vector<1x1x64x64xf32> to vector<64x64xf32>
    %79 = vector.shape_cast %76 : vector<64x64xf32> to vector<1x1x64x64xf32>
    tpu.vector_store %arg4[%c0_36, %c2_37, %c0_38, %c0_39], %79 {strides = array<i32>} : memref<1x32x64x64xf32, #tpu.memory_space<vmem>>, vector<1x1x64x64xf32>,
    %c0_40 = arith.constant 0 : index
    %c3_41 = arith.constant 3 : index
    %80 = memref.load %arg2[%c0_40, %c3_41] : memref<4x32xf32, #tpu.memory_space<smem>>
    %81 = vector.broadcast %80 : f32 to vector<64x64xf32>
    %82 = arith.mulf %1, %81 : vector<64x64xf32>
    %c1_42 = arith.constant 1 : index
    %c3_43 = arith.constant 3 : index
    %83 = memref.load %arg2[%c1_42, %c3_43] : memref<4x32xf32, #tpu.memory_space<smem>>
    %84 = vector.broadcast %83 : f32 to vector<64x64xf32>
    %85 = arith.mulf %4, %84 : vector<64x64xf32>
    %86 = arith.addf %82, %85 : vector<64x64xf32>
    %c2_44 = arith.constant 2 : index
    %c3_45 = arith.constant 3 : index
    %87 = memref.load %arg2[%c2_44, %c3_45] : memref<4x32xf32, #tpu.memory_space<smem>>
    %88 = vector.broadcast %87 : f32 to vector<64x64xf32>
    %89 = arith.mulf %7, %88 : vector<64x64xf32>
    %90 = arith.addf %86, %89 : vector<64x64xf32>
    %c3_46 = arith.constant 3 : index
    %c3_47 = arith.constant 3 : index
    %91 = memref.load %arg2[%c3_46, %c3_47] : memref<4x32xf32, #tpu.memory_space<smem>>
    %92 = vector.broadcast %91 : f32 to vector<64x64xf32>
    %93 = arith.mulf %10, %92 : vector<64x64xf32>
    %94 = arith.addf %90, %93 : vector<64x64xf32>
    %c3_48 = arith.constant 3 : index
    %95 = memref.load %arg3[%c3_48] : memref<32xf32, #tpu.memory_space<smem>>
    %96 = vector.broadcast %95 : f32 to vector<64x64xf32>
    %97 = arith.addf %94, %96 : vector<64x64xf32>
    %cst_49 = arith.constant 0.000000e+00 : f32
    %98 = vector.broadcast %cst_49 : f32 to vector<64x64xf32>
    %99 = arith.maximumf %97, %98 : vector<64x64xf32>
    %c0_50 = arith.constant 0 : index
    %c3_51 = arith.constant 3 : index
    %c0_52 = arith.constant 0 : index
    %c0_53 = arith.constant 0 : index
    %100 = vector.load %arg4[%c0_50, %c3_51, %c0_52, %c0_53] : memref<1x32x64x64xf32, #tpu.memory_space<vmem>>, vector<1x1x64x64xf32>
    %101 = vector.shape_cast %100 : vector<1x1x64x64xf32> to vector<64x64xf32>
    %102 = vector.shape_cast %99 : vector<64x64xf32> to vector<1x1x64x64xf32>
    tpu.vector_store %arg4[%c0_50, %c3_51, %c0_52, %c0_53], %102 {strides = array<i32>} : memref<1x32x64x64xf32, #tpu.memory_space<vmem>>, vector<1x1x64x64xf32>,
    %c0_54 = arith.constant 0 : index
    %c4 = arith.constant 4 : index
    %103 = memref.load %arg2[%c0_54, %c4] : memref<4x32xf32, #tpu.memory_space<smem>>
    %104 = vector.broadcast %103 : f32 to vector<64x64xf32>
    %105 = arith.mulf %1, %104 : vector<64x64xf32>
    %c1_55 = arith.constant 1 : index
    %c4_56 = arith.constant 4 : index
    %106 = memref.load %arg2[%c1_55, %c4_56] : memref<4x32xf32, #tpu.memory_space<smem>>
    %107 = vector.broadcast %106 : f32 to vector<64x64xf32>
    %108 = arith.mulf %4, %107 : vector<64x64xf32>
    %109 = arith.addf %105, %108 : vector<64x64xf32>
    %c2_57 = arith.constant 2 : index
    %c4_58 = arith.constant 4 : index
    %110 = memref.load %arg2[%c2_57, %c4_58] : memref<4x32xf32, #tpu.memory_space<smem>>
    %111 = vector.broadcast %110 : f32 to vector<64x64xf32>
    %112 = arith.mulf %7, %111 : vector<64x64xf32>
    %113 = arith.addf %109, %112 : vector<64x64xf32>
    %c3_59 = arith.constant 3 : index
    %c4_60 = arith.constant 4 : index
    %114 = memref.load %arg2[%c3_59, %c4_60] : memref<4x32xf32, #tpu.memory_space<smem>>
    %115 = vector.broadcast %114 : f32 to vector<64x64xf32>
    %116 = arith.mulf %10, %115 : vector<64x64xf32>
    %117 = arith.addf %113, %116 : vector<64x64xf32>
    %c4_61 = arith.constant 4 : index
    %118 = memref.load %arg3[%c4_61] : memref<32xf32, #tpu.memory_space<smem>>
    %119 = vector.broadcast %118 : f32 to vector<64x64xf32>
    %120 = arith.addf %117, %119 : vector<64x64xf32>
    %cst_62 = arith.constant 0.000000e+00 : f32
    %121 = vector.broadcast %cst_62 : f32 to vector<64x64xf32>
    %122 = arith.maximumf %120, %121 : vector<64x64xf32>
    %c0_63 = arith.constant 0 : index
    %c4_64 = arith.constant 4 : index
    %c0_65 = arith.constant 0 : index
    %c0_66 = arith.constant 0 : index
    %123 = vector.load %arg4[%c0_63, %c4_64, %c0_65, %c0_66] : memref<1x32x64x64xf32, #tpu.memory_space<vmem>>, vector<1x1x64x64xf32>
    %124 = vector.shape_cast %123 : vector<1x1x64x64xf32> to vector<64x64xf32>
    %125 = vector.shape_cast %122 : vector<64x64xf32> to vector<1x1x64x64xf32>
    tpu.vector_store %arg4[%c0_63, %c4_64, %c0_65, %c0_66], %125 {strides = array<i32>} : memref<1x32x64x64xf32, #tpu.memory_space<vmem>>, vector<1x1x64x64xf32>,
    %c0_67 = arith.constant 0 : index
    %c5 = arith.constant 5 : index
    %126 = memref.load %arg2[%c0_67, %c5] : memref<4x32xf32, #tpu.memory_space<smem>>
    %127 = vector.broadcast %126 : f32 to vector<64x64xf32>
    %128 = arith.mulf %1, %127 : vector<64x64xf32>
    %c1_68 = arith.constant 1 : index
    %c5_69 = arith.constant 5 : index
    %129 = memref.load %arg2[%c1_68, %c5_69] : memref<4x32xf32, #tpu.memory_space<smem>>
    %130 = vector.broadcast %129 : f32 to vector<64x64xf32>
    %131 = arith.mulf %4, %130 : vector<64x64xf32>
    %132 = arith.addf %128, %131 : vector<64x64xf32>
    %c2_70 = arith.constant 2 : index
    %c5_71 = arith.constant 5 : index
    %133 = memref.load %arg2[%c2_70, %c5_71] : memref<4x32xf32, #tpu.memory_space<smem>>
    %134 = vector.broadcast %133 : f32 to vector<64x64xf32>
    %135 = arith.mulf %7, %134 : vector<64x64xf32>
    %136 = arith.addf %132, %135 : vector<64x64xf32>
    %c3_72 = arith.constant 3 : index
    %c5_73 = arith.constant 5 : index
    %137 = memref.load %arg2[%c3_72, %c5_73] : memref<4x32xf32, #tpu.memory_space<smem>>
    %138 = vector.broadcast %137 : f32 to vector<64x64xf32>
    %139 = arith.mulf %10, %138 : vector<64x64xf32>
    %140 = arith.addf %136, %139 : vector<64x64xf32>
    %c5_74 = arith.constant 5 : index
    %141 = memref.load %arg3[%c5_74] : memref<32xf32, #tpu.memory_space<smem>>
    %142 = vector.broadcast %141 : f32 to vector<64x64xf32>
    %143 = arith.addf %140, %142 : vector<64x64xf32>
    %cst_75 = arith.constant 0.000000e+00 : f32
    %144 = vector.broadcast %cst_75 : f32 to vector<64x64xf32>
    %145 = arith.maximumf %143, %144 : vector<64x64xf32>
    %c0_76 = arith.constant 0 : index
    %c5_77 = arith.constant 5 : index
    %c0_78 = arith.constant 0 : index
    %c0_79 = arith.constant 0 : index
    %146 = vector.load %arg4[%c0_76, %c5_77, %c0_78, %c0_79] : memref<1x32x64x64xf32, #tpu.memory_space<vmem>>, vector<1x1x64x64xf32>
    %147 = vector.shape_cast %146 : vector<1x1x64x64xf32> to vector<64x64xf32>
    %148 = vector.shape_cast %145 : vector<64x64xf32> to vector<1x1x64x64xf32>
    tpu.vector_store %arg4[%c0_76, %c5_77, %c0_78, %c0_79], %148 {strides = array<i32>} : memref<1x32x64x64xf32, #tpu.memory_space<vmem>>, vector<1x1x64x64xf32>,
    %c0_80 = arith.constant 0 : index
    %c6 = arith.constant 6 : index
    %149 = memref.load %arg2[%c0_80, %c6] : memref<4x32xf32, #tpu.memory_space<smem>>
    %150 = vector.broadcast %149 : f32 to vector<64x64xf32>
    %151 = arith.mulf %1, %150 : vector<64x64xf32>
    %c1_81 = arith.constant 1 : index
    %c6_82 = arith.constant 6 : index
    %152 = memref.load %arg2[%c1_81, %c6_82] : memref<4x32xf32, #tpu.memory_space<smem>>
    %153 = vector.broadcast %152 : f32 to vector<64x64xf32>
    %154 = arith.mulf %4, %153 : vector<64x64xf32>
    %155 = arith.addf %151, %154 : vector<64x64xf32>
    %c2_83 = arith.constant 2 : index
    %c6_84 = arith.constant 6 : index
    %156 = memref.load %arg2[%c2_83, %c6_84] : memref<4x32xf32, #tpu.memory_space<smem>>
    %157 = vector.broadcast %156 : f32 to vector<64x64xf32>
    %158 = arith.mulf %7, %157 : vector<64x64xf32>
    %159 = arith.addf %155, %158 : vector<64x64xf32>
    %c3_85 = arith.constant 3 : index
    %c6_86 = arith.constant 6 : index
    %160 = memref.load %arg2[%c3_85, %c6_86] : memref<4x32xf32, #tpu.memory_space<smem>>
    %161 = vector.broadcast %160 : f32 to vector<64x64xf32>
    %162 = arith.mulf %10, %161 : vector<64x64xf32>
    %163 = arith.addf %159, %162 : vector<64x64xf32>
    %c6_87 = arith.constant 6 : index
    %164 = memref.load %arg3[%c6_87] : memref<32xf32, #tpu.memory_space<smem>>
    %165 = vector.broadcast %164 : f32 to vector<64x64xf32>
    %166 = arith.addf %163, %165 : vector<64x64xf32>
    %cst_88 = arith.constant 0.000000e+00 : f32
    %167 = vector.broadcast %cst_88 : f32 to vector<64x64xf32>
    %168 = arith.maximumf %166, %167 : vector<64x64xf32>
    %c0_89 = arith.constant 0 : index
    %c6_90 = arith.constant 6 : index
    %c0_91 = arith.constant 0 : index
    %c0_92 = arith.constant 0 : index
    %169 = vector.load %arg4[%c0_89, %c6_90, %c0_91, %c0_92] : memref<1x32x64x64xf32, #tpu.memory_space<vmem>>, vector<1x1x64x64xf32>
    %170 = vector.shape_cast %169 : vector<1x1x64x64xf32> to vector<64x64xf32>
    %171 = vector.shape_cast %168 : vector<64x64xf32> to vector<1x1x64x64xf32>
    tpu.vector_store %arg4[%c0_89, %c6_90, %c0_91, %c0_92], %171 {strides = array<i32>} : memref<1x32x64x64xf32, #tpu.memory_space<vmem>>, vector<1x1x64x64xf32>,
    %c0_93 = arith.constant 0 : index
    %c7 = arith.constant 7 : index
    %172 = memref.load %arg2[%c0_93, %c7] : memref<4x32xf32, #tpu.memory_space<smem>>
    %173 = vector.broadcast %172 : f32 to vector<64x64xf32>
    %174 = arith.mulf %1, %173 : vector<64x64xf32>
    %c1_94 = arith.constant 1 : index
    %c7_95 = arith.constant 7 : index
    %175 = memref.load %arg2[%c1_94, %c7_95] : memref<4x32xf32, #tpu.memory_space<smem>>
    %176 = vector.broadcast %175 : f32 to vector<64x64xf32>
    %177 = arith.mulf %4, %176 : vector<64x64xf32>
    %178 = arith.addf %174, %177 : vector<64x64xf32>
    %c2_96 = arith.constant 2 : index
    %c7_97 = arith.constant 7 : index
    %179 = memref.load %arg2[%c2_96, %c7_97] : memref<4x32xf32, #tpu.memory_space<smem>>
    %180 = vector.broadcast %179 : f32 to vector<64x64xf32>
    %181 = arith.mulf %7, %180 : vector<64x64xf32>
    %182 = arith.addf %178, %181 : vector<64x64xf32>
    %c3_98 = arith.constant 3 : index
    %c7_99 = arith.constant 7 : index
    %183 = memref.load %arg2[%c3_98, %c7_99] : memref<4x32xf32, #tpu.memory_space<smem>>
    %184 = vector.broadcast %183 : f32 to vector<64x64xf32>
    %185 = arith.mulf %10, %184 : vector<64x64xf32>
    %186 = arith.addf %182, %185 : vector<64x64xf32>
    %c7_100 = arith.constant 7 : index
    %187 = memref.load %arg3[%c7_100] : memref<32xf32, #tpu.memory_space<smem>>
    %188 = vector.broadcast %187 : f32 to vector<64x64xf32>
    %189 = arith.addf %186, %188 : vector<64x64xf32>
    %cst_101 = arith.constant 0.000000e+00 : f32
    %190 = vector.broadcast %cst_101 : f32 to vector<64x64xf32>
    %191 = arith.maximumf %189, %190 : vector<64x64xf32>
    %c0_102 = arith.constant 0 : index
    %c7_103 = arith.constant 7 : index
    %c0_104 = arith.constant 0 : index
    %c0_105 = arith.constant 0 : index
    %192 = vector.load %arg4[%c0_102, %c7_103, %c0_104, %c0_105] : memref<1x32x64x64xf32, #tpu.memory_space<vmem>>, vector<1x1x64x64xf32>
    %193 = vector.shape_cast %192 : vector<1x1x64x64xf32> to vector<64x64xf32>
    %194 = vector.shape_cast %191 : vector<64x64xf32> to vector<1x1x64x64xf32>
    tpu.vector_store %arg4[%c0_102, %c7_103, %c0_104, %c0_105], %194 {strides = array<i32>} : memref<1x32x64x64xf32, #tpu.memory_space<vmem>>, vector<1x1x64x64xf32>,
    %c0_106 = arith.constant 0 : index
    %c8 = arith.constant 8 : index
    %195 = memref.load %arg2[%c0_106, %c8] : memref<4x32xf32, #tpu.memory_space<smem>>
    %196 = vector.broadcast %195 : f32 to vector<64x64xf32>
    %197 = arith.mulf %1, %196 : vector<64x64xf32>
    %c1_107 = arith.constant 1 : index
    %c8_108 = arith.constant 8 : index
    %198 = memref.load %arg2[%c1_107, %c8_108] : memref<4x32xf32, #tpu.memory_space<smem>>
    %199 = vector.broadcast %198 : f32 to vector<64x64xf32>
    %200 = arith.mulf %4, %199 : vector<64x64xf32>
    %201 = arith.addf %197, %200 : vector<64x64xf32>
    %c2_109 = arith.constant 2 : index
    %c8_110 = arith.constant 8 : index
    %202 = memref.load %arg2[%c2_109, %c8_110] : memref<4x32xf32, #tpu.memory_space<smem>>
    %203 = vector.broadcast %202 : f32 to vector<64x64xf32>
    %204 = arith.mulf %7, %203 : vector<64x64xf32>
    %205 = arith.addf %201, %204 : vector<64x64xf32>
    %c3_111 = arith.constant 3 : index
    %c8_112 = arith.constant 8 : index
    %206 = memref.load %arg2[%c3_111, %c8_112] : memref<4x32xf32, #tpu.memory_space<smem>>
    %207 = vector.broadcast %206 : f32 to vector<64x64xf32>
    %208 = arith.mulf %10, %207 : vector<64x64xf32>
    %209 = arith.addf %205, %208 : vector<64x64xf32>
    %c8_113 = arith.constant 8 : index
    %210 = memref.load %arg3[%c8_113] : memref<32xf32, #tpu.memory_space<smem>>
    %211 = vector.broadcast %210 : f32 to vector<64x64xf32>
    %212 = arith.addf %209, %211 : vector<64x64xf32>
    %cst_114 = arith.constant 0.000000e+00 : f32
    %213 = vector.broadcast %cst_114 : f32 to vector<64x64xf32>
    %214 = arith.maximumf %212, %213 : vector<64x64xf32>
    %c0_115 = arith.constant 0 : index
    %c8_116 = arith.constant 8 : index
    %c0_117 = arith.constant 0 : index
    %c0_118 = arith.constant 0 : index
    %215 = vector.load %arg4[%c0_115, %c8_116, %c0_117, %c0_118] : memref<1x32x64x64xf32, #tpu.memory_space<vmem>>, vector<1x1x64x64xf32>
    %216 = vector.shape_cast %215 : vector<1x1x64x64xf32> to vector<64x64xf32>
    %217 = vector.shape_cast %214 : vector<64x64xf32> to vector<1x1x64x64xf32>
    tpu.vector_store %arg4[%c0_115, %c8_116, %c0_117, %c0_118], %217 {strides = array<i32>} : memref<1x32x64x64xf32, #tpu.memory_space<vmem>>, vector<1x1x64x64xf32>,
    %c0_119 = arith.constant 0 : index
    %c9 = arith.constant 9 : index
    %218 = memref.load %arg2[%c0_119, %c9] : memref<4x32xf32, #tpu.memory_space<smem>>
    %219 = vector.broadcast %218 : f32 to vector<64x64xf32>
    %220 = arith.mulf %1, %219 : vector<64x64xf32>
    %c1_120 = arith.constant 1 : index
    %c9_121 = arith.constant 9 : index
    %221 = memref.load %arg2[%c1_120, %c9_121] : memref<4x32xf32, #tpu.memory_space<smem>>
    %222 = vector.broadcast %221 : f32 to vector<64x64xf32>
    %223 = arith.mulf %4, %222 : vector<64x64xf32>
    %224 = arith.addf %220, %223 : vector<64x64xf32>
    %c2_122 = arith.constant 2 : index
    %c9_123 = arith.constant 9 : index
    %225 = memref.load %arg2[%c2_122, %c9_123] : memref<4x32xf32, #tpu.memory_space<smem>>
    %226 = vector.broadcast %225 : f32 to vector<64x64xf32>
    %227 = arith.mulf %7, %226 : vector<64x64xf32>
    %228 = arith.addf %224, %227 : vector<64x64xf32>
    %c3_124 = arith.constant 3 : index
    %c9_125 = arith.constant 9 : index
    %229 = memref.load %arg2[%c3_124, %c9_125] : memref<4x32xf32, #tpu.memory_space<smem>>
    %230 = vector.broadcast %229 : f32 to vector<64x64xf32>
    %231 = arith.mulf %10, %230 : vector<64x64xf32>
    %232 = arith.addf %228, %231 : vector<64x64xf32>
    %c9_126 = arith.constant 9 : index
    %233 = memref.load %arg3[%c9_126] : memref<32xf32, #tpu.memory_space<smem>>
    %234 = vector.broadcast %233 : f32 to vector<64x64xf32>
    %235 = arith.addf %232, %234 : vector<64x64xf32>
    %cst_127 = arith.constant 0.000000e+00 : f32
    %236 = vector.broadcast %cst_127 : f32 to vector<64x64xf32>
    %237 = arith.maximumf %235, %236 : vector<64x64xf32>
    %c0_128 = arith.constant 0 : index
    %c9_129 = arith.constant 9 : index
    %c0_130 = arith.constant 0 : index
    %c0_131 = arith.constant 0 : index
    %238 = vector.load %arg4[%c0_128, %c9_129, %c0_130, %c0_131] : memref<1x32x64x64xf32, #tpu.memory_space<vmem>>, vector<1x1x64x64xf32>
    %239 = vector.shape_cast %238 : vector<1x1x64x64xf32> to vector<64x64xf32>
    %240 = vector.shape_cast %237 : vector<64x64xf32> to vector<1x1x64x64xf32>
    tpu.vector_store %arg4[%c0_128, %c9_129, %c0_130, %c0_131], %240 {strides = array<i32>} : memref<1x32x64x64xf32, #tpu.memory_space<vmem>>, vector<1x1x64x64xf32>,
    %c0_132 = arith.constant 0 : index
    %c10 = arith.constant 10 : index
    %241 = memref.load %arg2[%c0_132, %c10] : memref<4x32xf32, #tpu.memory_space<smem>>
    %242 = vector.broadcast %241 : f32 to vector<64x64xf32>
    %243 = arith.mulf %1, %242 : vector<64x64xf32>
    %c1_133 = arith.constant 1 : index
    %c10_134 = arith.constant 10 : index
    %244 = memref.load %arg2[%c1_133, %c10_134] : memref<4x32xf32, #tpu.memory_space<smem>>
    %245 = vector.broadcast %244 : f32 to vector<64x64xf32>
    %246 = arith.mulf %4, %245 : vector<64x64xf32>
    %247 = arith.addf %243, %246 : vector<64x64xf32>
    %c2_135 = arith.constant 2 : index
    %c10_136 = arith.constant 10 : index
    %248 = memref.load %arg2[%c2_135, %c10_136] : memref<4x32xf32, #tpu.memory_space<smem>>
    %249 = vector.broadcast %248 : f32 to vector<64x64xf32>
    %250 = arith.mulf %7, %249 : vector<64x64xf32>
    %251 = arith.addf %247, %250 : vector<64x64xf32>
    %c3_137 = arith.constant 3 : index
    %c10_138 = arith.constant 10 : index
    %252 = memref.load %arg2[%c3_137, %c10_138] : memref<4x32xf32, #tpu.memory_space<smem>>
    %253 = vector.broadcast %252 : f32 to vector<64x64xf32>
    %254 = arith.mulf %10, %253 : vector<64x64xf32>
    %255 = arith.addf %251, %254 : vector<64x64xf32>
    %c10_139 = arith.constant 10 : index
    %256 = memref.load %arg3[%c10_139] : memref<32xf32, #tpu.memory_space<smem>>
    %257 = vector.broadcast %256 : f32 to vector<64x64xf32>
    %258 = arith.addf %255, %257 : vector<64x64xf32>
    %cst_140 = arith.constant 0.000000e+00 : f32
    %259 = vector.broadcast %cst_140 : f32 to vector<64x64xf32>
    %260 = arith.maximumf %258, %259 : vector<64x64xf32>
    %c0_141 = arith.constant 0 : index
    %c10_142 = arith.constant 10 : index
    %c0_143 = arith.constant 0 : index
    %c0_144 = arith.constant 0 : index
    %261 = vector.load %arg4[%c0_141, %c10_142, %c0_143, %c0_144] : memref<1x32x64x64xf32, #tpu.memory_space<vmem>>, vector<1x1x64x64xf32>
    %262 = vector.shape_cast %261 : vector<1x1x64x64xf32> to vector<64x64xf32>
    %263 = vector.shape_cast %260 : vector<64x64xf32> to vector<1x1x64x64xf32>
    tpu.vector_store %arg4[%c0_141, %c10_142, %c0_143, %c0_144], %263 {strides = array<i32>} : memref<1x32x64x64xf32, #tpu.memory_space<vmem>>, vector<1x1x64x64xf32>,
    %c0_145 = arith.constant 0 : index
    %c11 = arith.constant 11 : index
    %264 = memref.load %arg2[%c0_145, %c11] : memref<4x32xf32, #tpu.memory_space<smem>>
    %265 = vector.broadcast %264 : f32 to vector<64x64xf32>
    %266 = arith.mulf %1, %265 : vector<64x64xf32>
    %c1_146 = arith.constant 1 : index
    %c11_147 = arith.constant 11 : index
    %267 = memref.load %arg2[%c1_146, %c11_147] : memref<4x32xf32, #tpu.memory_space<smem>>
    %268 = vector.broadcast %267 : f32 to vector<64x64xf32>
    %269 = arith.mulf %4, %268 : vector<64x64xf32>
    %270 = arith.addf %266, %269 : vector<64x64xf32>
    %c2_148 = arith.constant 2 : index
    %c11_149 = arith.constant 11 : index
    %271 = memref.load %arg2[%c2_148, %c11_149] : memref<4x32xf32, #tpu.memory_space<smem>>
    %272 = vector.broadcast %271 : f32 to vector<64x64xf32>
    %273 = arith.mulf %7, %272 : vector<64x64xf32>
    %274 = arith.addf %270, %273 : vector<64x64xf32>
    %c3_150 = arith.constant 3 : index
    %c11_151 = arith.constant 11 : index
    %275 = memref.load %arg2[%c3_150, %c11_151] : memref<4x32xf32, #tpu.memory_space<smem>>
    %276 = vector.broadcast %275 : f32 to vector<64x64xf32>
    %277 = arith.mulf %10, %276 : vector<64x64xf32>
    %278 = arith.addf %274, %277 : vector<64x64xf32>
    %c11_152 = arith.constant 11 : index
    %279 = memref.load %arg3[%c11_152] : memref<32xf32, #tpu.memory_space<smem>>
    %280 = vector.broadcast %279 : f32 to vector<64x64xf32>
    %281 = arith.addf %278, %280 : vector<64x64xf32>
    %cst_153 = arith.constant 0.000000e+00 : f32
    %282 = vector.broadcast %cst_153 : f32 to vector<64x64xf32>
    %283 = arith.maximumf %281, %282 : vector<64x64xf32>
    %c0_154 = arith.constant 0 : index
    %c11_155 = arith.constant 11 : index
    %c0_156 = arith.constant 0 : index
    %c0_157 = arith.constant 0 : index
    %284 = vector.load %arg4[%c0_154, %c11_155, %c0_156, %c0_157] : memref<1x32x64x64xf32, #tpu.memory_space<vmem>>, vector<1x1x64x64xf32>
    %285 = vector.shape_cast %284 : vector<1x1x64x64xf32> to vector<64x64xf32>
    %286 = vector.shape_cast %283 : vector<64x64xf32> to vector<1x1x64x64xf32>
    tpu.vector_store %arg4[%c0_154, %c11_155, %c0_156, %c0_157], %286 {strides = array<i32>} : memref<1x32x64x64xf32, #tpu.memory_space<vmem>>, vector<1x1x64x64xf32>,
    %c0_158 = arith.constant 0 : index
    %c12 = arith.constant 12 : index
    %287 = memref.load %arg2[%c0_158, %c12] : memref<4x32xf32, #tpu.memory_space<smem>>
    %288 = vector.broadcast %287 : f32 to vector<64x64xf32>
    %289 = arith.mulf %1, %288 : vector<64x64xf32>
    %c1_159 = arith.constant 1 : index
    %c12_160 = arith.constant 12 : index
    %290 = memref.load %arg2[%c1_159, %c12_160] : memref<4x32xf32, #tpu.memory_space<smem>>
    %291 = vector.broadcast %290 : f32 to vector<64x64xf32>
    %292 = arith.mulf %4, %291 : vector<64x64xf32>
    %293 = arith.addf %289, %292 : vector<64x64xf32>
    %c2_161 = arith.constant 2 : index
    %c12_162 = arith.constant 12 : index
    %294 = memref.load %arg2[%c2_161, %c12_162] : memref<4x32xf32, #tpu.memory_space<smem>>
    %295 = vector.broadcast %294 : f32 to vector<64x64xf32>
    %296 = arith.mulf %7, %295 : vector<64x64xf32>
    %297 = arith.addf %293, %296 : vector<64x64xf32>
    %c3_163 = arith.constant 3 : index
    %c12_164 = arith.constant 12 : index
    %298 = memref.load %arg2[%c3_163, %c12_164] : memref<4x32xf32, #tpu.memory_space<smem>>
    %299 = vector.broadcast %298 : f32 to vector<64x64xf32>
    %300 = arith.mulf %10, %299 : vector<64x64xf32>
    %301 = arith.addf %297, %300 : vector<64x64xf32>
    %c12_165 = arith.constant 12 : index
    %302 = memref.load %arg3[%c12_165] : memref<32xf32, #tpu.memory_space<smem>>
    %303 = vector.broadcast %302 : f32 to vector<64x64xf32>
    %304 = arith.addf %301, %303 : vector<64x64xf32>
    %cst_166 = arith.constant 0.000000e+00 : f32
    %305 = vector.broadcast %cst_166 : f32 to vector<64x64xf32>
    %306 = arith.maximumf %304, %305 : vector<64x64xf32>
    %c0_167 = arith.constant 0 : index
    %c12_168 = arith.constant 12 : index
    %c0_169 = arith.constant 0 : index
    %c0_170 = arith.constant 0 : index
    %307 = vector.load %arg4[%c0_167, %c12_168, %c0_169, %c0_170] : memref<1x32x64x64xf32, #tpu.memory_space<vmem>>, vector<1x1x64x64xf32>
    %308 = vector.shape_cast %307 : vector<1x1x64x64xf32> to vector<64x64xf32>
    %309 = vector.shape_cast %306 : vector<64x64xf32> to vector<1x1x64x64xf32>
    tpu.vector_store %arg4[%c0_167, %c12_168, %c0_169, %c0_170], %309 {strides = array<i32>} : memref<1x32x64x64xf32, #tpu.memory_space<vmem>>, vector<1x1x64x64xf32>,
    %c0_171 = arith.constant 0 : index
    %c13 = arith.constant 13 : index
    %310 = memref.load %arg2[%c0_171, %c13] : memref<4x32xf32, #tpu.memory_space<smem>>
    %311 = vector.broadcast %310 : f32 to vector<64x64xf32>
    %312 = arith.mulf %1, %311 : vector<64x64xf32>
    %c1_172 = arith.constant 1 : index
    %c13_173 = arith.constant 13 : index
    %313 = memref.load %arg2[%c1_172, %c13_173] : memref<4x32xf32, #tpu.memory_space<smem>>
    %314 = vector.broadcast %313 : f32 to vector<64x64xf32>
    %315 = arith.mulf %4, %314 : vector<64x64xf32>
    %316 = arith.addf %312, %315 : vector<64x64xf32>
    %c2_174 = arith.constant 2 : index
    %c13_175 = arith.constant 13 : index
    %317 = memref.load %arg2[%c2_174, %c13_175] : memref<4x32xf32, #tpu.memory_space<smem>>
    %318 = vector.broadcast %317 : f32 to vector<64x64xf32>
    %319 = arith.mulf %7, %318 : vector<64x64xf32>
    %320 = arith.addf %316, %319 : vector<64x64xf32>
    %c3_176 = arith.constant 3 : index
    %c13_177 = arith.constant 13 : index
    %321 = memref.load %arg2[%c3_176, %c13_177] : memref<4x32xf32, #tpu.memory_space<smem>>
    %322 = vector.broadcast %321 : f32 to vector<64x64xf32>
    %323 = arith.mulf %10, %322 : vector<64x64xf32>
    %324 = arith.addf %320, %323 : vector<64x64xf32>
    %c13_178 = arith.constant 13 : index
    %325 = memref.load %arg3[%c13_178] : memref<32xf32, #tpu.memory_space<smem>>
    %326 = vector.broadcast %325 : f32 to vector<64x64xf32>
    %327 = arith.addf %324, %326 : vector<64x64xf32>
    %cst_179 = arith.constant 0.000000e+00 : f32
    %328 = vector.broadcast %cst_179 : f32 to vector<64x64xf32>
    %329 = arith.maximumf %327, %328 : vector<64x64xf32>
    %c0_180 = arith.constant 0 : index
    %c13_181 = arith.constant 13 : index
    %c0_182 = arith.constant 0 : index
    %c0_183 = arith.constant 0 : index
    %330 = vector.load %arg4[%c0_180, %c13_181, %c0_182, %c0_183] : memref<1x32x64x64xf32, #tpu.memory_space<vmem>>, vector<1x1x64x64xf32>
    %331 = vector.shape_cast %330 : vector<1x1x64x64xf32> to vector<64x64xf32>
    %332 = vector.shape_cast %329 : vector<64x64xf32> to vector<1x1x64x64xf32>
    tpu.vector_store %arg4[%c0_180, %c13_181, %c0_182, %c0_183], %332 {strides = array<i32>} : memref<1x32x64x64xf32, #tpu.memory_space<vmem>>, vector<1x1x64x64xf32>,
    %c0_184 = arith.constant 0 : index
    %c14 = arith.constant 14 : index
    %333 = memref.load %arg2[%c0_184, %c14] : memref<4x32xf32, #tpu.memory_space<smem>>
    %334 = vector.broadcast %333 : f32 to vector<64x64xf32>
    %335 = arith.mulf %1, %334 : vector<64x64xf32>
    %c1_185 = arith.constant 1 : index
    %c14_186 = arith.constant 14 : index
    %336 = memref.load %arg2[%c1_185, %c14_186] : memref<4x32xf32, #tpu.memory_space<smem>>
    %337 = vector.broadcast %336 : f32 to vector<64x64xf32>
    %338 = arith.mulf %4, %337 : vector<64x64xf32>
    %339 = arith.addf %335, %338 : vector<64x64xf32>
    %c2_187 = arith.constant 2 : index
    %c14_188 = arith.constant 14 : index
    %340 = memref.load %arg2[%c2_187, %c14_188] : memref<4x32xf32, #tpu.memory_space<smem>>
    %341 = vector.broadcast %340 : f32 to vector<64x64xf32>
    %342 = arith.mulf %7, %341 : vector<64x64xf32>
    %343 = arith.addf %339, %342 : vector<64x64xf32>
    %c3_189 = arith.constant 3 : index
    %c14_190 = arith.constant 14 : index
    %344 = memref.load %arg2[%c3_189, %c14_190] : memref<4x32xf32, #tpu.memory_space<smem>>
    %345 = vector.broadcast %344 : f32 to vector<64x64xf32>
    %346 = arith.mulf %10, %345 : vector<64x64xf32>
    %347 = arith.addf %343, %346 : vector<64x64xf32>
    %c14_191 = arith.constant 14 : index
    %348 = memref.load %arg3[%c14_191] : memref<32xf32, #tpu.memory_space<smem>>
    %349 = vector.broadcast %348 : f32 to vector<64x64xf32>
    %350 = arith.addf %347, %349 : vector<64x64xf32>
    %cst_192 = arith.constant 0.000000e+00 : f32
    %351 = vector.broadcast %cst_192 : f32 to vector<64x64xf32>
    %352 = arith.maximumf %350, %351 : vector<64x64xf32>
    %c0_193 = arith.constant 0 : index
    %c14_194 = arith.constant 14 : index
    %c0_195 = arith.constant 0 : index
    %c0_196 = arith.constant 0 : index
    %353 = vector.load %arg4[%c0_193, %c14_194, %c0_195, %c0_196] : memref<1x32x64x64xf32, #tpu.memory_space<vmem>>, vector<1x1x64x64xf32>
    %354 = vector.shape_cast %353 : vector<1x1x64x64xf32> to vector<64x64xf32>
    %355 = vector.shape_cast %352 : vector<64x64xf32> to vector<1x1x64x64xf32>
    tpu.vector_store %arg4[%c0_193, %c14_194, %c0_195, %c0_196], %355 {strides = array<i32>} : memref<1x32x64x64xf32, #tpu.memory_space<vmem>>, vector<1x1x64x64xf32>,
    %c0_197 = arith.constant 0 : index
    %c15 = arith.constant 15 : index
    %356 = memref.load %arg2[%c0_197, %c15] : memref<4x32xf32, #tpu.memory_space<smem>>
    %357 = vector.broadcast %356 : f32 to vector<64x64xf32>
    %358 = arith.mulf %1, %357 : vector<64x64xf32>
    %c1_198 = arith.constant 1 : index
    %c15_199 = arith.constant 15 : index
    %359 = memref.load %arg2[%c1_198, %c15_199] : memref<4x32xf32, #tpu.memory_space<smem>>
    %360 = vector.broadcast %359 : f32 to vector<64x64xf32>
    %361 = arith.mulf %4, %360 : vector<64x64xf32>
    %362 = arith.addf %358, %361 : vector<64x64xf32>
    %c2_200 = arith.constant 2 : index
    %c15_201 = arith.constant 15 : index
    %363 = memref.load %arg2[%c2_200, %c15_201] : memref<4x32xf32, #tpu.memory_space<smem>>
    %364 = vector.broadcast %363 : f32 to vector<64x64xf32>
    %365 = arith.mulf %7, %364 : vector<64x64xf32>
    %366 = arith.addf %362, %365 : vector<64x64xf32>
    %c3_202 = arith.constant 3 : index
    %c15_203 = arith.constant 15 : index
    %367 = memref.load %arg2[%c3_202, %c15_203] : memref<4x32xf32, #tpu.memory_space<smem>>
    %368 = vector.broadcast %367 : f32 to vector<64x64xf32>
    %369 = arith.mulf %10, %368 : vector<64x64xf32>
    %370 = arith.addf %366, %369 : vector<64x64xf32>
    %c15_204 = arith.constant 15 : index
    %371 = memref.load %arg3[%c15_204] : memref<32xf32, #tpu.memory_space<smem>>
    %372 = vector.broadcast %371 : f32 to vector<64x64xf32>
    %373 = arith.addf %370, %372 : vector<64x64xf32>
    %cst_205 = arith.constant 0.000000e+00 : f32
    %374 = vector.broadcast %cst_205 : f32 to vector<64x64xf32>
    %375 = arith.maximumf %373, %374 : vector<64x64xf32>
    %c0_206 = arith.constant 0 : index
    %c15_207 = arith.constant 15 : index
    %c0_208 = arith.constant 0 : index
    %c0_209 = arith.constant 0 : index
    %376 = vector.load %arg4[%c0_206, %c15_207, %c0_208, %c0_209] : memref<1x32x64x64xf32, #tpu.memory_space<vmem>>, vector<1x1x64x64xf32>
    %377 = vector.shape_cast %376 : vector<1x1x64x64xf32> to vector<64x64xf32>
    %378 = vector.shape_cast %375 : vector<64x64xf32> to vector<1x1x64x64xf32>
    tpu.vector_store %arg4[%c0_206, %c15_207, %c0_208, %c0_209], %378 {strides = array<i32>} : memref<1x32x64x64xf32, #tpu.memory_space<vmem>>, vector<1x1x64x64xf32>,
    %c0_210 = arith.constant 0 : index
    %c16 = arith.constant 16 : index
    %379 = memref.load %arg2[%c0_210, %c16] : memref<4x32xf32, #tpu.memory_space<smem>>
    %380 = vector.broadcast %379 : f32 to vector<64x64xf32>
    %381 = arith.mulf %1, %380 : vector<64x64xf32>
    %c1_211 = arith.constant 1 : index
    %c16_212 = arith.constant 16 : index
    %382 = memref.load %arg2[%c1_211, %c16_212] : memref<4x32xf32, #tpu.memory_space<smem>>
    %383 = vector.broadcast %382 : f32 to vector<64x64xf32>
    %384 = arith.mulf %4, %383 : vector<64x64xf32>
    %385 = arith.addf %381, %384 : vector<64x64xf32>
    %c2_213 = arith.constant 2 : index
    %c16_214 = arith.constant 16 : index
    %386 = memref.load %arg2[%c2_213, %c16_214] : memref<4x32xf32, #tpu.memory_space<smem>>
    %387 = vector.broadcast %386 : f32 to vector<64x64xf32>
    %388 = arith.mulf %7, %387 : vector<64x64xf32>
    %389 = arith.addf %385, %388 : vector<64x64xf32>
    %c3_215 = arith.constant 3 : index
    %c16_216 = arith.constant 16 : index
    %390 = memref.load %arg2[%c3_215, %c16_216] : memref<4x32xf32, #tpu.memory_space<smem>>
    %391 = vector.broadcast %390 : f32 to vector<64x64xf32>
    %392 = arith.mulf %10, %391 : vector<64x64xf32>
    %393 = arith.addf %389, %392 : vector<64x64xf32>
    %c16_217 = arith.constant 16 : index
    %394 = memref.load %arg3[%c16_217] : memref<32xf32, #tpu.memory_space<smem>>
    %395 = vector.broadcast %394 : f32 to vector<64x64xf32>
    %396 = arith.addf %393, %395 : vector<64x64xf32>
    %cst_218 = arith.constant 0.000000e+00 : f32
    %397 = vector.broadcast %cst_218 : f32 to vector<64x64xf32>
    %398 = arith.maximumf %396, %397 : vector<64x64xf32>
    %c0_219 = arith.constant 0 : index
    %c16_220 = arith.constant 16 : index
    %c0_221 = arith.constant 0 : index
    %c0_222 = arith.constant 0 : index
    %399 = vector.load %arg4[%c0_219, %c16_220, %c0_221, %c0_222] : memref<1x32x64x64xf32, #tpu.memory_space<vmem>>, vector<1x1x64x64xf32>
    %400 = vector.shape_cast %399 : vector<1x1x64x64xf32> to vector<64x64xf32>
    %401 = vector.shape_cast %398 : vector<64x64xf32> to vector<1x1x64x64xf32>
    tpu.vector_store %arg4[%c0_219, %c16_220, %c0_221, %c0_222], %401 {strides = array<i32>} : memref<1x32x64x64xf32, #tpu.memory_space<vmem>>, vector<1x1x64x64xf32>,
    %c0_223 = arith.constant 0 : index
    %c17 = arith.constant 17 : index
    %402 = memref.load %arg2[%c0_223, %c17] : memref<4x32xf32, #tpu.memory_space<smem>>
    %403 = vector.broadcast %402 : f32 to vector<64x64xf32>
    %404 = arith.mulf %1, %403 : vector<64x64xf32>
    %c1_224 = arith.constant 1 : index
    %c17_225 = arith.constant 17 : index
    %405 = memref.load %arg2[%c1_224, %c17_225] : memref<4x32xf32, #tpu.memory_space<smem>>
    %406 = vector.broadcast %405 : f32 to vector<64x64xf32>
    %407 = arith.mulf %4, %406 : vector<64x64xf32>
    %408 = arith.addf %404, %407 : vector<64x64xf32>
    %c2_226 = arith.constant 2 : index
    %c17_227 = arith.constant 17 : index
    %409 = memref.load %arg2[%c2_226, %c17_227] : memref<4x32xf32, #tpu.memory_space<smem>>
    %410 = vector.broadcast %409 : f32 to vector<64x64xf32>
    %411 = arith.mulf %7, %410 : vector<64x64xf32>
    %412 = arith.addf %408, %411 : vector<64x64xf32>
    %c3_228 = arith.constant 3 : index
    %c17_229 = arith.constant 17 : index
    %413 = memref.load %arg2[%c3_228, %c17_229] : memref<4x32xf32, #tpu.memory_space<smem>>
    %414 = vector.broadcast %413 : f32 to vector<64x64xf32>
    %415 = arith.mulf %10, %414 : vector<64x64xf32>
    %416 = arith.addf %412, %415 : vector<64x64xf32>
    %c17_230 = arith.constant 17 : index
    %417 = memref.load %arg3[%c17_230] : memref<32xf32, #tpu.memory_space<smem>>
    %418 = vector.broadcast %417 : f32 to vector<64x64xf32>
    %419 = arith.addf %416, %418 : vector<64x64xf32>
    %cst_231 = arith.constant 0.000000e+00 : f32
    %420 = vector.broadcast %cst_231 : f32 to vector<64x64xf32>
    %421 = arith.maximumf %419, %420 : vector<64x64xf32>
    %c0_232 = arith.constant 0 : index
    %c17_233 = arith.constant 17 : index
    %c0_234 = arith.constant 0 : index
    %c0_235 = arith.constant 0 : index
    %422 = vector.load %arg4[%c0_232, %c17_233, %c0_234, %c0_235] : memref<1x32x64x64xf32, #tpu.memory_space<vmem>>, vector<1x1x64x64xf32>
    %423 = vector.shape_cast %422 : vector<1x1x64x64xf32> to vector<64x64xf32>
    %424 = vector.shape_cast %421 : vector<64x64xf32> to vector<1x1x64x64xf32>
    tpu.vector_store %arg4[%c0_232, %c17_233, %c0_234, %c0_235], %424 {strides = array<i32>} : memref<1x32x64x64xf32, #tpu.memory_space<vmem>>, vector<1x1x64x64xf32>,
    %c0_236 = arith.constant 0 : index
    %c18 = arith.constant 18 : index
    %425 = memref.load %arg2[%c0_236, %c18] : memref<4x32xf32, #tpu.memory_space<smem>>
    %426 = vector.broadcast %425 : f32 to vector<64x64xf32>
    %427 = arith.mulf %1, %426 : vector<64x64xf32>
    %c1_237 = arith.constant 1 : index
    %c18_238 = arith.constant 18 : index
    %428 = memref.load %arg2[%c1_237, %c18_238] : memref<4x32xf32, #tpu.memory_space<smem>>
    %429 = vector.broadcast %428 : f32 to vector<64x64xf32>
    %430 = arith.mulf %4, %429 : vector<64x64xf32>
    %431 = arith.addf %427, %430 : vector<64x64xf32>
    %c2_239 = arith.constant 2 : index
    %c18_240 = arith.constant 18 : index
    %432 = memref.load %arg2[%c2_239, %c18_240] : memref<4x32xf32, #tpu.memory_space<smem>>
    %433 = vector.broadcast %432 : f32 to vector<64x64xf32>
    %434 = arith.mulf %7, %433 : vector<64x64xf32>
    %435 = arith.addf %431, %434 : vector<64x64xf32>
    %c3_241 = arith.constant 3 : index
    %c18_242 = arith.constant 18 : index
    %436 = memref.load %arg2[%c3_241, %c18_242] : memref<4x32xf32, #tpu.memory_space<smem>>
    %437 = vector.broadcast %436 : f32 to vector<64x64xf32>
    %438 = arith.mulf %10, %437 : vector<64x64xf32>
    %439 = arith.addf %435, %438 : vector<64x64xf32>
    %c18_243 = arith.constant 18 : index
    %440 = memref.load %arg3[%c18_243] : memref<32xf32, #tpu.memory_space<smem>>
    %441 = vector.broadcast %440 : f32 to vector<64x64xf32>
    %442 = arith.addf %439, %441 : vector<64x64xf32>
    %cst_244 = arith.constant 0.000000e+00 : f32
    %443 = vector.broadcast %cst_244 : f32 to vector<64x64xf32>
    %444 = arith.maximumf %442, %443 : vector<64x64xf32>
    %c0_245 = arith.constant 0 : index
    %c18_246 = arith.constant 18 : index
    %c0_247 = arith.constant 0 : index
    %c0_248 = arith.constant 0 : index
    %445 = vector.load %arg4[%c0_245, %c18_246, %c0_247, %c0_248] : memref<1x32x64x64xf32, #tpu.memory_space<vmem>>, vector<1x1x64x64xf32>
    %446 = vector.shape_cast %445 : vector<1x1x64x64xf32> to vector<64x64xf32>
    %447 = vector.shape_cast %444 : vector<64x64xf32> to vector<1x1x64x64xf32>
    tpu.vector_store %arg4[%c0_245, %c18_246, %c0_247, %c0_248], %447 {strides = array<i32>} : memref<1x32x64x64xf32, #tpu.memory_space<vmem>>, vector<1x1x64x64xf32>,
    %c0_249 = arith.constant 0 : index
    %c19 = arith.constant 19 : index
    %448 = memref.load %arg2[%c0_249, %c19] : memref<4x32xf32, #tpu.memory_space<smem>>
    %449 = vector.broadcast %448 : f32 to vector<64x64xf32>
    %450 = arith.mulf %1, %449 : vector<64x64xf32>
    %c1_250 = arith.constant 1 : index
    %c19_251 = arith.constant 19 : index
    %451 = memref.load %arg2[%c1_250, %c19_251] : memref<4x32xf32, #tpu.memory_space<smem>>
    %452 = vector.broadcast %451 : f32 to vector<64x64xf32>
    %453 = arith.mulf %4, %452 : vector<64x64xf32>
    %454 = arith.addf %450, %453 : vector<64x64xf32>
    %c2_252 = arith.constant 2 : index
    %c19_253 = arith.constant 19 : index
    %455 = memref.load %arg2[%c2_252, %c19_253] : memref<4x32xf32, #tpu.memory_space<smem>>
    %456 = vector.broadcast %455 : f32 to vector<64x64xf32>
    %457 = arith.mulf %7, %456 : vector<64x64xf32>
    %458 = arith.addf %454, %457 : vector<64x64xf32>
    %c3_254 = arith.constant 3 : index
    %c19_255 = arith.constant 19 : index
    %459 = memref.load %arg2[%c3_254, %c19_255] : memref<4x32xf32, #tpu.memory_space<smem>>
    %460 = vector.broadcast %459 : f32 to vector<64x64xf32>
    %461 = arith.mulf %10, %460 : vector<64x64xf32>
    %462 = arith.addf %458, %461 : vector<64x64xf32>
    %c19_256 = arith.constant 19 : index
    %463 = memref.load %arg3[%c19_256] : memref<32xf32, #tpu.memory_space<smem>>
    %464 = vector.broadcast %463 : f32 to vector<64x64xf32>
    %465 = arith.addf %462, %464 : vector<64x64xf32>
    %cst_257 = arith.constant 0.000000e+00 : f32
    %466 = vector.broadcast %cst_257 : f32 to vector<64x64xf32>
    %467 = arith.maximumf %465, %466 : vector<64x64xf32>
    %c0_258 = arith.constant 0 : index
    %c19_259 = arith.constant 19 : index
    %c0_260 = arith.constant 0 : index
    %c0_261 = arith.constant 0 : index
    %468 = vector.load %arg4[%c0_258, %c19_259, %c0_260, %c0_261] : memref<1x32x64x64xf32, #tpu.memory_space<vmem>>, vector<1x1x64x64xf32>
    %469 = vector.shape_cast %468 : vector<1x1x64x64xf32> to vector<64x64xf32>
    %470 = vector.shape_cast %467 : vector<64x64xf32> to vector<1x1x64x64xf32>
    tpu.vector_store %arg4[%c0_258, %c19_259, %c0_260, %c0_261], %470 {strides = array<i32>} : memref<1x32x64x64xf32, #tpu.memory_space<vmem>>, vector<1x1x64x64xf32>,
    %c0_262 = arith.constant 0 : index
    %c20 = arith.constant 20 : index
    %471 = memref.load %arg2[%c0_262, %c20] : memref<4x32xf32, #tpu.memory_space<smem>>
    %472 = vector.broadcast %471 : f32 to vector<64x64xf32>
    %473 = arith.mulf %1, %472 : vector<64x64xf32>
    %c1_263 = arith.constant 1 : index
    %c20_264 = arith.constant 20 : index
    %474 = memref.load %arg2[%c1_263, %c20_264] : memref<4x32xf32, #tpu.memory_space<smem>>
    %475 = vector.broadcast %474 : f32 to vector<64x64xf32>
    %476 = arith.mulf %4, %475 : vector<64x64xf32>
    %477 = arith.addf %473, %476 : vector<64x64xf32>
    %c2_265 = arith.constant 2 : index
    %c20_266 = arith.constant 20 : index
    %478 = memref.load %arg2[%c2_265, %c20_266] : memref<4x32xf32, #tpu.memory_space<smem>>
    %479 = vector.broadcast %478 : f32 to vector<64x64xf32>
    %480 = arith.mulf %7, %479 : vector<64x64xf32>
    %481 = arith.addf %477, %480 : vector<64x64xf32>
    %c3_267 = arith.constant 3 : index
    %c20_268 = arith.constant 20 : index
    %482 = memref.load %arg2[%c3_267, %c20_268] : memref<4x32xf32, #tpu.memory_space<smem>>
    %483 = vector.broadcast %482 : f32 to vector<64x64xf32>
    %484 = arith.mulf %10, %483 : vector<64x64xf32>
    %485 = arith.addf %481, %484 : vector<64x64xf32>
    %c20_269 = arith.constant 20 : index
    %486 = memref.load %arg3[%c20_269] : memref<32xf32, #tpu.memory_space<smem>>
    %487 = vector.broadcast %486 : f32 to vector<64x64xf32>
    %488 = arith.addf %485, %487 : vector<64x64xf32>
    %cst_270 = arith.constant 0.000000e+00 : f32
    %489 = vector.broadcast %cst_270 : f32 to vector<64x64xf32>
    %490 = arith.maximumf %488, %489 : vector<64x64xf32>
    %c0_271 = arith.constant 0 : index
    %c20_272 = arith.constant 20 : index
    %c0_273 = arith.constant 0 : index
    %c0_274 = arith.constant 0 : index
    %491 = vector.load %arg4[%c0_271, %c20_272, %c0_273, %c0_274] : memref<1x32x64x64xf32, #tpu.memory_space<vmem>>, vector<1x1x64x64xf32>
    %492 = vector.shape_cast %491 : vector<1x1x64x64xf32> to vector<64x64xf32>
    %493 = vector.shape_cast %490 : vector<64x64xf32> to vector<1x1x64x64xf32>
    tpu.vector_store %arg4[%c0_271, %c20_272, %c0_273, %c0_274], %493 {strides = array<i32>} : memref<1x32x64x64xf32, #tpu.memory_space<vmem>>, vector<1x1x64x64xf32>,
    %c0_275 = arith.constant 0 : index
    %c21 = arith.constant 21 : index
    %494 = memref.load %arg2[%c0_275, %c21] : memref<4x32xf32, #tpu.memory_space<smem>>
    %495 = vector.broadcast %494 : f32 to vector<64x64xf32>
    %496 = arith.mulf %1, %495 : vector<64x64xf32>
    %c1_276 = arith.constant 1 : index
    %c21_277 = arith.constant 21 : index
    %497 = memref.load %arg2[%c1_276, %c21_277] : memref<4x32xf32, #tpu.memory_space<smem>>
    %498 = vector.broadcast %497 : f32 to vector<64x64xf32>
    %499 = arith.mulf %4, %498 : vector<64x64xf32>
    %500 = arith.addf %496, %499 : vector<64x64xf32>
    %c2_278 = arith.constant 2 : index
    %c21_279 = arith.constant 21 : index
    %501 = memref.load %arg2[%c2_278, %c21_279] : memref<4x32xf32, #tpu.memory_space<smem>>
    %502 = vector.broadcast %501 : f32 to vector<64x64xf32>
    %503 = arith.mulf %7, %502 : vector<64x64xf32>
    %504 = arith.addf %500, %503 : vector<64x64xf32>
    %c3_280 = arith.constant 3 : index
    %c21_281 = arith.constant 21 : index
    %505 = memref.load %arg2[%c3_280, %c21_281] : memref<4x32xf32, #tpu.memory_space<smem>>
    %506 = vector.broadcast %505 : f32 to vector<64x64xf32>
    %507 = arith.mulf %10, %506 : vector<64x64xf32>
    %508 = arith.addf %504, %507 : vector<64x64xf32>
    %c21_282 = arith.constant 21 : index
    %509 = memref.load %arg3[%c21_282] : memref<32xf32, #tpu.memory_space<smem>>
    %510 = vector.broadcast %509 : f32 to vector<64x64xf32>
    %511 = arith.addf %508, %510 : vector<64x64xf32>
    %cst_283 = arith.constant 0.000000e+00 : f32
    %512 = vector.broadcast %cst_283 : f32 to vector<64x64xf32>
    %513 = arith.maximumf %511, %512 : vector<64x64xf32>
    %c0_284 = arith.constant 0 : index
    %c21_285 = arith.constant 21 : index
    %c0_286 = arith.constant 0 : index
    %c0_287 = arith.constant 0 : index
    %514 = vector.load %arg4[%c0_284, %c21_285, %c0_286, %c0_287] : memref<1x32x64x64xf32, #tpu.memory_space<vmem>>, vector<1x1x64x64xf32>
    %515 = vector.shape_cast %514 : vector<1x1x64x64xf32> to vector<64x64xf32>
    %516 = vector.shape_cast %513 : vector<64x64xf32> to vector<1x1x64x64xf32>
    tpu.vector_store %arg4[%c0_284, %c21_285, %c0_286, %c0_287], %516 {strides = array<i32>} : memref<1x32x64x64xf32, #tpu.memory_space<vmem>>, vector<1x1x64x64xf32>,
    %c0_288 = arith.constant 0 : index
    %c22 = arith.constant 22 : index
    %517 = memref.load %arg2[%c0_288, %c22] : memref<4x32xf32, #tpu.memory_space<smem>>
    %518 = vector.broadcast %517 : f32 to vector<64x64xf32>
    %519 = arith.mulf %1, %518 : vector<64x64xf32>
    %c1_289 = arith.constant 1 : index
    %c22_290 = arith.constant 22 : index
    %520 = memref.load %arg2[%c1_289, %c22_290] : memref<4x32xf32, #tpu.memory_space<smem>>
    %521 = vector.broadcast %520 : f32 to vector<64x64xf32>
    %522 = arith.mulf %4, %521 : vector<64x64xf32>
    %523 = arith.addf %519, %522 : vector<64x64xf32>
    %c2_291 = arith.constant 2 : index
    %c22_292 = arith.constant 22 : index
    %524 = memref.load %arg2[%c2_291, %c22_292] : memref<4x32xf32, #tpu.memory_space<smem>>
    %525 = vector.broadcast %524 : f32 to vector<64x64xf32>
    %526 = arith.mulf %7, %525 : vector<64x64xf32>
    %527 = arith.addf %523, %526 : vector<64x64xf32>
    %c3_293 = arith.constant 3 : index
    %c22_294 = arith.constant 22 : index
    %528 = memref.load %arg2[%c3_293, %c22_294] : memref<4x32xf32, #tpu.memory_space<smem>>
    %529 = vector.broadcast %528 : f32 to vector<64x64xf32>
    %530 = arith.mulf %10, %529 : vector<64x64xf32>
    %531 = arith.addf %527, %530 : vector<64x64xf32>
    %c22_295 = arith.constant 22 : index
    %532 = memref.load %arg3[%c22_295] : memref<32xf32, #tpu.memory_space<smem>>
    %533 = vector.broadcast %532 : f32 to vector<64x64xf32>
    %534 = arith.addf %531, %533 : vector<64x64xf32>
    %cst_296 = arith.constant 0.000000e+00 : f32
    %535 = vector.broadcast %cst_296 : f32 to vector<64x64xf32>
    %536 = arith.maximumf %534, %535 : vector<64x64xf32>
    %c0_297 = arith.constant 0 : index
    %c22_298 = arith.constant 22 : index
    %c0_299 = arith.constant 0 : index
    %c0_300 = arith.constant 0 : index
    %537 = vector.load %arg4[%c0_297, %c22_298, %c0_299, %c0_300] : memref<1x32x64x64xf32, #tpu.memory_space<vmem>>, vector<1x1x64x64xf32>
    %538 = vector.shape_cast %537 : vector<1x1x64x64xf32> to vector<64x64xf32>
    %539 = vector.shape_cast %536 : vector<64x64xf32> to vector<1x1x64x64xf32>
    tpu.vector_store %arg4[%c0_297, %c22_298, %c0_299, %c0_300], %539 {strides = array<i32>} : memref<1x32x64x64xf32, #tpu.memory_space<vmem>>, vector<1x1x64x64xf32>,
    %c0_301 = arith.constant 0 : index
    %c23 = arith.constant 23 : index
    %540 = memref.load %arg2[%c0_301, %c23] : memref<4x32xf32, #tpu.memory_space<smem>>
    %541 = vector.broadcast %540 : f32 to vector<64x64xf32>
    %542 = arith.mulf %1, %541 : vector<64x64xf32>
    %c1_302 = arith.constant 1 : index
    %c23_303 = arith.constant 23 : index
    %543 = memref.load %arg2[%c1_302, %c23_303] : memref<4x32xf32, #tpu.memory_space<smem>>
    %544 = vector.broadcast %543 : f32 to vector<64x64xf32>
    %545 = arith.mulf %4, %544 : vector<64x64xf32>
    %546 = arith.addf %542, %545 : vector<64x64xf32>
    %c2_304 = arith.constant 2 : index
    %c23_305 = arith.constant 23 : index
    %547 = memref.load %arg2[%c2_304, %c23_305] : memref<4x32xf32, #tpu.memory_space<smem>>
    %548 = vector.broadcast %547 : f32 to vector<64x64xf32>
    %549 = arith.mulf %7, %548 : vector<64x64xf32>
    %550 = arith.addf %546, %549 : vector<64x64xf32>
    %c3_306 = arith.constant 3 : index
    %c23_307 = arith.constant 23 : index
    %551 = memref.load %arg2[%c3_306, %c23_307] : memref<4x32xf32, #tpu.memory_space<smem>>
    %552 = vector.broadcast %551 : f32 to vector<64x64xf32>
    %553 = arith.mulf %10, %552 : vector<64x64xf32>
    %554 = arith.addf %550, %553 : vector<64x64xf32>
    %c23_308 = arith.constant 23 : index
    %555 = memref.load %arg3[%c23_308] : memref<32xf32, #tpu.memory_space<smem>>
    %556 = vector.broadcast %555 : f32 to vector<64x64xf32>
    %557 = arith.addf %554, %556 : vector<64x64xf32>
    %cst_309 = arith.constant 0.000000e+00 : f32
    %558 = vector.broadcast %cst_309 : f32 to vector<64x64xf32>
    %559 = arith.maximumf %557, %558 : vector<64x64xf32>
    %c0_310 = arith.constant 0 : index
    %c23_311 = arith.constant 23 : index
    %c0_312 = arith.constant 0 : index
    %c0_313 = arith.constant 0 : index
    %560 = vector.load %arg4[%c0_310, %c23_311, %c0_312, %c0_313] : memref<1x32x64x64xf32, #tpu.memory_space<vmem>>, vector<1x1x64x64xf32>
    %561 = vector.shape_cast %560 : vector<1x1x64x64xf32> to vector<64x64xf32>
    %562 = vector.shape_cast %559 : vector<64x64xf32> to vector<1x1x64x64xf32>
    tpu.vector_store %arg4[%c0_310, %c23_311, %c0_312, %c0_313], %562 {strides = array<i32>} : memref<1x32x64x64xf32, #tpu.memory_space<vmem>>, vector<1x1x64x64xf32>,
    %c0_314 = arith.constant 0 : index
    %c24 = arith.constant 24 : index
    %563 = memref.load %arg2[%c0_314, %c24] : memref<4x32xf32, #tpu.memory_space<smem>>
    %564 = vector.broadcast %563 : f32 to vector<64x64xf32>
    %565 = arith.mulf %1, %564 : vector<64x64xf32>
    %c1_315 = arith.constant 1 : index
    %c24_316 = arith.constant 24 : index
    %566 = memref.load %arg2[%c1_315, %c24_316] : memref<4x32xf32, #tpu.memory_space<smem>>
    %567 = vector.broadcast %566 : f32 to vector<64x64xf32>
    %568 = arith.mulf %4, %567 : vector<64x64xf32>
    %569 = arith.addf %565, %568 : vector<64x64xf32>
    %c2_317 = arith.constant 2 : index
    %c24_318 = arith.constant 24 : index
    %570 = memref.load %arg2[%c2_317, %c24_318] : memref<4x32xf32, #tpu.memory_space<smem>>
    %571 = vector.broadcast %570 : f32 to vector<64x64xf32>
    %572 = arith.mulf %7, %571 : vector<64x64xf32>
    %573 = arith.addf %569, %572 : vector<64x64xf32>
    %c3_319 = arith.constant 3 : index
    %c24_320 = arith.constant 24 : index
    %574 = memref.load %arg2[%c3_319, %c24_320] : memref<4x32xf32, #tpu.memory_space<smem>>
    %575 = vector.broadcast %574 : f32 to vector<64x64xf32>
    %576 = arith.mulf %10, %575 : vector<64x64xf32>
    %577 = arith.addf %573, %576 : vector<64x64xf32>
    %c24_321 = arith.constant 24 : index
    %578 = memref.load %arg3[%c24_321] : memref<32xf32, #tpu.memory_space<smem>>
    %579 = vector.broadcast %578 : f32 to vector<64x64xf32>
    %580 = arith.addf %577, %579 : vector<64x64xf32>
    %cst_322 = arith.constant 0.000000e+00 : f32
    %581 = vector.broadcast %cst_322 : f32 to vector<64x64xf32>
    %582 = arith.maximumf %580, %581 : vector<64x64xf32>
    %c0_323 = arith.constant 0 : index
    %c24_324 = arith.constant 24 : index
    %c0_325 = arith.constant 0 : index
    %c0_326 = arith.constant 0 : index
    %583 = vector.load %arg4[%c0_323, %c24_324, %c0_325, %c0_326] : memref<1x32x64x64xf32, #tpu.memory_space<vmem>>, vector<1x1x64x64xf32>
    %584 = vector.shape_cast %583 : vector<1x1x64x64xf32> to vector<64x64xf32>
    %585 = vector.shape_cast %582 : vector<64x64xf32> to vector<1x1x64x64xf32>
    tpu.vector_store %arg4[%c0_323, %c24_324, %c0_325, %c0_326], %585 {strides = array<i32>} : memref<1x32x64x64xf32, #tpu.memory_space<vmem>>, vector<1x1x64x64xf32>,
    %c0_327 = arith.constant 0 : index
    %c25 = arith.constant 25 : index
    %586 = memref.load %arg2[%c0_327, %c25] : memref<4x32xf32, #tpu.memory_space<smem>>
    %587 = vector.broadcast %586 : f32 to vector<64x64xf32>
    %588 = arith.mulf %1, %587 : vector<64x64xf32>
    %c1_328 = arith.constant 1 : index
    %c25_329 = arith.constant 25 : index
    %589 = memref.load %arg2[%c1_328, %c25_329] : memref<4x32xf32, #tpu.memory_space<smem>>
    %590 = vector.broadcast %589 : f32 to vector<64x64xf32>
    %591 = arith.mulf %4, %590 : vector<64x64xf32>
    %592 = arith.addf %588, %591 : vector<64x64xf32>
    %c2_330 = arith.constant 2 : index
    %c25_331 = arith.constant 25 : index
    %593 = memref.load %arg2[%c2_330, %c25_331] : memref<4x32xf32, #tpu.memory_space<smem>>
    %594 = vector.broadcast %593 : f32 to vector<64x64xf32>
    %595 = arith.mulf %7, %594 : vector<64x64xf32>
    %596 = arith.addf %592, %595 : vector<64x64xf32>
    %c3_332 = arith.constant 3 : index
    %c25_333 = arith.constant 25 : index
    %597 = memref.load %arg2[%c3_332, %c25_333] : memref<4x32xf32, #tpu.memory_space<smem>>
    %598 = vector.broadcast %597 : f32 to vector<64x64xf32>
    %599 = arith.mulf %10, %598 : vector<64x64xf32>
    %600 = arith.addf %596, %599 : vector<64x64xf32>
    %c25_334 = arith.constant 25 : index
    %601 = memref.load %arg3[%c25_334] : memref<32xf32, #tpu.memory_space<smem>>
    %602 = vector.broadcast %601 : f32 to vector<64x64xf32>
    %603 = arith.addf %600, %602 : vector<64x64xf32>
    %cst_335 = arith.constant 0.000000e+00 : f32
    %604 = vector.broadcast %cst_335 : f32 to vector<64x64xf32>
    %605 = arith.maximumf %603, %604 : vector<64x64xf32>
    %c0_336 = arith.constant 0 : index
    %c25_337 = arith.constant 25 : index
    %c0_338 = arith.constant 0 : index
    %c0_339 = arith.constant 0 : index
    %606 = vector.load %arg4[%c0_336, %c25_337, %c0_338, %c0_339] : memref<1x32x64x64xf32, #tpu.memory_space<vmem>>, vector<1x1x64x64xf32>
    %607 = vector.shape_cast %606 : vector<1x1x64x64xf32> to vector<64x64xf32>
    %608 = vector.shape_cast %605 : vector<64x64xf32> to vector<1x1x64x64xf32>
    tpu.vector_store %arg4[%c0_336, %c25_337, %c0_338, %c0_339], %608 {strides = array<i32>} : memref<1x32x64x64xf32, #tpu.memory_space<vmem>>, vector<1x1x64x64xf32>,
    %c0_340 = arith.constant 0 : index
    %c26 = arith.constant 26 : index
    %609 = memref.load %arg2[%c0_340, %c26] : memref<4x32xf32, #tpu.memory_space<smem>>
    %610 = vector.broadcast %609 : f32 to vector<64x64xf32>
    %611 = arith.mulf %1, %610 : vector<64x64xf32>
    %c1_341 = arith.constant 1 : index
    %c26_342 = arith.constant 26 : index
    %612 = memref.load %arg2[%c1_341, %c26_342] : memref<4x32xf32, #tpu.memory_space<smem>>
    %613 = vector.broadcast %612 : f32 to vector<64x64xf32>
    %614 = arith.mulf %4, %613 : vector<64x64xf32>
    %615 = arith.addf %611, %614 : vector<64x64xf32>
    %c2_343 = arith.constant 2 : index
    %c26_344 = arith.constant 26 : index
    %616 = memref.load %arg2[%c2_343, %c26_344] : memref<4x32xf32, #tpu.memory_space<smem>>
    %617 = vector.broadcast %616 : f32 to vector<64x64xf32>
    %618 = arith.mulf %7, %617 : vector<64x64xf32>
    %619 = arith.addf %615, %618 : vector<64x64xf32>
    %c3_345 = arith.constant 3 : index
    %c26_346 = arith.constant 26 : index
    %620 = memref.load %arg2[%c3_345, %c26_346] : memref<4x32xf32, #tpu.memory_space<smem>>
    %621 = vector.broadcast %620 : f32 to vector<64x64xf32>
    %622 = arith.mulf %10, %621 : vector<64x64xf32>
    %623 = arith.addf %619, %622 : vector<64x64xf32>
    %c26_347 = arith.constant 26 : index
    %624 = memref.load %arg3[%c26_347] : memref<32xf32, #tpu.memory_space<smem>>
    %625 = vector.broadcast %624 : f32 to vector<64x64xf32>
    %626 = arith.addf %623, %625 : vector<64x64xf32>
    %cst_348 = arith.constant 0.000000e+00 : f32
    %627 = vector.broadcast %cst_348 : f32 to vector<64x64xf32>
    %628 = arith.maximumf %626, %627 : vector<64x64xf32>
    %c0_349 = arith.constant 0 : index
    %c26_350 = arith.constant 26 : index
    %c0_351 = arith.constant 0 : index
    %c0_352 = arith.constant 0 : index
    %629 = vector.load %arg4[%c0_349, %c26_350, %c0_351, %c0_352] : memref<1x32x64x64xf32, #tpu.memory_space<vmem>>, vector<1x1x64x64xf32>
    %630 = vector.shape_cast %629 : vector<1x1x64x64xf32> to vector<64x64xf32>
    %631 = vector.shape_cast %628 : vector<64x64xf32> to vector<1x1x64x64xf32>
    tpu.vector_store %arg4[%c0_349, %c26_350, %c0_351, %c0_352], %631 {strides = array<i32>} : memref<1x32x64x64xf32, #tpu.memory_space<vmem>>, vector<1x1x64x64xf32>,
    %c0_353 = arith.constant 0 : index
    %c27 = arith.constant 27 : index
    %632 = memref.load %arg2[%c0_353, %c27] : memref<4x32xf32, #tpu.memory_space<smem>>
    %633 = vector.broadcast %632 : f32 to vector<64x64xf32>
    %634 = arith.mulf %1, %633 : vector<64x64xf32>
    %c1_354 = arith.constant 1 : index
    %c27_355 = arith.constant 27 : index
    %635 = memref.load %arg2[%c1_354, %c27_355] : memref<4x32xf32, #tpu.memory_space<smem>>
    %636 = vector.broadcast %635 : f32 to vector<64x64xf32>
    %637 = arith.mulf %4, %636 : vector<64x64xf32>
    %638 = arith.addf %634, %637 : vector<64x64xf32>
    %c2_356 = arith.constant 2 : index
    %c27_357 = arith.constant 27 : index
    %639 = memref.load %arg2[%c2_356, %c27_357] : memref<4x32xf32, #tpu.memory_space<smem>>
    %640 = vector.broadcast %639 : f32 to vector<64x64xf32>
    %641 = arith.mulf %7, %640 : vector<64x64xf32>
    %642 = arith.addf %638, %641 : vector<64x64xf32>
    %c3_358 = arith.constant 3 : index
    %c27_359 = arith.constant 27 : index
    %643 = memref.load %arg2[%c3_358, %c27_359] : memref<4x32xf32, #tpu.memory_space<smem>>
    %644 = vector.broadcast %643 : f32 to vector<64x64xf32>
    %645 = arith.mulf %10, %644 : vector<64x64xf32>
    %646 = arith.addf %642, %645 : vector<64x64xf32>
    %c27_360 = arith.constant 27 : index
    %647 = memref.load %arg3[%c27_360] : memref<32xf32, #tpu.memory_space<smem>>
    %648 = vector.broadcast %647 : f32 to vector<64x64xf32>
    %649 = arith.addf %646, %648 : vector<64x64xf32>
    %cst_361 = arith.constant 0.000000e+00 : f32
    %650 = vector.broadcast %cst_361 : f32 to vector<64x64xf32>
    %651 = arith.maximumf %649, %650 : vector<64x64xf32>
    %c0_362 = arith.constant 0 : index
    %c27_363 = arith.constant 27 : index
    %c0_364 = arith.constant 0 : index
    %c0_365 = arith.constant 0 : index
    %652 = vector.load %arg4[%c0_362, %c27_363, %c0_364, %c0_365] : memref<1x32x64x64xf32, #tpu.memory_space<vmem>>, vector<1x1x64x64xf32>
    %653 = vector.shape_cast %652 : vector<1x1x64x64xf32> to vector<64x64xf32>
    %654 = vector.shape_cast %651 : vector<64x64xf32> to vector<1x1x64x64xf32>
    tpu.vector_store %arg4[%c0_362, %c27_363, %c0_364, %c0_365], %654 {strides = array<i32>} : memref<1x32x64x64xf32, #tpu.memory_space<vmem>>, vector<1x1x64x64xf32>,
    %c0_366 = arith.constant 0 : index
    %c28 = arith.constant 28 : index
    %655 = memref.load %arg2[%c0_366, %c28] : memref<4x32xf32, #tpu.memory_space<smem>>
    %656 = vector.broadcast %655 : f32 to vector<64x64xf32>
    %657 = arith.mulf %1, %656 : vector<64x64xf32>
    %c1_367 = arith.constant 1 : index
    %c28_368 = arith.constant 28 : index
    %658 = memref.load %arg2[%c1_367, %c28_368] : memref<4x32xf32, #tpu.memory_space<smem>>
    %659 = vector.broadcast %658 : f32 to vector<64x64xf32>
    %660 = arith.mulf %4, %659 : vector<64x64xf32>
    %661 = arith.addf %657, %660 : vector<64x64xf32>
    %c2_369 = arith.constant 2 : index
    %c28_370 = arith.constant 28 : index
    %662 = memref.load %arg2[%c2_369, %c28_370] : memref<4x32xf32, #tpu.memory_space<smem>>
    %663 = vector.broadcast %662 : f32 to vector<64x64xf32>
    %664 = arith.mulf %7, %663 : vector<64x64xf32>
    %665 = arith.addf %661, %664 : vector<64x64xf32>
    %c3_371 = arith.constant 3 : index
    %c28_372 = arith.constant 28 : index
    %666 = memref.load %arg2[%c3_371, %c28_372] : memref<4x32xf32, #tpu.memory_space<smem>>
    %667 = vector.broadcast %666 : f32 to vector<64x64xf32>
    %668 = arith.mulf %10, %667 : vector<64x64xf32>
    %669 = arith.addf %665, %668 : vector<64x64xf32>
    %c28_373 = arith.constant 28 : index
    %670 = memref.load %arg3[%c28_373] : memref<32xf32, #tpu.memory_space<smem>>
    %671 = vector.broadcast %670 : f32 to vector<64x64xf32>
    %672 = arith.addf %669, %671 : vector<64x64xf32>
    %cst_374 = arith.constant 0.000000e+00 : f32
    %673 = vector.broadcast %cst_374 : f32 to vector<64x64xf32>
    %674 = arith.maximumf %672, %673 : vector<64x64xf32>
    %c0_375 = arith.constant 0 : index
    %c28_376 = arith.constant 28 : index
    %c0_377 = arith.constant 0 : index
    %c0_378 = arith.constant 0 : index
    %675 = vector.load %arg4[%c0_375, %c28_376, %c0_377, %c0_378] : memref<1x32x64x64xf32, #tpu.memory_space<vmem>>, vector<1x1x64x64xf32>
    %676 = vector.shape_cast %675 : vector<1x1x64x64xf32> to vector<64x64xf32>
    %677 = vector.shape_cast %674 : vector<64x64xf32> to vector<1x1x64x64xf32>
    tpu.vector_store %arg4[%c0_375, %c28_376, %c0_377, %c0_378], %677 {strides = array<i32>} : memref<1x32x64x64xf32, #tpu.memory_space<vmem>>, vector<1x1x64x64xf32>,
    %c0_379 = arith.constant 0 : index
    %c29 = arith.constant 29 : index
    %678 = memref.load %arg2[%c0_379, %c29] : memref<4x32xf32, #tpu.memory_space<smem>>
    %679 = vector.broadcast %678 : f32 to vector<64x64xf32>
    %680 = arith.mulf %1, %679 : vector<64x64xf32>
    %c1_380 = arith.constant 1 : index
    %c29_381 = arith.constant 29 : index
    %681 = memref.load %arg2[%c1_380, %c29_381] : memref<4x32xf32, #tpu.memory_space<smem>>
    %682 = vector.broadcast %681 : f32 to vector<64x64xf32>
    %683 = arith.mulf %4, %682 : vector<64x64xf32>
    %684 = arith.addf %680, %683 : vector<64x64xf32>
    %c2_382 = arith.constant 2 : index
    %c29_383 = arith.constant 29 : index
    %685 = memref.load %arg2[%c2_382, %c29_383] : memref<4x32xf32, #tpu.memory_space<smem>>
    %686 = vector.broadcast %685 : f32 to vector<64x64xf32>
    %687 = arith.mulf %7, %686 : vector<64x64xf32>
    %688 = arith.addf %684, %687 : vector<64x64xf32>
    %c3_384 = arith.constant 3 : index
    %c29_385 = arith.constant 29 : index
    %689 = memref.load %arg2[%c3_384, %c29_385] : memref<4x32xf32, #tpu.memory_space<smem>>
    %690 = vector.broadcast %689 : f32 to vector<64x64xf32>
    %691 = arith.mulf %10, %690 : vector<64x64xf32>
    %692 = arith.addf %688, %691 : vector<64x64xf32>
    %c29_386 = arith.constant 29 : index
    %693 = memref.load %arg3[%c29_386] : memref<32xf32, #tpu.memory_space<smem>>
    %694 = vector.broadcast %693 : f32 to vector<64x64xf32>
    %695 = arith.addf %692, %694 : vector<64x64xf32>
    %cst_387 = arith.constant 0.000000e+00 : f32
    %696 = vector.broadcast %cst_387 : f32 to vector<64x64xf32>
    %697 = arith.maximumf %695, %696 : vector<64x64xf32>
    %c0_388 = arith.constant 0 : index
    %c29_389 = arith.constant 29 : index
    %c0_390 = arith.constant 0 : index
    %c0_391 = arith.constant 0 : index
    %698 = vector.load %arg4[%c0_388, %c29_389, %c0_390, %c0_391] : memref<1x32x64x64xf32, #tpu.memory_space<vmem>>, vector<1x1x64x64xf32>
    %699 = vector.shape_cast %698 : vector<1x1x64x64xf32> to vector<64x64xf32>
    %700 = vector.shape_cast %697 : vector<64x64xf32> to vector<1x1x64x64xf32>
    tpu.vector_store %arg4[%c0_388, %c29_389, %c0_390, %c0_391], %700 {strides = array<i32>} : memref<1x32x64x64xf32, #tpu.memory_space<vmem>>, vector<1x1x64x64xf32>,
    %c0_392 = arith.constant 0 : index
    %c30 = arith.constant 30 : index
    %701 = memref.load %arg2[%c0_392, %c30] : memref<4x32xf32, #tpu.memory_space<smem>>
    %702 = vector.broadcast %701 : f32 to vector<64x64xf32>
    %703 = arith.mulf %1, %702 : vector<64x64xf32>
    %c1_393 = arith.constant 1 : index
    %c30_394 = arith.constant 30 : index
    %704 = memref.load %arg2[%c1_393, %c30_394] : memref<4x32xf32, #tpu.memory_space<smem>>
    %705 = vector.broadcast %704 : f32 to vector<64x64xf32>
    %706 = arith.mulf %4, %705 : vector<64x64xf32>
    %707 = arith.addf %703, %706 : vector<64x64xf32>
    %c2_395 = arith.constant 2 : index
    %c30_396 = arith.constant 30 : index
    %708 = memref.load %arg2[%c2_395, %c30_396] : memref<4x32xf32, #tpu.memory_space<smem>>
    %709 = vector.broadcast %708 : f32 to vector<64x64xf32>
    %710 = arith.mulf %7, %709 : vector<64x64xf32>
    %711 = arith.addf %707, %710 : vector<64x64xf32>
    %c3_397 = arith.constant 3 : index
    %c30_398 = arith.constant 30 : index
    %712 = memref.load %arg2[%c3_397, %c30_398] : memref<4x32xf32, #tpu.memory_space<smem>>
    %713 = vector.broadcast %712 : f32 to vector<64x64xf32>
    %714 = arith.mulf %10, %713 : vector<64x64xf32>
    %715 = arith.addf %711, %714 : vector<64x64xf32>
    %c30_399 = arith.constant 30 : index
    %716 = memref.load %arg3[%c30_399] : memref<32xf32, #tpu.memory_space<smem>>
    %717 = vector.broadcast %716 : f32 to vector<64x64xf32>
    %718 = arith.addf %715, %717 : vector<64x64xf32>
    %cst_400 = arith.constant 0.000000e+00 : f32
    %719 = vector.broadcast %cst_400 : f32 to vector<64x64xf32>
    %720 = arith.maximumf %718, %719 : vector<64x64xf32>
    %c0_401 = arith.constant 0 : index
    %c30_402 = arith.constant 30 : index
    %c0_403 = arith.constant 0 : index
    %c0_404 = arith.constant 0 : index
    %721 = vector.load %arg4[%c0_401, %c30_402, %c0_403, %c0_404] : memref<1x32x64x64xf32, #tpu.memory_space<vmem>>, vector<1x1x64x64xf32>
    %722 = vector.shape_cast %721 : vector<1x1x64x64xf32> to vector<64x64xf32>
    %723 = vector.shape_cast %720 : vector<64x64xf32> to vector<1x1x64x64xf32>
    tpu.vector_store %arg4[%c0_401, %c30_402, %c0_403, %c0_404], %723 {strides = array<i32>} : memref<1x32x64x64xf32, #tpu.memory_space<vmem>>, vector<1x1x64x64xf32>,
    %c0_405 = arith.constant 0 : index
    %c31 = arith.constant 31 : index
    %724 = memref.load %arg2[%c0_405, %c31] : memref<4x32xf32, #tpu.memory_space<smem>>
    %725 = vector.broadcast %724 : f32 to vector<64x64xf32>
    %726 = arith.mulf %1, %725 : vector<64x64xf32>
    %c1_406 = arith.constant 1 : index
    %c31_407 = arith.constant 31 : index
    %727 = memref.load %arg2[%c1_406, %c31_407] : memref<4x32xf32, #tpu.memory_space<smem>>
    %728 = vector.broadcast %727 : f32 to vector<64x64xf32>
    %729 = arith.mulf %4, %728 : vector<64x64xf32>
    %730 = arith.addf %726, %729 : vector<64x64xf32>
    %c2_408 = arith.constant 2 : index
    %c31_409 = arith.constant 31 : index
    %731 = memref.load %arg2[%c2_408, %c31_409] : memref<4x32xf32, #tpu.memory_space<smem>>
    %732 = vector.broadcast %731 : f32 to vector<64x64xf32>
    %733 = arith.mulf %7, %732 : vector<64x64xf32>
    %734 = arith.addf %730, %733 : vector<64x64xf32>
    %c3_410 = arith.constant 3 : index
    %c31_411 = arith.constant 31 : index
    %735 = memref.load %arg2[%c3_410, %c31_411] : memref<4x32xf32, #tpu.memory_space<smem>>
    %736 = vector.broadcast %735 : f32 to vector<64x64xf32>
    %737 = arith.mulf %10, %736 : vector<64x64xf32>
    %738 = arith.addf %734, %737 : vector<64x64xf32>
    %c31_412 = arith.constant 31 : index
    %739 = memref.load %arg3[%c31_412] : memref<32xf32, #tpu.memory_space<smem>>
    %740 = vector.broadcast %739 : f32 to vector<64x64xf32>
    %741 = arith.addf %738, %740 : vector<64x64xf32>
    %cst_413 = arith.constant 0.000000e+00 : f32
    %742 = vector.broadcast %cst_413 : f32 to vector<64x64xf32>
    %743 = arith.maximumf %741, %742 : vector<64x64xf32>
    %c0_414 = arith.constant 0 : index
    %c31_415 = arith.constant 31 : index
    %c0_416 = arith.constant 0 : index
    %c0_417 = arith.constant 0 : index
    %744 = vector.load %arg4[%c0_414, %c31_415, %c0_416, %c0_417] : memref<1x32x64x64xf32, #tpu.memory_space<vmem>>, vector<1x1x64x64xf32>
    %745 = vector.shape_cast %744 : vector<1x1x64x64xf32> to vector<64x64xf32>
    %746 = vector.shape_cast %743 : vector<64x64xf32> to vector<1x1x64x64xf32>
    tpu.vector_store %arg4[%c0_414, %c31_415, %c0_416, %c0_417], %746 {strides = array<i32>} : memref<1x32x64x64xf32, #tpu.memory_space<vmem>>, vector<1x1x64x64xf32>,
    return
  }
  func.func @transform_0(%arg0: i32) -> (i32, i32, i32) {
    %c0_i32 = arith.constant 0 : i32
    %c0_i32_0 = arith.constant 0 : i32
    %c0_i32_1 = arith.constant 0 : i32
    return %arg0, %c0_i32, %c0_i32_0 : i32, i32, i32
  }
  func.func @transform_1(%arg0: i32) -> (i32, i32) {
    %c0_i32 = arith.constant 0 : i32
    %c0_i32_0 = arith.constant 0 : i32
    %c0_i32_1 = arith.constant 0 : i32
    return %c0_i32, %c0_i32_0 : i32, i32
  }
  func.func @transform_2(%arg0: i32) -> i32 {
    %c0_i32 = arith.constant 0 : i32
    %c0_i32_0 = arith.constant 0 : i32
    return %c0_i32 : i32
  }
  func.func @transform_3(%arg0: i32) -> (i32, i32, i32, i32) {
    %c0_i32 = arith.constant 0 : i32
    %c0_i32_0 = arith.constant 0 : i32
    %c0_i32_1 = arith.constant 0 : i32
    %c0_i32_2 = arith.constant 0 : i32
    return %arg0, %c0_i32, %c0_i32_0, %c0_i32_1 : i32, i32, i32, i32
  }
}

module attributes {stable_mosaic.version = 11 : i64} {
  func.func @_conv_stage_kernel(%arg0: i32, %arg1: memref<1x2048x64xf32, #tpu.memory_space<vmem>>, %arg2: memref<128x64xf32, #tpu.memory_space<vmem>>, %arg3: memref<1x64xf32, #tpu.memory_space<vmem>>, %arg4: memref<1x16x32x64xf32, #tpu.memory_space<vmem>>) attributes {dimension_semantics = [#tpu.dimension_semantics<parallel>], iteration_bounds = array<i64: 2>, scalar_prefetch = 0 : i64, scratch_operands = 0 : i64, tpu.core_type = #tpu.core_type<tc>, window_params = [{transform_indices = @transform_0, window_bounds = array<i64: 1, 2048, 64>}, {pipeline_mode = #tpu.pipeline_mode<synchronous>, transform_indices = @transform_1, window_bounds = array<i64: 128, 64>}, {pipeline_mode = #tpu.pipeline_mode<synchronous>, transform_indices = @transform_2, window_bounds = array<i64: 1, 64>}, {transform_indices = @transform_3, window_bounds = array<i64: 1, 16, 32, 64>}]} {
    %c0 = arith.constant 0 : index
    %c0_0 = arith.constant 0 : index
    %c0_1 = arith.constant 0 : index
    %0 = vector.load %arg1[%c0, %c0_0, %c0_1] : memref<1x2048x64xf32, #tpu.memory_space<vmem>>, vector<1x2048x64xf32>
    %1 = vector.shape_cast %0 : vector<1x2048x64xf32> to vector<2048x64xf32>
    %2 = vector.extract_strided_slice %1 {offsets = [0, 0], sizes = [2048, 32], strides = [1, 1]} : vector<2048x64xf32> to vector<2048x32xf32>
    %3 = vector.extract_strided_slice %1 {offsets = [0, 32], sizes = [2048, 32], strides = [1, 1]} : vector<2048x64xf32> to vector<2048x32xf32>
    %4 = arith.maximumf %2, %3 : vector<2048x32xf32>
    %5 = vector.shape_cast %4 : vector<2048x32xf32> to vector<32x64x32xf32>
    %6 = vector.extract_strided_slice %5 {offsets = [0, 0, 0], sizes = [32, 32, 32], strides = [1, 1, 1]} : vector<32x64x32xf32> to vector<32x32x32xf32>
    %7 = vector.extract_strided_slice %5 {offsets = [0, 32, 0], sizes = [32, 32, 32], strides = [1, 1, 1]} : vector<32x64x32xf32> to vector<32x32x32xf32>
    %8 = arith.maximumf %6, %7 : vector<32x32x32xf32>
    %9 = vector.shape_cast %8 : vector<32x32x32xf32> to vector<1024x32xf32>
    %10 = vector.extract_strided_slice %9 {offsets = [32, 0], sizes = [992, 32], strides = [1, 1]} : vector<1024x32xf32> to vector<992x32xf32>
    %11 = vector.extract_strided_slice %9 {offsets = [0, 0], sizes = [32, 32], strides = [1, 1]} : vector<1024x32xf32> to vector<32x32xf32>
    %12 = tpu.concatenate %10, %11 in 0 : vector<992x32xf32>, vector<32x32xf32> -> vector<1024x32xf32>
    %13 = tpu.concatenate %9, %12 in 1 : vector<1024x32xf32>, vector<1024x32xf32> -> vector<1024x64xf32>
    %14 = vector.extract_strided_slice %13 {offsets = [1, 0], sizes = [1023, 64], strides = [1, 1]} : vector<1024x64xf32> to vector<1023x64xf32>
    %15 = vector.extract_strided_slice %13 {offsets = [0, 0], sizes = [1, 64], strides = [1, 1]} : vector<1024x64xf32> to vector<1x64xf32>
    %16 = tpu.concatenate %14, %15 in 0 : vector<1023x64xf32>, vector<1x64xf32> -> vector<1024x64xf32>
    %17 = tpu.concatenate %13, %16 in 1 : vector<1024x64xf32>, vector<1024x64xf32> -> vector<1024x128xf32>
    %c0_2 = arith.constant 0 : index
    %c0_3 = arith.constant 0 : index
    %18 = vector.load %arg2[%c0_2, %c0_3] : memref<128x64xf32, #tpu.memory_space<vmem>>, vector<128x64xf32>
    %cst = arith.constant dense<0.000000e+00> : vector<1024x64xf32>
    %19 = tpu.matmul %17, %18, %cst {dimension_numbers = #tpu.dot_dimension_numbers<[1], [0], [0], [1], [0, 0, 1, 1], [], []>} : vector<1024x128xf32>, vector<128x64xf32>, vector<1024x64xf32> -> vector<1024x64xf32>
    %c0_4 = arith.constant 0 : index
    %c0_5 = arith.constant 0 : index
    %20 = vector.load %arg3[%c0_4, %c0_5] : memref<1x64xf32, #tpu.memory_space<vmem>>, vector<1x64xf32>
    %21 = vector.broadcast %20 : vector<1x64xf32> to vector<1024x64xf32>
    %22 = arith.addf %19, %21 : vector<1024x64xf32>
    %cst_6 = arith.constant 0.000000e+00 : f32
    %23 = vector.broadcast %cst_6 : f32 to vector<1024x64xf32>
    %24 = arith.maximumf %22, %23 : vector<1024x64xf32>
    %25 = vector.shape_cast %24 : vector<1024x64xf32> to vector<16x64x64xf32>
    %26 = vector.extract_strided_slice %25 {offsets = [0, 0, 0], sizes = [16, 32, 64], strides = [1, 1, 1]} : vector<16x64x64xf32> to vector<16x32x64xf32>
    %27 = vector.extract_strided_slice %25 {offsets = [0, 32, 0], sizes = [16, 32, 64], strides = [1, 1, 1]} : vector<16x64x64xf32> to vector<16x32x64xf32>
    %28 = arith.maximumf %26, %27 : vector<16x32x64xf32>
    %c0_7 = arith.constant 0 : index
    %c0_8 = arith.constant 0 : index
    %c0_9 = arith.constant 0 : index
    %c0_10 = arith.constant 0 : index
    %29 = vector.load %arg4[%c0_7, %c0_8, %c0_9, %c0_10] : memref<1x16x32x64xf32, #tpu.memory_space<vmem>>, vector<1x16x32x64xf32>
    %30 = vector.shape_cast %29 : vector<1x16x32x64xf32> to vector<16x32x64xf32>
    %31 = vector.shape_cast %28 : vector<16x32x64xf32> to vector<1x16x32x64xf32>
    tpu.vector_store %arg4[%c0_7, %c0_8, %c0_9, %c0_10], %31 {strides = array<i32>} : memref<1x16x32x64xf32, #tpu.memory_space<vmem>>, vector<1x16x32x64xf32>,
    return
  }
  func.func @transform_0(%arg0: i32) -> (i32, i32, i32) {
    %c0_i32 = arith.constant 0 : i32
    %c0_i32_0 = arith.constant 0 : i32
    %c0_i32_1 = arith.constant 0 : i32
    return %arg0, %c0_i32, %c0_i32_0 : i32, i32, i32
  }
  func.func @transform_1(%arg0: i32) -> (i32, i32) {
    %c0_i32 = arith.constant 0 : i32
    %c0_i32_0 = arith.constant 0 : i32
    %c0_i32_1 = arith.constant 0 : i32
    return %c0_i32, %c0_i32_0 : i32, i32
  }
  func.func @transform_2(%arg0: i32) -> (i32, i32) {
    %c0_i32 = arith.constant 0 : i32
    %c0_i32_0 = arith.constant 0 : i32
    %c0_i32_1 = arith.constant 0 : i32
    return %c0_i32, %c0_i32_0 : i32, i32
  }
  func.func @transform_3(%arg0: i32) -> (i32, i32, i32, i32) {
    %c0_i32 = arith.constant 0 : i32
    %c0_i32_0 = arith.constant 0 : i32
    %c0_i32_1 = arith.constant 0 : i32
    %c0_i32_2 = arith.constant 0 : i32
    return %arg0, %c0_i32, %c0_i32_0, %c0_i32_1 : i32, i32, i32, i32
  }
}

module attributes {stable_mosaic.version = 11 : i64} {
  func.func @_conv_stage_kernel(%arg0: i32, %arg1: memref<1x256x128xf32, #tpu.memory_space<vmem>>, %arg2: memref<256x16xf32, #tpu.memory_space<vmem>>, %arg3: memref<1x16xf32, #tpu.memory_space<vmem>>, %arg4: memref<1x8x16x16xf32, #tpu.memory_space<vmem>>) attributes {dimension_semantics = [#tpu.dimension_semantics<parallel>], iteration_bounds = array<i64: 2>, scalar_prefetch = 0 : i64, scratch_operands = 0 : i64, tpu.core_type = #tpu.core_type<tc>, window_params = [{transform_indices = @transform_0, window_bounds = array<i64: 1, 256, 128>}, {pipeline_mode = #tpu.pipeline_mode<synchronous>, transform_indices = @transform_1, window_bounds = array<i64: 256, 16>}, {pipeline_mode = #tpu.pipeline_mode<synchronous>, transform_indices = @transform_2, window_bounds = array<i64: 1, 16>}, {transform_indices = @transform_3, window_bounds = array<i64: 1, 8, 16, 16>}]} {
    %c0 = arith.constant 0 : index
    %c0_0 = arith.constant 0 : index
    %c0_1 = arith.constant 0 : index
    %0 = vector.load %arg1[%c0, %c0_0, %c0_1] : memref<1x256x128xf32, #tpu.memory_space<vmem>>, vector<1x256x128xf32>
    %1 = vector.shape_cast %0 : vector<1x256x128xf32> to vector<256x128xf32>
    %2 = vector.extract_strided_slice %1 {offsets = [0, 0], sizes = [256, 64], strides = [1, 1]} : vector<256x128xf32> to vector<256x64xf32>
    %3 = vector.extract_strided_slice %1 {offsets = [0, 64], sizes = [256, 64], strides = [1, 1]} : vector<256x128xf32> to vector<256x64xf32>
    %4 = arith.maximumf %2, %3 : vector<256x64xf32>
    %5 = vector.extract_strided_slice %4 {offsets = [16, 0], sizes = [240, 64], strides = [1, 1]} : vector<256x64xf32> to vector<240x64xf32>
    %6 = vector.extract_strided_slice %4 {offsets = [0, 0], sizes = [16, 64], strides = [1, 1]} : vector<256x64xf32> to vector<16x64xf32>
    %7 = tpu.concatenate %5, %6 in 0 : vector<240x64xf32>, vector<16x64xf32> -> vector<256x64xf32>
    %8 = tpu.concatenate %4, %7 in 1 : vector<256x64xf32>, vector<256x64xf32> -> vector<256x128xf32>
    %9 = vector.extract_strided_slice %8 {offsets = [1, 0], sizes = [255, 128], strides = [1, 1]} : vector<256x128xf32> to vector<255x128xf32>
    %10 = vector.extract_strided_slice %8 {offsets = [0, 0], sizes = [1, 128], strides = [1, 1]} : vector<256x128xf32> to vector<1x128xf32>
    %11 = tpu.concatenate %9, %10 in 0 : vector<255x128xf32>, vector<1x128xf32> -> vector<256x128xf32>
    %12 = tpu.concatenate %8, %11 in 1 : vector<256x128xf32>, vector<256x128xf32> -> vector<256x256xf32>
    %c0_2 = arith.constant 0 : index
    %c0_3 = arith.constant 0 : index
    %13 = vector.load %arg2[%c0_2, %c0_3] : memref<256x16xf32, #tpu.memory_space<vmem>>, vector<256x16xf32>
    %cst = arith.constant dense<0.000000e+00> : vector<256x16xf32>
    %14 = tpu.matmul %12, %13, %cst {dimension_numbers = #tpu.dot_dimension_numbers<[1], [0], [0], [1], [0, 0, 1, 1], [], []>} : vector<256x256xf32>, vector<256x16xf32>, vector<256x16xf32> -> vector<256x16xf32>
    %c0_4 = arith.constant 0 : index
    %c0_5 = arith.constant 0 : index
    %15 = vector.load %arg3[%c0_4, %c0_5] : memref<1x16xf32, #tpu.memory_space<vmem>>, vector<1x16xf32>
    %16 = vector.broadcast %15 : vector<1x16xf32> to vector<256x16xf32>
    %17 = arith.addf %14, %16 : vector<256x16xf32>
    %cst_6 = arith.constant 0.000000e+00 : f32
    %18 = vector.broadcast %cst_6 : f32 to vector<256x16xf32>
    %19 = arith.maximumf %17, %18 : vector<256x16xf32>
    %20 = vector.shape_cast %19 : vector<256x16xf32> to vector<8x32x16xf32>
    %21 = vector.extract_strided_slice %20 {offsets = [0, 0, 0], sizes = [8, 16, 16], strides = [1, 1, 1]} : vector<8x32x16xf32> to vector<8x16x16xf32>
    %22 = vector.extract_strided_slice %20 {offsets = [0, 16, 0], sizes = [8, 16, 16], strides = [1, 1, 1]} : vector<8x32x16xf32> to vector<8x16x16xf32>
    %23 = arith.maximumf %21, %22 : vector<8x16x16xf32>
    %c0_7 = arith.constant 0 : index
    %c0_8 = arith.constant 0 : index
    %c0_9 = arith.constant 0 : index
    %c0_10 = arith.constant 0 : index
    %24 = vector.load %arg4[%c0_7, %c0_8, %c0_9, %c0_10] : memref<1x8x16x16xf32, #tpu.memory_space<vmem>>, vector<1x8x16x16xf32>
    %25 = vector.shape_cast %24 : vector<1x8x16x16xf32> to vector<8x16x16xf32>
    %26 = vector.shape_cast %23 : vector<8x16x16xf32> to vector<1x8x16x16xf32>
    tpu.vector_store %arg4[%c0_7, %c0_8, %c0_9, %c0_10], %26 {strides = array<i32>} : memref<1x8x16x16xf32, #tpu.memory_space<vmem>>, vector<1x8x16x16xf32>,
    return
  }
  func.func @transform_0(%arg0: i32) -> (i32, i32, i32) {
    %c0_i32 = arith.constant 0 : i32
    %c0_i32_0 = arith.constant 0 : i32
    %c0_i32_1 = arith.constant 0 : i32
    return %arg0, %c0_i32, %c0_i32_0 : i32, i32, i32
  }
  func.func @transform_1(%arg0: i32) -> (i32, i32) {
    %c0_i32 = arith.constant 0 : i32
    %c0_i32_0 = arith.constant 0 : i32
    %c0_i32_1 = arith.constant 0 : i32
    return %c0_i32, %c0_i32_0 : i32, i32
  }
  func.func @transform_2(%arg0: i32) -> (i32, i32) {
    %c0_i32 = arith.constant 0 : i32
    %c0_i32_0 = arith.constant 0 : i32
    %c0_i32_1 = arith.constant 0 : i32
    return %c0_i32, %c0_i32_0 : i32, i32
  }
  func.func @transform_3(%arg0: i32) -> (i32, i32, i32, i32) {
    %c0_i32 = arith.constant 0 : i32
    %c0_i32_0 = arith.constant 0 : i32
    %c0_i32_1 = arith.constant 0 : i32
    %c0_i32_2 = arith.constant 0 : i32
    return %arg0, %c0_i32, %c0_i32_0, %c0_i32_1 : i32, i32, i32, i32
  }
}

module attributes {stable_mosaic.version = 11 : i64} {
  func.func @_fc_kernel(%arg0: i32, %arg1: memref<2x1024xf32, #tpu.memory_space<vmem>>, %arg2: memref<1024x128xf32, #tpu.memory_space<vmem>>, %arg3: memref<1x128xf32, #tpu.memory_space<vmem>>, %arg4: memref<128x128xf32, #tpu.memory_space<vmem>>, %arg5: memref<1x128xf32, #tpu.memory_space<vmem>>, %arg6: memref<2x128xf32, #tpu.memory_space<vmem>>) attributes {dimension_semantics = [#tpu.dimension_semantics<arbitrary>], iteration_bounds = array<i64: 1>, scalar_prefetch = 0 : i64, scratch_operands = 0 : i64, tpu.core_type = #tpu.core_type<tc>, window_params = [{pipeline_mode = #tpu.pipeline_mode<synchronous>, transform_indices = @transform_0, window_bounds = array<i64: 2, 1024>}, {pipeline_mode = #tpu.pipeline_mode<synchronous>, transform_indices = @transform_1, window_bounds = array<i64: 1024, 128>}, {pipeline_mode = #tpu.pipeline_mode<synchronous>, transform_indices = @transform_2, window_bounds = array<i64: 1, 128>}, {pipeline_mode = #tpu.pipeline_mode<synchronous>, transform_indices = @transform_3, window_bounds = array<i64: 128, 128>}, {pipeline_mode = #tpu.pipeline_mode<synchronous>, transform_indices = @transform_4, window_bounds = array<i64: 1, 128>}, {pipeline_mode = #tpu.pipeline_mode<synchronous>, transform_indices = @transform_5, window_bounds = array<i64: 2, 128>}]} {
    %c0 = arith.constant 0 : index
    %c0_0 = arith.constant 0 : index
    %0 = vector.load %arg1[%c0, %c0_0] : memref<2x1024xf32, #tpu.memory_space<vmem>>, vector<2x1024xf32>
    %c0_1 = arith.constant 0 : index
    %c0_2 = arith.constant 0 : index
    %1 = vector.load %arg2[%c0_1, %c0_2] : memref<1024x128xf32, #tpu.memory_space<vmem>>, vector<1024x128xf32>
    %cst = arith.constant dense<0.000000e+00> : vector<2x128xf32>
    %2 = tpu.matmul %0, %1, %cst {dimension_numbers = #tpu.dot_dimension_numbers<[1], [0], [0], [1], [0, 0, 1, 1], [], []>} : vector<2x1024xf32>, vector<1024x128xf32>, vector<2x128xf32> -> vector<2x128xf32>
    %c0_3 = arith.constant 0 : index
    %c0_4 = arith.constant 0 : index
    %3 = vector.load %arg3[%c0_3, %c0_4] : memref<1x128xf32, #tpu.memory_space<vmem>>, vector<1x128xf32>
    %4 = vector.broadcast %3 : vector<1x128xf32> to vector<2x128xf32>
    %5 = arith.addf %2, %4 : vector<2x128xf32>
    %cst_5 = arith.constant 0.000000e+00 : f32
    %6 = vector.broadcast %cst_5 : f32 to vector<2x128xf32>
    %7 = arith.maximumf %5, %6 : vector<2x128xf32>
    %c0_6 = arith.constant 0 : index
    %c0_7 = arith.constant 0 : index
    %8 = vector.load %arg4[%c0_6, %c0_7] : memref<128x128xf32, #tpu.memory_space<vmem>>, vector<128x128xf32>
    %cst_8 = arith.constant dense<0.000000e+00> : vector<2x128xf32>
    %9 = tpu.matmul %7, %8, %cst_8 {dimension_numbers = #tpu.dot_dimension_numbers<[1], [0], [0], [1], [0, 0, 1, 1], [], []>} : vector<2x128xf32>, vector<128x128xf32>, vector<2x128xf32> -> vector<2x128xf32>
    %c0_9 = arith.constant 0 : index
    %c0_10 = arith.constant 0 : index
    %10 = vector.load %arg5[%c0_9, %c0_10] : memref<1x128xf32, #tpu.memory_space<vmem>>, vector<1x128xf32>
    %11 = vector.broadcast %10 : vector<1x128xf32> to vector<2x128xf32>
    %12 = arith.addf %9, %11 : vector<2x128xf32>
    %c0_11 = arith.constant 0 : index
    %c0_12 = arith.constant 0 : index
    %13 = vector.load %arg6[%c0_11, %c0_12] : memref<2x128xf32, #tpu.memory_space<vmem>>, vector<2x128xf32>
    tpu.vector_store %arg6[%c0_11, %c0_12], %12 {strides = array<i32>} : memref<2x128xf32, #tpu.memory_space<vmem>>, vector<2x128xf32>,
    return
  }
  func.func @transform_0(%arg0: i32) -> (i32, i32) {
    %c0_i32 = arith.constant 0 : i32
    %c0_i32_0 = arith.constant 0 : i32
    %c0_i32_1 = arith.constant 0 : i32
    return %c0_i32, %c0_i32_0 : i32, i32
  }
  func.func @transform_1(%arg0: i32) -> (i32, i32) {
    %c0_i32 = arith.constant 0 : i32
    %c0_i32_0 = arith.constant 0 : i32
    %c0_i32_1 = arith.constant 0 : i32
    return %c0_i32, %c0_i32_0 : i32, i32
  }
  func.func @transform_2(%arg0: i32) -> (i32, i32) {
    %c0_i32 = arith.constant 0 : i32
    %c0_i32_0 = arith.constant 0 : i32
    %c0_i32_1 = arith.constant 0 : i32
    return %c0_i32, %c0_i32_0 : i32, i32
  }
  func.func @transform_3(%arg0: i32) -> (i32, i32) {
    %c0_i32 = arith.constant 0 : i32
    %c0_i32_0 = arith.constant 0 : i32
    %c0_i32_1 = arith.constant 0 : i32
    return %c0_i32, %c0_i32_0 : i32, i32
  }
  func.func @transform_4(%arg0: i32) -> (i32, i32) {
    %c0_i32 = arith.constant 0 : i32
    %c0_i32_0 = arith.constant 0 : i32
    %c0_i32_1 = arith.constant 0 : i32
    return %c0_i32, %c0_i32_0 : i32, i32
  }
  func.func @transform_5(%arg0: i32) -> (i32, i32) {
    %c0_i32 = arith.constant 0 : i32
    %c0_i32_0 = arith.constant 0 : i32
    %c0_i32_1 = arith.constant 0 : i32
    return %c0_i32, %c0_i32_0 : i32, i32
  }
}

</mosaic_0001>

<llo_original>
// kernel: net_forward.6
$region0: #{net_forward.6}
  #allocation0 [shape = 'u32[]', space=smem, size = 0x4, offset = 0x4, fixed_abs, tag = 'smem constant byte address 0x4 - core index']
  #allocation1 [shape = 'u32[144,128]{1,0:T(1,128)}', space=vmem, size = 0x12000, scoped, tag = 'internal scratch']
  %s0 = inlined_call_operand.vmem [shape: f32[2,256,128], index: 0, kind: input, shape index: {}]
  %s1 = inlined_call_operand.vmem [shape: f32[256,16], index: 1, kind: input, shape index: {}]
  %s2 = inlined_call_operand.vmem [shape: f32[1,16], index: 2, kind: input, shape index: {}]
  %s3 = inlined_call_operand.vmem [shape: f32[2,8,16,16], index: 3, kind: output, shape index: {}]
  %s4 = sld [smem:[#allocation0]]
  $region45: #{net_forward.6} parent=0
    _
  %s6 = ssub.s32 1, %s4
  %s7 = scalar_select 0, %s6, %s4
  loop: start=0, step=1, limit=4
  $region2: #{net_forward.6} parent=0 // loop_pre_header
    _
  $region3: #{net_forward.6} parent=0 // loop_header
    %s9 = sphi 0, %s13
    %p10 = scmp.ge.s32.totalorder %s9, 4
    %s19 = sphi 0, %s21
    %s22 = sphi 0, %s19
    %s23 = sphi 0, %s22
    %s39 = sphi 0, %s23
    %s43 = sphi 0, %s43
    %s45 = sphi 0, %s43
    %s46 = sphi 0, %s45
    %s60 = sphi 0, %s46
    %s64 = sphi 0, %s64
    %s66 = sphi 0, %s64
    %s67 = sphi 0, %s66
    %s81 = sphi 0, %s67
    %s87 = sphi 0, %s89
    %s90 = sphi 0, %s87
    %s91 = sphi 0, %s90
    %s107 = sphi 0, %s91
  $region4: #{net_forward.6} parent=0 // loop_header_branch
    %12 = sbr.rel (%p10) target = $region8
  $region5: #{net_forward.6} parent=0 // loop_body
    %s14 = ssub.s32 %s9, 1
    %s15 = ssub.s32 %s9, 2
    %s16 = sadd.s32 %s9, 1
    %s17 = ssub.s32 %s9, %s16
    %p18 = scmp.eq.s32.totalorder %s17, 0
    %s20 = sadd.s32 %s19, 1
    %s21 = scalar_select %p18, %s19, %s20
    %p24 = pneg %p18
    %p25 = scmp.eq.s32.totalorder %s9, 1
    %p26 = por %p24, %p25
    %p27 = scmp.ne.s32.totalorder %s19, %s22
    %p28 = scmp.eq.s32.totalorder %s9, 0
    %p29 = por %p27, %p28
    %p30 = scmp.ne.s32.totalorder %s19, %s22
    %p31 = scmp.eq.s32.totalorder %s14, 1
    %p32 = por %p30, %p31
    %p33 = scmp.ne.s32.totalorder %s22, %s23
    %p34 = scmp.eq.s32.totalorder %s14, 0
    %p35 = por %p33, %p34
    %p36 = scmp.ne.s32.totalorder %s22, %s23
    %p37 = scmp.eq.s32.totalorder %s15, 1
    %p38 = por %p36, %p37
    %p40 = scmp.ne.s32.totalorder %s23, %s39
    %p41 = scmp.eq.s32.totalorder %s15, 0
    %p42 = por %p40, %p41
    %s44 = sadd.s32 %s43, 1
    %p47 = scmp.eq.s32.totalorder %s9, 1
    %p48 = scmp.ne.s32.totalorder %s43, %s45
    %p49 = scmp.eq.s32.totalorder %s9, 0
    %p50 = por %p48, %p49
    %p51 = scmp.ne.s32.totalorder %s43, %s45
    %p52 = scmp.eq.s32.totalorder %s14, 1
    %p53 = por %p51, %p52
    %p54 = scmp.ne.s32.totalorder %s45, %s46
    %p55 = scmp.eq.s32.totalorder %s14, 0
    %p56 = por %p54, %p55
    %p57 = scmp.ne.s32.totalorder %s45, %s46
    %p58 = scmp.eq.s32.totalorder %s15, 1
    %p59 = por %p57, %p58
    %p61 = scmp.ne.s32.totalorder %s46, %s60
    %p62 = scmp.eq.s32.totalorder %s15, 0
    %p63 = por %p61, %p62
    %s65 = sadd.s32 %s64, 1
    %p68 = scmp.eq.s32.totalorder %s9, 1
    %p69 = scmp.ne.s32.totalorder %s64, %s66
    %p70 = scmp.eq.s32.totalorder %s9, 0
    %p71 = por %p69, %p70
    %p72 = scmp.ne.s32.totalorder %s64, %s66
    %p73 = scmp.eq.s32.totalorder %s14, 1
    %p74 = por %p72, %p73
    %p75 = scmp.ne.s32.totalorder %s66, %s67
    %p76 = scmp.eq.s32.totalorder %s14, 0
    %p77 = por %p75, %p76
    %p78 = scmp.ne.s32.totalorder %s66, %s67
    %p79 = scmp.eq.s32.totalorder %s15, 1
    %p80 = por %p78, %p79
    %p82 = scmp.ne.s32.totalorder %s67, %s81
    %p83 = scmp.eq.s32.totalorder %s15, 0
    %p84 = por %p82, %p83
    %s85 = ssub.s32 %s9, %s16
    %p86 = scmp.eq.s32.totalorder %s85, 0
    %s88 = sadd.s32 %s87, 1
    %s89 = scalar_select %p86, %s87, %s88
    %p92 = pneg %p86
    %p93 = scmp.eq.s32.totalorder %s9, 1
    %p94 = por %p92, %p93
    %p95 = scmp.ne.s32.totalorder %s87, %s90
    %p96 = scmp.eq.s32.totalorder %s9, 0
    %p97 = por %p95, %p96
    %p98 = scmp.ne.s32.totalorder %s87, %s90
    %p99 = scmp.eq.s32.totalorder %s14, 1
    %p100 = por %p98, %p99
    %p101 = scmp.ne.s32.totalorder %s90, %s91
    %p102 = scmp.eq.s32.totalorder %s14, 0
    %p103 = por %p101, %p102
    %p104 = scmp.ne.s32.totalorder %s90, %s91
    %p105 = scmp.eq.s32.totalorder %s15, 1
    %p106 = por %p104, %p105
    %p108 = scmp.ne.s32.totalorder %s91, %s107
    %p109 = scmp.eq.s32.totalorder %s15, 0
    %p110 = por %p108, %p109
    %p111 = scmp.le.s32.totalorder 1, %s9
    %p112 = scmp.lt.s32.totalorder %s9, 3
    %p113 = pnand %p111, %p112
    %p114 = pneg %p113
    // Predicated region
    $region9: #{net_forward.6} parent=5 // pred_check
      _
    $region10: #{net_forward.6} parent=5 // pred_check_branch
      %116 = sbr.rel (%p113) target = $region12
    $region11: #{net_forward.6} parent=5 // pred_region
      %s117 = ssub.s32 %s9, 1
      // Predicated region
      $region13: #{net_forward.6} parent=11 // pred_check
        %p118 = pneg %p56
      $region14: #{net_forward.6} parent=11 // pred_check_branch
        %120 = sbr.rel (%p118) target = $region16
      $region15: #{net_forward.6} parent=11 // pred_region
        _
      $region16: #{net_forward.6} parent=11 // pred_fallthru
        _
      // Predicated region
      $region17: #{net_forward.6} parent=11 // pred_check
        %p121 = pneg %p77
      $region18: #{net_forward.6} parent=11 // pred_check_branch
        %123 = sbr.rel (%p121) target = $region20
      $region19: #{net_forward.6} parent=11 // pred_region
        _
      $region20: #{net_forward.6} parent=11 // pred_fallthru
        _
    $region12: #{net_forward.6} parent=5 // pred_fallthru
      _
    %p124 = scmp.lt.s32.totalorder %s9, 2
    // Predicated region
    $region21: #{net_forward.6} parent=5 // pred_check
      %p125 = pneg %p124
    $region22: #{net_forward.6} parent=5 // pred_check_branch
      %127 = sbr.rel (%p125) target = $region24
    $region23: #{net_forward.6} parent=5 // pred_region
      // Predicated region
      $region25: #{net_forward.6} parent=23 // pred_check
        %p128 = pneg %p29
      $region26: #{net_forward.6} parent=23 // pred_check_branch
        %130 = sbr.rel (%p128) target = $region28
      $region27: #{net_forward.6} parent=23 // pred_region
        %p131 = scmp.lt.s32.totalorder %s9, 1
        %s132 = scalar_select %p131, %s9, 1
        %s133 = smul.addr %s132, 32
        %s134 = smul.addr %s133, 8
        %s135 = scalar_lea.vmem %s0, %s134
      $region28: #{net_forward.6} parent=23 // pred_fallthru
        _
    $region24: #{net_forward.6} parent=5 // pred_fallthru
      _
    %p136 = scmp.le.s32.totalorder 1, %s9
    %p137 = scmp.lt.s32.totalorder %s9, 3
    %p138 = pnand %p136, %p137
    %p139 = pneg %p138
    // Predicated region
    $region29: #{net_forward.6} parent=5 // pred_check
      _
    $region30: #{net_forward.6} parent=5 // pred_check_branch
      %141 = sbr.rel (%p138) target = $region32
    $region31: #{net_forward.6} parent=5 // pred_region
      %s142 = ssub.s32 %s9, 1
      %p143 = scmp.lt.s32.totalorder %s14, 1
      %s144 = scalar_select %p143, %s14, 1
      %s145 = smul.addr %s144, 32
      %s146 = smul.addr %s145, 8
      %s147 = scalar_lea.vmem %s0, %s146
      %p148 = pneg %p35
      %p149 = pneg %p32
      %p150 = pneg %p56
      %p151 = pneg %p53
      %p152 = pneg %p77
      %p153 = pneg %p74
      %p154 = pneg %p103
      %p155 = pneg %p100
      %p156 = scmp.lt.s32.totalorder %s14, 1
      %s157 = scalar_select %p156, %s14, 1
      %s158 = smul.addr %s157, 16
      %s159 = smul.addr %s158, 8
      %s160 = scalar_lea.vmem %s3, %s159
      %p161 = scmp.lt.s32.totalorder %s14, 1
      %s162 = scalar_select %p161, %s14, 1
      %s163 = smul.addr %s162, 32
      %s164 = smul.addr %s163, 8
      %s165 = scalar_lea.vmem %s0, %s164
      %p166 = scmp.lt.s32.totalorder %s14, 1
      %s167 = scalar_select %p166, %s14, 1
      %s168 = smul.addr %s167, 16
      %s169 = smul.addr %s168, 8
      %s170 = scalar_lea.vmem %s3, %s169
      %v171 = vld [vmem:[%s165] sm:$0xff]
      %v172 = vld [vmem:[%s165 + $0x8] sm:$0xff]
      %v173 = vld [vmem:[%s165 + $0x10] sm:$0xff]
      %v174 = vld [vmem:[%s165 + $0x18] sm:$0xff]
      %v175 = vld [vmem:[%s165 + $0x20] sm:$0xff]
      %v176 = vld [vmem:[%s165 + $0x28] sm:$0xff]
      %v177 = vld [vmem:[%s165 + $0x30] sm:$0xff]
      %v178 = vld [vmem:[%s165 + $0x38] sm:$0xff]
      %v179 = vld [vmem:[%s165 + $0x40] sm:$0xff]
      %v180 = vld [vmem:[%s165 + $0x48] sm:$0xff]
      %v181 = vld [vmem:[%s165 + $0x50] sm:$0xff]
      %v182 = vld [vmem:[%s165 + $0x58] sm:$0xff]
      %v183 = vld [vmem:[%s165 + $0x60] sm:$0xff]
      %v184 = vld [vmem:[%s165 + $0x68] sm:$0xff]
      %v185 = vld [vmem:[%s165 + $0x70] sm:$0xff]
      %v186 = vld [vmem:[%s165 + $0x78] sm:$0xff]
      %v187 = vld [vmem:[%s165 + $0x80] sm:$0xff]
      %v188 = vld [vmem:[%s165 + $0x88] sm:$0xff]
      %v189 = vld [vmem:[%s165 + $0x90] sm:$0xff]
      %v190 = vld [vmem:[%s165 + $0x98] sm:$0xff]
      %v191 = vld [vmem:[%s165 + $0xa0] sm:$0xff]
      %v192 = vld [vmem:[%s165 + $0xa8] sm:$0xff]
      %v193 = vld [vmem:[%s165 + $0xb0] sm:$0xff]
      %v194 = vld [vmem:[%s165 + $0xb8] sm:$0xff]
      %v195 = vld [vmem:[%s165 + $0xc0] sm:$0xff]
      %v196 = vld [vmem:[%s165 + $0xc8] sm:$0xff]
      %v197 = vld [vmem:[%s165 + $0xd0] sm:$0xff]
      %v198 = vld [vmem:[%s165 + $0xd8] sm:$0xff]
      %v199 = vld [vmem:[%s165 + $0xe0] sm:$0xff]
      %v200 = vld [vmem:[%s165 + $0xe8] sm:$0xff]
      %v201 = vld [vmem:[%s165 + $0xf0] sm:$0xff]
      %v202 = vld [vmem:[%s165 + $0xf8] sm:$0xff]
      %235 = vrot.lane.b32.xlu0 %v171, 64
      %v236 = vpop.permute.xlu0 %235
      %237 = vrot.lane.b32.xlu0 %v172, 64
      %v238 = vpop.permute.xlu0 %237
      %239 = vrot.lane.b32.xlu0 %v173, 64
      %v240 = vpop.permute.xlu0 %239
      %241 = vrot.lane.b32.xlu0 %v174, 64
      %v242 = vpop.permute.xlu0 %241
      %243 = vrot.lane.b32.xlu0 %v175, 64
      %v244 = vpop.permute.xlu0 %243
      %245 = vrot.lane.b32.xlu0 %v176, 64
      %v246 = vpop.permute.xlu0 %245
      %247 = vrot.lane.b32.xlu0 %v177, 64
      %v248 = vpop.permute.xlu0 %247
      %249 = vrot.lane.b32.xlu0 %v178, 64
      %v250 = vpop.permute.xlu0 %249
      %251 = vrot.lane.b32.xlu0 %v179, 64
      %v252 = vpop.permute.xlu0 %251
      %253 = vrot.lane.b32.xlu0 %v180, 64
      %v254 = vpop.permute.xlu0 %253
      %255 = vrot.lane.b32.xlu0 %v181, 64
      %v256 = vpop.permute.xlu0 %255
      %257 = vrot.lane.b32.xlu0 %v182, 64
      %v258 = vpop.permute.xlu0 %257
      %259 = vrot.lane.b32.xlu0 %v183, 64
      %v260 = vpop.permute.xlu0 %259
      %261 = vrot.lane.b32.xlu0 %v184, 64
      %v262 = vpop.permute.xlu0 %261
      %263 = vrot.lane.b32.xlu0 %v185, 64
      %v264 = vpop.permute.xlu0 %263
      %265 = vrot.lane.b32.xlu0 %v186, 64
      %v266 = vpop.permute.xlu0 %265
      %267 = vrot.lane.b32.xlu0 %v187, 64
      %v268 = vpop.permute.xlu0 %267
      %269 = vrot.lane.b32.xlu0 %v188, 64
      %v270 = vpop.permute.xlu0 %269
      %271 = vrot.lane.b32.xlu0 %v189, 64
      %v272 = vpop.permute.xlu0 %271
      %273 = vrot.lane.b32.xlu0 %v190, 64
      %v274 = vpop.permute.xlu0 %273
      %275 = vrot.lane.b32.xlu0 %v191, 64
      %v276 = vpop.permute.xlu0 %275
      %277 = vrot.lane.b32.xlu0 %v192, 64
      %v278 = vpop.permute.xlu0 %277
      %279 = vrot.lane.b32.xlu0 %v193, 64
      %v280 = vpop.permute.xlu0 %279
      %281 = vrot.lane.b32.xlu0 %v194, 64
      %v282 = vpop.permute.xlu0 %281
      %283 = vrot.lane.b32.xlu0 %v195, 64
      %v284 = vpop.permute.xlu0 %283
      %285 = vrot.lane.b32.xlu0 %v196, 64
      %v286 = vpop.permute.xlu0 %285
      %287 = vrot.lane.b32.xlu0 %v197, 64
      %v288 = vpop.permute.xlu0 %287
      %289 = vrot.lane.b32.xlu0 %v198, 64
      %v290 = vpop.permute.xlu0 %289
      %291 = vrot.lane.b32.xlu0 %v199, 64
      %v292 = vpop.permute.xlu0 %291
      %293 = vrot.lane.b32.xlu0 %v200, 64
      %v294 = vpop.permute.xlu0 %293
      %295 = vrot.lane.b32.xlu0 %v201, 64
      %v296 = vpop.permute.xlu0 %295
      %297 = vrot.lane.b32.xlu0 %v202, 64
      %v298 = vpop.permute.xlu0 %297
      %v331 = vmax.f32 %v171, %v236
      %v332 = vmax.f32 %v172, %v238
      %v333 = vmax.f32 %v173, %v240
      %v334 = vmax.f32 %v174, %v242
      %v335 = vmax.f32 %v175, %v244
      %v336 = vmax.f32 %v176, %v246
      %v337 = vmax.f32 %v177, %v248
      %v338 = vmax.f32 %v178, %v250
      %v339 = vmax.f32 %v179, %v252
      %v340 = vmax.f32 %v180, %v254
      %v341 = vmax.f32 %v181, %v256
      %v342 = vmax.f32 %v182, %v258
      %v343 = vmax.f32 %v183, %v260
      %v344 = vmax.f32 %v184, %v262
      %v345 = vmax.f32 %v185, %v264
      %v346 = vmax.f32 %v186, %v266
      %v347 = vmax.f32 %v187, %v268
      %v348 = vmax.f32 %v188, %v270
      %v349 = vmax.f32 %v189, %v272
      %v350 = vmax.f32 %v190, %v274
      %v351 = vmax.f32 %v191, %v276
      %v352 = vmax.f32 %v192, %v278
      %v353 = vmax.f32 %v193, %v280
      %v354 = vmax.f32 %v194, %v282
      %v355 = vmax.f32 %v195, %v284
      %v356 = vmax.f32 %v196, %v286
      %v357 = vmax.f32 %v197, %v288
      %v358 = vmax.f32 %v198, %v290
      %v359 = vmax.f32 %v199, %v292
      %v360 = vmax.f32 %v200, %v294
      %v361 = vmax.f32 %v201, %v296
      %v362 = vmax.f32 %v202, %v298
      %395 = vrot.lane.b32.xlu0 %v333, 64
      %v396 = vpop.permute.xlu0 %395
      %397 = vrot.lane.b32.xlu0 %v334, 64
      %v398 = vpop.permute.xlu0 %397
      %399 = vrot.lane.b32.xlu0 %v335, 64
      %v400 = vpop.permute.xlu0 %399
      %401 = vrot.lane.b32.xlu0 %v336, 64
      %v402 = vpop.permute.xlu0 %401
      %403 = vrot.lane.b32.xlu0 %v337, 64
      %v404 = vpop.permute.xlu0 %403
      %405 = vrot.lane.b32.xlu0 %v338, 64
      %v406 = vpop.permute.xlu0 %405
      %407 = vrot.lane.b32.xlu0 %v339, 64
      %v408 = vpop.permute.xlu0 %407
      %409 = vrot.lane.b32.xlu0 %v340, 64
      %v410 = vpop.permute.xlu0 %409
      %411 = vrot.lane.b32.xlu0 %v341, 64
      %v412 = vpop.permute.xlu0 %411
      %413 = vrot.lane.b32.xlu0 %v342, 64
      %v414 = vpop.permute.xlu0 %413
      %415 = vrot.lane.b32.xlu0 %v343, 64
      %v416 = vpop.permute.xlu0 %415
      %417 = vrot.lane.b32.xlu0 %v344, 64
      %v418 = vpop.permute.xlu0 %417
      %419 = vrot.lane.b32.xlu0 %v345, 64
      %v420 = vpop.permute.xlu0 %419
      %421 = vrot.lane.b32.xlu0 %v346, 64
      %v422 = vpop.permute.xlu0 %421
      %423 = vrot.lane.b32.xlu0 %v347, 64
      %v424 = vpop.permute.xlu0 %423
      %425 = vrot.lane.b32.xlu0 %v348, 64
      %v426 = vpop.permute.xlu0 %425
      %427 = vrot.lane.b32.xlu0 %v349, 64
      %v428 = vpop.permute.xlu0 %427
      %429 = vrot.lane.b32.xlu0 %v350, 64
      %v430 = vpop.permute.xlu0 %429
      %431 = vrot.lane.b32.xlu0 %v351, 64
      %v432 = vpop.permute.xlu0 %431
      %433 = vrot.lane.b32.xlu0 %v352, 64
      %v434 = vpop.permute.xlu0 %433
      %435 = vrot.lane.b32.xlu0 %v353, 64
      %v436 = vpop.permute.xlu0 %435
      %437 = vrot.lane.b32.xlu0 %v354, 64
      %v438 = vpop.permute.xlu0 %437
      %439 = vrot.lane.b32.xlu0 %v355, 64
      %v440 = vpop.permute.xlu0 %439
      %441 = vrot.lane.b32.xlu0 %v356, 64
      %v442 = vpop.permute.xlu0 %441
      %443 = vrot.lane.b32.xlu0 %v357, 64
      %v444 = vpop.permute.xlu0 %443
      %445 = vrot.lane.b32.xlu0 %v358, 64
      %v446 = vpop.permute.xlu0 %445
      %447 = vrot.lane.b32.xlu0 %v359, 64
      %v448 = vpop.permute.xlu0 %447
      %449 = vrot.lane.b32.xlu0 %v360, 64
      %v450 = vpop.permute.xlu0 %449
      %451 = vrot.lane.b32.xlu0 %v361, 64
      %v452 = vpop.permute.xlu0 %451
      %453 = vrot.lane.b32.xlu0 %v362, 64
      %v454 = vpop.permute.xlu0 %453
      %455 = vrot.lane.b32.xlu0 %v331, 64
      %v456 = vpop.permute.xlu0 %455
      %457 = vrot.lane.b32.xlu0 %v332, 64
      %v458 = vpop.permute.xlu0 %457
      %vm491 = vcmask 523264
      %v492 = vsel %vm491, %v331, %v396
      %v493 = vsel %vm491, %v332, %v398
      %v494 = vsel %vm491, %v333, %v400
      %v495 = vsel %vm491, %v334, %v402
      %v496 = vsel %vm491, %v335, %v404
      %v497 = vsel %vm491, %v336, %v406
      %v498 = vsel %vm491, %v337, %v408
      %v499 = vsel %vm491, %v338, %v410
      %v500 = vsel %vm491, %v339, %v412
      %v501 = vsel %vm491, %v340, %v414
      %v502 = vsel %vm491, %v341, %v416
      %v503 = vsel %vm491, %v342, %v418
      %v504 = vsel %vm491, %v343, %v420
      %v505 = vsel %vm491, %v344, %v422
      %v506 = vsel %vm491, %v345, %v424
      %v507 = vsel %vm491, %v346, %v426
      %v508 = vsel %vm491, %v347, %v428
      %v509 = vsel %vm491, %v348, %v430
      %v510 = vsel %vm491, %v349, %v432
      %v511 = vsel %vm491, %v350, %v434
      %v512 = vsel %vm491, %v351, %v436
      %v513 = vsel %vm491, %v352, %v438
      %v514 = vsel %vm491, %v353, %v440
      %v515 = vsel %vm491, %v354, %v442
      %v516 = vsel %vm491, %v355, %v444
      %v517 = vsel %vm491, %v356, %v446
      %v518 = vsel %vm491, %v357, %v448
      %v519 = vsel %vm491, %v358, %v450
      %v520 = vsel %vm491, %v359, %v452
      %v521 = vsel %vm491, %v360, %v454
      %v522 = vsel %vm491, %v361, %v456
      %v523 = vsel %vm491, %v362, %v458
      %vm556 = vcmask 1046528
      %v557 = vrot.slane %v492, 1
      %v558 = vrot.slane %v493, 1
      %v559 = vsel %vm556, %v557, %v558
      %v560 = vrot.slane %v494, 1
      %v561 = vsel %vm556, %v558, %v560
      %v562 = vrot.slane %v495, 1
      %v563 = vsel %vm556, %v560, %v562
      %v564 = vrot.slane %v496, 1
      %v565 = vsel %vm556, %v562, %v564
      %v566 = vrot.slane %v497, 1
      %v567 = vsel %vm556, %v564, %v566
      %v568 = vrot.slane %v498, 1
      %v569 = vsel %vm556, %v566, %v568
      %v570 = vrot.slane %v499, 1
      %v571 = vsel %vm556, %v568, %v570
      %v572 = vrot.slane %v500, 1
      %v573 = vsel %vm556, %v570, %v572
      %v574 = vrot.slane %v501, 1
      %v575 = vsel %vm556, %v572, %v574
      %v576 = vrot.slane %v502, 1
      %v577 = vsel %vm556, %v574, %v576
      %v578 = vrot.slane %v503, 1
      %v579 = vsel %vm556, %v576, %v578
      %v580 = vrot.slane %v504, 1
      %v581 = vsel %vm556, %v578, %v580
      %v582 = vrot.slane %v505, 1
      %v583 = vsel %vm556, %v580, %v582
      %v584 = vrot.slane %v506, 1
      %v585 = vsel %vm556, %v582, %v584
      %v586 = vrot.slane %v507, 1
      %v587 = vsel %vm556, %v584, %v586
      %v588 = vrot.slane %v508, 1
      %v589 = vsel %vm556, %v586, %v588
      %v590 = vrot.slane %v509, 1
      %v591 = vsel %vm556, %v588, %v590
      %v592 = vrot.slane %v510, 1
      %v593 = vsel %vm556, %v590, %v592
      %v594 = vrot.slane %v511, 1
      %v595 = vsel %vm556, %v592, %v594
      %v596 = vrot.slane %v512, 1
      %v597 = vsel %vm556, %v594, %v596
      %v598 = vrot.slane %v513, 1
      %v599 = vsel %vm556, %v596, %v598
      %v600 = vrot.slane %v514, 1
      %v601 = vsel %vm556, %v598, %v600
      %v602 = vrot.slane %v515, 1
      %v603 = vsel %vm556, %v600, %v602
      %v604 = vrot.slane %v516, 1
      %v605 = vsel %vm556, %v602, %v604
      %v606 = vrot.slane %v517, 1
      %v607 = vsel %vm556, %v604, %v606
      %v608 = vrot.slane %v518, 1
      %v609 = vsel %vm556, %v606, %v608
      %v610 = vrot.slane %v519, 1
      %v611 = vsel %vm556, %v608, %v610
      %v612 = vrot.slane %v520, 1
      %v613 = vsel %vm556, %v610, %v612
      %v614 = vrot.slane %v521, 1
      %v615 = vsel %vm556, %v612, %v614
      %v616 = vrot.slane %v522, 1
      %v617 = vsel %vm556, %v614, %v616
      %v618 = vrot.slane %v523, 1
      %v619 = vsel %vm556, %v616, %v618
      %v653 = vsel %vm556, %v618, %v557
      %v654 = vld [vmem:[%s1] sm:$0xff]
      %v655 = vld [vmem:[%s1 + $0x8] sm:$0xff]
      %v656 = vld [vmem:[%s1 + $0x10] sm:$0xff]
      %v657 = vld [vmem:[%s1 + $0x18] sm:$0xff]
      %v658 = vld [vmem:[%s1 + $0x20] sm:$0xff]
      %v659 = vld [vmem:[%s1 + $0x28] sm:$0xff]
      %v660 = vld [vmem:[%s1 + $0x30] sm:$0xff]
      %v661 = vld [vmem:[%s1 + $0x38] sm:$0xff]
      %v662 = vld [vmem:[%s1 + $0x40] sm:$0xff]
      %v663 = vld [vmem:[%s1 + $0x48] sm:$0xff]
      %v664 = vld [vmem:[%s1 + $0x50] sm:$0xff]
      %v665 = vld [vmem:[%s1 + $0x58] sm:$0xff]
      %v666 = vld [vmem:[%s1 + $0x60] sm:$0xff]
      %v667 = vld [vmem:[%s1 + $0x68] sm:$0xff]
      %v668 = vld [vmem:[%s1 + $0x70] sm:$0xff]
      %v669 = vld [vmem:[%s1 + $0x78] sm:$0xff]
      %v670 = vld [vmem:[%s1 + $0x80] sm:$0xff]
      %v671 = vld [vmem:[%s1 + $0x88] sm:$0xff]
      %v672 = vld [vmem:[%s1 + $0x90] sm:$0xff]
      %v673 = vld [vmem:[%s1 + $0x98] sm:$0xff]
      %v674 = vld [vmem:[%s1 + $0xa0] sm:$0xff]
      %v675 = vld [vmem:[%s1 + $0xa8] sm:$0xff]
      %v676 = vld [vmem:[%s1 + $0xb0] sm:$0xff]
      %v677 = vld [vmem:[%s1 + $0xb8] sm:$0xff]
      %v678 = vld [vmem:[%s1 + $0xc0] sm:$0xff]
      %v679 = vld [vmem:[%s1 + $0xc8] sm:$0xff]
      %v680 = vld [vmem:[%s1 + $0xd0] sm:$0xff]
      %v681 = vld [vmem:[%s1 + $0xd8] sm:$0xff]
      %v682 = vld [vmem:[%s1 + $0xe0] sm:$0xff]
      %v683 = vld [vmem:[%s1 + $0xe8] sm:$0xff]
      %v684 = vld [vmem:[%s1 + $0xf0] sm:$0xff]
      %v685 = vld [vmem:[%s1 + $0xf8] sm:$0xff]
      %v686 = vld [vmem:[%s2] sm:$0x1]
      %v688 = vlaneseq
      %v689 = vshrl.u32 %v688, 7
      %v690 = vsub.s32 0, %v689
      %v691 = vrot.slane %v686, %v690
      %693 = vmatprep.subr.mxu0 0.0
      %694 = vmatpush1.msra.mxu0 %v654
      %695 = vmatprep.subr.mxu0 0.0
      %696 = vmatpush1.msra.mxu0 %v655
      %697 = vmatprep.subr.mxu0 0.0
      %698 = vmatpush1.msra.mxu0 %v656
      %699 = vmatprep.subr.mxu0 0.0
      %700 = vmatpush1.msra.mxu0 %v657
      %701 = vmatprep.subr.mxu0 0.0
      %702 = vmatpush1.msra.mxu0 %v658
      %703 = vmatprep.subr.mxu0 0.0
      %704 = vmatpush1.msra.mxu0 %v659
      %705 = vmatprep.subr.mxu0 0.0
      %706 = vmatpush1.msra.mxu0 %v660
      %707 = vmatprep.subr.mxu0 0.0
      %708 = vmatpush1.msra.mxu0 %v661
      %709 = vmatprep.subr.mxu0 0.0
      %710 = vmatpush1.msra.mxu0 %v662
      %711 = vmatprep.subr.mxu0 0.0
      %712 = vmatpush1.msra.mxu0 %v663
      %713 = vmatprep.subr.mxu0 0.0
      %714 = vmatpush1.msra.mxu0 %v664
      %715 = vmatprep.subr.mxu0 0.0
      %716 = vmatpush1.msra.mxu0 %v665
      %717 = vmatprep.subr.mxu0 0.0
      %718 = vmatpush1.msra.mxu0 %v666
      %719 = vmatprep.subr.mxu0 0.0
      %720 = vmatpush1.msra.mxu0 %v667
      %721 = vmatprep.subr.mxu0 0.0
      %722 = vmatpush1.msra.mxu0 %v668
      %723 = vmatprep.subr.mxu0 0.0
      %724 = vmatpush1.msra.mxu0 %v669
      %725 = vmatprep.subr.mxu0 0.0
      %726 = vmatpush1.msra.mxu0 %v670
      %727 = vmatprep.subr.mxu0 0.0
      %728 = vmatpush1.msra.mxu0 %v671
      %729 = vmatprep.subr.mxu0 0.0
      %730 = vmatpush1.msra.mxu0 %v672
      %731 = vmatprep.subr.mxu0 0.0
      %732 = vmatpush1.msra.mxu0 %v673
      %733 = vmatprep.subr.mxu0 0.0
      %734 = vmatpush1.msra.mxu0 %v674
      %735 = vmatprep.subr.mxu0 0.0
      %736 = vmatpush1.msra.mxu0 %v675
      %737 = vmatprep.subr.mxu0 0.0
      %738 = vmatpush1.msra.mxu0 %v676
      %739 = vmatprep.subr.mxu0 0.0
      %740 = vmatpush1.msra.mxu0 %v677
      %741 = vmatprep.subr.mxu0 0.0
      %742 = vmatpush1.msra.mxu0 %v678
      %743 = vmatprep.subr.mxu0 0.0
      %744 = vmatpush1.msra.mxu0 %v679
      %745 = vmatprep.subr.mxu0 0.0
      %746 = vmatpush1.msra.mxu0 %v680
      %747 = vmatprep.subr.mxu0 0.0
      %748 = vmatpush1.msra.mxu0 %v681
      %749 = vmatprep.subr.mxu0 0.0
      %750 = vmatpush1.msra.mxu0 %v682
      %751 = vmatprep.subr.mxu0 0.0
      %752 = vmatpush1.msra.mxu0 %v683
      %753 = vmatprep.subr.mxu0 0.0
      %754 = vmatpush1.msra.mxu0 %v684
      %755 = vmatprep.subr.mxu0 0.0
      %756 = vmatpush1.msra.mxu0 %v685
      %757 = vmatprep.mubr.f32.mxu0 %v559
      %758 = vmatmul.mubr.f32.gmra.mrb[0].mxu0 %v492
      %v759 = vpop.f32.mrb[0].mxu0
      %v760 = vadd.f32 %v691, %v759
      %v761 = vpop.f32.mrb[0].mxu0
      %762 = vmatprep.mubr.f32.mxu0 %v561
      %763 = vmatmul.mubr.f32.gmra.mrb[0].mxu0 %v493
      %v764 = vpop.f32.mrb[0].mxu0
      %v765 = vadd.f32 %v691, %v764
      %v766 = vpop.f32.mrb[0].mxu0
      %767 = vmatprep.mubr.f32.mxu0 %v563
      %768 = vmatmul.mubr.f32.gmra.mrb[0].mxu0 %v494
      %v769 = vpop.f32.mrb[0].mxu0
      %v770 = vadd.f32 %v691, %v769
      %v771 = vpop.f32.mrb[0].mxu0
      %772 = vmatprep.mubr.f32.mxu0 %v565
      %773 = vmatmul.mubr.f32.gmra.mrb[0].mxu0 %v495
      %v774 = vpop.f32.mrb[0].mxu0
      %v775 = vadd.f32 %v691, %v774
      %v776 = vpop.f32.mrb[0].mxu0
      %777 = vmatprep.mubr.f32.mxu0 %v567
      %778 = vmatmul.mubr.f32.gmra.mrb[0].mxu0 %v496
      %v779 = vpop.f32.mrb[0].mxu0
      %v780 = vadd.f32 %v691, %v779
      %v781 = vpop.f32.mrb[0].mxu0
      %782 = vmatprep.mubr.f32.mxu0 %v569
      %783 = vmatmul.mubr.f32.gmra.mrb[0].mxu0 %v497
      %v784 = vpop.f32.mrb[0].mxu0
      %v785 = vadd.f32 %v691, %v784
      %v786 = vpop.f32.mrb[0].mxu0
      %787 = vmatprep.mubr.f32.mxu0 %v571
      %788 = vmatmul.mubr.f32.gmra.mrb[0].mxu0 %v498
      %v789 = vpop.f32.mrb[0].mxu0
      %v790 = vadd.f32 %v691, %v789
      %v791 = vpop.f32.mrb[0].mxu0
      %792 = vmatprep.mubr.f32.mxu0 %v573
      %793 = vmatmul.mubr.f32.gmra.mrb[0].mxu0 %v499
      %v794 = vpop.f32.mrb[0].mxu0
      %v795 = vadd.f32 %v691, %v794
      %v796 = vpop.f32.mrb[0].mxu0
      %797 = vmatprep.mubr.f32.mxu0 %v575
      %798 = vmatmul.mubr.f32.gmra.mrb[0].mxu0 %v500
      %v799 = vpop.f32.mrb[0].mxu0
      %v800 = vadd.f32 %v691, %v799
      %v801 = vpop.f32.mrb[0].mxu0
      %802 = vmatprep.mubr.f32.mxu0 %v577
      %803 = vmatmul.mubr.f32.gmra.mrb[0].mxu0 %v501
      %v804 = vpop.f32.mrb[0].mxu0
      %v805 = vadd.f32 %v691, %v804
      %v806 = vpop.f32.mrb[0].mxu0
      %807 = vmatprep.mubr.f32.mxu0 %v579
      %808 = vmatmul.mubr.f32.gmra.mrb[0].mxu0 %v502
      %v809 = vpop.f32.mrb[0].mxu0
      %v810 = vadd.f32 %v691, %v809
      %v811 = vpop.f32.mrb[0].mxu0
      %812 = vmatprep.mubr.f32.mxu0 %v581
      %813 = vmatmul.mubr.f32.gmra.mrb[0].mxu0 %v503
      %v814 = vpop.f32.mrb[0].mxu0
      %v815 = vadd.f32 %v691, %v814
      %v816 = vpop.f32.mrb[0].mxu0
      %817 = vmatprep.mubr.f32.mxu0 %v583
      %818 = vmatmul.mubr.f32.gmra.mrb[0].mxu0 %v504
      %v819 = vpop.f32.mrb[0].mxu0
      %v820 = vadd.f32 %v691, %v819
      %v821 = vpop.f32.mrb[0].mxu0
      %822 = vmatprep.mubr.f32.mxu0 %v585
      %823 = vmatmul.mubr.f32.gmra.mrb[0].mxu0 %v505
      %v824 = vpop.f32.mrb[0].mxu0
      %v825 = vadd.f32 %v691, %v824
      %v826 = vpop.f32.mrb[0].mxu0
      %827 = vmatprep.mubr.f32.mxu0 %v587
      %828 = vmatmul.mubr.f32.gmra.mrb[0].mxu0 %v506
      %v829 = vpop.f32.mrb[0].mxu0
      %v830 = vadd.f32 %v691, %v829
      %v831 = vpop.f32.mrb[0].mxu0
      %832 = vmatprep.mubr.f32.mxu0 %v589
      %833 = vmatmul.mubr.f32.gmra.mrb[0].mxu0 %v507
      %v834 = vpop.f32.mrb[0].mxu0
      %v835 = vadd.f32 %v691, %v834
      %v836 = vpop.f32.mrb[0].mxu0
      %837 = vmatprep.mubr.f32.mxu0 %v591
      %838 = vmatmul.mubr.f32.gmra.mrb[0].mxu0 %v508
      %v839 = vpop.f32.mrb[0].mxu0
      %v840 = vadd.f32 %v691, %v839
      %v841 = vpop.f32.mrb[0].mxu0
      %842 = vmatprep.mubr.f32.mxu0 %v593
      %843 = vmatmul.mubr.f32.gmra.mrb[0].mxu0 %v509
      %v844 = vpop.f32.mrb[0].mxu0
      %v845 = vadd.f32 %v691, %v844
      %v846 = vpop.f32.mrb[0].mxu0
      %847 = vmatprep.mubr.f32.mxu0 %v595
      %848 = vmatmul.mubr.f32.gmra.mrb[0].mxu0 %v510
      %v849 = vpop.f32.mrb[0].mxu0
      %v850 = vadd.f32 %v691, %v849
      %v851 = vpop.f32.mrb[0].mxu0
      %852 = vmatprep.mubr.f32.mxu0 %v597
      %853 = vmatmul.mubr.f32.gmra.mrb[0].mxu0 %v511
      %v854 = vpop.f32.mrb[0].mxu0
      %v855 = vadd.f32 %v691, %v854
      %v856 = vpop.f32.mrb[0].mxu0
      %857 = vmatprep.mubr.f32.mxu0 %v599
      %858 = vmatmul.mubr.f32.gmra.mrb[0].mxu0 %v512
      %v859 = vpop.f32.mrb[0].mxu0
      %v860 = vadd.f32 %v691, %v859
      %v861 = vpop.f32.mrb[0].mxu0
      %862 = vmatprep.mubr.f32.mxu0 %v601
      %863 = vmatmul.mubr.f32.gmra.mrb[0].mxu0 %v513
      %v864 = vpop.f32.mrb[0].mxu0
      %v865 = vadd.f32 %v691, %v864
      %v866 = vpop.f32.mrb[0].mxu0
      %867 = vmatprep.mubr.f32.mxu0 %v603
      %868 = vmatmul.mubr.f32.gmra.mrb[0].mxu0 %v514
      %v869 = vpop.f32.mrb[0].mxu0
      %v870 = vadd.f32 %v691, %v869
      %v871 = vpop.f32.mrb[0].mxu0
      %872 = vmatprep.mubr.f32.mxu0 %v605
      %873 = vmatmul.mubr.f32.gmra.mrb[0].mxu0 %v515
      %v874 = vpop.f32.mrb[0].mxu0
      %v875 = vadd.f32 %v691, %v874
      %v876 = vpop.f32.mrb[0].mxu0
      %877 = vmatprep.mubr.f32.mxu0 %v607
      %878 = vmatmul.mubr.f32.gmra.mrb[0].mxu0 %v516
      %v879 = vpop.f32.mrb[0].mxu0
      %v880 = vadd.f32 %v691, %v879
      %v881 = vpop.f32.mrb[0].mxu0
      %882 = vmatprep.mubr.f32.mxu0 %v609
      %883 = vmatmul.mubr.f32.gmra.mrb[0].mxu0 %v517
      %v884 = vpop.f32.mrb[0].mxu0
      %v885 = vadd.f32 %v691, %v884
      %v886 = vpop.f32.mrb[0].mxu0
      %887 = vmatprep.mubr.f32.mxu0 %v611
      %888 = vmatmul.mubr.f32.gmra.mrb[0].mxu0 %v518
      %v889 = vpop.f32.mrb[0].mxu0
      %v890 = vadd.f32 %v691, %v889
      %v891 = vpop.f32.mrb[0].mxu0
      %892 = vmatprep.mubr.f32.mxu0 %v613
      %893 = vmatmul.mubr.f32.gmra.mrb[0].mxu0 %v519
      %v894 = vpop.f32.mrb[0].mxu0
      %v895 = vadd.f32 %v691, %v894
      %v896 = vpop.f32.mrb[0].mxu0
      %897 = vmatprep.mubr.f32.mxu0 %v615
      %898 = vmatmul.mubr.f32.gmra.mrb[0].mxu0 %v520
      %v899 = vpop.f32.mrb[0].mxu0
      %v900 = vadd.f32 %v691, %v899
      %v901 = vpop.f32.mrb[0].mxu0
      %902 = vmatprep.mubr.f32.mxu0 %v617
      %903 = vmatmul.mubr.f32.gmra.mrb[0].mxu0 %v521
      %v904 = vpop.f32.mrb[0].mxu0
      %v905 = vadd.f32 %v691, %v904
      %v906 = vpop.f32.mrb[0].mxu0
      %907 = vmatprep.mubr.f32.mxu0 %v619
      %908 = vmatmul.mubr.f32.gmra.mrb[0].mxu0 %v522
      %v909 = vpop.f32.mrb[0].mxu0
      %v910 = vadd.f32 %v691, %v909
      %v911 = vpop.f32.mrb[0].mxu0
      %912 = vmatprep.mubr.f32.mxu0 %v653
      %913 = vmatmul.mubr.f32.gmra.mrb[0].mxu0 %v523
      %v914 = vpop.f32.mrb[0].mxu0
      %v915 = vadd.f32 %v691, %v914
      %v916 = vpop.f32.mrb[0].mxu0
      %917 = vdwg.mxu0
      %v918 = vmax.f32 %v760, 0.0
      %v919 = vmax.f32 %v765, 0.0
      %v920 = vmax.f32 %v770, 0.0
      %v921 = vmax.f32 %v775, 0.0
      %v922 = vmax.f32 %v780, 0.0
      %v923 = vmax.f32 %v785, 0.0
      %v924 = vmax.f32 %v790, 0.0
      %v925 = vmax.f32 %v795, 0.0
      %v926 = vmax.f32 %v800, 0.0
      %v927 = vmax.f32 %v805, 0.0
      %v928 = vmax.f32 %v810, 0.0
      %v929 = vmax.f32 %v815, 0.0
      %v930 = vmax.f32 %v820, 0.0
      %v931 = vmax.f32 %v825, 0.0
      %v932 = vmax.f32 %v830, 0.0
      %v933 = vmax.f32 %v835, 0.0
      %v934 = vmax.f32 %v840, 0.0
      %v935 = vmax.f32 %v845, 0.0
      %v936 = vmax.f32 %v850, 0.0
      %v937 = vmax.f32 %v855, 0.0
      %v938 = vmax.f32 %v860, 0.0
      %v939 = vmax.f32 %v865, 0.0
      %v940 = vmax.f32 %v870, 0.0
      %v941 = vmax.f32 %v875, 0.0
      %v942 = vmax.f32 %v880, 0.0
      %v943 = vmax.f32 %v885, 0.0
      %v944 = vmax.f32 %v890, 0.0
      %v945 = vmax.f32 %v895, 0.0
      %v946 = vmax.f32 %v900, 0.0
      %v947 = vmax.f32 %v905, 0.0
      %v948 = vmax.f32 %v910, 0.0
      %v949 = vmax.f32 %v915, 0.0
      %v950 = vmax.f32 %v918, %v920
      %v951 = vmax.f32 %v919, %v921
      %v952 = vmax.f32 %v922, %v924
      %v953 = vmax.f32 %v923, %v925
      %v954 = vmax.f32 %v926, %v928
      %v955 = vmax.f32 %v927, %v929
      %v956 = vmax.f32 %v930, %v932
      %v957 = vmax.f32 %v931, %v933
      %v958 = vmax.f32 %v934, %v936
      %v959 = vmax.f32 %v935, %v937
      %v960 = vmax.f32 %v938, %v940
      %v961 = vmax.f32 %v939, %v941
      %v962 = vmax.f32 %v942, %v944
      %v963 = vmax.f32 %v943, %v945
      %v964 = vmax.f32 %v946, %v948
      %v965 = vmax.f32 %v947, %v949
      %vm966 = vcmask 130048
      %967 = vst.msk [vmem:[%s170] sm:$0xff] %vm966, %v950
      %968 = vst.msk [vmem:[%s170 + $0x8] sm:$0xff] %vm966, %v951
      %969 = vst.msk [vmem:[%s170 + $0x10] sm:$0xff] %vm966, %v952
      %970 = vst.msk [vmem:[%s170 + $0x18] sm:$0xff] %vm966, %v953
      %971 = vst.msk [vmem:[%s170 + $0x20] sm:$0xff] %vm966, %v954
      %972 = vst.msk [vmem:[%s170 + $0x28] sm:$0xff] %vm966, %v955
      %973 = vst.msk [vmem:[%s170 + $0x30] sm:$0xff] %vm966, %v956
      %974 = vst.msk [vmem:[%s170 + $0x38] sm:$0xff] %vm966, %v957
      %975 = vst.msk [vmem:[%s170 + $0x40] sm:$0xff] %vm966, %v958
      %976 = vst.msk [vmem:[%s170 + $0x48] sm:$0xff] %vm966, %v959
      %977 = vst.msk [vmem:[%s170 + $0x50] sm:$0xff] %vm966, %v960
      %978 = vst.msk [vmem:[%s170 + $0x58] sm:$0xff] %vm966, %v961
      %979 = vst.msk [vmem:[%s170 + $0x60] sm:$0xff] %vm966, %v962
      %980 = vst.msk [vmem:[%s170 + $0x68] sm:$0xff] %vm966, %v963
      %981 = vst.msk [vmem:[%s170 + $0x70] sm:$0xff] %vm966, %v964
      %982 = vst.msk [vmem:[%s170 + $0x78] sm:$0xff] %vm966, %v965
      %p983 = scmp.lt.s32.totalorder %s14, 1
      %s984 = scalar_select %p983, %s14, 1
      %s985 = smul.addr %s984, 16
      %s986 = smul.addr %s985, 8
      %s987 = scalar_lea.vmem %s3, %s986
      // Predicated region
      $region33: #{net_forward.6} parent=31 // pred_check
        %p988 = pneg %p100
      $region34: #{net_forward.6} parent=31 // pred_check_branch
        %990 = sbr.rel (%p988) target = $region36
      $region35: #{net_forward.6} parent=31 // pred_region
        _
      $region36: #{net_forward.6} parent=31 // pred_fallthru
        _
    $region32: #{net_forward.6} parent=5 // pred_fallthru
      _
    %p991 = scmp.le.s32.totalorder 2, %s9
    // Predicated region
    $region37: #{net_forward.6} parent=5 // pred_check
      %p992 = pneg %p991
    $region38: #{net_forward.6} parent=5 // pred_check_branch
      %994 = sbr.rel (%p992) target = $region40
    $region39: #{net_forward.6} parent=5 // pred_region
      %s995 = ssub.s32 %s9, 2
      // Predicated region
      $region41: #{net_forward.6} parent=39 // pred_check
        %p996 = pneg %p106
      $region42: #{net_forward.6} parent=39 // pred_check_branch
        %998 = sbr.rel (%p996) target = $region44
      $region43: #{net_forward.6} parent=39 // pred_region
        %p999 = scmp.lt.s32.totalorder %s15, 1
        %s1000 = scalar_select %p999, %s15, 1
        %s1001 = smul.addr %s1000, 16
        %s1002 = smul.addr %s1001, 8
        %s1003 = scalar_lea.vmem %s3, %s1002
      $region44: #{net_forward.6} parent=39 // pred_fallthru
        _
    $region40: #{net_forward.6} parent=5 // pred_fallthru
      _
  $region6: #{net_forward.6} parent=0 // loop_footer
    %s13 = sadd.s32 1, %s9
  $region7: #{net_forward.6} parent=0 // loop_footer_branch
    %8 = sbr.rel target = $region3
  $region8: #{net_forward.6} parent=0 // loop_exit
    _

// kernel: net_forward.4
$region0: #{net_forward.4}
  #allocation0 [shape = 'u32[]', space=smem, size = 0x4, offset = 0x4, fixed_abs, tag = 'smem constant byte address 0x4 - core index']
  #allocation1 [shape = 'u32[144,128]{1,0:T(1,128)}', space=vmem, size = 0x12000, scoped, tag = 'internal scratch']
  %s0 = inlined_call_operand.hbm [shape: f32[2,64,64], index: 0, kind: input, shape index: {}]
  %s1 = inlined_call_operand.hbm [shape: f32[4,32], index: 1, kind: input, shape index: {}]
  %s2 = inlined_call_operand.hbm [shape: f32[32], index: 2, kind: input, shape index: {}]
  %s3 = inlined_call_operand.vmem [shape: f32[2,32,64,64], index: 3, kind: output, shape index: {}]
  %s4 = sld [smem:[#allocation0]]
  $region57: #{net_forward.4} parent=0
    _
  %s6 = ssub.s32 1, %s4
  %s7 = scalar_select 0, %s6, %s4
  $region1: #{net_forward.4} parent=0
    #allocation2 [shape = 'u8[65536]{0}', space=vmem, size = 0x10000, scoped, tag = 'input window, operand 0']
    #allocation3 [shape = 's32[2]{0}', space=sflag, size = 0x8, scoped, tag = 'scoped memory for net_forward.4']
    #allocation4 [shape = 's32[2]{0}', space=sflag, size = 0x8, scoped, tag = 'scoped memory for net_forward.4']
    #allocation5 [shape = 'u8[2048]{0}', space=smem, size = 0x800, scoped, tag = 'input window, operand 1, single buffered']
    #allocation6 [shape = 'u8[512]{0}', space=smem, size = 0x200, scoped, tag = 'input window, operand 2, single buffered']
    #allocation7 [shape = 's32[1]{0}', space=sflag, size = 0x4, scoped, tag = 'scoped memory for net_forward.4']
    %8 = vsyncpa [#allocation3], 0
    %s9 = scalar_lea.sflag [#allocation3], 1
    %10 = vsyncpa %s9, 0
    %11 = vsyncpa [#allocation4], 0
    %12 = vsyncpa [#allocation7], 0
    loop: start=0, step=1, limit=4
    $region2: #{net_forward.4} parent=1 // loop_pre_header
      _
    $region3: #{net_forward.4} parent=1 // loop_header
      %s14 = sphi 0, %s18
      %p15 = scmp.ge.s32.totalorder %s14, 4
      %s24 = sphi 0, %s26
      %s27 = sphi 0, %s24
      %s28 = sphi 0, %s27
      %s44 = sphi 0, %s28
      %s48 = sphi 0, %s48
      %s50 = sphi 0, %s48
      %s51 = sphi 0, %s50
      %s65 = sphi 0, %s51
      %s69 = sphi 0, %s69
      %s71 = sphi 0, %s69
      %s72 = sphi 0, %s71
      %s86 = sphi 0, %s72
      %s92 = sphi 0, %s94
      %s95 = sphi 0, %s92
      %s96 = sphi 0, %s95
      %s112 = sphi 0, %s96
    $region4: #{net_forward.4} parent=1 // loop_header_branch
      %17 = sbr.rel (%p15) target = $region8
    $region5: #{net_forward.4} parent=1 // loop_body
      %s19 = ssub.s32 %s14, 1
      %s20 = ssub.s32 %s14, 2
      %s21 = sadd.s32 %s14, 1
      %s22 = ssub.s32 %s14, %s21
      %p23 = scmp.eq.s32.totalorder %s22, 0
      %s25 = sadd.s32 %s24, 1
      %s26 = scalar_select %p23, %s24, %s25
      %p29 = pneg %p23
      %p30 = scmp.eq.s32.totalorder %s14, 1
      %p31 = por %p29, %p30
      %p32 = scmp.ne.s32.totalorder %s24, %s27
      %p33 = scmp.eq.s32.totalorder %s14, 0
      %p34 = por %p32, %p33
      %p35 = scmp.ne.s32.totalorder %s24, %s27
      %p36 = scmp.eq.s32.totalorder %s19, 1
      %p37 = por %p35, %p36
      %p38 = scmp.ne.s32.totalorder %s27, %s28
      %p39 = scmp.eq.s32.totalorder %s19, 0
      %p40 = por %p38, %p39
      %p41 = scmp.ne.s32.totalorder %s27, %s28
      %p42 = scmp.eq.s32.totalorder %s20, 1
      %p43 = por %p41, %p42
      %p45 = scmp.ne.s32.totalorder %s28, %s44
      %p46 = scmp.eq.s32.totalorder %s20, 0
      %p47 = por %p45, %p46
      %s49 = sadd.s32 %s48, 1
      %p52 = scmp.eq.s32.totalorder %s14, 1
      %p53 = scmp.ne.s32.totalorder %s48, %s50
      %p54 = scmp.eq.s32.totalorder %s14, 0
      %p55 = por %p53, %p54
      %p56 = scmp.ne.s32.totalorder %s48, %s50
      %p57 = scmp.eq.s32.totalorder %s19, 1
      %p58 = por %p56, %p57
      %p59 = scmp.ne.s32.totalorder %s50, %s51
      %p60 = scmp.eq.s32.totalorder %s19, 0
      %p61 = por %p59, %p60
      %p62 = scmp.ne.s32.totalorder %s50, %s51
      %p63 = scmp.eq.s32.totalorder %s20, 1
      %p64 = por %p62, %p63
      %p66 = scmp.ne.s32.totalorder %s51, %s65
      %p67 = scmp.eq.s32.totalorder %s20, 0
      %p68 = por %p66, %p67
      %s70 = sadd.s32 %s69, 1
      %p73 = scmp.eq.s32.totalorder %s14, 1
      %p74 = scmp.ne.s32.totalorder %s69, %s71
      %p75 = scmp.eq.s32.totalorder %s14, 0
      %p76 = por %p74, %p75
      %p77 = scmp.ne.s32.totalorder %s69, %s71
      %p78 = scmp.eq.s32.totalorder %s19, 1
      %p79 = por %p77, %p78
      %p80 = scmp.ne.s32.totalorder %s71, %s72
      %p81 = scmp.eq.s32.totalorder %s19, 0
      %p82 = por %p80, %p81
      %p83 = scmp.ne.s32.totalorder %s71, %s72
      %p84 = scmp.eq.s32.totalorder %s20, 1
      %p85 = por %p83, %p84
      %p87 = scmp.ne.s32.totalorder %s72, %s86
      %p88 = scmp.eq.s32.totalorder %s20, 0
      %p89 = por %p87, %p88
      %s90 = ssub.s32 %s14, %s21
      %p91 = scmp.eq.s32.totalorder %s90, 0
      %s93 = sadd.s32 %s92, 1
      %s94 = scalar_select %p91, %s92, %s93
      %p97 = pneg %p91
      %p98 = scmp.eq.s32.totalorder %s14, 1
      %p99 = por %p97, %p98
      %p100 = scmp.ne.s32.totalorder %s92, %s95
      %p101 = scmp.eq.s32.totalorder %s14, 0
      %p102 = por %p100, %p101
      %p103 = scmp.ne.s32.totalorder %s92, %s95
      %p104 = scmp.eq.s32.totalorder %s19, 1
      %p105 = por %p103, %p104
      %p106 = scmp.ne.s32.totalorder %s95, %s96
      %p107 = scmp.eq.s32.totalorder %s19, 0
      %p108 = por %p106, %p107
      %p109 = scmp.ne.s32.totalorder %s95, %s96
      %p110 = scmp.eq.s32.totalorder %s20, 1
      %p111 = por %p109, %p110
      %p113 = scmp.ne.s32.totalorder %s96, %s112
      %p114 = scmp.eq.s32.totalorder %s20, 0
      %p115 = por %p113, %p114
      %p116 = scmp.le.s32.totalorder 1, %s14
      %p117 = scmp.lt.s32.totalorder %s14, 3
      %p118 = pnand %p116, %p117
      %p119 = pneg %p118
      // Predicated region
      $region9: #{net_forward.4} parent=5 // pred_check
        _
      $region10: #{net_forward.4} parent=5 // pred_check_branch
        %121 = sbr.rel (%p118) target = $region12
      $region11: #{net_forward.4} parent=5 // pred_region
        %s122 = ssub.s32 %s14, 1
        // Predicated region
        $region13: #{net_forward.4} parent=11 // pred_check
          %p123 = pneg %p61
        $region14: #{net_forward.4} parent=11 // pred_check_branch
          %125 = sbr.rel (%p123) target = $region16
        $region15: #{net_forward.4} parent=11 // pred_region
          %s127 = ssub.s32 64, 64
          %128 = vsyncadd [#allocation4], %s127
          %131 = dma.hbm_to_smem %s1, 64, [#allocation5], [#allocation4]
        $region16: #{net_forward.4} parent=11 // pred_fallthru
          _
        // Predicated region
        $region17: #{net_forward.4} parent=11 // pred_check
          %p132 = pneg %p82
        $region18: #{net_forward.4} parent=11 // pred_check_branch
          %134 = sbr.rel (%p132) target = $region20
        $region19: #{net_forward.4} parent=11 // pred_region
          %s136 = ssub.s32 16, 16
          %137 = vsyncadd [#allocation7], %s136
          %140 = dma.hbm_to_smem %s2, 16, [#allocation6], [#allocation7]
        $region20: #{net_forward.4} parent=11 // pred_fallthru
          _
      $region12: #{net_forward.4} parent=5 // pred_fallthru
        _
      %p141 = scmp.lt.s32.totalorder %s14, 2
      // Predicated region
      $region21: #{net_forward.4} parent=5 // pred_check
        %p142 = pneg %p141
      $region22: #{net_forward.4} parent=5 // pred_check_branch
        %144 = sbr.rel (%p142) target = $region24
      $region23: #{net_forward.4} parent=5 // pred_region
        // Predicated region
        $region25: #{net_forward.4} parent=23 // pred_check
          %p145 = pneg %p34
        $region26: #{net_forward.4} parent=23 // pred_check_branch
          %147 = sbr.rel (%p145) target = $region28
        $region27: #{net_forward.4} parent=23 // pred_region
          %s148 = sand.u32 %s24, 1
          %s149 = scalar_lea.sflag [#allocation3], %s148
          %s150 = sand.u32 %s24, 1
          %s151 = smul.addr %s150, 64
          %s152 = scalar_lea.vmem [#allocation2], %s151
          %s154 = ssub.s32 1024, 1024
          %155 = vsyncadd %s149, %s154
          %s156 = smul.addr %s14, 8
          %s157 = smul.addr %s156, 128
          %s158 = scalar_lea.hbm %s0, %s157
          %s159 = sshll.u32 %s152, 4
          %s160 = int_to_ptr.vmem [resolvable:$true] %s159
          %165 = dma.hbm_to_vmem [thread:$0]  %s158, 1024, %s160, %s149, 128, 128, 8
        $region28: #{net_forward.4} parent=23 // pred_fallthru
          _
      $region24: #{net_forward.4} parent=5 // pred_fallthru
        _
      %p166 = scmp.le.s32.totalorder 1, %s14
      %p167 = scmp.lt.s32.totalorder %s14, 3
      %p168 = pnand %p166, %p167
      %p169 = pneg %p168
      // Predicated region
      $region29: #{net_forward.4} parent=5 // pred_check
        _
      $region30: #{net_forward.4} parent=5 // pred_check_branch
        %171 = sbr.rel (%p168) target = $region32
      $region31: #{net_forward.4} parent=5 // pred_region
        %s172 = ssub.s32 %s14, 1
        %s173 = sand.u32 %s27, 1
        %s174 = scalar_lea.sflag [#allocation3], %s173
        %s175 = sand.u32 %s27, 1
        %s176 = smul.addr %s175, 64
        %s177 = scalar_lea.vmem [#allocation2], %s176
        // Predicated region
        $region33: #{net_forward.4} parent=31 // pred_check
          %p178 = pneg %p40
        $region34: #{net_forward.4} parent=31 // pred_check_branch
          %180 = sbr.rel (%p178) target = $region36
        $region35: #{net_forward.4} parent=31 // pred_region
          %181 = dma.done %s174, 1024
        $region36: #{net_forward.4} parent=31 // pred_fallthru
          _
        // Predicated region
        $region37: #{net_forward.4} parent=31 // pred_check
          %p182 = pneg %p61
        $region38: #{net_forward.4} parent=31 // pred_check_branch
          %184 = sbr.rel (%p182) target = $region40
        $region39: #{net_forward.4} parent=31 // pred_region
          %185 = dma.done [#allocation4], 64
        $region40: #{net_forward.4} parent=31 // pred_fallthru
          _
        // Predicated region
        $region41: #{net_forward.4} parent=31 // pred_check
          %p186 = pneg %p82
        $region42: #{net_forward.4} parent=31 // pred_check_branch
          %188 = sbr.rel (%p186) target = $region44
        $region43: #{net_forward.4} parent=31 // pred_region
          %189 = dma.done [#allocation7], 16
        $region44: #{net_forward.4} parent=31 // pred_fallthru
          _
        %190 = sfence
        %s191 = sand.u32 %s27, 1
        %s192 = scalar_lea.sflag [#allocation3], %s191
        %s193 = sand.u32 %s27, 1
        %s194 = smul.addr %s193, 64
        %s195 = scalar_lea.vmem [#allocation2], %s194
        %p196 = pneg %p40
        %p197 = pneg %p37
        %p198 = pneg %p61
        %p199 = pneg %p58
        %p200 = pneg %p82
        %p201 = pneg %p79
        %p202 = pneg %p108
        %p203 = pneg %p105
        %p204 = scmp.lt.s32.totalorder %s19, 1
        %s205 = scalar_select %p204, %s19, 1
        %s206 = smul.addr %s205, 256
        %s207 = smul.addr %s206, 8
        %s208 = scalar_lea.vmem %s3, %s207
        %p209 = scmp.lt.s32.totalorder %s19, 1
        %s210 = scalar_select %p209, %s19, 1
        %s211 = smul.addr %s210, 256
        %s212 = smul.addr %s211, 8
        %s213 = scalar_lea.vmem %s3, %s212
        %v214 = vld [vmem:[%s177] sm:$0xff]
        %v215 = vld [vmem:[%s177 + $0x8] sm:$0xff]
        %v216 = vld [vmem:[%s177 + $0x10] sm:$0xff]
        %v217 = vld [vmem:[%s177 + $0x18] sm:$0xff]
        %v218 = vld [vmem:[%s177 + $0x20] sm:$0xff]
        %v219 = vld [vmem:[%s177 + $0x28] sm:$0xff]
        %v220 = vld [vmem:[%s177 + $0x30] sm:$0xff]
        %v221 = vld [vmem:[%s177 + $0x38] sm:$0xff]
        %230 = vrot.lane.b32.xlu0 %v214, 127
        %v231 = vpop.permute.xlu0 %230
        %232 = vrot.lane.b32.xlu0 %v215, 127
        %v233 = vpop.permute.xlu0 %232
        %234 = vrot.lane.b32.xlu0 %v216, 127
        %v235 = vpop.permute.xlu0 %234
        %236 = vrot.lane.b32.xlu0 %v217, 127
        %v237 = vpop.permute.xlu0 %236
        %238 = vrot.lane.b32.xlu0 %v218, 127
        %v239 = vpop.permute.xlu0 %238
        %240 = vrot.lane.b32.xlu0 %v219, 127
        %v241 = vpop.permute.xlu0 %240
        %242 = vrot.lane.b32.xlu0 %v220, 127
        %v243 = vpop.permute.xlu0 %242
        %244 = vrot.lane.b32.xlu0 %v221, 127
        %v245 = vpop.permute.xlu0 %244
        %254 = vrot.lane.b32.xlu0 %v214, 63
        %v255 = vpop.permute.xlu0 %254
        %256 = vrot.lane.b32.xlu0 %v215, 63
        %v257 = vpop.permute.xlu0 %256
        %258 = vrot.lane.b32.xlu0 %v216, 63
        %v259 = vpop.permute.xlu0 %258
        %260 = vrot.lane.b32.xlu0 %v217, 63
        %v261 = vpop.permute.xlu0 %260
        %262 = vrot.lane.b32.xlu0 %v218, 63
        %v263 = vpop.permute.xlu0 %262
        %264 = vrot.lane.b32.xlu0 %v219, 63
        %v265 = vpop.permute.xlu0 %264
        %266 = vrot.lane.b32.xlu0 %v220, 63
        %v267 = vpop.permute.xlu0 %266
        %268 = vrot.lane.b32.xlu0 %v221, 63
        %v269 = vpop.permute.xlu0 %268
        %vm278 = vcmask 515072
        %v279 = vsel %vm278, %v231, %v255
        %v280 = vsel %vm278, %v233, %v257
        %v281 = vsel %vm278, %v235, %v259
        %v282 = vsel %vm278, %v237, %v261
        %v283 = vsel %vm278, %v239, %v263
        %v284 = vsel %vm278, %v241, %v265
        %v285 = vsel %vm278, %v243, %v267
        %v286 = vsel %vm278, %v245, %v269
        %vm287 = vcmask 1046528
        %v288 = vrot.slane %v214, 1
        %v289 = vrot.slane %v215, 1
        %v290 = vsel %vm287, %v288, %v289
        %v291 = vrot.slane %v216, 1
        %v292 = vsel %vm287, %v289, %v291
        %v293 = vrot.slane %v217, 1
        %v294 = vsel %vm287, %v291, %v293
        %v295 = vrot.slane %v218, 1
        %v296 = vsel %vm287, %v293, %v295
        %v297 = vrot.slane %v219, 1
        %v298 = vsel %vm287, %v295, %v297
        %v299 = vrot.slane %v220, 1
        %v300 = vsel %vm287, %v297, %v299
        %v301 = vrot.slane %v221, 1
        %v302 = vsel %vm287, %v299, %v301
        %v312 = vsel %vm287, %v301, %v288
        %314 = vrot.lane.b32.xlu0 %v290, 127
        %v315 = vpop.permute.xlu0 %314
        %316 = vrot.lane.b32.xlu0 %v292, 127
        %v317 = vpop.permute.xlu0 %316
        %318 = vrot.lane.b32.xlu0 %v294, 127
        %v319 = vpop.permute.xlu0 %318
        %320 = vrot.lane.b32.xlu0 %v296, 127
        %v321 = vpop.permute.xlu0 %320
        %322 = vrot.lane.b32.xlu0 %v298, 127
        %v323 = vpop.permute.xlu0 %322
        %324 = vrot.lane.b32.xlu0 %v300, 127
        %v325 = vpop.permute.xlu0 %324
        %326 = vrot.lane.b32.xlu0 %v302, 127
        %v327 = vpop.permute.xlu0 %326
        %328 = vrot.lane.b32.xlu0 %v312, 127
        %v329 = vpop.permute.xlu0 %328
        %338 = vrot.lane.b32.xlu0 %v290, 63
        %v339 = vpop.permute.xlu0 %338
        %340 = vrot.lane.b32.xlu0 %v292, 63
        %v341 = vpop.permute.xlu0 %340
        %342 = vrot.lane.b32.xlu0 %v294, 63
        %v343 = vpop.permute.xlu0 %342
        %344 = vrot.lane.b32.xlu0 %v296, 63
        %v345 = vpop.permute.xlu0 %344
        %346 = vrot.lane.b32.xlu0 %v298, 63
        %v347 = vpop.permute.xlu0 %346
        %348 = vrot.lane.b32.xlu0 %v300, 63
        %v349 = vpop.permute.xlu0 %348
        %350 = vrot.lane.b32.xlu0 %v302, 63
        %v351 = vpop.permute.xlu0 %350
        %352 = vrot.lane.b32.xlu0 %v312, 63
        %v353 = vpop.permute.xlu0 %352
        %v362 = vsel %vm278, %v315, %v339
        %v363 = vsel %vm278, %v317, %v341
        %v364 = vsel %vm278, %v319, %v343
        %v365 = vsel %vm278, %v321, %v345
        %v366 = vsel %vm278, %v323, %v347
        %v367 = vsel %vm278, %v325, %v349
        %v368 = vsel %vm278, %v327, %v351
        %v369 = vsel %vm278, %v329, %v353
        %s370 = sld [smem:[#allocation5]]
        %v371 = vstv %s370
        %v372 = vmul.f32 %v214, %v371
        %v373 = vmul.f32 %v215, %v371
        %v374 = vmul.f32 %v216, %v371
        %v375 = vmul.f32 %v217, %v371
        %v376 = vmul.f32 %v218, %v371
        %v377 = vmul.f32 %v219, %v371
        %v378 = vmul.f32 %v220, %v371
        %v379 = vmul.f32 %v221, %v371
        %s380 = sld [smem:[#allocation5 + $0x80]]
        %v381 = vstv %s380
        %v382 = vmul.f32 %v279, %v381
        %v383 = vmul.f32 %v280, %v381
        %v384 = vmul.f32 %v281, %v381
        %v385 = vmul.f32 %v282, %v381
        %v386 = vmul.f32 %v283, %v381
        %v387 = vmul.f32 %v284, %v381
        %v388 = vmul.f32 %v285, %v381
        %v389 = vmul.f32 %v286, %v381
        %v390 = vadd.f32 %v372, %v382
        %v391 = vadd.f32 %v373, %v383
        %v392 = vadd.f32 %v374, %v384
        %v393 = vadd.f32 %v375, %v385
        %v394 = vadd.f32 %v376, %v386
        %v395 = vadd.f32 %v377, %v387
        %v396 = vadd.f32 %v378, %v388
        %v397 = vadd.f32 %v379, %v389
        %s398 = sld [smem:[#allocation5 + $0x100]]
        %v399 = vstv %s398
        %v400 = vmul.f32 %v290, %v399
        %v401 = vmul.f32 %v292, %v399
        %v402 = vmul.f32 %v294, %v399
        %v403 = vmul.f32 %v296, %v399
        %v404 = vmul.f32 %v298, %v399
        %v405 = vmul.f32 %v300, %v399
        %v406 = vmul.f32 %v302, %v399
        %v407 = vmul.f32 %v312, %v399
        %v408 = vadd.f32 %v390, %v400
        %v409 = vadd.f32 %v391, %v401
        %v410 = vadd.f32 %v392, %v402
        %v411 = vadd.f32 %v393, %v403
        %v412 = vadd.f32 %v394, %v404
        %v413 = vadd.f32 %v395, %v405
        %v414 = vadd.f32 %v396, %v406
        %v415 = vadd.f32 %v397, %v407
        %s416 = sld [smem:[#allocation5 + $0x180]]
        %v417 = vstv %s416
        %v418 = vmul.f32 %v362, %v417
        %v419 = vmul.f32 %v363, %v417
        %v420 = vmul.f32 %v364, %v417
        %v421 = vmul.f32 %v365, %v417
        %v422 = vmul.f32 %v366, %v417
        %v423 = vmul.f32 %v367, %v417
        %v424 = vmul.f32 %v368, %v417
        %v425 = vmul.f32 %v369, %v417
        %v426 = vadd.f32 %v408, %v418
        %v427 = vadd.f32 %v409, %v419
        %v428 = vadd.f32 %v410, %v420
        %v429 = vadd.f32 %v411, %v421
        %v430 = vadd.f32 %v412, %v422
        %v431 = vadd.f32 %v413, %v423
        %v432 = vadd.f32 %v414, %v424
        %v433 = vadd.f32 %v415, %v425
        %s434 = sld [smem:[#allocation6]]
        %v435 = vstv %s434
        %v436 = vadd.f32 %v426, %v435
        %v437 = vadd.f32 %v427, %v435
        %v438 = vadd.f32 %v428, %v435
        %v439 = vadd.f32 %v429, %v435
        %v440 = vadd.f32 %v430, %v435
        %v441 = vadd.f32 %v431, %v435
        %v442 = vadd.f32 %v432, %v435
        %v443 = vadd.f32 %v433, %v435
        %v444 = vmax.f32 %v436, 0.0
        %v445 = vmax.f32 %v437, 0.0
        %v446 = vmax.f32 %v438, 0.0
        %v447 = vmax.f32 %v439, 0.0
        %v448 = vmax.f32 %v440, 0.0
        %v449 = vmax.f32 %v441, 0.0
        %v450 = vmax.f32 %v442, 0.0
        %v451 = vmax.f32 %v443, 0.0
        %vm452 = vcmask 523264
        %453 = vst.msk [vmem:[%s213] sm:$0xff] %vm452, %v444
        %454 = vst.msk [vmem:[%s213 + $0x8] sm:$0xff] %vm452, %v445
        %455 = vst.msk [vmem:[%s213 + $0x10] sm:$0xff] %vm452, %v446
        %456 = vst.msk [vmem:[%s213 + $0x18] sm:$0xff] %vm452, %v447
        %457 = vst.msk [vmem:[%s213 + $0x20] sm:$0xff] %vm452, %v448
        %458 = vst.msk [vmem:[%s213 + $0x28] sm:$0xff] %vm452, %v449
        %459 = vst.msk [vmem:[%s213 + $0x30] sm:$0xff] %vm452, %v450
        %460 = vst.msk [vmem:[%s213 + $0x38] sm:$0xff] %vm452, %v451
        %s461 = sld [smem:[#allocation5 + $0x1]]
        %v462 = vstv %s461
        %v463 = vmul.f32 %v214, %v462
        %v464 = vmul.f32 %v215, %v462
        %v465 = vmul.f32 %v216, %v462
        %v466 = vmul.f32 %v217, %v462
        %v467 = vmul.f32 %v218, %v462
        %v468 = vmul.f32 %v219, %v462
        %v469 = vmul.f32 %v220, %v462
        %v470 = vmul.f32 %v221, %v462
        %s471 = sld [smem:[#allocation5 + $0x81]]
        %v472 = vstv %s471
        %v473 = vmul.f32 %v279, %v472
        %v474 = vmul.f32 %v280, %v472
        %v475 = vmul.f32 %v281, %v472
        %v476 = vmul.f32 %v282, %v472
        %v477 = vmul.f32 %v283, %v472
        %v478 = vmul.f32 %v284, %v472
        %v479 = vmul.f32 %v285, %v472
        %v480 = vmul.f32 %v286, %v472
        %v481 = vadd.f32 %v463, %v473
        %v482 = vadd.f32 %v464, %v474
        %v483 = vadd.f32 %v465, %v475
        %v484 = vadd.f32 %v466, %v476
        %v485 = vadd.f32 %v467, %v477
        %v486 = vadd.f32 %v468, %v478
        %v487 = vadd.f32 %v469, %v479
        %v488 = vadd.f32 %v470, %v480
        %s489 = sld [smem:[#allocation5 + $0x101]]
        %v490 = vstv %s489
        %v491 = vmul.f32 %v290, %v490
        %v492 = vmul.f32 %v292, %v490
        %v493 = vmul.f32 %v294, %v490
        %v494 = vmul.f32 %v296, %v490
        %v495 = vmul.f32 %v298, %v490
        %v496 = vmul.f32 %v300, %v490
        %v497 = vmul.f32 %v302, %v490
        %v498 = vmul.f32 %v312, %v490
        %v499 = vadd.f32 %v481, %v491
        %v500 = vadd.f32 %v482, %v492
        %v501 = vadd.f32 %v483, %v493
        %v502 = vadd.f32 %v484, %v494
        %v503 = vadd.f32 %v485, %v495
        %v504 = vadd.f32 %v486, %v496
        %v505 = vadd.f32 %v487, %v497
        %v506 = vadd.f32 %v488, %v498
        %s507 = sld [smem:[#allocation5 + $0x181]]
        %v508 = vstv %s507
        %v509 = vmul.f32 %v362, %v508
        %v510 = vmul.f32 %v363, %v508
        %v511 = vmul.f32 %v364, %v508
        %v512 = vmul.f32 %v365, %v508
        %v513 = vmul.f32 %v366, %v508
        %v514 = vmul.f32 %v367, %v508
        %v515 = vmul.f32 %v368, %v508
        %v516 = vmul.f32 %v369, %v508
        %v517 = vadd.f32 %v499, %v509
        %v518 = vadd.f32 %v500, %v510
        %v519 = vadd.f32 %v501, %v511
        %v520 = vadd.f32 %v502, %v512
        %v521 = vadd.f32 %v503, %v513
        %v522 = vadd.f32 %v504, %v514
        %v523 = vadd.f32 %v505, %v515
        %v524 = vadd.f32 %v506, %v516
        %s525 = sld [smem:[#allocation6 + $0x1]]
        %v526 = vstv %s525
        %v527 = vadd.f32 %v517, %v526
        %v528 = vadd.f32 %v518, %v526
        %v529 = vadd.f32 %v519, %v526
        %v530 = vadd.f32 %v520, %v526
        %v531 = vadd.f32 %v521, %v526
        %v532 = vadd.f32 %v522, %v526
        %v533 = vadd.f32 %v523, %v526
        %v534 = vadd.f32 %v524, %v526
        %v535 = vmax.f32 %v527, 0.0
        %v536 = vmax.f32 %v528, 0.0
        %v537 = vmax.f32 %v529, 0.0
        %v538 = vmax.f32 %v530, 0.0
        %v539 = vmax.f32 %v531, 0.0
        %v540 = vmax.f32 %v532, 0.0
        %v541 = vmax.f32 %v533, 0.0
        %v542 = vmax.f32 %v534, 0.0
        %s543 = scalar_lea.vmem %s213, 64
        %544 = vst.msk [vmem:[%s543] sm:$0xff] %vm452, %v535
        %545 = vst.msk [vmem:[%s543 + $0x8] sm:$0xff] %vm452, %v536
        %546 = vst.msk [vmem:[%s543 + $0x10] sm:$0xff] %vm452, %v537
        %547 = vst.msk [vmem:[%s543 + $0x18] sm:$0xff] %vm452, %v538
        %548 = vst.msk [vmem:[%s543 + $0x20] sm:$0xff] %vm452, %v539
        %549 = vst.msk [vmem:[%s543 + $0x28] sm:$0xff] %vm452, %v540
        %550 = vst.msk [vmem:[%s543 + $0x30] sm:$0xff] %vm452, %v541
        %551 = vst.msk [vmem:[%s543 + $0x38] sm:$0xff] %vm452, %v542
        %s552 = sld [smem:[#allocation5 + $0x2]]
        %v553 = vstv %s552
        %v554 = vmul.f32 %v214, %v553
        %v555 = vmul.f32 %v215, %v553
        %v556 = vmul.f32 %v216, %v553
        %v557 = vmul.f32 %v217, %v553
        %v558 = vmul.f32 %v218, %v553
        %v559 = vmul.f32 %v219, %v553
        %v560 = vmul.f32 %v220, %v553
        %v561 = vmul.f32 %v221, %v553
        %s562 = sld [smem:[#allocation5 + $0x82]]
        %v563 = vstv %s562
        %v564 = vmul.f32 %v279, %v563
        %v565 = vmul.f32 %v280, %v563
        %v566 = vmul.f32 %v281, %v563
        %v567 = vmul.f32 %v282, %v563
        %v568 = vmul.f32 %v283, %v563
        %v569 = vmul.f32 %v284, %v563
        %v570 = vmul.f32 %v285, %v563
        %v571 = vmul.f32 %v286, %v563
        %v572 = vadd.f32 %v554, %v564
        %v573 = vadd.f32 %v555, %v565
        %v574 = vadd.f32 %v556, %v566
        %v575 = vadd.f32 %v557, %v567
        %v576 = vadd.f32 %v558, %v568
        %v577 = vadd.f32 %v559, %v569
        %v578 = vadd.f32 %v560, %v570
        %v579 = vadd.f32 %v561, %v571
        %s580 = sld [smem:[#allocation5 + $0x102]]
        %v581 = vstv %s580
        %v582 = vmul.f32 %v290, %v581
        %v583 = vmul.f32 %v292, %v581
        %v584 = vmul.f32 %v294, %v581
        %v585 = vmul.f32 %v296, %v581
        %v586 = vmul.f32 %v298, %v581
        %v587 = vmul.f32 %v300, %v581
        %v588 = vmul.f32 %v302, %v581
        %v589 = vmul.f32 %v312, %v581
        %v590 = vadd.f32 %v572, %v582
        %v591 = vadd.f32 %v573, %v583
        %v592 = vadd.f32 %v574, %v584
        %v593 = vadd.f32 %v575, %v585
        %v594 = vadd.f32 %v576, %v586
        %v595 = vadd.f32 %v577, %v587
        %v596 = vadd.f32 %v578, %v588
        %v597 = vadd.f32 %v579, %v589
        %s598 = sld [smem:[#allocation5 + $0x182]]
        %v599 = vstv %s598
        %v600 = vmul.f32 %v362, %v599
        %v601 = vmul.f32 %v363, %v599
        %v602 = vmul.f32 %v364, %v599
        %v603 = vmul.f32 %v365, %v599
        %v604 = vmul.f32 %v366, %v599
        %v605 = vmul.f32 %v367, %v599
        %v606 = vmul.f32 %v368, %v599
        %v607 = vmul.f32 %v369, %v599
        %v608 = vadd.f32 %v590, %v600
        %v609 = vadd.f32 %v591, %v601
        %v610 = vadd.f32 %v592, %v602
        %v611 = vadd.f32 %v593, %v603
        %v612 = vadd.f32 %v594, %v604
        %v613 = vadd.f32 %v595, %v605
        %v614 = vadd.f32 %v596, %v606
        %v615 = vadd.f32 %v597, %v607
        %s616 = sld [smem:[#allocation6 + $0x2]]
        %v617 = vstv %s616
        %v618 = vadd.f32 %v608, %v617
        %v619 = vadd.f32 %v609, %v617
        %v620 = vadd.f32 %v610, %v617
        %v621 = vadd.f32 %v611, %v617
        %v622 = vadd.f32 %v612, %v617
        %v623 = vadd.f32 %v613, %v617
        %v624 = vadd.f32 %v614, %v617
        %v625 = vadd.f32 %v615, %v617
        %v626 = vmax.f32 %v618, 0.0
        %v627 = vmax.f32 %v619, 0.0
        %v628 = vmax.f32 %v620, 0.0
        %v629 = vmax.f32 %v621, 0.0
        %v630 = vmax.f32 %v622, 0.0
        %v631 = vmax.f32 %v623, 0.0
        %v632 = vmax.f32 %v624, 0.0
        %v633 = vmax.f32 %v625, 0.0
        %s634 = scalar_lea.vmem %s213, 128
        %635 = vst.msk [vmem:[%s634] sm:$0xff] %vm452, %v626
        %636 = vst.msk [vmem:[%s634 + $0x8] sm:$0xff] %vm452, %v627
        %637 = vst.msk [vmem:[%s634 + $0x10] sm:$0xff] %vm452, %v628
        %638 = vst.msk [vmem:[%s634 + $0x18] sm:$0xff] %vm452, %v629
        %639 = vst.msk [vmem:[%s634 + $0x20] sm:$0xff] %vm452, %v630
        %640 = vst.msk [vmem:[%s634 + $0x28] sm:$0xff] %vm452, %v631
        %641 = vst.msk [vmem:[%s634 + $0x30] sm:$0xff] %vm452, %v632
        %642 = vst.msk [vmem:[%s634 + $0x38] sm:$0xff] %vm452, %v633
        %s643 = sld [smem:[#allocation5 + $0x3]]
        %v644 = vstv %s643
        %v645 = vmul.f32 %v214, %v644
        %v646 = vmul.f32 %v215, %v644
        %v647 = vmul.f32 %v216, %v644
        %v648 = vmul.f32 %v217, %v644
        %v649 = vmul.f32 %v218, %v644
        %v650 = vmul.f32 %v219, %v644
        %v651 = vmul.f32 %v220, %v644
        %v652 = vmul.f32 %v221, %v644
        %s653 = sld [smem:[#allocation5 + $0x83]]
        %v654 = vstv %s653
        %v655 = vmul.f32 %v279, %v654
        %v656 = vmul.f32 %v280, %v654
        %v657 = vmul.f32 %v281, %v654
        %v658 = vmul.f32 %v282, %v654
        %v659 = vmul.f32 %v283, %v654
        %v660 = vmul.f32 %v284, %v654
        %v661 = vmul.f32 %v285, %v654
        %v662 = vmul.f32 %v286, %v654
        %v663 = vadd.f32 %v645, %v655
        %v664 = vadd.f32 %v646, %v656
        %v665 = vadd.f32 %v647, %v657
        %v666 = vadd.f32 %v648, %v658
        %v667 = vadd.f32 %v649, %v659
        %v668 = vadd.f32 %v650, %v660
        %v669 = vadd.f32 %v651, %v661
        %v670 = vadd.f32 %v652, %v662
        %s671 = sld [smem:[#allocation5 + $0x103]]
        %v672 = vstv %s671
        %v673 = vmul.f32 %v290, %v672
        %v674 = vmul.f32 %v292, %v672
        %v675 = vmul.f32 %v294, %v672
        %v676 = vmul.f32 %v296, %v672
        %v677 = vmul.f32 %v298, %v672
        %v678 = vmul.f32 %v300, %v672
        %v679 = vmul.f32 %v302, %v672
        %v680 = vmul.f32 %v312, %v672
        %v681 = vadd.f32 %v663, %v673
        %v682 = vadd.f32 %v664, %v674
        %v683 = vadd.f32 %v665, %v675
        %v684 = vadd.f32 %v666, %v676
        %v685 = vadd.f32 %v667, %v677
        %v686 = vadd.f32 %v668, %v678
        %v687 = vadd.f32 %v669, %v679
        %v688 = vadd.f32 %v670, %v680
        %s689 = sld [smem:[#allocation5 + $0x183]]
        %v690 = vstv %s689
        %v691 = vmul.f32 %v362, %v690
        %v692 = vmul.f32 %v363, %v690
        %v693 = vmul.f32 %v364, %v690
        %v694 = vmul.f32 %v365, %v690
        %v695 = vmul.f32 %v366, %v690
        %v696 = vmul.f32 %v367, %v690
        %v697 = vmul.f32 %v368, %v690
        %v698 = vmul.f32 %v369, %v690
        %v699 = vadd.f32 %v681, %v691
        %v700 = vadd.f32 %v682, %v692
        %v701 = vadd.f32 %v683, %v693
        %v702 = vadd.f32 %v684, %v694
        %v703 = vadd.f32 %v685, %v695
        %v704 = vadd.f32 %v686, %v696
        %v705 = vadd.f32 %v687, %v697
        %v706 = vadd.f32 %v688, %v698
        %s707 = sld [smem:[#allocation6 + $0x3]]
        %v708 = vstv %s707
        %v709 = vadd.f32 %v699, %v708
        %v710 = vadd.f32 %v700, %v708
        %v711 = vadd.f32 %v701, %v708
        %v712 = vadd.f32 %v702, %v708
        %v713 = vadd.f32 %v703, %v708
        %v714 = vadd.f32 %v704, %v708
        %v715 = vadd.f32 %v705, %v708
        %v716 = vadd.f32 %v706, %v708
        %v717 = vmax.f32 %v709, 0.0
        %v718 = vmax.f32 %v710, 0.0
        %v719 = vmax.f32 %v711, 0.0
        %v720 = vmax.f32 %v712, 0.0
        %v721 = vmax.f32 %v713, 0.0
        %v722 = vmax.f32 %v714, 0.0
        %v723 = vmax.f32 %v715, 0.0
        %v724 = vmax.f32 %v716, 0.0
        %s725 = scalar_lea.vmem %s213, 192
        %726 = vst.msk [vmem:[%s725] sm:$0xff] %vm452, %v717
        %727 = vst.msk [vmem:[%s725 + $0x8] sm:$0xff] %vm452, %v718
        %728 = vst.msk [vmem:[%s725 + $0x10] sm:$0xff] %vm452, %v719
        %729 = vst.msk [vmem:[%s725 + $0x18] sm:$0xff] %vm452, %v720
        %730 = vst.msk [vmem:[%s725 + $0x20] sm:$0xff] %vm452, %v721
        %731 = vst.msk [vmem:[%s725 + $0x28] sm:$0xff] %vm452, %v722
        %732 = vst.msk [vmem:[%s725 + $0x30] sm:$0xff] %vm452, %v723
        %733 = vst.msk [vmem:[%s725 + $0x38] sm:$0xff] %vm452, %v724
        %s734 = sld [smem:[#allocation5 + $0x4]]
        %v735 = vstv %s734
        %v736 = vmul.f32 %v214, %v735
        %v737 = vmul.f32 %v215, %v735
        %v738 = vmul.f32 %v216, %v735
        %v739 = vmul.f32 %v217, %v735
        %v740 = vmul.f32 %v218, %v735
        %v741 = vmul.f32 %v219, %v735
        %v742 = vmul.f32 %v220, %v735
        %v743 = vmul.f32 %v221, %v735
        %s744 = sld [smem:[#allocation5 + $0x84]]
        %v745 = vstv %s744
        %v746 = vmul.f32 %v279, %v745
        %v747 = vmul.f32 %v280, %v745
        %v748 = vmul.f32 %v281, %v745
        %v749 = vmul.f32 %v282, %v745
        %v750 = vmul.f32 %v283, %v745
        %v751 = vmul.f32 %v284, %v745
        %v752 = vmul.f32 %v285, %v745
        %v753 = vmul.f32 %v286, %v745
        %v754 = vadd.f32 %v736, %v746
        %v755 = vadd.f32 %v737, %v747
        %v756 = vadd.f32 %v738, %v748
        %v757 = vadd.f32 %v739, %v749
        %v758 = vadd.f32 %v740, %v750
        %v759 = vadd.f32 %v741, %v751
        %v760 = vadd.f32 %v742, %v752
        %v761 = vadd.f32 %v743, %v753
        %s762 = sld [smem:[#allocation5 + $0x104]]
        %v763 = vstv %s762
        %v764 = vmul.f32 %v290, %v763
        %v765 = vmul.f32 %v292, %v763
        %v766 = vmul.f32 %v294, %v763
        %v767 = vmul.f32 %v296, %v763
        %v768 = vmul.f32 %v298, %v763
        %v769 = vmul.f32 %v300, %v763
        %v770 = vmul.f32 %v302, %v763
        %v771 = vmul.f32 %v312, %v763
        %v772 = vadd.f32 %v754, %v764
        %v773 = vadd.f32 %v755, %v765
        %v774 = vadd.f32 %v756, %v766
        %v775 = vadd.f32 %v757, %v767
        %v776 = vadd.f32 %v758, %v768
        %v777 = vadd.f32 %v759, %v769
        %v778 = vadd.f32 %v760, %v770
        %v779 = vadd.f32 %v761, %v771
        %s780 = sld [smem:[#allocation5 + $0x184]]
        %v781 = vstv %s780
        %v782 = vmul.f32 %v362, %v781
        %v783 = vmul.f32 %v363, %v781
        %v784 = vmul.f32 %v364, %v781
        %v785 = vmul.f32 %v365, %v781
        %v786 = vmul.f32 %v366, %v781
        %v787 = vmul.f32 %v367, %v781
        %v788 = vmul.f32 %v368, %v781
        %v789 = vmul.f32 %v369, %v781
        %v790 = vadd.f32 %v772, %v782
        %v791 = vadd.f32 %v773, %v783
        %v792 = vadd.f32 %v774, %v784
        %v793 = vadd.f32 %v775, %v785
        %v794 = vadd.f32 %v776, %v786
        %v795 = vadd.f32 %v777, %v787
        %v796 = vadd.f32 %v778, %v788
        %v797 = vadd.f32 %v779, %v789
        %s798 = sld [smem:[#allocation6 + $0x4]]
        %v799 = vstv %s798
        %v800 = vadd.f32 %v790, %v799
        %v801 = vadd.f32 %v791, %v799
        %v802 = vadd.f32 %v792, %v799
        %v803 = vadd.f32 %v793, %v799
        %v804 = vadd.f32 %v794, %v799
        %v805 = vadd.f32 %v795, %v799
        %v806 = vadd.f32 %v796, %v799
        %v807 = vadd.f32 %v797, %v799
        %v808 = vmax.f32 %v800, 0.0
        %v809 = vmax.f32 %v801, 0.0
        %v810 = vmax.f32 %v802, 0.0
        %v811 = vmax.f32 %v803, 0.0
        %v812 = vmax.f32 %v804, 0.0
        %v813 = vmax.f32 %v805, 0.0
        %v814 = vmax.f32 %v806, 0.0
        %v815 = vmax.f32 %v807, 0.0
        %s816 = scalar_lea.vmem %s213, 256
        %817 = vst.msk [vmem:[%s816] sm:$0xff] %vm452, %v808
        %818 = vst.msk [vmem:[%s816 + $0x8] sm:$0xff] %vm452, %v809
        %819 = vst.msk [vmem:[%s816 + $0x10] sm:$0xff] %vm452, %v810
        %820 = vst.msk [vmem:[%s816 + $0x18] sm:$0xff] %vm452, %v811
        %821 = vst.msk [vmem:[%s816 + $0x20] sm:$0xff] %vm452, %v812
        %822 = vst.msk [vmem:[%s816 + $0x28] sm:$0xff] %vm452, %v813
        %823 = vst.msk [vmem:[%s816 + $0x30] sm:$0xff] %vm452, %v814
        %824 = vst.msk [vmem:[%s816 + $0x38] sm:$0xff] %vm452, %v815
        %s825 = sld [smem:[#allocation5 + $0x5]]
        %v826 = vstv %s825
        %v827 = vmul.f32 %v214, %v826
        %v828 = vmul.f32 %v215, %v826
        %v829 = vmul.f32 %v216, %v826
        %v830 = vmul.f32 %v217, %v826
        %v831 = vmul.f32 %v218, %v826
        %v832 = vmul.f32 %v219, %v826
        %v833 = vmul.f32 %v220, %v826
        %v834 = vmul.f32 %v221, %v826
        %s835 = sld [smem:[#allocation5 + $0x85]]
        %v836 = vstv %s835
        %v837 = vmul.f32 %v279, %v836
        %v838 = vmul.f32 %v280, %v836
        %v839 = vmul.f32 %v281, %v836
        %v840 = vmul.f32 %v282, %v836
        %v841 = vmul.f32 %v283, %v836
        %v842 = vmul.f32 %v284, %v836
        %v843 = vmul.f32 %v285, %v836
        %v844 = vmul.f32 %v286, %v836
        %v845 = vadd.f32 %v827, %v837
        %v846 = vadd.f32 %v828, %v838
        %v847 = vadd.f32 %v829, %v839
        %v848 = vadd.f32 %v830, %v840
        %v849 = vadd.f32 %v831, %v841
        %v850 = vadd.f32 %v832, %v842
        %v851 = vadd.f32 %v833, %v843
        %v852 = vadd.f32 %v834, %v844
        %s853 = sld [smem:[#allocation5 + $0x105]]
        %v854 = vstv %s853
        %v855 = vmul.f32 %v290, %v854
        %v856 = vmul.f32 %v292, %v854
        %v857 = vmul.f32 %v294, %v854
        %v858 = vmul.f32 %v296, %v854
        %v859 = vmul.f32 %v298, %v854
        %v860 = vmul.f32 %v300, %v854
        %v861 = vmul.f32 %v302, %v854
        %v862 = vmul.f32 %v312, %v854
        %v863 = vadd.f32 %v845, %v855
        %v864 = vadd.f32 %v846, %v856
        %v865 = vadd.f32 %v847, %v857
        %v866 = vadd.f32 %v848, %v858
        %v867 = vadd.f32 %v849, %v859
        %v868 = vadd.f32 %v850, %v860
        %v869 = vadd.f32 %v851, %v861
        %v870 = vadd.f32 %v852, %v862
        %s871 = sld [smem:[#allocation5 + $0x185]]
        %v872 = vstv %s871
        %v873 = vmul.f32 %v362, %v872
        %v874 = vmul.f32 %v363, %v872
        %v875 = vmul.f32 %v364, %v872
        %v876 = vmul.f32 %v365, %v872
        %v877 = vmul.f32 %v366, %v872
        %v878 = vmul.f32 %v367, %v872
        %v879 = vmul.f32 %v368, %v872
        %v880 = vmul.f32 %v369, %v872
        %v881 = vadd.f32 %v863, %v873
        %v882 = vadd.f32 %v864, %v874
        %v883 = vadd.f32 %v865, %v875
        %v884 = vadd.f32 %v866, %v876
        %v885 = vadd.f32 %v867, %v877
        %v886 = vadd.f32 %v868, %v878
        %v887 = vadd.f32 %v869, %v879
        %v888 = vadd.f32 %v870, %v880
        %s889 = sld [smem:[#allocation6 + $0x5]]
        %v890 = vstv %s889
        %v891 = vadd.f32 %v881, %v890
        %v892 = vadd.f32 %v882, %v890
        %v893 = vadd.f32 %v883, %v890
        %v894 = vadd.f32 %v884, %v890
        %v895 = vadd.f32 %v885, %v890
        %v896 = vadd.f32 %v886, %v890
        %v897 = vadd.f32 %v887, %v890
        %v898 = vadd.f32 %v888, %v890
        %v899 = vmax.f32 %v891, 0.0
        %v900 = vmax.f32 %v892, 0.0
        %v901 = vmax.f32 %v893, 0.0
        %v902 = vmax.f32 %v894, 0.0
        %v903 = vmax.f32 %v895, 0.0
        %v904 = vmax.f32 %v896, 0.0
        %v905 = vmax.f32 %v897, 0.0
        %v906 = vmax.f32 %v898, 0.0
        %s907 = scalar_lea.vmem %s213, 320
        %908 = vst.msk [vmem:[%s907] sm:$0xff] %vm452, %v899
        %909 = vst.msk [vmem:[%s907 + $0x8] sm:$0xff] %vm452, %v900
        %910 = vst.msk [vmem:[%s907 + $0x10] sm:$0xff] %vm452, %v901
        %911 = vst.msk [vmem:[%s907 + $0x18] sm:$0xff] %vm452, %v902
        %912 = vst.msk [vmem:[%s907 + $0x20] sm:$0xff] %vm452, %v903
        %913 = vst.msk [vmem:[%s907 + $0x28] sm:$0xff] %vm452, %v904
        %914 = vst.msk [vmem:[%s907 + $0x30] sm:$0xff] %vm452, %v905
        %915 = vst.msk [vmem:[%s907 + $0x38] sm:$0xff] %vm452, %v906
        %s916 = sld [smem:[#allocation5 + $0x6]]
        %v917 = vstv %s916
        %v918 = vmul.f32 %v214, %v917
        %v919 = vmul.f32 %v215, %v917
        %v920 = vmul.f32 %v216, %v917
        %v921 = vmul.f32 %v217, %v917
        %v922 = vmul.f32 %v218, %v917
        %v923 = vmul.f32 %v219, %v917
        %v924 = vmul.f32 %v220, %v917
        %v925 = vmul.f32 %v221, %v917
        %s926 = sld [smem:[#allocation5 + $0x86]]
        %v927 = vstv %s926
        %v928 = vmul.f32 %v279, %v927
        %v929 = vmul.f32 %v280, %v927
        %v930 = vmul.f32 %v281, %v927
        %v931 = vmul.f32 %v282, %v927
        %v932 = vmul.f32 %v283, %v927
        %v933 = vmul.f32 %v284, %v927
        %v934 = vmul.f32 %v285, %v927
        %v935 = vmul.f32 %v286, %v927
        %v936 = vadd.f32 %v918, %v928
        %v937 = vadd.f32 %v919, %v929
        %v938 = vadd.f32 %v920, %v930
        %v939 = vadd.f32 %v921, %v931
        %v940 = vadd.f32 %v922, %v932
        %v941 = vadd.f32 %v923, %v933
        %v942 = vadd.f32 %v924, %v934
        %v943 = vadd.f32 %v925, %v935
        %s944 = sld [smem:[#allocation5 + $0x106]]
        %v945 = vstv %s944
        %v946 = vmul.f32 %v290, %v945
        %v947 = vmul.f32 %v292, %v945
        %v948 = vmul.f32 %v294, %v945
        %v949 = vmul.f32 %v296, %v945
        %v950 = vmul.f32 %v298, %v945
        %v951 = vmul.f32 %v300, %v945
        %v952 = vmul.f32 %v302, %v945
        %v953 = vmul.f32 %v312, %v945
        %v954 = vadd.f32 %v936, %v946
        %v955 = vadd.f32 %v937, %v947
        %v956 = vadd.f32 %v938, %v948
        %v957 = vadd.f32 %v939, %v949
        %v958 = vadd.f32 %v940, %v950
        %v959 = vadd.f32 %v941, %v951
        %v960 = vadd.f32 %v942, %v952
        %v961 = vadd.f32 %v943, %v953
        %s962 = sld [smem:[#allocation5 + $0x186]]
        %v963 = vstv %s962
        %v964 = vmul.f32 %v362, %v963
        %v965 = vmul.f32 %v363, %v963
        %v966 = vmul.f32 %v364, %v963
        %v967 = vmul.f32 %v365, %v963
        %v968 = vmul.f32 %v366, %v963
        %v969 = vmul.f32 %v367, %v963
        %v970 = vmul.f32 %v368, %v963
        %v971 = vmul.f32 %v369, %v963
        %v972 = vadd.f32 %v954, %v964
        %v973 = vadd.f32 %v955, %v965
        %v974 = vadd.f32 %v956, %v966
        %v975 = vadd.f32 %v957, %v967
        %v976 = vadd.f32 %v958, %v968
        %v977 = vadd.f32 %v959, %v969
        %v978 = vadd.f32 %v960, %v970
        %v979 = vadd.f32 %v961, %v971
        %s980 = sld [smem:[#allocation6 + $0x6]]
        %v981 = vstv %s980
        %v982 = vadd.f32 %v972, %v981
        %v983 = vadd.f32 %v973, %v981
        %v984 = vadd.f32 %v974, %v981
        %v985 = vadd.f32 %v975, %v981
        %v986 = vadd.f32 %v976, %v981
        %v987 = vadd.f32 %v977, %v981
        %v988 = vadd.f32 %v978, %v981
        %v989 = vadd.f32 %v979, %v981
        %v990 = vmax.f32 %v982, 0.0
        %v991 = vmax.f32 %v983, 0.0
        %v992 = vmax.f32 %v984, 0.0
        %v993 = vmax.f32 %v985, 0.0
        %v994 = vmax.f32 %v986, 0.0
        %v995 = vmax.f32 %v987, 0.0
        %v996 = vmax.f32 %v988, 0.0
        %v997 = vmax.f32 %v989, 0.0
        %s998 = scalar_lea.vmem %s213, 384
        %999 = vst.msk [vmem:[%s998] sm:$0xff] %vm452, %v990
        %1000 = vst.msk [vmem:[%s998 + $0x8] sm:$0xff] %vm452, %v991
        %1001 = vst.msk [vmem:[%s998 + $0x10] sm:$0xff] %vm452, %v992
        %1002 = vst.msk [vmem:[%s998 + $0x18] sm:$0xff] %vm452, %v993
        %1003 = vst.msk [vmem:[%s998 + $0x20] sm:$0xff] %vm452, %v994
        %1004 = vst.msk [vmem:[%s998 + $0x28] sm:$0xff] %vm452, %v995
        %1005 = vst.msk [vmem:[%s998 + $0x30] sm:$0xff] %vm452, %v996
        %1006 = vst.msk [vmem:[%s998 + $0x38] sm:$0xff] %vm452, %v997
        %s1007 = sld [smem:[#allocation5 + $0x7]]
        %v1008 = vstv %s1007
        %v1009 = vmul.f32 %v214, %v1008
        %v1010 = vmul.f32 %v215, %v1008
        %v1011 = vmul.f32 %v216, %v1008
        %v1012 = vmul.f32 %v217, %v1008
        %v1013 = vmul.f32 %v218, %v1008
        %v1014 = vmul.f32 %v219, %v1008
        %v1015 = vmul.f32 %v220, %v1008
        %v1016 = vmul.f32 %v221, %v1008
        %s1017 = sld [smem:[#allocation5 + $0x87]]
        %v1018 = vstv %s1017
        %v1019 = vmul.f32 %v279, %v1018
        %v1020 = vmul.f32 %v280, %v1018
        %v1021 = vmul.f32 %v281, %v1018
        %v1022 = vmul.f32 %v282, %v1018
        %v1023 = vmul.f32 %v283, %v1018
        %v1024 = vmul.f32 %v284, %v1018
        %v1025 = vmul.f32 %v285, %v1018
        %v1026 = vmul.f32 %v286, %v1018
        %v1027 = vadd.f32 %v1009, %v1019
        %v1028 = vadd.f32 %v1010, %v1020
        %v1029 = vadd.f32 %v1011, %v1021
        %v1030 = vadd.f32 %v1012, %v1022
        %v1031 = vadd.f32 %v1013, %v1023
        %v1032 = vadd.f32 %v1014, %v1024
        %v1033 = vadd.f32 %v1015, %v1025
        %v1034 = vadd.f32 %v1016, %v1026
        %s1035 = sld [smem:[#allocation5 + $0x107]]
        %v1036 = vstv %s1035
        %v1037 = vmul.f32 %v290, %v1036
        %v1038 = vmul.f32 %v292, %v1036
        %v1039 = vmul.f32 %v294, %v1036
        %v1040 = vmul.f32 %v296, %v1036
        %v1041 = vmul.f32 %v298, %v1036
        %v1042 = vmul.f32 %v300, %v1036
        %v1043 = vmul.f32 %v302, %v1036
        %v1044 = vmul.f32 %v312, %v1036
        %v1045 = vadd.f32 %v1027, %v1037
        %v1046 = vadd.f32 %v1028, %v1038
        %v1047 = vadd.f32 %v1029, %v1039
        %v1048 = vadd.f32 %v1030, %v1040
        %v1049 = vadd.f32 %v1031, %v1041
        %v1050 = vadd.f32 %v1032, %v1042
        %v1051 = vadd.f32 %v1033, %v1043
        %v1052 = vadd.f32 %v1034, %v1044
        %s1053 = sld [smem:[#allocation5 + $0x187]]
        %v1054 = vstv %s1053
        %v1055 = vmul.f32 %v362, %v1054
        %v1056 = vmul.f32 %v363, %v1054
        %v1057 = vmul.f32 %v364, %v1054
        %v1058 = vmul.f32 %v365, %v1054
        %v1059 = vmul.f32 %v366, %v1054
        %v1060 = vmul.f32 %v367, %v1054
        %v1061 = vmul.f32 %v368, %v1054
        %v1062 = vmul.f32 %v369, %v1054
        %v1063 = vadd.f32 %v1045, %v1055
        %v1064 = vadd.f32 %v1046, %v1056
        %v1065 = vadd.f32 %v1047, %v1057
        %v1066 = vadd.f32 %v1048, %v1058
        %v1067 = vadd.f32 %v1049, %v1059
        %v1068 = vadd.f32 %v1050, %v1060
        %v1069 = vadd.f32 %v1051, %v1061
        %v1070 = vadd.f32 %v1052, %v1062
        %s1071 = sld [smem:[#allocation6 + $0x7]]
        %v1072 = vstv %s1071
        %v1073 = vadd.f32 %v1063, %v1072
        %v1074 = vadd.f32 %v1064, %v1072
        %v1075 = vadd.f32 %v1065, %v1072
        %v1076 = vadd.f32 %v1066, %v1072
        %v1077 = vadd.f32 %v1067, %v1072
        %v1078 = vadd.f32 %v1068, %v1072
        %v1079 = vadd.f32 %v1069, %v1072
        %v1080 = vadd.f32 %v1070, %v1072
        %v1081 = vmax.f32 %v1073, 0.0
        %v1082 = vmax.f32 %v1074, 0.0
        %v1083 = vmax.f32 %v1075, 0.0
        %v1084 = vmax.f32 %v1076, 0.0
        %v1085 = vmax.f32 %v1077, 0.0
        %v1086 = vmax.f32 %v1078, 0.0
        %v1087 = vmax.f32 %v1079, 0.0
        %v1088 = vmax.f32 %v1080, 0.0
        %s1089 = scalar_lea.vmem %s213, 448
        %1090 = vst.msk [vmem:[%s1089] sm:$0xff] %vm452, %v1081
        %1091 = vst.msk [vmem:[%s1089 + $0x8] sm:$0xff] %vm452, %v1082
        %1092 = vst.msk [vmem:[%s1089 + $0x10] sm:$0xff] %vm452, %v1083
        %1093 = vst.msk [vmem:[%s1089 + $0x18] sm:$0xff] %vm452, %v1084
        %1094 = vst.msk [vmem:[%s1089 + $0x20] sm:$0xff] %vm452, %v1085
        %1095 = vst.msk [vmem:[%s1089 + $0x28] sm:$0xff] %vm452, %v1086
        %1096 = vst.msk [vmem:[%s1089 + $0x30] sm:$0xff] %vm452, %v1087
        %1097 = vst.msk [vmem:[%s1089 + $0x38] sm:$0xff] %vm452, %v1088
        %s1098 = sld [smem:[#allocation5 + $0x8]]
        %v1099 = vstv %s1098
        %v1100 = vmul.f32 %v214, %v1099
        %v1101 = vmul.f32 %v215, %v1099
        %v1102 = vmul.f32 %v216, %v1099
        %v1103 = vmul.f32 %v217, %v1099
        %v1104 = vmul.f32 %v218, %v1099
        %v1105 = vmul.f32 %v219, %v1099
        %v1106 = vmul.f32 %v220, %v1099
        %v1107 = vmul.f32 %v221, %v1099
        %s1108 = sld [smem:[#allocation5 + $0x88]]
        %v1109 = vstv %s1108
        %v1110 = vmul.f32 %v279, %v1109
        %v1111 = vmul.f32 %v280, %v1109
        %v1112 = vmul.f32 %v281, %v1109
        %v1113 = vmul.f32 %v282, %v1109
        %v1114 = vmul.f32 %v283, %v1109
        %v1115 = vmul.f32 %v284, %v1109
        %v1116 = vmul.f32 %v285, %v1109
        %v1117 = vmul.f32 %v286, %v1109
        %v1118 = vadd.f32 %v1100, %v1110
        %v1119 = vadd.f32 %v1101, %v1111
        %v1120 = vadd.f32 %v1102, %v1112
        %v1121 = vadd.f32 %v1103, %v1113
        %v1122 = vadd.f32 %v1104, %v1114
        %v1123 = vadd.f32 %v1105, %v1115
        %v1124 = vadd.f32 %v1106, %v1116
        %v1125 = vadd.f32 %v1107, %v1117
        %s1126 = sld [smem:[#allocation5 + $0x108]]
        %v1127 = vstv %s1126
        %v1128 = vmul.f32 %v290, %v1127
        %v1129 = vmul.f32 %v292, %v1127
        %v1130 = vmul.f32 %v294, %v1127
        %v1131 = vmul.f32 %v296, %v1127
        %v1132 = vmul.f32 %v298, %v1127
        %v1133 = vmul.f32 %v300, %v1127
        %v1134 = vmul.f32 %v302, %v1127
        %v1135 = vmul.f32 %v312, %v1127
        %v1136 = vadd.f32 %v1118, %v1128
        %v1137 = vadd.f32 %v1119, %v1129
        %v1138 = vadd.f32 %v1120, %v1130
        %v1139 = vadd.f32 %v1121, %v1131
        %v1140 = vadd.f32 %v1122, %v1132
        %v1141 = vadd.f32 %v1123, %v1133
        %v1142 = vadd.f32 %v1124, %v1134
        %v1143 = vadd.f32 %v1125, %v1135
        %s1144 = sld [smem:[#allocation5 + $0x188]]
        %v1145 = vstv %s1144
        %v1146 = vmul.f32 %v362, %v1145
        %v1147 = vmul.f32 %v363, %v1145
        %v1148 = vmul.f32 %v364, %v1145
        %v1149 = vmul.f32 %v365, %v1145
        %v1150 = vmul.f32 %v366, %v1145
        %v1151 = vmul.f32 %v367, %v1145
        %v1152 = vmul.f32 %v368, %v1145
        %v1153 = vmul.f32 %v369, %v1145
        %v1154 = vadd.f32 %v1136, %v1146
        %v1155 = vadd.f32 %v1137, %v1147
        %v1156 = vadd.f32 %v1138, %v1148
        %v1157 = vadd.f32 %v1139, %v1149
        %v1158 = vadd.f32 %v1140, %v1150
        %v1159 = vadd.f32 %v1141, %v1151
        %v1160 = vadd.f32 %v1142, %v1152
        %v1161 = vadd.f32 %v1143, %v1153
        %s1162 = sld [smem:[#allocation6 + $0x8]]
        %v1163 = vstv %s1162
        %v1164 = vadd.f32 %v1154, %v1163
        %v1165 = vadd.f32 %v1155, %v1163
        %v1166 = vadd.f32 %v1156, %v1163
        %v1167 = vadd.f32 %v1157, %v1163
        %v1168 = vadd.f32 %v1158, %v1163
        %v1169 = vadd.f32 %v1159, %v1163
        %v1170 = vadd.f32 %v1160, %v1163
        %v1171 = vadd.f32 %v1161, %v1163
        %v1172 = vmax.f32 %v1164, 0.0
        %v1173 = vmax.f32 %v1165, 0.0
        %v1174 = vmax.f32 %v1166, 0.0
        %v1175 = vmax.f32 %v1167, 0.0
        %v1176 = vmax.f32 %v1168, 0.0
        %v1177 = vmax.f32 %v1169, 0.0
        %v1178 = vmax.f32 %v1170, 0.0
        %v1179 = vmax.f32 %v1171, 0.0
        %s1180 = scalar_lea.vmem %s213, 512
        %1181 = vst.msk [vmem:[%s1180] sm:$0xff] %vm452, %v1172
        %1182 = vst.msk [vmem:[%s1180 + $0x8] sm:$0xff] %vm452, %v1173
        %1183 = vst.msk [vmem:[%s1180 + $0x10] sm:$0xff] %vm452, %v1174
        %1184 = vst.msk [vmem:[%s1180 + $0x18] sm:$0xff] %vm452, %v1175
        %1185 = vst.msk [vmem:[%s1180 + $0x20] sm:$0xff] %vm452, %v1176
        %1186 = vst.msk [vmem:[%s1180 + $0x28] sm:$0xff] %vm452, %v1177
        %1187 = vst.msk [vmem:[%s1180 + $0x30] sm:$0xff] %vm452, %v1178
        %1188 = vst.msk [vmem:[%s1180 + $0x38] sm:$0xff] %vm452, %v1179
        %s1189 = sld [smem:[#allocation5 + $0x9]]
        %v1190 = vstv %s1189
        %v1191 = vmul.f32 %v214, %v1190
        %v1192 = vmul.f32 %v215, %v1190
        %v1193 = vmul.f32 %v216, %v1190
        %v1194 = vmul.f32 %v217, %v1190
        %v1195 = vmul.f32 %v218, %v1190
        %v1196 = vmul.f32 %v219, %v1190
        %v1197 = vmul.f32 %v220, %v1190
        %v1198 = vmul.f32 %v221, %v1190
        %s1199 = sld [smem:[#allocation5 + $0x89]]
        %v1200 = vstv %s1199
        %v1201 = vmul.f32 %v279, %v1200
        %v1202 = vmul.f32 %v280, %v1200
        %v1203 = vmul.f32 %v281, %v1200
        %v1204 = vmul.f32 %v282, %v1200
        %v1205 = vmul.f32 %v283, %v1200
        %v1206 = vmul.f32 %v284, %v1200
        %v1207 = vmul.f32 %v285, %v1200
        %v1208 = vmul.f32 %v286, %v1200
        %v1209 = vadd.f32 %v1191, %v1201
        %v1210 = vadd.f32 %v1192, %v1202
        %v1211 = vadd.f32 %v1193, %v1203
        %v1212 = vadd.f32 %v1194, %v1204
        %v1213 = vadd.f32 %v1195, %v1205
        %v1214 = vadd.f32 %v1196, %v1206
        %v1215 = vadd.f32 %v1197, %v1207
        %v1216 = vadd.f32 %v1198, %v1208
        %s1217 = sld [smem:[#allocation5 + $0x109]]
        %v1218 = vstv %s1217
        %v1219 = vmul.f32 %v290, %v1218
        %v1220 = vmul.f32 %v292, %v1218
        %v1221 = vmul.f32 %v294, %v1218
        %v1222 = vmul.f32 %v296, %v1218
        %v1223 = vmul.f32 %v298, %v1218
        %v1224 = vmul.f32 %v300, %v1218
        %v1225 = vmul.f32 %v302, %v1218
        %v1226 = vmul.f32 %v312, %v1218
        %v1227 = vadd.f32 %v1209, %v1219
        %v1228 = vadd.f32 %v1210, %v1220
        %v1229 = vadd.f32 %v1211, %v1221
        %v1230 = vadd.f32 %v1212, %v1222
        %v1231 = vadd.f32 %v1213, %v1223
        %v1232 = vadd.f32 %v1214, %v1224
        %v1233 = vadd.f32 %v1215, %v1225
        %v1234 = vadd.f32 %v1216, %v1226
        %s1235 = sld [smem:[#allocation5 + $0x189]]
        %v1236 = vstv %s1235
        %v1237 = vmul.f32 %v362, %v1236
        %v1238 = vmul.f32 %v363, %v1236
        %v1239 = vmul.f32 %v364, %v1236
        %v1240 = vmul.f32 %v365, %v1236
        %v1241 = vmul.f32 %v366, %v1236
        %v1242 = vmul.f32 %v367, %v1236
        %v1243 = vmul.f32 %v368, %v1236
        %v1244 = vmul.f32 %v369, %v1236
        %v1245 = vadd.f32 %v1227, %v1237
        %v1246 = vadd.f32 %v1228, %v1238
        %v1247 = vadd.f32 %v1229, %v1239
        %v1248 = vadd.f32 %v1230, %v1240
        %v1249 = vadd.f32 %v1231, %v1241
        %v1250 = vadd.f32 %v1232, %v1242
        %v1251 = vadd.f32 %v1233, %v1243
        %v1252 = vadd.f32 %v1234, %v1244
        %s1253 = sld [smem:[#allocation6 + $0x9]]
        %v1254 = vstv %s1253
        %v1255 = vadd.f32 %v1245, %v1254
        %v1256 = vadd.f32 %v1246, %v1254
        %v1257 = vadd.f32 %v1247, %v1254
        %v1258 = vadd.f32 %v1248, %v1254
        %v1259 = vadd.f32 %v1249, %v1254
        %v1260 = vadd.f32 %v1250, %v1254
        %v1261 = vadd.f32 %v1251, %v1254
        %v1262 = vadd.f32 %v1252, %v1254
        %v1263 = vmax.f32 %v1255, 0.0
        %v1264 = vmax.f32 %v1256, 0.0
        %v1265 = vmax.f32 %v1257, 0.0
        %v1266 = vmax.f32 %v1258, 0.0
        %v1267 = vmax.f32 %v1259, 0.0
        %v1268 = vmax.f32 %v1260, 0.0
        %v1269 = vmax.f32 %v1261, 0.0
        %v1270 = vmax.f32 %v1262, 0.0
        %s1271 = scalar_lea.vmem %s213, 576
        %1272 = vst.msk [vmem:[%s1271] sm:$0xff] %vm452, %v1263
        %1273 = vst.msk [vmem:[%s1271 + $0x8] sm:$0xff] %vm452, %v1264
        %1274 = vst.msk [vmem:[%s1271 + $0x10] sm:$0xff] %vm452, %v1265
        %1275 = vst.msk [vmem:[%s1271 + $0x18] sm:$0xff] %vm452, %v1266
        %1276 = vst.msk [vmem:[%s1271 + $0x20] sm:$0xff] %vm452, %v1267
        %1277 = vst.msk [vmem:[%s1271 + $0x28] sm:$0xff] %vm452, %v1268
        %1278 = vst.msk [vmem:[%s1271 + $0x30] sm:$0xff] %vm452, %v1269
        %1279 = vst.msk [vmem:[%s1271 + $0x38] sm:$0xff] %vm452, %v1270
        %s1280 = sld [smem:[#allocation5 + $0xa]]
        %v1281 = vstv %s1280
        %v1282 = vmul.f32 %v214, %v1281
        %v1283 = vmul.f32 %v215, %v1281
        %v1284 = vmul.f32 %v216, %v1281
        %v1285 = vmul.f32 %v217, %v1281
        %v1286 = vmul.f32 %v218, %v1281
        %v1287 = vmul.f32 %v219, %v1281
        %v1288 = vmul.f32 %v220, %v1281
        %v1289 = vmul.f32 %v221, %v1281
        %s1290 = sld [smem:[#allocation5 + $0x8a]]
        %v1291 = vstv %s1290
        %v1292 = vmul.f32 %v279, %v1291
        %v1293 = vmul.f32 %v280, %v1291
        %v1294 = vmul.f32 %v281, %v1291
        %v1295 = vmul.f32 %v282, %v1291
        %v1296 = vmul.f32 %v283, %v1291
        %v1297 = vmul.f32 %v284, %v1291
        %v1298 = vmul.f32 %v285, %v1291
        %v1299 = vmul.f32 %v286, %v1291
        %v1300 = vadd.f32 %v1282, %v1292
        %v1301 = vadd.f32 %v1283, %v1293
        %v1302 = vadd.f32 %v1284, %v1294
        %v1303 = vadd.f32 %v1285, %v1295
        %v1304 = vadd.f32 %v1286, %v1296
        %v1305 = vadd.f32 %v1287, %v1297
        %v1306 = vadd.f32 %v1288, %v1298
        %v1307 = vadd.f32 %v1289, %v1299
        %s1308 = sld [smem:[#allocation5 + $0x10a]]
        %v1309 = vstv %s1308
        %v1310 = vmul.f32 %v290, %v1309
        %v1311 = vmul.f32 %v292, %v1309
        %v1312 = vmul.f32 %v294, %v1309
        %v1313 = vmul.f32 %v296, %v1309
        %v1314 = vmul.f32 %v298, %v1309
        %v1315 = vmul.f32 %v300, %v1309
        %v1316 = vmul.f32 %v302, %v1309
        %v1317 = vmul.f32 %v312, %v1309
        %v1318 = vadd.f32 %v1300, %v1310
        %v1319 = vadd.f32 %v1301, %v1311
        %v1320 = vadd.f32 %v1302, %v1312
        %v1321 = vadd.f32 %v1303, %v1313
        %v1322 = vadd.f32 %v1304, %v1314
        %v1323 = vadd.f32 %v1305, %v1315
        %v1324 = vadd.f32 %v1306, %v1316
        %v1325 = vadd.f32 %v1307, %v1317
        %s1326 = sld [smem:[#allocation5 + $0x18a]]
        %v1327 = vstv %s1326
        %v1328 = vmul.f32 %v362, %v1327
        %v1329 = vmul.f32 %v363, %v1327
        %v1330 = vmul.f32 %v364, %v1327
        %v1331 = vmul.f32 %v365, %v1327
        %v1332 = vmul.f32 %v366, %v1327
        %v1333 = vmul.f32 %v367, %v1327
        %v1334 = vmul.f32 %v368, %v1327
        %v1335 = vmul.f32 %v369, %v1327
        %v1336 = vadd.f32 %v1318, %v1328
        %v1337 = vadd.f32 %v1319, %v1329
        %v1338 = vadd.f32 %v1320, %v1330
        %v1339 = vadd.f32 %v1321, %v1331
        %v1340 = vadd.f32 %v1322, %v1332
        %v1341 = vadd.f32 %v1323, %v1333
        %v1342 = vadd.f32 %v1324, %v1334
        %v1343 = vadd.f32 %v1325, %v1335
        %s1344 = sld [smem:[#allocation6 + $0xa]]
        %v1345 = vstv %s1344
        %v1346 = vadd.f32 %v1336, %v1345
        %v1347 = vadd.f32 %v1337, %v1345
        %v1348 = vadd.f32 %v1338, %v1345
        %v1349 = vadd.f32 %v1339, %v1345
        %v1350 = vadd.f32 %v1340, %v1345
        %v1351 = vadd.f32 %v1341, %v1345
        %v1352 = vadd.f32 %v1342, %v1345
        %v1353 = vadd.f32 %v1343, %v1345
        %v1354 = vmax.f32 %v1346, 0.0
        %v1355 = vmax.f32 %v1347, 0.0
        %v1356 = vmax.f32 %v1348, 0.0
        %v1357 = vmax.f32 %v1349, 0.0
        %v1358 = vmax.f32 %v1350, 0.0
        %v1359 = vmax.f32 %v1351, 0.0
        %v1360 = vmax.f32 %v1352, 0.0
        %v1361 = vmax.f32 %v1353, 0.0
        %s1362 = scalar_lea.vmem %s213, 640
        %1363 = vst.msk [vmem:[%s1362] sm:$0xff] %vm452, %v1354
        %1364 = vst.msk [vmem:[%s1362 + $0x8] sm:$0xff] %vm452, %v1355
        %1365 = vst.msk [vmem:[%s1362 + $0x10] sm:$0xff] %vm452, %v1356
        %1366 = vst.msk [vmem:[%s1362 + $0x18] sm:$0xff] %vm452, %v1357
        %1367 = vst.msk [vmem:[%s1362 + $0x20] sm:$0xff] %vm452, %v1358
        %1368 = vst.msk [vmem:[%s1362 + $0x28] sm:$0xff] %vm452, %v1359
        %1369 = vst.msk [vmem:[%s1362 + $0x30] sm:$0xff] %vm452, %v1360
        %1370 = vst.msk [vmem:[%s1362 + $0x38] sm:$0xff] %vm452, %v1361
        %s1371 = sld [smem:[#allocation5 + $0xb]]
        %v1372 = vstv %s1371
        %v1373 = vmul.f32 %v214, %v1372
        %v1374 = vmul.f32 %v215, %v1372
        %v1375 = vmul.f32 %v216, %v1372
        %v1376 = vmul.f32 %v217, %v1372
        %v1377 = vmul.f32 %v218, %v1372
        %v1378 = vmul.f32 %v219, %v1372
        %v1379 = vmul.f32 %v220, %v1372
        %v1380 = vmul.f32 %v221, %v1372
        %s1381 = sld [smem:[#allocation5 + $0x8b]]
        %v1382 = vstv %s1381
        %v1383 = vmul.f32 %v279, %v1382
        %v1384 = vmul.f32 %v280, %v1382
        %v1385 = vmul.f32 %v281, %v1382
        %v1386 = vmul.f32 %v282, %v1382
        %v1387 = vmul.f32 %v283, %v1382
        %v1388 = vmul.f32 %v284, %v1382
        %v1389 = vmul.f32 %v285, %v1382
        %v1390 = vmul.f32 %v286, %v1382
        %v1391 = vadd.f32 %v1373, %v1383
        %v1392 = vadd.f32 %v1374, %v1384
        %v1393 = vadd.f32 %v1375, %v1385
        %v1394 = vadd.f32 %v1376, %v1386
        %v1395 = vadd.f32 %v1377, %v1387
        %v1396 = vadd.f32 %v1378, %v1388
        %v1397 = vadd.f32 %v1379, %v1389
        %v1398 = vadd.f32 %v1380, %v1390
        %s1399 = sld [smem:[#allocation5 + $0x10b]]
        %v1400 = vstv %s1399
        %v1401 = vmul.f32 %v290, %v1400
        %v1402 = vmul.f32 %v292, %v1400
        %v1403 = vmul.f32 %v294, %v1400
        %v1404 = vmul.f32 %v296, %v1400
        %v1405 = vmul.f32 %v298, %v1400
        %v1406 = vmul.f32 %v300, %v1400
        %v1407 = vmul.f32 %v302, %v1400
        %v1408 = vmul.f32 %v312, %v1400
        %v1409 = vadd.f32 %v1391, %v1401
        %v1410 = vadd.f32 %v1392, %v1402
        %v1411 = vadd.f32 %v1393, %v1403
        %v1412 = vadd.f32 %v1394, %v1404
        %v1413 = vadd.f32 %v1395, %v1405
        %v1414 = vadd.f32 %v1396, %v1406
        %v1415 = vadd.f32 %v1397, %v1407
        %v1416 = vadd.f32 %v1398, %v1408
        %s1417 = sld [smem:[#allocation5 + $0x18b]]
        %v1418 = vstv %s1417
        %v1419 = vmul.f32 %v362, %v1418
        %v1420 = vmul.f32 %v363, %v1418
        %v1421 = vmul.f32 %v364, %v1418
        %v1422 = vmul.f32 %v365, %v1418
        %v1423 = vmul.f32 %v366, %v1418
        %v1424 = vmul.f32 %v367, %v1418
        %v1425 = vmul.f32 %v368, %v1418
        %v1426 = vmul.f32 %v369, %v1418
        %v1427 = vadd.f32 %v1409, %v1419
        %v1428 = vadd.f32 %v1410, %v1420
        %v1429 = vadd.f32 %v1411, %v1421
        %v1430 = vadd.f32 %v1412, %v1422
        %v1431 = vadd.f32 %v1413, %v1423
        %v1432 = vadd.f32 %v1414, %v1424
        %v1433 = vadd.f32 %v1415, %v1425
        %v1434 = vadd.f32 %v1416, %v1426
        %s1435 = sld [smem:[#allocation6 + $0xb]]
        %v1436 = vstv %s1435
        %v1437 = vadd.f32 %v1427, %v1436
        %v1438 = vadd.f32 %v1428, %v1436
        %v1439 = vadd.f32 %v1429, %v1436
        %v1440 = vadd.f32 %v1430, %v1436
        %v1441 = vadd.f32 %v1431, %v1436
        %v1442 = vadd.f32 %v1432, %v1436
        %v1443 = vadd.f32 %v1433, %v1436
        %v1444 = vadd.f32 %v1434, %v1436
        %v1445 = vmax.f32 %v1437, 0.0
        %v1446 = vmax.f32 %v1438, 0.0
        %v1447 = vmax.f32 %v1439, 0.0
        %v1448 = vmax.f32 %v1440, 0.0
        %v1449 = vmax.f32 %v1441, 0.0
        %v1450 = vmax.f32 %v1442, 0.0
        %v1451 = vmax.f32 %v1443, 0.0
        %v1452 = vmax.f32 %v1444, 0.0
        %s1453 = scalar_lea.vmem %s213, 704
        %1454 = vst.msk [vmem:[%s1453] sm:$0xff] %vm452, %v1445
        %1455 = vst.msk [vmem:[%s1453 + $0x8] sm:$0xff] %vm452, %v1446
        %1456 = vst.msk [vmem:[%s1453 + $0x10] sm:$0xff] %vm452, %v1447
        %1457 = vst.msk [vmem:[%s1453 + $0x18] sm:$0xff] %vm452, %v1448
        %1458 = vst.msk [vmem:[%s1453 + $0x20] sm:$0xff] %vm452, %v1449
        %1459 = vst.msk [vmem:[%s1453 + $0x28] sm:$0xff] %vm452, %v1450
        %1460 = vst.msk [vmem:[%s1453 + $0x30] sm:$0xff] %vm452, %v1451
        %1461 = vst.msk [vmem:[%s1453 + $0x38] sm:$0xff] %vm452, %v1452
        %s1462 = sld [smem:[#allocation5 + $0xc]]
        %v1463 = vstv %s1462
        %v1464 = vmul.f32 %v214, %v1463
        %v1465 = vmul.f32 %v215, %v1463
        %v1466 = vmul.f32 %v216, %v1463
        %v1467 = vmul.f32 %v217, %v1463
        %v1468 = vmul.f32 %v218, %v1463
        %v1469 = vmul.f32 %v219, %v1463
        %v1470 = vmul.f32 %v220, %v1463
        %v1471 = vmul.f32 %v221, %v1463
        %s1472 = sld [smem:[#allocation5 + $0x8c]]
        %v1473 = vstv %s1472
        %v1474 = vmul.f32 %v279, %v1473
        %v1475 = vmul.f32 %v280, %v1473
        %v1476 = vmul.f32 %v281, %v1473
        %v1477 = vmul.f32 %v282, %v1473
        %v1478 = vmul.f32 %v283, %v1473
        %v1479 = vmul.f32 %v284, %v1473
        %v1480 = vmul.f32 %v285, %v1473
        %v1481 = vmul.f32 %v286, %v1473
        %v1482 = vadd.f32 %v1464, %v1474
        %v1483 = vadd.f32 %v1465, %v1475
        %v1484 = vadd.f32 %v1466, %v1476
        %v1485 = vadd.f32 %v1467, %v1477
        %v1486 = vadd.f32 %v1468, %v1478
        %v1487 = vadd.f32 %v1469, %v1479
        %v1488 = vadd.f32 %v1470, %v1480
        %v1489 = vadd.f32 %v1471, %v1481
        %s1490 = sld [smem:[#allocation5 + $0x10c]]
        %v1491 = vstv %s1490
        %v1492 = vmul.f32 %v290, %v1491
        %v1493 = vmul.f32 %v292, %v1491
        %v1494 = vmul.f32 %v294, %v1491
        %v1495 = vmul.f32 %v296, %v1491
        %v1496 = vmul.f32 %v298, %v1491
        %v1497 = vmul.f32 %v300, %v1491
        %v1498 = vmul.f32 %v302, %v1491
        %v1499 = vmul.f32 %v312, %v1491
        %v1500 = vadd.f32 %v1482, %v1492
        %v1501 = vadd.f32 %v1483, %v1493
        %v1502 = vadd.f32 %v1484, %v1494
        %v1503 = vadd.f32 %v1485, %v1495
        %v1504 = vadd.f32 %v1486, %v1496
        %v1505 = vadd.f32 %v1487, %v1497
        %v1506 = vadd.f32 %v1488, %v1498
        %v1507 = vadd.f32 %v1489, %v1499
        %s1508 = sld [smem:[#allocation5 + $0x18c]]
        %v1509 = vstv %s1508
        %v1510 = vmul.f32 %v362, %v1509
        %v1511 = vmul.f32 %v363, %v1509
        %v1512 = vmul.f32 %v364, %v1509
        %v1513 = vmul.f32 %v365, %v1509
        %v1514 = vmul.f32 %v366, %v1509
        %v1515 = vmul.f32 %v367, %v1509
        %v1516 = vmul.f32 %v368, %v1509
        %v1517 = vmul.f32 %v369, %v1509
        %v1518 = vadd.f32 %v1500, %v1510
        %v1519 = vadd.f32 %v1501, %v1511
        %v1520 = vadd.f32 %v1502, %v1512
        %v1521 = vadd.f32 %v1503, %v1513
        %v1522 = vadd.f32 %v1504, %v1514
        %v1523 = vadd.f32 %v1505, %v1515
        %v1524 = vadd.f32 %v1506, %v1516
        %v1525 = vadd.f32 %v1507, %v1517
        %s1526 = sld [smem:[#allocation6 + $0xc]]
        %v1527 = vstv %s1526
        %v1528 = vadd.f32 %v1518, %v1527
        %v1529 = vadd.f32 %v1519, %v1527
        %v1530 = vadd.f32 %v1520, %v1527
        %v1531 = vadd.f32 %v1521, %v1527
        %v1532 = vadd.f32 %v1522, %v1527
        %v1533 = vadd.f32 %v1523, %v1527
        %v1534 = vadd.f32 %v1524, %v1527
        %v1535 = vadd.f32 %v1525, %v1527
        %v1536 = vmax.f32 %v1528, 0.0
        %v1537 = vmax.f32 %v1529, 0.0
        %v1538 = vmax.f32 %v1530, 0.0
        %v1539 = vmax.f32 %v1531, 0.0
        %v1540 = vmax.f32 %v1532, 0.0
        %v1541 = vmax.f32 %v1533, 0.0
        %v1542 = vmax.f32 %v1534, 0.0
        %v1543 = vmax.f32 %v1535, 0.0
        %s1544 = scalar_lea.vmem %s213, 768
        %1545 = vst.msk [vmem:[%s1544] sm:$0xff] %vm452, %v1536
        %1546 = vst.msk [vmem:[%s1544 + $0x8] sm:$0xff] %vm452, %v1537
        %1547 = vst.msk [vmem:[%s1544 + $0x10] sm:$0xff] %vm452, %v1538
        %1548 = vst.msk [vmem:[%s1544 + $0x18] sm:$0xff] %vm452, %v1539
        %1549 = vst.msk [vmem:[%s1544 + $0x20] sm:$0xff] %vm452, %v1540
        %1550 = vst.msk [vmem:[%s1544 + $0x28] sm:$0xff] %vm452, %v1541
        %1551 = vst.msk [vmem:[%s1544 + $0x30] sm:$0xff] %vm452, %v1542
        %1552 = vst.msk [vmem:[%s1544 + $0x38] sm:$0xff] %vm452, %v1543
        %s1553 = sld [smem:[#allocation5 + $0xd]]
        %v1554 = vstv %s1553
        %v1555 = vmul.f32 %v214, %v1554
        %v1556 = vmul.f32 %v215, %v1554
        %v1557 = vmul.f32 %v216, %v1554
        %v1558 = vmul.f32 %v217, %v1554
        %v1559 = vmul.f32 %v218, %v1554
        %v1560 = vmul.f32 %v219, %v1554
        %v1561 = vmul.f32 %v220, %v1554
        %v1562 = vmul.f32 %v221, %v1554
        %s1563 = sld [smem:[#allocation5 + $0x8d]]
        %v1564 = vstv %s1563
        %v1565 = vmul.f32 %v279, %v1564
        %v1566 = vmul.f32 %v280, %v1564
        %v1567 = vmul.f32 %v281, %v1564
        %v1568 = vmul.f32 %v282, %v1564
        %v1569 = vmul.f32 %v283, %v1564
        %v1570 = vmul.f32 %v284, %v1564
        %v1571 = vmul.f32 %v285, %v1564
        %v1572 = vmul.f32 %v286, %v1564
        %v1573 = vadd.f32 %v1555, %v1565
        %v1574 = vadd.f32 %v1556, %v1566
        %v1575 = vadd.f32 %v1557, %v1567
        %v1576 = vadd.f32 %v1558, %v1568
        %v1577 = vadd.f32 %v1559, %v1569
        %v1578 = vadd.f32 %v1560, %v1570
        %v1579 = vadd.f32 %v1561, %v1571
        %v1580 = vadd.f32 %v1562, %v1572
        %s1581 = sld [smem:[#allocation5 + $0x10d]]
        %v1582 = vstv %s1581
        %v1583 = vmul.f32 %v290, %v1582
        %v1584 = vmul.f32 %v292, %v1582
        %v1585 = vmul.f32 %v294, %v1582
        %v1586 = vmul.f32 %v296, %v1582
        %v1587 = vmul.f32 %v298, %v1582
        %v1588 = vmul.f32 %v300, %v1582
        %v1589 = vmul.f32 %v302, %v1582
        %v1590 = vmul.f32 %v312, %v1582
        %v1591 = vadd.f32 %v1573, %v1583
        %v1592 = vadd.f32 %v1574, %v1584
        %v1593 = vadd.f32 %v1575, %v1585
        %v1594 = vadd.f32 %v1576, %v1586
        %v1595 = vadd.f32 %v1577, %v1587
        %v1596 = vadd.f32 %v1578, %v1588
        %v1597 = vadd.f32 %v1579, %v1589
        %v1598 = vadd.f32 %v1580, %v1590
        %s1599 = sld [smem:[#allocation5 + $0x18d]]
        %v1600 = vstv %s1599
        %v1601 = vmul.f32 %v362, %v1600
        %v1602 = vmul.f32 %v363, %v1600
        %v1603 = vmul.f32 %v364, %v1600
        %v1604 = vmul.f32 %v365, %v1600
        %v1605 = vmul.f32 %v366, %v1600
        %v1606 = vmul.f32 %v367, %v1600
        %v1607 = vmul.f32 %v368, %v1600
        %v1608 = vmul.f32 %v369, %v1600
        %v1609 = vadd.f32 %v1591, %v1601
        %v1610 = vadd.f32 %v1592, %v1602
        %v1611 = vadd.f32 %v1593, %v1603
        %v1612 = vadd.f32 %v1594, %v1604
        %v1613 = vadd.f32 %v1595, %v1605
        %v1614 = vadd.f32 %v1596, %v1606
        %v1615 = vadd.f32 %v1597, %v1607
        %v1616 = vadd.f32 %v1598, %v1608
        %s1617 = sld [smem:[#allocation6 + $0xd]]
        %v1618 = vstv %s1617
        %v1619 = vadd.f32 %v1609, %v1618
        %v1620 = vadd.f32 %v1610, %v1618
        %v1621 = vadd.f32 %v1611, %v1618
        %v1622 = vadd.f32 %v1612, %v1618
        %v1623 = vadd.f32 %v1613, %v1618
        %v1624 = vadd.f32 %v1614, %v1618
        %v1625 = vadd.f32 %v1615, %v1618
        %v1626 = vadd.f32 %v1616, %v1618
        %v1627 = vmax.f32 %v1619, 0.0
        %v1628 = vmax.f32 %v1620, 0.0
        %v1629 = vmax.f32 %v1621, 0.0
        %v1630 = vmax.f32 %v1622, 0.0
        %v1631 = vmax.f32 %v1623, 0.0
        %v1632 = vmax.f32 %v1624, 0.0
        %v1633 = vmax.f32 %v1625, 0.0
        %v1634 = vmax.f32 %v1626, 0.0
        %s1635 = scalar_lea.vmem %s213, 832
        %1636 = vst.msk [vmem:[%s1635] sm:$0xff] %vm452, %v1627
        %1637 = vst.msk [vmem:[%s1635 + $0x8] sm:$0xff] %vm452, %v1628
        %1638 = vst.msk [vmem:[%s1635 + $0x10] sm:$0xff] %vm452, %v1629
        %1639 = vst.msk [vmem:[%s1635 + $0x18] sm:$0xff] %vm452, %v1630
        %1640 = vst.msk [vmem:[%s1635 + $0x20] sm:$0xff] %vm452, %v1631
        %1641 = vst.msk [vmem:[%s1635 + $0x28] sm:$0xff] %vm452, %v1632
        %1642 = vst.msk [vmem:[%s1635 + $0x30] sm:$0xff] %vm452, %v1633
        %1643 = vst.msk [vmem:[%s1635 + $0x38] sm:$0xff] %vm452, %v1634
        %s1644 = sld [smem:[#allocation5 + $0xe]]
        %v1645 = vstv %s1644
        %v1646 = vmul.f32 %v214, %v1645
        %v1647 = vmul.f32 %v215, %v1645
        %v1648 = vmul.f32 %v216, %v1645
        %v1649 = vmul.f32 %v217, %v1645
        %v1650 = vmul.f32 %v218, %v1645
        %v1651 = vmul.f32 %v219, %v1645
        %v1652 = vmul.f32 %v220, %v1645
        %v1653 = vmul.f32 %v221, %v1645
        %s1654 = sld [smem:[#allocation5 + $0x8e]]
        %v1655 = vstv %s1654
        %v1656 = vmul.f32 %v279, %v1655
        %v1657 = vmul.f32 %v280, %v1655
        %v1658 = vmul.f32 %v281, %v1655
        %v1659 = vmul.f32 %v282, %v1655
        %v1660 = vmul.f32 %v283, %v1655
        %v1661 = vmul.f32 %v284, %v1655
        %v1662 = vmul.f32 %v285, %v1655
        %v1663 = vmul.f32 %v286, %v1655
        %v1664 = vadd.f32 %v1646, %v1656
        %v1665 = vadd.f32 %v1647, %v1657
        %v1666 = vadd.f32 %v1648, %v1658
        %v1667 = vadd.f32 %v1649, %v1659
        %v1668 = vadd.f32 %v1650, %v1660
        %v1669 = vadd.f32 %v1651, %v1661
        %v1670 = vadd.f32 %v1652, %v1662
        %v1671 = vadd.f32 %v1653, %v1663
        %s1672 = sld [smem:[#allocation5 + $0x10e]]
        %v1673 = vstv %s1672
        %v1674 = vmul.f32 %v290, %v1673
        %v1675 = vmul.f32 %v292, %v1673
        %v1676 = vmul.f32 %v294, %v1673
        %v1677 = vmul.f32 %v296, %v1673
        %v1678 = vmul.f32 %v298, %v1673
        %v1679 = vmul.f32 %v300, %v1673
        %v1680 = vmul.f32 %v302, %v1673
        %v1681 = vmul.f32 %v312, %v1673
        %v1682 = vadd.f32 %v1664, %v1674
        %v1683 = vadd.f32 %v1665, %v1675
        %v1684 = vadd.f32 %v1666, %v1676
        %v1685 = vadd.f32 %v1667, %v1677
        %v1686 = vadd.f32 %v1668, %v1678
        %v1687 = vadd.f32 %v1669, %v1679
        %v1688 = vadd.f32 %v1670, %v1680
        %v1689 = vadd.f32 %v1671, %v1681
        %s1690 = sld [smem:[#allocation5 + $0x18e]]
        %v1691 = vstv %s1690
        %v1692 = vmul.f32 %v362, %v1691
        %v1693 = vmul.f32 %v363, %v1691
        %v1694 = vmul.f32 %v364, %v1691
        %v1695 = vmul.f32 %v365, %v1691
        %v1696 = vmul.f32 %v366, %v1691
        %v1697 = vmul.f32 %v367, %v1691
        %v1698 = vmul.f32 %v368, %v1691
        %v1699 = vmul.f32 %v369, %v1691
        %v1700 = vadd.f32 %v1682, %v1692
        %v1701 = vadd.f32 %v1683, %v1693
        %v1702 = vadd.f32 %v1684, %v1694
        %v1703 = vadd.f32 %v1685, %v1695
        %v1704 = vadd.f32 %v1686, %v1696
        %v1705 = vadd.f32 %v1687, %v1697
        %v1706 = vadd.f32 %v1688, %v1698
        %v1707 = vadd.f32 %v1689, %v1699
        %s1708 = sld [smem:[#allocation6 + $0xe]]
        %v1709 = vstv %s1708
        %v1710 = vadd.f32 %v1700, %v1709
        %v1711 = vadd.f32 %v1701, %v1709
        %v1712 = vadd.f32 %v1702, %v1709
        %v1713 = vadd.f32 %v1703, %v1709
        %v1714 = vadd.f32 %v1704, %v1709
        %v1715 = vadd.f32 %v1705, %v1709
        %v1716 = vadd.f32 %v1706, %v1709
        %v1717 = vadd.f32 %v1707, %v1709
        %v1718 = vmax.f32 %v1710, 0.0
        %v1719 = vmax.f32 %v1711, 0.0
        %v1720 = vmax.f32 %v1712, 0.0
        %v1721 = vmax.f32 %v1713, 0.0
        %v1722 = vmax.f32 %v1714, 0.0
        %v1723 = vmax.f32 %v1715, 0.0
        %v1724 = vmax.f32 %v1716, 0.0
        %v1725 = vmax.f32 %v1717, 0.0
        %s1726 = scalar_lea.vmem %s213, 896
        %1727 = vst.msk [vmem:[%s1726] sm:$0xff] %vm452, %v1718
        %1728 = vst.msk [vmem:[%s1726 + $0x8] sm:$0xff] %vm452, %v1719
        %1729 = vst.msk [vmem:[%s1726 + $0x10] sm:$0xff] %vm452, %v1720
        %1730 = vst.msk [vmem:[%s1726 + $0x18] sm:$0xff] %vm452, %v1721
        %1731 = vst.msk [vmem:[%s1726 + $0x20] sm:$0xff] %vm452, %v1722
        %1732 = vst.msk [vmem:[%s1726 + $0x28] sm:$0xff] %vm452, %v1723
        %1733 = vst.msk [vmem:[%s1726 + $0x30] sm:$0xff] %vm452, %v1724
        %1734 = vst.msk [vmem:[%s1726 + $0x38] sm:$0xff] %vm452, %v1725
        %s1735 = sld [smem:[#allocation5 + $0xf]]
        %v1736 = vstv %s1735
        %v1737 = vmul.f32 %v214, %v1736
        %v1738 = vmul.f32 %v215, %v1736
        %v1739 = vmul.f32 %v216, %v1736
        %v1740 = vmul.f32 %v217, %v1736
        %v1741 = vmul.f32 %v218, %v1736
        %v1742 = vmul.f32 %v219, %v1736
        %v1743 = vmul.f32 %v220, %v1736
        %v1744 = vmul.f32 %v221, %v1736
        %s1745 = sld [smem:[#allocation5 + $0x8f]]
        %v1746 = vstv %s1745
        %v1747 = vmul.f32 %v279, %v1746
        %v1748 = vmul.f32 %v280, %v1746
        %v1749 = vmul.f32 %v281, %v1746
        %v1750 = vmul.f32 %v282, %v1746
        %v1751 = vmul.f32 %v283, %v1746
        %v1752 = vmul.f32 %v284, %v1746
        %v1753 = vmul.f32 %v285, %v1746
        %v1754 = vmul.f32 %v286, %v1746
        %v1755 = vadd.f32 %v1737, %v1747
        %v1756 = vadd.f32 %v1738, %v1748
        %v1757 = vadd.f32 %v1739, %v1749
        %v1758 = vadd.f32 %v1740, %v1750
        %v1759 = vadd.f32 %v1741, %v1751
        %v1760 = vadd.f32 %v1742, %v1752
        %v1761 = vadd.f32 %v1743, %v1753
        %v1762 = vadd.f32 %v1744, %v1754
        %s1763 = sld [smem:[#allocation5 + $0x10f]]
        %v1764 = vstv %s1763
        %v1765 = vmul.f32 %v290, %v1764
        %v1766 = vmul.f32 %v292, %v1764
        %v1767 = vmul.f32 %v294, %v1764
        %v1768 = vmul.f32 %v296, %v1764
        %v1769 = vmul.f32 %v298, %v1764
        %v1770 = vmul.f32 %v300, %v1764
        %v1771 = vmul.f32 %v302, %v1764
        %v1772 = vmul.f32 %v312, %v1764
        %v1773 = vadd.f32 %v1755, %v1765
        %v1774 = vadd.f32 %v1756, %v1766
        %v1775 = vadd.f32 %v1757, %v1767
        %v1776 = vadd.f32 %v1758, %v1768
        %v1777 = vadd.f32 %v1759, %v1769
        %v1778 = vadd.f32 %v1760, %v1770
        %v1779 = vadd.f32 %v1761, %v1771
        %v1780 = vadd.f32 %v1762, %v1772
        %s1781 = sld [smem:[#allocation5 + $0x18f]]
        %v1782 = vstv %s1781
        %v1783 = vmul.f32 %v362, %v1782
        %v1784 = vmul.f32 %v363, %v1782
        %v1785 = vmul.f32 %v364, %v1782
        %v1786 = vmul.f32 %v365, %v1782
        %v1787 = vmul.f32 %v366, %v1782
        %v1788 = vmul.f32 %v367, %v1782
        %v1789 = vmul.f32 %v368, %v1782
        %v1790 = vmul.f32 %v369, %v1782
        %v1791 = vadd.f32 %v1773, %v1783
        %v1792 = vadd.f32 %v1774, %v1784
        %v1793 = vadd.f32 %v1775, %v1785
        %v1794 = vadd.f32 %v1776, %v1786
        %v1795 = vadd.f32 %v1777, %v1787
        %v1796 = vadd.f32 %v1778, %v1788
        %v1797 = vadd.f32 %v1779, %v1789
        %v1798 = vadd.f32 %v1780, %v1790
        %s1799 = sld [smem:[#allocation6 + $0xf]]
        %v1800 = vstv %s1799
        %v1801 = vadd.f32 %v1791, %v1800
        %v1802 = vadd.f32 %v1792, %v1800
        %v1803 = vadd.f32 %v1793, %v1800
        %v1804 = vadd.f32 %v1794, %v1800
        %v1805 = vadd.f32 %v1795, %v1800
        %v1806 = vadd.f32 %v1796, %v1800
        %v1807 = vadd.f32 %v1797, %v1800
        %v1808 = vadd.f32 %v1798, %v1800
        %v1809 = vmax.f32 %v1801, 0.0
        %v1810 = vmax.f32 %v1802, 0.0
        %v1811 = vmax.f32 %v1803, 0.0
        %v1812 = vmax.f32 %v1804, 0.0
        %v1813 = vmax.f32 %v1805, 0.0
        %v1814 = vmax.f32 %v1806, 0.0
        %v1815 = vmax.f32 %v1807, 0.0
        %v1816 = vmax.f32 %v1808, 0.0
        %s1817 = scalar_lea.vmem %s213, 960
        %1818 = vst.msk [vmem:[%s1817] sm:$0xff] %vm452, %v1809
        %1819 = vst.msk [vmem:[%s1817 + $0x8] sm:$0xff] %vm452, %v1810
        %1820 = vst.msk [vmem:[%s1817 + $0x10] sm:$0xff] %vm452, %v1811
        %1821 = vst.msk [vmem:[%s1817 + $0x18] sm:$0xff] %vm452, %v1812
        %1822 = vst.msk [vmem:[%s1817 + $0x20] sm:$0xff] %vm452, %v1813
        %1823 = vst.msk [vmem:[%s1817 + $0x28] sm:$0xff] %vm452, %v1814
        %1824 = vst.msk [vmem:[%s1817 + $0x30] sm:$0xff] %vm452, %v1815
        %1825 = vst.msk [vmem:[%s1817 + $0x38] sm:$0xff] %vm452, %v1816
        %s1826 = sld [smem:[#allocation5 + $0x10]]
        %v1827 = vstv %s1826
        %v1828 = vmul.f32 %v214, %v1827
        %v1829 = vmul.f32 %v215, %v1827
        %v1830 = vmul.f32 %v216, %v1827
        %v1831 = vmul.f32 %v217, %v1827
        %v1832 = vmul.f32 %v218, %v1827
        %v1833 = vmul.f32 %v219, %v1827
        %v1834 = vmul.f32 %v220, %v1827
        %v1835 = vmul.f32 %v221, %v1827
        %s1836 = sld [smem:[#allocation5 + $0x90]]
        %v1837 = vstv %s1836
        %v1838 = vmul.f32 %v279, %v1837
        %v1839 = vmul.f32 %v280, %v1837
        %v1840 = vmul.f32 %v281, %v1837
        %v1841 = vmul.f32 %v282, %v1837
        %v1842 = vmul.f32 %v283, %v1837
        %v1843 = vmul.f32 %v284, %v1837
        %v1844 = vmul.f32 %v285, %v1837
        %v1845 = vmul.f32 %v286, %v1837
        %v1846 = vadd.f32 %v1828, %v1838
        %v1847 = vadd.f32 %v1829, %v1839
        %v1848 = vadd.f32 %v1830, %v1840
        %v1849 = vadd.f32 %v1831, %v1841
        %v1850 = vadd.f32 %v1832, %v1842
        %v1851 = vadd.f32 %v1833, %v1843
        %v1852 = vadd.f32 %v1834, %v1844
        %v1853 = vadd.f32 %v1835, %v1845
        %s1854 = sld [smem:[#allocation5 + $0x110]]
        %v1855 = vstv %s1854
        %v1856 = vmul.f32 %v290, %v1855
        %v1857 = vmul.f32 %v292, %v1855
        %v1858 = vmul.f32 %v294, %v1855
        %v1859 = vmul.f32 %v296, %v1855
        %v1860 = vmul.f32 %v298, %v1855
        %v1861 = vmul.f32 %v300, %v1855
        %v1862 = vmul.f32 %v302, %v1855
        %v1863 = vmul.f32 %v312, %v1855
        %v1864 = vadd.f32 %v1846, %v1856
        %v1865 = vadd.f32 %v1847, %v1857
        %v1866 = vadd.f32 %v1848, %v1858
        %v1867 = vadd.f32 %v1849, %v1859
        %v1868 = vadd.f32 %v1850, %v1860
        %v1869 = vadd.f32 %v1851, %v1861
        %v1870 = vadd.f32 %v1852, %v1862
        %v1871 = vadd.f32 %v1853, %v1863
        %s1872 = sld [smem:[#allocation5 + $0x190]]
        %v1873 = vstv %s1872
        %v1874 = vmul.f32 %v362, %v1873
        %v1875 = vmul.f32 %v363, %v1873
        %v1876 = vmul.f32 %v364, %v1873
        %v1877 = vmul.f32 %v365, %v1873
        %v1878 = vmul.f32 %v366, %v1873
        %v1879 = vmul.f32 %v367, %v1873
        %v1880 = vmul.f32 %v368, %v1873
        %v1881 = vmul.f32 %v369, %v1873
        %v1882 = vadd.f32 %v1864, %v1874
        %v1883 = vadd.f32 %v1865, %v1875
        %v1884 = vadd.f32 %v1866, %v1876
        %v1885 = vadd.f32 %v1867, %v1877
        %v1886 = vadd.f32 %v1868, %v1878
        %v1887 = vadd.f32 %v1869, %v1879
        %v1888 = vadd.f32 %v1870, %v1880
        %v1889 = vadd.f32 %v1871, %v1881
        %s1890 = sld [smem:[#allocation6 + $0x10]]
        %v1891 = vstv %s1890
        %v1892 = vadd.f32 %v1882, %v1891
        %v1893 = vadd.f32 %v1883, %v1891
        %v1894 = vadd.f32 %v1884, %v1891
        %v1895 = vadd.f32 %v1885, %v1891
        %v1896 = vadd.f32 %v1886, %v1891
        %v1897 = vadd.f32 %v1887, %v1891
        %v1898 = vadd.f32 %v1888, %v1891
        %v1899 = vadd.f32 %v1889, %v1891
        %v1900 = vmax.f32 %v1892, 0.0
        %v1901 = vmax.f32 %v1893, 0.0
        %v1902 = vmax.f32 %v1894, 0.0
        %v1903 = vmax.f32 %v1895, 0.0
        %v1904 = vmax.f32 %v1896, 0.0
        %v1905 = vmax.f32 %v1897, 0.0
        %v1906 = vmax.f32 %v1898, 0.0
        %v1907 = vmax.f32 %v1899, 0.0
        %s1908 = scalar_lea.vmem %s213, 1024
        %1909 = vst.msk [vmem:[%s1908] sm:$0xff] %vm452, %v1900
        %1910 = vst.msk [vmem:[%s1908 + $0x8] sm:$0xff] %vm452, %v1901
        %1911 = vst.msk [vmem:[%s1908 + $0x10] sm:$0xff] %vm452, %v1902
        %1912 = vst.msk [vmem:[%s1908 + $0x18] sm:$0xff] %vm452, %v1903
        %1913 = vst.msk [vmem:[%s1908 + $0x20] sm:$0xff] %vm452, %v1904
        %1914 = vst.msk [vmem:[%s1908 + $0x28] sm:$0xff] %vm452, %v1905
        %1915 = vst.msk [vmem:[%s1908 + $0x30] sm:$0xff] %vm452, %v1906
        %1916 = vst.msk [vmem:[%s1908 + $0x38] sm:$0xff] %vm452, %v1907
        %s1917 = sld [smem:[#allocation5 + $0x11]]
        %v1918 = vstv %s1917
        %v1919 = vmul.f32 %v214, %v1918
        %v1920 = vmul.f32 %v215, %v1918
        %v1921 = vmul.f32 %v216, %v1918
        %v1922 = vmul.f32 %v217, %v1918
        %v1923 = vmul.f32 %v218, %v1918
        %v1924 = vmul.f32 %v219, %v1918
        %v1925 = vmul.f32 %v220, %v1918
        %v1926 = vmul.f32 %v221, %v1918
        %s1927 = sld [smem:[#allocation5 + $0x91]]
        %v1928 = vstv %s1927
        %v1929 = vmul.f32 %v279, %v1928
        %v1930 = vmul.f32 %v280, %v1928
        %v1931 = vmul.f32 %v281, %v1928
        %v1932 = vmul.f32 %v282, %v1928
        %v1933 = vmul.f32 %v283, %v1928
        %v1934 = vmul.f32 %v284, %v1928
        %v1935 = vmul.f32 %v285, %v1928
        %v1936 = vmul.f32 %v286, %v1928
        %v1937 = vadd.f32 %v1919, %v1929
        %v1938 = vadd.f32 %v1920, %v1930
        %v1939 = vadd.f32 %v1921, %v1931
        %v1940 = vadd.f32 %v1922, %v1932
        %v1941 = vadd.f32 %v1923, %v1933
        %v1942 = vadd.f32 %v1924, %v1934
        %v1943 = vadd.f32 %v1925, %v1935
        %v1944 = vadd.f32 %v1926, %v1936
        %s1945 = sld [smem:[#allocation5 + $0x111]]
        %v1946 = vstv %s1945
        %v1947 = vmul.f32 %v290, %v1946
        %v1948 = vmul.f32 %v292, %v1946
        %v1949 = vmul.f32 %v294, %v1946
        %v1950 = vmul.f32 %v296, %v1946
        %v1951 = vmul.f32 %v298, %v1946
        %v1952 = vmul.f32 %v300, %v1946
        %v1953 = vmul.f32 %v302, %v1946
        %v1954 = vmul.f32 %v312, %v1946
        %v1955 = vadd.f32 %v1937, %v1947
        %v1956 = vadd.f32 %v1938, %v1948
        %v1957 = vadd.f32 %v1939, %v1949
        %v1958 = vadd.f32 %v1940, %v1950
        %v1959 = vadd.f32 %v1941, %v1951
        %v1960 = vadd.f32 %v1942, %v1952
        %v1961 = vadd.f32 %v1943, %v1953
        %v1962 = vadd.f32 %v1944, %v1954
        %s1963 = sld [smem:[#allocation5 + $0x191]]
        %v1964 = vstv %s1963
        %v1965 = vmul.f32 %v362, %v1964
        %v1966 = vmul.f32 %v363, %v1964
        %v1967 = vmul.f32 %v364, %v1964
        %v1968 = vmul.f32 %v365, %v1964
        %v1969 = vmul.f32 %v366, %v1964
        %v1970 = vmul.f32 %v367, %v1964
        %v1971 = vmul.f32 %v368, %v1964
        %v1972 = vmul.f32 %v369, %v1964
        %v1973 = vadd.f32 %v1955, %v1965
        %v1974 = vadd.f32 %v1956, %v1966
        %v1975 = vadd.f32 %v1957, %v1967
        %v1976 = vadd.f32 %v1958, %v1968
        %v1977 = vadd.f32 %v1959, %v1969
        %v1978 = vadd.f32 %v1960, %v1970
        %v1979 = vadd.f32 %v1961, %v1971
        %v1980 = vadd.f32 %v1962, %v1972
        %s1981 = sld [smem:[#allocation6 + $0x11]]
        %v1982 = vstv %s1981
        %v1983 = vadd.f32 %v1973, %v1982
        %v1984 = vadd.f32 %v1974, %v1982
        %v1985 = vadd.f32 %v1975, %v1982
        %v1986 = vadd.f32 %v1976, %v1982
        %v1987 = vadd.f32 %v1977, %v1982
        %v1988 = vadd.f32 %v1978, %v1982
        %v1989 = vadd.f32 %v1979, %v1982
        %v1990 = vadd.f32 %v1980, %v1982
        %v1991 = vmax.f32 %v1983, 0.0
        %v1992 = vmax.f32 %v1984, 0.0
        %v1993 = vmax.f32 %v1985, 0.0
        %v1994 = vmax.f32 %v1986, 0.0
        %v1995 = vmax.f32 %v1987, 0.0
        %v1996 = vmax.f32 %v1988, 0.0
        %v1997 = vmax.f32 %v1989, 0.0
        %v1998 = vmax.f32 %v1990, 0.0
        %s1999 = scalar_lea.vmem %s213, 1088
        %2000 = vst.msk [vmem:[%s1999] sm:$0xff] %vm452, %v1991
        %2001 = vst.msk [vmem:[%s1999 + $0x8] sm:$0xff] %vm452, %v1992
        %2002 = vst.msk [vmem:[%s1999 + $0x10] sm:$0xff] %vm452, %v1993
        %2003 = vst.msk [vmem:[%s1999 + $0x18] sm:$0xff] %vm452, %v1994
        %2004 = vst.msk [vmem:[%s1999 + $0x20] sm:$0xff] %vm452, %v1995
        %2005 = vst.msk [vmem:[%s1999 + $0x28] sm:$0xff] %vm452, %v1996
        %2006 = vst.msk [vmem:[%s1999 + $0x30] sm:$0xff] %vm452, %v1997
        %2007 = vst.msk [vmem:[%s1999 + $0x38] sm:$0xff] %vm452, %v1998
        %s2008 = sld [smem:[#allocation5 + $0x12]]
        %v2009 = vstv %s2008
        %v2010 = vmul.f32 %v214, %v2009
        %v2011 = vmul.f32 %v215, %v2009
        %v2012 = vmul.f32 %v216, %v2009
        %v2013 = vmul.f32 %v217, %v2009
        %v2014 = vmul.f32 %v218, %v2009
        %v2015 = vmul.f32 %v219, %v2009
        %v2016 = vmul.f32 %v220, %v2009
        %v2017 = vmul.f32 %v221, %v2009
        %s2018 = sld [smem:[#allocation5 + $0x92]]
        %v2019 = vstv %s2018
        %v2020 = vmul.f32 %v279, %v2019
        %v2021 = vmul.f32 %v280, %v2019
        %v2022 = vmul.f32 %v281, %v2019
        %v2023 = vmul.f32 %v282, %v2019
        %v2024 = vmul.f32 %v283, %v2019
        %v2025 = vmul.f32 %v284, %v2019
        %v2026 = vmul.f32 %v285, %v2019
        %v2027 = vmul.f32 %v286, %v2019
        %v2028 = vadd.f32 %v2010, %v2020
        %v2029 = vadd.f32 %v2011, %v2021
        %v2030 = vadd.f32 %v2012, %v2022
        %v2031 = vadd.f32 %v2013, %v2023
        %v2032 = vadd.f32 %v2014, %v2024
        %v2033 = vadd.f32 %v2015, %v2025
        %v2034 = vadd.f32 %v2016, %v2026
        %v2035 = vadd.f32 %v2017, %v2027
        %s2036 = sld [smem:[#allocation5 + $0x112]]
        %v2037 = vstv %s2036
        %v2038 = vmul.f32 %v290, %v2037
        %v2039 = vmul.f32 %v292, %v2037
        %v2040 = vmul.f32 %v294, %v2037
        %v2041 = vmul.f32 %v296, %v2037
        %v2042 = vmul.f32 %v298, %v2037
        %v2043 = vmul.f32 %v300, %v2037
        %v2044 = vmul.f32 %v302, %v2037
        %v2045 = vmul.f32 %v312, %v2037
        %v2046 = vadd.f32 %v2028, %v2038
        %v2047 = vadd.f32 %v2029, %v2039
        %v2048 = vadd.f32 %v2030, %v2040
        %v2049 = vadd.f32 %v2031, %v2041
        %v2050 = vadd.f32 %v2032, %v2042
        %v2051 = vadd.f32 %v2033, %v2043
        %v2052 = vadd.f32 %v2034, %v2044
        %v2053 = vadd.f32 %v2035, %v2045
        %s2054 = sld [smem:[#allocation5 + $0x192]]
        %v2055 = vstv %s2054
        %v2056 = vmul.f32 %v362, %v2055
        %v2057 = vmul.f32 %v363, %v2055
        %v2058 = vmul.f32 %v364, %v2055
        %v2059 = vmul.f32 %v365, %v2055
        %v2060 = vmul.f32 %v366, %v2055
        %v2061 = vmul.f32 %v367, %v2055
        %v2062 = vmul.f32 %v368, %v2055
        %v2063 = vmul.f32 %v369, %v2055
        %v2064 = vadd.f32 %v2046, %v2056
        %v2065 = vadd.f32 %v2047, %v2057
        %v2066 = vadd.f32 %v2048, %v2058
        %v2067 = vadd.f32 %v2049, %v2059
        %v2068 = vadd.f32 %v2050, %v2060
        %v2069 = vadd.f32 %v2051, %v2061
        %v2070 = vadd.f32 %v2052, %v2062
        %v2071 = vadd.f32 %v2053, %v2063
        %s2072 = sld [smem:[#allocation6 + $0x12]]
        %v2073 = vstv %s2072
        %v2074 = vadd.f32 %v2064, %v2073
        %v2075 = vadd.f32 %v2065, %v2073
        %v2076 = vadd.f32 %v2066, %v2073
        %v2077 = vadd.f32 %v2067, %v2073
        %v2078 = vadd.f32 %v2068, %v2073
        %v2079 = vadd.f32 %v2069, %v2073
        %v2080 = vadd.f32 %v2070, %v2073
        %v2081 = vadd.f32 %v2071, %v2073
        %v2082 = vmax.f32 %v2074, 0.0
        %v2083 = vmax.f32 %v2075, 0.0
        %v2084 = vmax.f32 %v2076, 0.0
        %v2085 = vmax.f32 %v2077, 0.0
        %v2086 = vmax.f32 %v2078, 0.0
        %v2087 = vmax.f32 %v2079, 0.0
        %v2088 = vmax.f32 %v2080, 0.0
        %v2089 = vmax.f32 %v2081, 0.0
        %s2090 = scalar_lea.vmem %s213, 1152
        %2091 = vst.msk [vmem:[%s2090] sm:$0xff] %vm452, %v2082
        %2092 = vst.msk [vmem:[%s2090 + $0x8] sm:$0xff] %vm452, %v2083
        %2093 = vst.msk [vmem:[%s2090 + $0x10] sm:$0xff] %vm452, %v2084
        %2094 = vst.msk [vmem:[%s2090 + $0x18] sm:$0xff] %vm452, %v2085
        %2095 = vst.msk [vmem:[%s2090 + $0x20] sm:$0xff] %vm452, %v2086
        %2096 = vst.msk [vmem:[%s2090 + $0x28] sm:$0xff] %vm452, %v2087
        %2097 = vst.msk [vmem:[%s2090 + $0x30] sm:$0xff] %vm452, %v2088
        %2098 = vst.msk [vmem:[%s2090 + $0x38] sm:$0xff] %vm452, %v2089
        %s2099 = sld [smem:[#allocation5 + $0x13]]
        %v2100 = vstv %s2099
        %v2101 = vmul.f32 %v214, %v2100
        %v2102 = vmul.f32 %v215, %v2100
        %v2103 = vmul.f32 %v216, %v2100
        %v2104 = vmul.f32 %v217, %v2100
        %v2105 = vmul.f32 %v218, %v2100
        %v2106 = vmul.f32 %v219, %v2100
        %v2107 = vmul.f32 %v220, %v2100
        %v2108 = vmul.f32 %v221, %v2100
        %s2109 = sld [smem:[#allocation5 + $0x93]]
        %v2110 = vstv %s2109
        %v2111 = vmul.f32 %v279, %v2110
        %v2112 = vmul.f32 %v280, %v2110
        %v2113 = vmul.f32 %v281, %v2110
        %v2114 = vmul.f32 %v282, %v2110
        %v2115 = vmul.f32 %v283, %v2110
        %v2116 = vmul.f32 %v284, %v2110
        %v2117 = vmul.f32 %v285, %v2110
        %v2118 = vmul.f32 %v286, %v2110
        %v2119 = vadd.f32 %v2101, %v2111
        %v2120 = vadd.f32 %v2102, %v2112
        %v2121 = vadd.f32 %v2103, %v2113
        %v2122 = vadd.f32 %v2104, %v2114
        %v2123 = vadd.f32 %v2105, %v2115
        %v2124 = vadd.f32 %v2106, %v2116
        %v2125 = vadd.f32 %v2107, %v2117
        %v2126 = vadd.f32 %v2108, %v2118
        %s2127 = sld [smem:[#allocation5 + $0x113]]
        %v2128 = vstv %s2127
        %v2129 = vmul.f32 %v290, %v2128
        %v2130 = vmul.f32 %v292, %v2128
        %v2131 = vmul.f32 %v294, %v2128
        %v2132 = vmul.f32 %v296, %v2128
        %v2133 = vmul.f32 %v298, %v2128
        %v2134 = vmul.f32 %v300, %v2128
        %v2135 = vmul.f32 %v302, %v2128
        %v2136 = vmul.f32 %v312, %v2128
        %v2137 = vadd.f32 %v2119, %v2129
        %v2138 = vadd.f32 %v2120, %v2130
        %v2139 = vadd.f32 %v2121, %v2131
        %v2140 = vadd.f32 %v2122, %v2132
        %v2141 = vadd.f32 %v2123, %v2133
        %v2142 = vadd.f32 %v2124, %v2134
        %v2143 = vadd.f32 %v2125, %v2135
        %v2144 = vadd.f32 %v2126, %v2136
        %s2145 = sld [smem:[#allocation5 + $0x193]]
        %v2146 = vstv %s2145
        %v2147 = vmul.f32 %v362, %v2146
        %v2148 = vmul.f32 %v363, %v2146
        %v2149 = vmul.f32 %v364, %v2146
        %v2150 = vmul.f32 %v365, %v2146
        %v2151 = vmul.f32 %v366, %v2146
        %v2152 = vmul.f32 %v367, %v2146
        %v2153 = vmul.f32 %v368, %v2146
        %v2154 = vmul.f32 %v369, %v2146
        %v2155 = vadd.f32 %v2137, %v2147
        %v2156 = vadd.f32 %v2138, %v2148
        %v2157 = vadd.f32 %v2139, %v2149
        %v2158 = vadd.f32 %v2140, %v2150
        %v2159 = vadd.f32 %v2141, %v2151
        %v2160 = vadd.f32 %v2142, %v2152
        %v2161 = vadd.f32 %v2143, %v2153
        %v2162 = vadd.f32 %v2144, %v2154
        %s2163 = sld [smem:[#allocation6 + $0x13]]
        %v2164 = vstv %s2163
        %v2165 = vadd.f32 %v2155, %v2164
        %v2166 = vadd.f32 %v2156, %v2164
        %v2167 = vadd.f32 %v2157, %v2164
        %v2168 = vadd.f32 %v2158, %v2164
        %v2169 = vadd.f32 %v2159, %v2164
        %v2170 = vadd.f32 %v2160, %v2164
        %v2171 = vadd.f32 %v2161, %v2164
        %v2172 = vadd.f32 %v2162, %v2164
        %v2173 = vmax.f32 %v2165, 0.0
        %v2174 = vmax.f32 %v2166, 0.0
        %v2175 = vmax.f32 %v2167, 0.0
        %v2176 = vmax.f32 %v2168, 0.0
        %v2177 = vmax.f32 %v2169, 0.0
        %v2178 = vmax.f32 %v2170, 0.0
        %v2179 = vmax.f32 %v2171, 0.0
        %v2180 = vmax.f32 %v2172, 0.0
        %s2181 = scalar_lea.vmem %s213, 1216
        %2182 = vst.msk [vmem:[%s2181] sm:$0xff] %vm452, %v2173
        %2183 = vst.msk [vmem:[%s2181 + $0x8] sm:$0xff] %vm452, %v2174
        %2184 = vst.msk [vmem:[%s2181 + $0x10] sm:$0xff] %vm452, %v2175
        %2185 = vst.msk [vmem:[%s2181 + $0x18] sm:$0xff] %vm452, %v2176
        %2186 = vst.msk [vmem:[%s2181 + $0x20] sm:$0xff] %vm452, %v2177
        %2187 = vst.msk [vmem:[%s2181 + $0x28] sm:$0xff] %vm452, %v2178
        %2188 = vst.msk [vmem:[%s2181 + $0x30] sm:$0xff] %vm452, %v2179
        %2189 = vst.msk [vmem:[%s2181 + $0x38] sm:$0xff] %vm452, %v2180
        %s2190 = sld [smem:[#allocation5 + $0x14]]
        %v2191 = vstv %s2190
        %v2192 = vmul.f32 %v214, %v2191
        %v2193 = vmul.f32 %v215, %v2191
        %v2194 = vmul.f32 %v216, %v2191
        %v2195 = vmul.f32 %v217, %v2191
        %v2196 = vmul.f32 %v218, %v2191
        %v2197 = vmul.f32 %v219, %v2191
        %v2198 = vmul.f32 %v220, %v2191
        %v2199 = vmul.f32 %v221, %v2191
        %s2200 = sld [smem:[#allocation5 + $0x94]]
        %v2201 = vstv %s2200
        %v2202 = vmul.f32 %v279, %v2201
        %v2203 = vmul.f32 %v280, %v2201
        %v2204 = vmul.f32 %v281, %v2201
        %v2205 = vmul.f32 %v282, %v2201
        %v2206 = vmul.f32 %v283, %v2201
        %v2207 = vmul.f32 %v284, %v2201
        %v2208 = vmul.f32 %v285, %v2201
        %v2209 = vmul.f32 %v286, %v2201
        %v2210 = vadd.f32 %v2192, %v2202
        %v2211 = vadd.f32 %v2193, %v2203
        %v2212 = vadd.f32 %v2194, %v2204
        %v2213 = vadd.f32 %v2195, %v2205
        %v2214 = vadd.f32 %v2196, %v2206
        %v2215 = vadd.f32 %v2197, %v2207
        %v2216 = vadd.f32 %v2198, %v2208
        %v2217 = vadd.f32 %v2199, %v2209
        %s2218 = sld [smem:[#allocation5 + $0x114]]
        %v2219 = vstv %s2218
        %v2220 = vmul.f32 %v290, %v2219
        %v2221 = vmul.f32 %v292, %v2219
        %v2222 = vmul.f32 %v294, %v2219
        %v2223 = vmul.f32 %v296, %v2219
        %v2224 = vmul.f32 %v298, %v2219
        %v2225 = vmul.f32 %v300, %v2219
        %v2226 = vmul.f32 %v302, %v2219
        %v2227 = vmul.f32 %v312, %v2219
        %v2228 = vadd.f32 %v2210, %v2220
        %v2229 = vadd.f32 %v2211, %v2221
        %v2230 = vadd.f32 %v2212, %v2222
        %v2231 = vadd.f32 %v2213, %v2223
        %v2232 = vadd.f32 %v2214, %v2224
        %v2233 = vadd.f32 %v2215, %v2225
        %v2234 = vadd.f32 %v2216, %v2226
        %v2235 = vadd.f32 %v2217, %v2227
        %s2236 = sld [smem:[#allocation5 + $0x194]]
        %v2237 = vstv %s2236
        %v2238 = vmul.f32 %v362, %v2237
        %v2239 = vmul.f32 %v363, %v2237
        %v2240 = vmul.f32 %v364, %v2237
        %v2241 = vmul.f32 %v365, %v2237
        %v2242 = vmul.f32 %v366, %v2237
        %v2243 = vmul.f32 %v367, %v2237
        %v2244 = vmul.f32 %v368, %v2237
        %v2245 = vmul.f32 %v369, %v2237
        %v2246 = vadd.f32 %v2228, %v2238
        %v2247 = vadd.f32 %v2229, %v2239
        %v2248 = vadd.f32 %v2230, %v2240
        %v2249 = vadd.f32 %v2231, %v2241
        %v2250 = vadd.f32 %v2232, %v2242
        %v2251 = vadd.f32 %v2233, %v2243
        %v2252 = vadd.f32 %v2234, %v2244
        %v2253 = vadd.f32 %v2235, %v2245
        %s2254 = sld [smem:[#allocation6 + $0x14]]
        %v2255 = vstv %s2254
        %v2256 = vadd.f32 %v2246, %v2255
        %v2257 = vadd.f32 %v2247, %v2255
        %v2258 = vadd.f32 %v2248, %v2255
        %v2259 = vadd.f32 %v2249, %v2255
        %v2260 = vadd.f32 %v2250, %v2255
        %v2261 = vadd.f32 %v2251, %v2255
        %v2262 = vadd.f32 %v2252, %v2255
        %v2263 = vadd.f32 %v2253, %v2255
        %v2264 = vmax.f32 %v2256, 0.0
        %v2265 = vmax.f32 %v2257, 0.0
        %v2266 = vmax.f32 %v2258, 0.0
        %v2267 = vmax.f32 %v2259, 0.0
        %v2268 = vmax.f32 %v2260, 0.0
        %v2269 = vmax.f32 %v2261, 0.0
        %v2270 = vmax.f32 %v2262, 0.0
        %v2271 = vmax.f32 %v2263, 0.0
        %s2272 = scalar_lea.vmem %s213, 1280
        %2273 = vst.msk [vmem:[%s2272] sm:$0xff] %vm452, %v2264
        %2274 = vst.msk [vmem:[%s2272 + $0x8] sm:$0xff] %vm452, %v2265
        %2275 = vst.msk [vmem:[%s2272 + $0x10] sm:$0xff] %vm452, %v2266
        %2276 = vst.msk [vmem:[%s2272 + $0x18] sm:$0xff] %vm452, %v2267
        %2277 = vst.msk [vmem:[%s2272 + $0x20] sm:$0xff] %vm452, %v2268
        %2278 = vst.msk [vmem:[%s2272 + $0x28] sm:$0xff] %vm452, %v2269
        %2279 = vst.msk [vmem:[%s2272 + $0x30] sm:$0xff] %vm452, %v2270
        %2280 = vst.msk [vmem:[%s2272 + $0x38] sm:$0xff] %vm452, %v2271
        %s2281 = sld [smem:[#allocation5 + $0x15]]
        %v2282 = vstv %s2281
        %v2283 = vmul.f32 %v214, %v2282
        %v2284 = vmul.f32 %v215, %v2282
        %v2285 = vmul.f32 %v216, %v2282
        %v2286 = vmul.f32 %v217, %v2282
        %v2287 = vmul.f32 %v218, %v2282
        %v2288 = vmul.f32 %v219, %v2282
        %v2289 = vmul.f32 %v220, %v2282
        %v2290 = vmul.f32 %v221, %v2282
        %s2291 = sld [smem:[#allocation5 + $0x95]]
        %v2292 = vstv %s2291
        %v2293 = vmul.f32 %v279, %v2292
        %v2294 = vmul.f32 %v280, %v2292
        %v2295 = vmul.f32 %v281, %v2292
        %v2296 = vmul.f32 %v282, %v2292
        %v2297 = vmul.f32 %v283, %v2292
        %v2298 = vmul.f32 %v284, %v2292
        %v2299 = vmul.f32 %v285, %v2292
        %v2300 = vmul.f32 %v286, %v2292
        %v2301 = vadd.f32 %v2283, %v2293
        %v2302 = vadd.f32 %v2284, %v2294
        %v2303 = vadd.f32 %v2285, %v2295
        %v2304 = vadd.f32 %v2286, %v2296
        %v2305 = vadd.f32 %v2287, %v2297
        %v2306 = vadd.f32 %v2288, %v2298
        %v2307 = vadd.f32 %v2289, %v2299
        %v2308 = vadd.f32 %v2290, %v2300
        %s2309 = sld [smem:[#allocation5 + $0x115]]
        %v2310 = vstv %s2309
        %v2311 = vmul.f32 %v290, %v2310
        %v2312 = vmul.f32 %v292, %v2310
        %v2313 = vmul.f32 %v294, %v2310
        %v2314 = vmul.f32 %v296, %v2310
        %v2315 = vmul.f32 %v298, %v2310
        %v2316 = vmul.f32 %v300, %v2310
        %v2317 = vmul.f32 %v302, %v2310
        %v2318 = vmul.f32 %v312, %v2310
        %v2319 = vadd.f32 %v2301, %v2311
        %v2320 = vadd.f32 %v2302, %v2312
        %v2321 = vadd.f32 %v2303, %v2313
        %v2322 = vadd.f32 %v2304, %v2314
        %v2323 = vadd.f32 %v2305, %v2315
        %v2324 = vadd.f32 %v2306, %v2316
        %v2325 = vadd.f32 %v2307, %v2317
        %v2326 = vadd.f32 %v2308, %v2318
        %s2327 = sld [smem:[#allocation5 + $0x195]]
        %v2328 = vstv %s2327
        %v2329 = vmul.f32 %v362, %v2328
        %v2330 = vmul.f32 %v363, %v2328
        %v2331 = vmul.f32 %v364, %v2328
        %v2332 = vmul.f32 %v365, %v2328
        %v2333 = vmul.f32 %v366, %v2328
        %v2334 = vmul.f32 %v367, %v2328
        %v2335 = vmul.f32 %v368, %v2328
        %v2336 = vmul.f32 %v369, %v2328
        %v2337 = vadd.f32 %v2319, %v2329
        %v2338 = vadd.f32 %v2320, %v2330
        %v2339 = vadd.f32 %v2321, %v2331
        %v2340 = vadd.f32 %v2322, %v2332
        %v2341 = vadd.f32 %v2323, %v2333
        %v2342 = vadd.f32 %v2324, %v2334
        %v2343 = vadd.f32 %v2325, %v2335
        %v2344 = vadd.f32 %v2326, %v2336
        %s2345 = sld [smem:[#allocation6 + $0x15]]
        %v2346 = vstv %s2345
        %v2347 = vadd.f32 %v2337, %v2346
        %v2348 = vadd.f32 %v2338, %v2346
        %v2349 = vadd.f32 %v2339, %v2346
        %v2350 = vadd.f32 %v2340, %v2346
        %v2351 = vadd.f32 %v2341, %v2346
        %v2352 = vadd.f32 %v2342, %v2346
        %v2353 = vadd.f32 %v2343, %v2346
        %v2354 = vadd.f32 %v2344, %v2346
        %v2355 = vmax.f32 %v2347, 0.0
        %v2356 = vmax.f32 %v2348, 0.0
        %v2357 = vmax.f32 %v2349, 0.0
        %v2358 = vmax.f32 %v2350, 0.0
        %v2359 = vmax.f32 %v2351, 0.0
        %v2360 = vmax.f32 %v2352, 0.0
        %v2361 = vmax.f32 %v2353, 0.0
        %v2362 = vmax.f32 %v2354, 0.0
        %s2363 = scalar_lea.vmem %s213, 1344
        %2364 = vst.msk [vmem:[%s2363] sm:$0xff] %vm452, %v2355
        %2365 = vst.msk [vmem:[%s2363 + $0x8] sm:$0xff] %vm452, %v2356
        %2366 = vst.msk [vmem:[%s2363 + $0x10] sm:$0xff] %vm452, %v2357
        %2367 = vst.msk [vmem:[%s2363 + $0x18] sm:$0xff] %vm452, %v2358
        %2368 = vst.msk [vmem:[%s2363 + $0x20] sm:$0xff] %vm452, %v2359
        %2369 = vst.msk [vmem:[%s2363 + $0x28] sm:$0xff] %vm452, %v2360
        %2370 = vst.msk [vmem:[%s2363 + $0x30] sm:$0xff] %vm452, %v2361
        %2371 = vst.msk [vmem:[%s2363 + $0x38] sm:$0xff] %vm452, %v2362
        %s2372 = sld [smem:[#allocation5 + $0x16]]
        %v2373 = vstv %s2372
        %v2374 = vmul.f32 %v214, %v2373
        %v2375 = vmul.f32 %v215, %v2373
        %v2376 = vmul.f32 %v216, %v2373
        %v2377 = vmul.f32 %v217, %v2373
        %v2378 = vmul.f32 %v218, %v2373
        %v2379 = vmul.f32 %v219, %v2373
        %v2380 = vmul.f32 %v220, %v2373
        %v2381 = vmul.f32 %v221, %v2373
        %s2382 = sld [smem:[#allocation5 + $0x96]]
        %v2383 = vstv %s2382
        %v2384 = vmul.f32 %v279, %v2383
        %v2385 = vmul.f32 %v280, %v2383
        %v2386 = vmul.f32 %v281, %v2383
        %v2387 = vmul.f32 %v282, %v2383
        %v2388 = vmul.f32 %v283, %v2383
        %v2389 = vmul.f32 %v284, %v2383
        %v2390 = vmul.f32 %v285, %v2383
        %v2391 = vmul.f32 %v286, %v2383
        %v2392 = vadd.f32 %v2374, %v2384
        %v2393 = vadd.f32 %v2375, %v2385
        %v2394 = vadd.f32 %v2376, %v2386
        %v2395 = vadd.f32 %v2377, %v2387
        %v2396 = vadd.f32 %v2378, %v2388
        %v2397 = vadd.f32 %v2379, %v2389
        %v2398 = vadd.f32 %v2380, %v2390
        %v2399 = vadd.f32 %v2381, %v2391
        %s2400 = sld [smem:[#allocation5 + $0x116]]
        %v2401 = vstv %s2400
        %v2402 = vmul.f32 %v290, %v2401
        %v2403 = vmul.f32 %v292, %v2401
        %v2404 = vmul.f32 %v294, %v2401
        %v2405 = vmul.f32 %v296, %v2401
        %v2406 = vmul.f32 %v298, %v2401
        %v2407 = vmul.f32 %v300, %v2401
        %v2408 = vmul.f32 %v302, %v2401
        %v2409 = vmul.f32 %v312, %v2401
        %v2410 = vadd.f32 %v2392, %v2402
        %v2411 = vadd.f32 %v2393, %v2403
        %v2412 = vadd.f32 %v2394, %v2404
        %v2413 = vadd.f32 %v2395, %v2405
        %v2414 = vadd.f32 %v2396, %v2406
        %v2415 = vadd.f32 %v2397, %v2407
        %v2416 = vadd.f32 %v2398, %v2408
        %v2417 = vadd.f32 %v2399, %v2409
        %s2418 = sld [smem:[#allocation5 + $0x196]]
        %v2419 = vstv %s2418
        %v2420 = vmul.f32 %v362, %v2419
        %v2421 = vmul.f32 %v363, %v2419
        %v2422 = vmul.f32 %v364, %v2419
        %v2423 = vmul.f32 %v365, %v2419
        %v2424 = vmul.f32 %v366, %v2419
        %v2425 = vmul.f32 %v367, %v2419
        %v2426 = vmul.f32 %v368, %v2419
        %v2427 = vmul.f32 %v369, %v2419
        %v2428 = vadd.f32 %v2410, %v2420
        %v2429 = vadd.f32 %v2411, %v2421
        %v2430 = vadd.f32 %v2412, %v2422
        %v2431 = vadd.f32 %v2413, %v2423
        %v2432 = vadd.f32 %v2414, %v2424
        %v2433 = vadd.f32 %v2415, %v2425
        %v2434 = vadd.f32 %v2416, %v2426
        %v2435 = vadd.f32 %v2417, %v2427
        %s2436 = sld [smem:[#allocation6 + $0x16]]
        %v2437 = vstv %s2436
        %v2438 = vadd.f32 %v2428, %v2437
        %v2439 = vadd.f32 %v2429, %v2437
        %v2440 = vadd.f32 %v2430, %v2437
        %v2441 = vadd.f32 %v2431, %v2437
        %v2442 = vadd.f32 %v2432, %v2437
        %v2443 = vadd.f32 %v2433, %v2437
        %v2444 = vadd.f32 %v2434, %v2437
        %v2445 = vadd.f32 %v2435, %v2437
        %v2446 = vmax.f32 %v2438, 0.0
        %v2447 = vmax.f32 %v2439, 0.0
        %v2448 = vmax.f32 %v2440, 0.0
        %v2449 = vmax.f32 %v2441, 0.0
        %v2450 = vmax.f32 %v2442, 0.0
        %v2451 = vmax.f32 %v2443, 0.0
        %v2452 = vmax.f32 %v2444, 0.0
        %v2453 = vmax.f32 %v2445, 0.0
        %s2454 = scalar_lea.vmem %s213, 1408
        %2455 = vst.msk [vmem:[%s2454] sm:$0xff] %vm452, %v2446
        %2456 = vst.msk [vmem:[%s2454 + $0x8] sm:$0xff] %vm452, %v2447
        %2457 = vst.msk [vmem:[%s2454 + $0x10] sm:$0xff] %vm452, %v2448
        %2458 = vst.msk [vmem:[%s2454 + $0x18] sm:$0xff] %vm452, %v2449
        %2459 = vst.msk [vmem:[%s2454 + $0x20] sm:$0xff] %vm452, %v2450
        %2460 = vst.msk [vmem:[%s2454 + $0x28] sm:$0xff] %vm452, %v2451
        %2461 = vst.msk [vmem:[%s2454 + $0x30] sm:$0xff] %vm452, %v2452
        %2462 = vst.msk [vmem:[%s2454 + $0x38] sm:$0xff] %vm452, %v2453
        %s2463 = sld [smem:[#allocation5 + $0x17]]
        %v2464 = vstv %s2463
        %v2465 = vmul.f32 %v214, %v2464
        %v2466 = vmul.f32 %v215, %v2464
        %v2467 = vmul.f32 %v216, %v2464
        %v2468 = vmul.f32 %v217, %v2464
        %v2469 = vmul.f32 %v218, %v2464
        %v2470 = vmul.f32 %v219, %v2464
        %v2471 = vmul.f32 %v220, %v2464
        %v2472 = vmul.f32 %v221, %v2464
        %s2473 = sld [smem:[#allocation5 + $0x97]]
        %v2474 = vstv %s2473
        %v2475 = vmul.f32 %v279, %v2474
        %v2476 = vmul.f32 %v280, %v2474
        %v2477 = vmul.f32 %v281, %v2474
        %v2478 = vmul.f32 %v282, %v2474
        %v2479 = vmul.f32 %v283, %v2474
        %v2480 = vmul.f32 %v284, %v2474
        %v2481 = vmul.f32 %v285, %v2474
        %v2482 = vmul.f32 %v286, %v2474
        %v2483 = vadd.f32 %v2465, %v2475
        %v2484 = vadd.f32 %v2466, %v2476
        %v2485 = vadd.f32 %v2467, %v2477
        %v2486 = vadd.f32 %v2468, %v2478
        %v2487 = vadd.f32 %v2469, %v2479
        %v2488 = vadd.f32 %v2470, %v2480
        %v2489 = vadd.f32 %v2471, %v2481
        %v2490 = vadd.f32 %v2472, %v2482
        %s2491 = sld [smem:[#allocation5 + $0x117]]
        %v2492 = vstv %s2491
        %v2493 = vmul.f32 %v290, %v2492
        %v2494 = vmul.f32 %v292, %v2492
        %v2495 = vmul.f32 %v294, %v2492
        %v2496 = vmul.f32 %v296, %v2492
        %v2497 = vmul.f32 %v298, %v2492
        %v2498 = vmul.f32 %v300, %v2492
        %v2499 = vmul.f32 %v302, %v2492
        %v2500 = vmul.f32 %v312, %v2492
        %v2501 = vadd.f32 %v2483, %v2493
        %v2502 = vadd.f32 %v2484, %v2494
        %v2503 = vadd.f32 %v2485, %v2495
        %v2504 = vadd.f32 %v2486, %v2496
        %v2505 = vadd.f32 %v2487, %v2497
        %v2506 = vadd.f32 %v2488, %v2498
        %v2507 = vadd.f32 %v2489, %v2499
        %v2508 = vadd.f32 %v2490, %v2500
        %s2509 = sld [smem:[#allocation5 + $0x197]]
        %v2510 = vstv %s2509
        %v2511 = vmul.f32 %v362, %v2510
        %v2512 = vmul.f32 %v363, %v2510
        %v2513 = vmul.f32 %v364, %v2510
        %v2514 = vmul.f32 %v365, %v2510
        %v2515 = vmul.f32 %v366, %v2510
        %v2516 = vmul.f32 %v367, %v2510
        %v2517 = vmul.f32 %v368, %v2510
        %v2518 = vmul.f32 %v369, %v2510
        %v2519 = vadd.f32 %v2501, %v2511
        %v2520 = vadd.f32 %v2502, %v2512
        %v2521 = vadd.f32 %v2503, %v2513
        %v2522 = vadd.f32 %v2504, %v2514
        %v2523 = vadd.f32 %v2505, %v2515
        %v2524 = vadd.f32 %v2506, %v2516
        %v2525 = vadd.f32 %v2507, %v2517
        %v2526 = vadd.f32 %v2508, %v2518
        %s2527 = sld [smem:[#allocation6 + $0x17]]
        %v2528 = vstv %s2527
        %v2529 = vadd.f32 %v2519, %v2528
        %v2530 = vadd.f32 %v2520, %v2528
        %v2531 = vadd.f32 %v2521, %v2528
        %v2532 = vadd.f32 %v2522, %v2528
        %v2533 = vadd.f32 %v2523, %v2528
        %v2534 = vadd.f32 %v2524, %v2528
        %v2535 = vadd.f32 %v2525, %v2528
        %v2536 = vadd.f32 %v2526, %v2528
        %v2537 = vmax.f32 %v2529, 0.0
        %v2538 = vmax.f32 %v2530, 0.0
        %v2539 = vmax.f32 %v2531, 0.0
        %v2540 = vmax.f32 %v2532, 0.0
        %v2541 = vmax.f32 %v2533, 0.0
        %v2542 = vmax.f32 %v2534, 0.0
        %v2543 = vmax.f32 %v2535, 0.0
        %v2544 = vmax.f32 %v2536, 0.0
        %s2545 = scalar_lea.vmem %s213, 1472
        %2546 = vst.msk [vmem:[%s2545] sm:$0xff] %vm452, %v2537
        %2547 = vst.msk [vmem:[%s2545 + $0x8] sm:$0xff] %vm452, %v2538
        %2548 = vst.msk [vmem:[%s2545 + $0x10] sm:$0xff] %vm452, %v2539
        %2549 = vst.msk [vmem:[%s2545 + $0x18] sm:$0xff] %vm452, %v2540
        %2550 = vst.msk [vmem:[%s2545 + $0x20] sm:$0xff] %vm452, %v2541
        %2551 = vst.msk [vmem:[%s2545 + $0x28] sm:$0xff] %vm452, %v2542
        %2552 = vst.msk [vmem:[%s2545 + $0x30] sm:$0xff] %vm452, %v2543
        %2553 = vst.msk [vmem:[%s2545 + $0x38] sm:$0xff] %vm452, %v2544
        %s2554 = sld [smem:[#allocation5 + $0x18]]
        %v2555 = vstv %s2554
        %v2556 = vmul.f32 %v214, %v2555
        %v2557 = vmul.f32 %v215, %v2555
        %v2558 = vmul.f32 %v216, %v2555
        %v2559 = vmul.f32 %v217, %v2555
        %v2560 = vmul.f32 %v218, %v2555
        %v2561 = vmul.f32 %v219, %v2555
        %v2562 = vmul.f32 %v220, %v2555
        %v2563 = vmul.f32 %v221, %v2555
        %s2564 = sld [smem:[#allocation5 + $0x98]]
        %v2565 = vstv %s2564
        %v2566 = vmul.f32 %v279, %v2565
        %v2567 = vmul.f32 %v280, %v2565
        %v2568 = vmul.f32 %v281, %v2565
        %v2569 = vmul.f32 %v282, %v2565
        %v2570 = vmul.f32 %v283, %v2565
        %v2571 = vmul.f32 %v284, %v2565
        %v2572 = vmul.f32 %v285, %v2565
        %v2573 = vmul.f32 %v286, %v2565
        %v2574 = vadd.f32 %v2556, %v2566
        %v2575 = vadd.f32 %v2557, %v2567
        %v2576 = vadd.f32 %v2558, %v2568
        %v2577 = vadd.f32 %v2559, %v2569
        %v2578 = vadd.f32 %v2560, %v2570
        %v2579 = vadd.f32 %v2561, %v2571
        %v2580 = vadd.f32 %v2562, %v2572
        %v2581 = vadd.f32 %v2563, %v2573
        %s2582 = sld [smem:[#allocation5 + $0x118]]
        %v2583 = vstv %s2582
        %v2584 = vmul.f32 %v290, %v2583
        %v2585 = vmul.f32 %v292, %v2583
        %v2586 = vmul.f32 %v294, %v2583
        %v2587 = vmul.f32 %v296, %v2583
        %v2588 = vmul.f32 %v298, %v2583
        %v2589 = vmul.f32 %v300, %v2583
        %v2590 = vmul.f32 %v302, %v2583
        %v2591 = vmul.f32 %v312, %v2583
        %v2592 = vadd.f32 %v2574, %v2584
        %v2593 = vadd.f32 %v2575, %v2585
        %v2594 = vadd.f32 %v2576, %v2586
        %v2595 = vadd.f32 %v2577, %v2587
        %v2596 = vadd.f32 %v2578, %v2588
        %v2597 = vadd.f32 %v2579, %v2589
        %v2598 = vadd.f32 %v2580, %v2590
        %v2599 = vadd.f32 %v2581, %v2591
        %s2600 = sld [smem:[#allocation5 + $0x198]]
        %v2601 = vstv %s2600
        %v2602 = vmul.f32 %v362, %v2601
        %v2603 = vmul.f32 %v363, %v2601
        %v2604 = vmul.f32 %v364, %v2601
        %v2605 = vmul.f32 %v365, %v2601
        %v2606 = vmul.f32 %v366, %v2601
        %v2607 = vmul.f32 %v367, %v2601
        %v2608 = vmul.f32 %v368, %v2601
        %v2609 = vmul.f32 %v369, %v2601
        %v2610 = vadd.f32 %v2592, %v2602
        %v2611 = vadd.f32 %v2593, %v2603
        %v2612 = vadd.f32 %v2594, %v2604
        %v2613 = vadd.f32 %v2595, %v2605
        %v2614 = vadd.f32 %v2596, %v2606
        %v2615 = vadd.f32 %v2597, %v2607
        %v2616 = vadd.f32 %v2598, %v2608
        %v2617 = vadd.f32 %v2599, %v2609
        %s2618 = sld [smem:[#allocation6 + $0x18]]
        %v2619 = vstv %s2618
        %v2620 = vadd.f32 %v2610, %v2619
        %v2621 = vadd.f32 %v2611, %v2619
        %v2622 = vadd.f32 %v2612, %v2619
        %v2623 = vadd.f32 %v2613, %v2619
        %v2624 = vadd.f32 %v2614, %v2619
        %v2625 = vadd.f32 %v2615, %v2619
        %v2626 = vadd.f32 %v2616, %v2619
        %v2627 = vadd.f32 %v2617, %v2619
        %v2628 = vmax.f32 %v2620, 0.0
        %v2629 = vmax.f32 %v2621, 0.0
        %v2630 = vmax.f32 %v2622, 0.0
        %v2631 = vmax.f32 %v2623, 0.0
        %v2632 = vmax.f32 %v2624, 0.0
        %v2633 = vmax.f32 %v2625, 0.0
        %v2634 = vmax.f32 %v2626, 0.0
        %v2635 = vmax.f32 %v2627, 0.0
        %s2636 = scalar_lea.vmem %s213, 1536
        %2637 = vst.msk [vmem:[%s2636] sm:$0xff] %vm452, %v2628
        %2638 = vst.msk [vmem:[%s2636 + $0x8] sm:$0xff] %vm452, %v2629
        %2639 = vst.msk [vmem:[%s2636 + $0x10] sm:$0xff] %vm452, %v2630
        %2640 = vst.msk [vmem:[%s2636 + $0x18] sm:$0xff] %vm452, %v2631
        %2641 = vst.msk [vmem:[%s2636 + $0x20] sm:$0xff] %vm452, %v2632
        %2642 = vst.msk [vmem:[%s2636 + $0x28] sm:$0xff] %vm452, %v2633
        %2643 = vst.msk [vmem:[%s2636 + $0x30] sm:$0xff] %vm452, %v2634
        %2644 = vst.msk [vmem:[%s2636 + $0x38] sm:$0xff] %vm452, %v2635
        %s2645 = sld [smem:[#allocation5 + $0x19]]
        %v2646 = vstv %s2645
        %v2647 = vmul.f32 %v214, %v2646
        %v2648 = vmul.f32 %v215, %v2646
        %v2649 = vmul.f32 %v216, %v2646
        %v2650 = vmul.f32 %v217, %v2646
        %v2651 = vmul.f32 %v218, %v2646
        %v2652 = vmul.f32 %v219, %v2646
        %v2653 = vmul.f32 %v220, %v2646
        %v2654 = vmul.f32 %v221, %v2646
        %s2655 = sld [smem:[#allocation5 + $0x99]]
        %v2656 = vstv %s2655
        %v2657 = vmul.f32 %v279, %v2656
        %v2658 = vmul.f32 %v280, %v2656
        %v2659 = vmul.f32 %v281, %v2656
        %v2660 = vmul.f32 %v282, %v2656
        %v2661 = vmul.f32 %v283, %v2656
        %v2662 = vmul.f32 %v284, %v2656
        %v2663 = vmul.f32 %v285, %v2656
        %v2664 = vmul.f32 %v286, %v2656
        %v2665 = vadd.f32 %v2647, %v2657
        %v2666 = vadd.f32 %v2648, %v2658
        %v2667 = vadd.f32 %v2649, %v2659
        %v2668 = vadd.f32 %v2650, %v2660
        %v2669 = vadd.f32 %v2651, %v2661
        %v2670 = vadd.f32 %v2652, %v2662
        %v2671 = vadd.f32 %v2653, %v2663
        %v2672 = vadd.f32 %v2654, %v2664
        %s2673 = sld [smem:[#allocation5 + $0x119]]
        %v2674 = vstv %s2673
        %v2675 = vmul.f32 %v290, %v2674
        %v2676 = vmul.f32 %v292, %v2674
        %v2677 = vmul.f32 %v294, %v2674
        %v2678 = vmul.f32 %v296, %v2674
        %v2679 = vmul.f32 %v298, %v2674
        %v2680 = vmul.f32 %v300, %v2674
        %v2681 = vmul.f32 %v302, %v2674
        %v2682 = vmul.f32 %v312, %v2674
        %v2683 = vadd.f32 %v2665, %v2675
        %v2684 = vadd.f32 %v2666, %v2676
        %v2685 = vadd.f32 %v2667, %v2677
        %v2686 = vadd.f32 %v2668, %v2678
        %v2687 = vadd.f32 %v2669, %v2679
        %v2688 = vadd.f32 %v2670, %v2680
        %v2689 = vadd.f32 %v2671, %v2681
        %v2690 = vadd.f32 %v2672, %v2682
        %s2691 = sld [smem:[#allocation5 + $0x199]]
        %v2692 = vstv %s2691
        %v2693 = vmul.f32 %v362, %v2692
        %v2694 = vmul.f32 %v363, %v2692
        %v2695 = vmul.f32 %v364, %v2692
        %v2696 = vmul.f32 %v365, %v2692
        %v2697 = vmul.f32 %v366, %v2692
        %v2698 = vmul.f32 %v367, %v2692
        %v2699 = vmul.f32 %v368, %v2692
        %v2700 = vmul.f32 %v369, %v2692
        %v2701 = vadd.f32 %v2683, %v2693
        %v2702 = vadd.f32 %v2684, %v2694
        %v2703 = vadd.f32 %v2685, %v2695
        %v2704 = vadd.f32 %v2686, %v2696
        %v2705 = vadd.f32 %v2687, %v2697
        %v2706 = vadd.f32 %v2688, %v2698
        %v2707 = vadd.f32 %v2689, %v2699
        %v2708 = vadd.f32 %v2690, %v2700
        %s2709 = sld [smem:[#allocation6 + $0x19]]
        %v2710 = vstv %s2709
        %v2711 = vadd.f32 %v2701, %v2710
        %v2712 = vadd.f32 %v2702, %v2710
        %v2713 = vadd.f32 %v2703, %v2710
        %v2714 = vadd.f32 %v2704, %v2710
        %v2715 = vadd.f32 %v2705, %v2710
        %v2716 = vadd.f32 %v2706, %v2710
        %v2717 = vadd.f32 %v2707, %v2710
        %v2718 = vadd.f32 %v2708, %v2710
        %v2719 = vmax.f32 %v2711, 0.0
        %v2720 = vmax.f32 %v2712, 0.0
        %v2721 = vmax.f32 %v2713, 0.0
        %v2722 = vmax.f32 %v2714, 0.0
        %v2723 = vmax.f32 %v2715, 0.0
        %v2724 = vmax.f32 %v2716, 0.0
        %v2725 = vmax.f32 %v2717, 0.0
        %v2726 = vmax.f32 %v2718, 0.0
        %s2727 = scalar_lea.vmem %s213, 1600
        %2728 = vst.msk [vmem:[%s2727] sm:$0xff] %vm452, %v2719
        %2729 = vst.msk [vmem:[%s2727 + $0x8] sm:$0xff] %vm452, %v2720
        %2730 = vst.msk [vmem:[%s2727 + $0x10] sm:$0xff] %vm452, %v2721
        %2731 = vst.msk [vmem:[%s2727 + $0x18] sm:$0xff] %vm452, %v2722
        %2732 = vst.msk [vmem:[%s2727 + $0x20] sm:$0xff] %vm452, %v2723
        %2733 = vst.msk [vmem:[%s2727 + $0x28] sm:$0xff] %vm452, %v2724
        %2734 = vst.msk [vmem:[%s2727 + $0x30] sm:$0xff] %vm452, %v2725
        %2735 = vst.msk [vmem:[%s2727 + $0x38] sm:$0xff] %vm452, %v2726
        %s2736 = sld [smem:[#allocation5 + $0x1a]]
        %v2737 = vstv %s2736
        %v2738 = vmul.f32 %v214, %v2737
        %v2739 = vmul.f32 %v215, %v2737
        %v2740 = vmul.f32 %v216, %v2737
        %v2741 = vmul.f32 %v217, %v2737
        %v2742 = vmul.f32 %v218, %v2737
        %v2743 = vmul.f32 %v219, %v2737
        %v2744 = vmul.f32 %v220, %v2737
        %v2745 = vmul.f32 %v221, %v2737
        %s2746 = sld [smem:[#allocation5 + $0x9a]]
        %v2747 = vstv %s2746
        %v2748 = vmul.f32 %v279, %v2747
        %v2749 = vmul.f32 %v280, %v2747
        %v2750 = vmul.f32 %v281, %v2747
        %v2751 = vmul.f32 %v282, %v2747
        %v2752 = vmul.f32 %v283, %v2747
        %v2753 = vmul.f32 %v284, %v2747
        %v2754 = vmul.f32 %v285, %v2747
        %v2755 = vmul.f32 %v286, %v2747
        %v2756 = vadd.f32 %v2738, %v2748
        %v2757 = vadd.f32 %v2739, %v2749
        %v2758 = vadd.f32 %v2740, %v2750
        %v2759 = vadd.f32 %v2741, %v2751
        %v2760 = vadd.f32 %v2742, %v2752
        %v2761 = vadd.f32 %v2743, %v2753
        %v2762 = vadd.f32 %v2744, %v2754
        %v2763 = vadd.f32 %v2745, %v2755
        %s2764 = sld [smem:[#allocation5 + $0x11a]]
        %v2765 = vstv %s2764
        %v2766 = vmul.f32 %v290, %v2765
        %v2767 = vmul.f32 %v292, %v2765
        %v2768 = vmul.f32 %v294, %v2765
        %v2769 = vmul.f32 %v296, %v2765
        %v2770 = vmul.f32 %v298, %v2765
        %v2771 = vmul.f32 %v300, %v2765
        %v2772 = vmul.f32 %v302, %v2765
        %v2773 = vmul.f32 %v312, %v2765
        %v2774 = vadd.f32 %v2756, %v2766
        %v2775 = vadd.f32 %v2757, %v2767
        %v2776 = vadd.f32 %v2758, %v2768
        %v2777 = vadd.f32 %v2759, %v2769
        %v2778 = vadd.f32 %v2760, %v2770
        %v2779 = vadd.f32 %v2761, %v2771
        %v2780 = vadd.f32 %v2762, %v2772
        %v2781 = vadd.f32 %v2763, %v2773
        %s2782 = sld [smem:[#allocation5 + $0x19a]]
        %v2783 = vstv %s2782
        %v2784 = vmul.f32 %v362, %v2783
        %v2785 = vmul.f32 %v363, %v2783
        %v2786 = vmul.f32 %v364, %v2783
        %v2787 = vmul.f32 %v365, %v2783
        %v2788 = vmul.f32 %v366, %v2783
        %v2789 = vmul.f32 %v367, %v2783
        %v2790 = vmul.f32 %v368, %v2783
        %v2791 = vmul.f32 %v369, %v2783
        %v2792 = vadd.f32 %v2774, %v2784
        %v2793 = vadd.f32 %v2775, %v2785
        %v2794 = vadd.f32 %v2776, %v2786
        %v2795 = vadd.f32 %v2777, %v2787
        %v2796 = vadd.f32 %v2778, %v2788
        %v2797 = vadd.f32 %v2779, %v2789
        %v2798 = vadd.f32 %v2780, %v2790
        %v2799 = vadd.f32 %v2781, %v2791
        %s2800 = sld [smem:[#allocation6 + $0x1a]]
        %v2801 = vstv %s2800
        %v2802 = vadd.f32 %v2792, %v2801
        %v2803 = vadd.f32 %v2793, %v2801
        %v2804 = vadd.f32 %v2794, %v2801
        %v2805 = vadd.f32 %v2795, %v2801
        %v2806 = vadd.f32 %v2796, %v2801
        %v2807 = vadd.f32 %v2797, %v2801
        %v2808 = vadd.f32 %v2798, %v2801
        %v2809 = vadd.f32 %v2799, %v2801
        %v2810 = vmax.f32 %v2802, 0.0
        %v2811 = vmax.f32 %v2803, 0.0
        %v2812 = vmax.f32 %v2804, 0.0
        %v2813 = vmax.f32 %v2805, 0.0
        %v2814 = vmax.f32 %v2806, 0.0
        %v2815 = vmax.f32 %v2807, 0.0
        %v2816 = vmax.f32 %v2808, 0.0
        %v2817 = vmax.f32 %v2809, 0.0
        %s2818 = scalar_lea.vmem %s213, 1664
        %2819 = vst.msk [vmem:[%s2818] sm:$0xff] %vm452, %v2810
        %2820 = vst.msk [vmem:[%s2818 + $0x8] sm:$0xff] %vm452, %v2811
        %2821 = vst.msk [vmem:[%s2818 + $0x10] sm:$0xff] %vm452, %v2812
        %2822 = vst.msk [vmem:[%s2818 + $0x18] sm:$0xff] %vm452, %v2813
        %2823 = vst.msk [vmem:[%s2818 + $0x20] sm:$0xff] %vm452, %v2814
        %2824 = vst.msk [vmem:[%s2818 + $0x28] sm:$0xff] %vm452, %v2815
        %2825 = vst.msk [vmem:[%s2818 + $0x30] sm:$0xff] %vm452, %v2816
        %2826 = vst.msk [vmem:[%s2818 + $0x38] sm:$0xff] %vm452, %v2817
        %s2827 = sld [smem:[#allocation5 + $0x1b]]
        %v2828 = vstv %s2827
        %v2829 = vmul.f32 %v214, %v2828
        %v2830 = vmul.f32 %v215, %v2828
        %v2831 = vmul.f32 %v216, %v2828
        %v2832 = vmul.f32 %v217, %v2828
        %v2833 = vmul.f32 %v218, %v2828
        %v2834 = vmul.f32 %v219, %v2828
        %v2835 = vmul.f32 %v220, %v2828
        %v2836 = vmul.f32 %v221, %v2828
        %s2837 = sld [smem:[#allocation5 + $0x9b]]
        %v2838 = vstv %s2837
        %v2839 = vmul.f32 %v279, %v2838
        %v2840 = vmul.f32 %v280, %v2838
        %v2841 = vmul.f32 %v281, %v2838
        %v2842 = vmul.f32 %v282, %v2838
        %v2843 = vmul.f32 %v283, %v2838
        %v2844 = vmul.f32 %v284, %v2838
        %v2845 = vmul.f32 %v285, %v2838
        %v2846 = vmul.f32 %v286, %v2838
        %v2847 = vadd.f32 %v2829, %v2839
        %v2848 = vadd.f32 %v2830, %v2840
        %v2849 = vadd.f32 %v2831, %v2841
        %v2850 = vadd.f32 %v2832, %v2842
        %v2851 = vadd.f32 %v2833, %v2843
        %v2852 = vadd.f32 %v2834, %v2844
        %v2853 = vadd.f32 %v2835, %v2845
        %v2854 = vadd.f32 %v2836, %v2846
        %s2855 = sld [smem:[#allocation5 + $0x11b]]
        %v2856 = vstv %s2855
        %v2857 = vmul.f32 %v290, %v2856
        %v2858 = vmul.f32 %v292, %v2856
        %v2859 = vmul.f32 %v294, %v2856
        %v2860 = vmul.f32 %v296, %v2856
        %v2861 = vmul.f32 %v298, %v2856
        %v2862 = vmul.f32 %v300, %v2856
        %v2863 = vmul.f32 %v302, %v2856
        %v2864 = vmul.f32 %v312, %v2856
        %v2865 = vadd.f32 %v2847, %v2857
        %v2866 = vadd.f32 %v2848, %v2858
        %v2867 = vadd.f32 %v2849, %v2859
        %v2868 = vadd.f32 %v2850, %v2860
        %v2869 = vadd.f32 %v2851, %v2861
        %v2870 = vadd.f32 %v2852, %v2862
        %v2871 = vadd.f32 %v2853, %v2863
        %v2872 = vadd.f32 %v2854, %v2864
        %s2873 = sld [smem:[#allocation5 + $0x19b]]
        %v2874 = vstv %s2873
        %v2875 = vmul.f32 %v362, %v2874
        %v2876 = vmul.f32 %v363, %v2874
        %v2877 = vmul.f32 %v364, %v2874
        %v2878 = vmul.f32 %v365, %v2874
        %v2879 = vmul.f32 %v366, %v2874
        %v2880 = vmul.f32 %v367, %v2874
        %v2881 = vmul.f32 %v368, %v2874
        %v2882 = vmul.f32 %v369, %v2874
        %v2883 = vadd.f32 %v2865, %v2875
        %v2884 = vadd.f32 %v2866, %v2876
        %v2885 = vadd.f32 %v2867, %v2877
        %v2886 = vadd.f32 %v2868, %v2878
        %v2887 = vadd.f32 %v2869, %v2879
        %v2888 = vadd.f32 %v2870, %v2880
        %v2889 = vadd.f32 %v2871, %v2881
        %v2890 = vadd.f32 %v2872, %v2882
        %s2891 = sld [smem:[#allocation6 + $0x1b]]
        %v2892 = vstv %s2891
        %v2893 = vadd.f32 %v2883, %v2892
        %v2894 = vadd.f32 %v2884, %v2892
        %v2895 = vadd.f32 %v2885, %v2892
        %v2896 = vadd.f32 %v2886, %v2892
        %v2897 = vadd.f32 %v2887, %v2892
        %v2898 = vadd.f32 %v2888, %v2892
        %v2899 = vadd.f32 %v2889, %v2892
        %v2900 = vadd.f32 %v2890, %v2892
        %v2901 = vmax.f32 %v2893, 0.0
        %v2902 = vmax.f32 %v2894, 0.0
        %v2903 = vmax.f32 %v2895, 0.0
        %v2904 = vmax.f32 %v2896, 0.0
        %v2905 = vmax.f32 %v2897, 0.0
        %v2906 = vmax.f32 %v2898, 0.0
        %v2907 = vmax.f32 %v2899, 0.0
        %v2908 = vmax.f32 %v2900, 0.0
        %s2909 = scalar_lea.vmem %s213, 1728
        %2910 = vst.msk [vmem:[%s2909] sm:$0xff] %vm452, %v2901
        %2911 = vst.msk [vmem:[%s2909 + $0x8] sm:$0xff] %vm452, %v2902
        %2912 = vst.msk [vmem:[%s2909 + $0x10] sm:$0xff] %vm452, %v2903
        %2913 = vst.msk [vmem:[%s2909 + $0x18] sm:$0xff] %vm452, %v2904
        %2914 = vst.msk [vmem:[%s2909 + $0x20] sm:$0xff] %vm452, %v2905
        %2915 = vst.msk [vmem:[%s2909 + $0x28] sm:$0xff] %vm452, %v2906
        %2916 = vst.msk [vmem:[%s2909 + $0x30] sm:$0xff] %vm452, %v2907
        %2917 = vst.msk [vmem:[%s2909 + $0x38] sm:$0xff] %vm452, %v2908
        %s2918 = sld [smem:[#allocation5 + $0x1c]]
        %v2919 = vstv %s2918
        %v2920 = vmul.f32 %v214, %v2919
        %v2921 = vmul.f32 %v215, %v2919
        %v2922 = vmul.f32 %v216, %v2919
        %v2923 = vmul.f32 %v217, %v2919
        %v2924 = vmul.f32 %v218, %v2919
        %v2925 = vmul.f32 %v219, %v2919
        %v2926 = vmul.f32 %v220, %v2919
        %v2927 = vmul.f32 %v221, %v2919
        %s2928 = sld [smem:[#allocation5 + $0x9c]]
        %v2929 = vstv %s2928
        %v2930 = vmul.f32 %v279, %v2929
        %v2931 = vmul.f32 %v280, %v2929
        %v2932 = vmul.f32 %v281, %v2929
        %v2933 = vmul.f32 %v282, %v2929
        %v2934 = vmul.f32 %v283, %v2929
        %v2935 = vmul.f32 %v284, %v2929
        %v2936 = vmul.f32 %v285, %v2929
        %v2937 = vmul.f32 %v286, %v2929
        %v2938 = vadd.f32 %v2920, %v2930
        %v2939 = vadd.f32 %v2921, %v2931
        %v2940 = vadd.f32 %v2922, %v2932
        %v2941 = vadd.f32 %v2923, %v2933
        %v2942 = vadd.f32 %v2924, %v2934
        %v2943 = vadd.f32 %v2925, %v2935
        %v2944 = vadd.f32 %v2926, %v2936
        %v2945 = vadd.f32 %v2927, %v2937
        %s2946 = sld [smem:[#allocation5 + $0x11c]]
        %v2947 = vstv %s2946
        %v2948 = vmul.f32 %v290, %v2947
        %v2949 = vmul.f32 %v292, %v2947
        %v2950 = vmul.f32 %v294, %v2947
        %v2951 = vmul.f32 %v296, %v2947
        %v2952 = vmul.f32 %v298, %v2947
        %v2953 = vmul.f32 %v300, %v2947
        %v2954 = vmul.f32 %v302, %v2947
        %v2955 = vmul.f32 %v312, %v2947
        %v2956 = vadd.f32 %v2938, %v2948
        %v2957 = vadd.f32 %v2939, %v2949
        %v2958 = vadd.f32 %v2940, %v2950
        %v2959 = vadd.f32 %v2941, %v2951
        %v2960 = vadd.f32 %v2942, %v2952
        %v2961 = vadd.f32 %v2943, %v2953
        %v2962 = vadd.f32 %v2944, %v2954
        %v2963 = vadd.f32 %v2945, %v2955
        %s2964 = sld [smem:[#allocation5 + $0x19c]]
        %v2965 = vstv %s2964
        %v2966 = vmul.f32 %v362, %v2965
        %v2967 = vmul.f32 %v363, %v2965
        %v2968 = vmul.f32 %v364, %v2965
        %v2969 = vmul.f32 %v365, %v2965
        %v2970 = vmul.f32 %v366, %v2965
        %v2971 = vmul.f32 %v367, %v2965
        %v2972 = vmul.f32 %v368, %v2965
        %v2973 = vmul.f32 %v369, %v2965
        %v2974 = vadd.f32 %v2956, %v2966
        %v2975 = vadd.f32 %v2957, %v2967
        %v2976 = vadd.f32 %v2958, %v2968
        %v2977 = vadd.f32 %v2959, %v2969
        %v2978 = vadd.f32 %v2960, %v2970
        %v2979 = vadd.f32 %v2961, %v2971
        %v2980 = vadd.f32 %v2962, %v2972
        %v2981 = vadd.f32 %v2963, %v2973
        %s2982 = sld [smem:[#allocation6 + $0x1c]]
        %v2983 = vstv %s2982
        %v2984 = vadd.f32 %v2974, %v2983
        %v2985 = vadd.f32 %v2975, %v2983
        %v2986 = vadd.f32 %v2976, %v2983
        %v2987 = vadd.f32 %v2977, %v2983
        %v2988 = vadd.f32 %v2978, %v2983
        %v2989 = vadd.f32 %v2979, %v2983
        %v2990 = vadd.f32 %v2980, %v2983
        %v2991 = vadd.f32 %v2981, %v2983
        %v2992 = vmax.f32 %v2984, 0.0
        %v2993 = vmax.f32 %v2985, 0.0
        %v2994 = vmax.f32 %v2986, 0.0
        %v2995 = vmax.f32 %v2987, 0.0
        %v2996 = vmax.f32 %v2988, 0.0
        %v2997 = vmax.f32 %v2989, 0.0
        %v2998 = vmax.f32 %v2990, 0.0
        %v2999 = vmax.f32 %v2991, 0.0
        %s3000 = scalar_lea.vmem %s213, 1792
        %3001 = vst.msk [vmem:[%s3000] sm:$0xff] %vm452, %v2992
        %3002 = vst.msk [vmem:[%s3000 + $0x8] sm:$0xff] %vm452, %v2993
        %3003 = vst.msk [vmem:[%s3000 + $0x10] sm:$0xff] %vm452, %v2994
        %3004 = vst.msk [vmem:[%s3000 + $0x18] sm:$0xff] %vm452, %v2995
        %3005 = vst.msk [vmem:[%s3000 + $0x20] sm:$0xff] %vm452, %v2996
        %3006 = vst.msk [vmem:[%s3000 + $0x28] sm:$0xff] %vm452, %v2997
        %3007 = vst.msk [vmem:[%s3000 + $0x30] sm:$0xff] %vm452, %v2998
        %3008 = vst.msk [vmem:[%s3000 + $0x38] sm:$0xff] %vm452, %v2999
        %s3009 = sld [smem:[#allocation5 + $0x1d]]
        %v3010 = vstv %s3009
        %v3011 = vmul.f32 %v214, %v3010
        %v3012 = vmul.f32 %v215, %v3010
        %v3013 = vmul.f32 %v216, %v3010
        %v3014 = vmul.f32 %v217, %v3010
        %v3015 = vmul.f32 %v218, %v3010
        %v3016 = vmul.f32 %v219, %v3010
        %v3017 = vmul.f32 %v220, %v3010
        %v3018 = vmul.f32 %v221, %v3010
        %s3019 = sld [smem:[#allocation5 + $0x9d]]
        %v3020 = vstv %s3019
        %v3021 = vmul.f32 %v279, %v3020
        %v3022 = vmul.f32 %v280, %v3020
        %v3023 = vmul.f32 %v281, %v3020
        %v3024 = vmul.f32 %v282, %v3020
        %v3025 = vmul.f32 %v283, %v3020
        %v3026 = vmul.f32 %v284, %v3020
        %v3027 = vmul.f32 %v285, %v3020
        %v3028 = vmul.f32 %v286, %v3020
        %v3029 = vadd.f32 %v3011, %v3021
        %v3030 = vadd.f32 %v3012, %v3022
        %v3031 = vadd.f32 %v3013, %v3023
        %v3032 = vadd.f32 %v3014, %v3024
        %v3033 = vadd.f32 %v3015, %v3025
        %v3034 = vadd.f32 %v3016, %v3026
        %v3035 = vadd.f32 %v3017, %v3027
        %v3036 = vadd.f32 %v3018, %v3028
        %s3037 = sld [smem:[#allocation5 + $0x11d]]
        %v3038 = vstv %s3037
        %v3039 = vmul.f32 %v290, %v3038
        %v3040 = vmul.f32 %v292, %v3038
        %v3041 = vmul.f32 %v294, %v3038
        %v3042 = vmul.f32 %v296, %v3038
        %v3043 = vmul.f32 %v298, %v3038
        %v3044 = vmul.f32 %v300, %v3038
        %v3045 = vmul.f32 %v302, %v3038
        %v3046 = vmul.f32 %v312, %v3038
        %v3047 = vadd.f32 %v3029, %v3039
        %v3048 = vadd.f32 %v3030, %v3040
        %v3049 = vadd.f32 %v3031, %v3041
        %v3050 = vadd.f32 %v3032, %v3042
        %v3051 = vadd.f32 %v3033, %v3043
        %v3052 = vadd.f32 %v3034, %v3044
        %v3053 = vadd.f32 %v3035, %v3045
        %v3054 = vadd.f32 %v3036, %v3046
        %s3055 = sld [smem:[#allocation5 + $0x19d]]
        %v3056 = vstv %s3055
        %v3057 = vmul.f32 %v362, %v3056
        %v3058 = vmul.f32 %v363, %v3056
        %v3059 = vmul.f32 %v364, %v3056
        %v3060 = vmul.f32 %v365, %v3056
        %v3061 = vmul.f32 %v366, %v3056
        %v3062 = vmul.f32 %v367, %v3056
        %v3063 = vmul.f32 %v368, %v3056
        %v3064 = vmul.f32 %v369, %v3056
        %v3065 = vadd.f32 %v3047, %v3057
        %v3066 = vadd.f32 %v3048, %v3058
        %v3067 = vadd.f32 %v3049, %v3059
        %v3068 = vadd.f32 %v3050, %v3060
        %v3069 = vadd.f32 %v3051, %v3061
        %v3070 = vadd.f32 %v3052, %v3062
        %v3071 = vadd.f32 %v3053, %v3063
        %v3072 = vadd.f32 %v3054, %v3064
        %s3073 = sld [smem:[#allocation6 + $0x1d]]
        %v3074 = vstv %s3073
        %v3075 = vadd.f32 %v3065, %v3074
        %v3076 = vadd.f32 %v3066, %v3074
        %v3077 = vadd.f32 %v3067, %v3074
        %v3078 = vadd.f32 %v3068, %v3074
        %v3079 = vadd.f32 %v3069, %v3074
        %v3080 = vadd.f32 %v3070, %v3074
        %v3081 = vadd.f32 %v3071, %v3074
        %v3082 = vadd.f32 %v3072, %v3074
        %v3083 = vmax.f32 %v3075, 0.0
        %v3084 = vmax.f32 %v3076, 0.0
        %v3085 = vmax.f32 %v3077, 0.0
        %v3086 = vmax.f32 %v3078, 0.0
        %v3087 = vmax.f32 %v3079, 0.0
        %v3088 = vmax.f32 %v3080, 0.0
        %v3089 = vmax.f32 %v3081, 0.0
        %v3090 = vmax.f32 %v3082, 0.0
        %s3091 = scalar_lea.vmem %s213, 1856
        %3092 = vst.msk [vmem:[%s3091] sm:$0xff] %vm452, %v3083
        %3093 = vst.msk [vmem:[%s3091 + $0x8] sm:$0xff] %vm452, %v3084
        %3094 = vst.msk [vmem:[%s3091 + $0x10] sm:$0xff] %vm452, %v3085
        %3095 = vst.msk [vmem:[%s3091 + $0x18] sm:$0xff] %vm452, %v3086
        %3096 = vst.msk [vmem:[%s3091 + $0x20] sm:$0xff] %vm452, %v3087
        %3097 = vst.msk [vmem:[%s3091 + $0x28] sm:$0xff] %vm452, %v3088
        %3098 = vst.msk [vmem:[%s3091 + $0x30] sm:$0xff] %vm452, %v3089
        %3099 = vst.msk [vmem:[%s3091 + $0x38] sm:$0xff] %vm452, %v3090
        %s3100 = sld [smem:[#allocation5 + $0x1e]]
        %v3101 = vstv %s3100
        %v3102 = vmul.f32 %v214, %v3101
        %v3103 = vmul.f32 %v215, %v3101
        %v3104 = vmul.f32 %v216, %v3101
        %v3105 = vmul.f32 %v217, %v3101
        %v3106 = vmul.f32 %v218, %v3101
        %v3107 = vmul.f32 %v219, %v3101
        %v3108 = vmul.f32 %v220, %v3101
        %v3109 = vmul.f32 %v221, %v3101
        %s3110 = sld [smem:[#allocation5 + $0x9e]]
        %v3111 = vstv %s3110
        %v3112 = vmul.f32 %v279, %v3111
        %v3113 = vmul.f32 %v280, %v3111
        %v3114 = vmul.f32 %v281, %v3111
        %v3115 = vmul.f32 %v282, %v3111
        %v3116 = vmul.f32 %v283, %v3111
        %v3117 = vmul.f32 %v284, %v3111
        %v3118 = vmul.f32 %v285, %v3111
        %v3119 = vmul.f32 %v286, %v3111
        %v3120 = vadd.f32 %v3102, %v3112
        %v3121 = vadd.f32 %v3103, %v3113
        %v3122 = vadd.f32 %v3104, %v3114
        %v3123 = vadd.f32 %v3105, %v3115
        %v3124 = vadd.f32 %v3106, %v3116
        %v3125 = vadd.f32 %v3107, %v3117
        %v3126 = vadd.f32 %v3108, %v3118
        %v3127 = vadd.f32 %v3109, %v3119
        %s3128 = sld [smem:[#allocation5 + $0x11e]]
        %v3129 = vstv %s3128
        %v3130 = vmul.f32 %v290, %v3129
        %v3131 = vmul.f32 %v292, %v3129
        %v3132 = vmul.f32 %v294, %v3129
        %v3133 = vmul.f32 %v296, %v3129
        %v3134 = vmul.f32 %v298, %v3129
        %v3135 = vmul.f32 %v300, %v3129
        %v3136 = vmul.f32 %v302, %v3129
        %v3137 = vmul.f32 %v312, %v3129
        %v3138 = vadd.f32 %v3120, %v3130
        %v3139 = vadd.f32 %v3121, %v3131
        %v3140 = vadd.f32 %v3122, %v3132
        %v3141 = vadd.f32 %v3123, %v3133
        %v3142 = vadd.f32 %v3124, %v3134
        %v3143 = vadd.f32 %v3125, %v3135
        %v3144 = vadd.f32 %v3126, %v3136
        %v3145 = vadd.f32 %v3127, %v3137
        %s3146 = sld [smem:[#allocation5 + $0x19e]]
        %v3147 = vstv %s3146
        %v3148 = vmul.f32 %v362, %v3147
        %v3149 = vmul.f32 %v363, %v3147
        %v3150 = vmul.f32 %v364, %v3147
        %v3151 = vmul.f32 %v365, %v3147
        %v3152 = vmul.f32 %v366, %v3147
        %v3153 = vmul.f32 %v367, %v3147
        %v3154 = vmul.f32 %v368, %v3147
        %v3155 = vmul.f32 %v369, %v3147
        %v3156 = vadd.f32 %v3138, %v3148
        %v3157 = vadd.f32 %v3139, %v3149
        %v3158 = vadd.f32 %v3140, %v3150
        %v3159 = vadd.f32 %v3141, %v3151
        %v3160 = vadd.f32 %v3142, %v3152
        %v3161 = vadd.f32 %v3143, %v3153
        %v3162 = vadd.f32 %v3144, %v3154
        %v3163 = vadd.f32 %v3145, %v3155
        %s3164 = sld [smem:[#allocation6 + $0x1e]]
        %v3165 = vstv %s3164
        %v3166 = vadd.f32 %v3156, %v3165
        %v3167 = vadd.f32 %v3157, %v3165
        %v3168 = vadd.f32 %v3158, %v3165
        %v3169 = vadd.f32 %v3159, %v3165
        %v3170 = vadd.f32 %v3160, %v3165
        %v3171 = vadd.f32 %v3161, %v3165
        %v3172 = vadd.f32 %v3162, %v3165
        %v3173 = vadd.f32 %v3163, %v3165
        %v3174 = vmax.f32 %v3166, 0.0
        %v3175 = vmax.f32 %v3167, 0.0
        %v3176 = vmax.f32 %v3168, 0.0
        %v3177 = vmax.f32 %v3169, 0.0
        %v3178 = vmax.f32 %v3170, 0.0
        %v3179 = vmax.f32 %v3171, 0.0
        %v3180 = vmax.f32 %v3172, 0.0
        %v3181 = vmax.f32 %v3173, 0.0
        %s3182 = scalar_lea.vmem %s213, 1920
        %3183 = vst.msk [vmem:[%s3182] sm:$0xff] %vm452, %v3174
        %3184 = vst.msk [vmem:[%s3182 + $0x8] sm:$0xff] %vm452, %v3175
        %3185 = vst.msk [vmem:[%s3182 + $0x10] sm:$0xff] %vm452, %v3176
        %3186 = vst.msk [vmem:[%s3182 + $0x18] sm:$0xff] %vm452, %v3177
        %3187 = vst.msk [vmem:[%s3182 + $0x20] sm:$0xff] %vm452, %v3178
        %3188 = vst.msk [vmem:[%s3182 + $0x28] sm:$0xff] %vm452, %v3179
        %3189 = vst.msk [vmem:[%s3182 + $0x30] sm:$0xff] %vm452, %v3180
        %3190 = vst.msk [vmem:[%s3182 + $0x38] sm:$0xff] %vm452, %v3181
        %s3191 = sld [smem:[#allocation5 + $0x1f]]
        %v3192 = vstv %s3191
        %v3193 = vmul.f32 %v214, %v3192
        %v3194 = vmul.f32 %v215, %v3192
        %v3195 = vmul.f32 %v216, %v3192
        %v3196 = vmul.f32 %v217, %v3192
        %v3197 = vmul.f32 %v218, %v3192
        %v3198 = vmul.f32 %v219, %v3192
        %v3199 = vmul.f32 %v220, %v3192
        %v3200 = vmul.f32 %v221, %v3192
        %s3201 = sld [smem:[#allocation5 + $0x9f]]
        %v3202 = vstv %s3201
        %v3203 = vmul.f32 %v279, %v3202
        %v3204 = vmul.f32 %v280, %v3202
        %v3205 = vmul.f32 %v281, %v3202
        %v3206 = vmul.f32 %v282, %v3202
        %v3207 = vmul.f32 %v283, %v3202
        %v3208 = vmul.f32 %v284, %v3202
        %v3209 = vmul.f32 %v285, %v3202
        %v3210 = vmul.f32 %v286, %v3202
        %v3211 = vadd.f32 %v3193, %v3203
        %v3212 = vadd.f32 %v3194, %v3204
        %v3213 = vadd.f32 %v3195, %v3205
        %v3214 = vadd.f32 %v3196, %v3206
        %v3215 = vadd.f32 %v3197, %v3207
        %v3216 = vadd.f32 %v3198, %v3208
        %v3217 = vadd.f32 %v3199, %v3209
        %v3218 = vadd.f32 %v3200, %v3210
        %s3219 = sld [smem:[#allocation5 + $0x11f]]
        %v3220 = vstv %s3219
        %v3221 = vmul.f32 %v290, %v3220
        %v3222 = vmul.f32 %v292, %v3220
        %v3223 = vmul.f32 %v294, %v3220
        %v3224 = vmul.f32 %v296, %v3220
        %v3225 = vmul.f32 %v298, %v3220
        %v3226 = vmul.f32 %v300, %v3220
        %v3227 = vmul.f32 %v302, %v3220
        %v3228 = vmul.f32 %v312, %v3220
        %v3229 = vadd.f32 %v3211, %v3221
        %v3230 = vadd.f32 %v3212, %v3222
        %v3231 = vadd.f32 %v3213, %v3223
        %v3232 = vadd.f32 %v3214, %v3224
        %v3233 = vadd.f32 %v3215, %v3225
        %v3234 = vadd.f32 %v3216, %v3226
        %v3235 = vadd.f32 %v3217, %v3227
        %v3236 = vadd.f32 %v3218, %v3228
        %s3237 = sld [smem:[#allocation5 + $0x19f]]
        %v3238 = vstv %s3237
        %v3239 = vmul.f32 %v362, %v3238
        %v3240 = vmul.f32 %v363, %v3238
        %v3241 = vmul.f32 %v364, %v3238
        %v3242 = vmul.f32 %v365, %v3238
        %v3243 = vmul.f32 %v366, %v3238
        %v3244 = vmul.f32 %v367, %v3238
        %v3245 = vmul.f32 %v368, %v3238
        %v3246 = vmul.f32 %v369, %v3238
        %v3247 = vadd.f32 %v3229, %v3239
        %v3248 = vadd.f32 %v3230, %v3240
        %v3249 = vadd.f32 %v3231, %v3241
        %v3250 = vadd.f32 %v3232, %v3242
        %v3251 = vadd.f32 %v3233, %v3243
        %v3252 = vadd.f32 %v3234, %v3244
        %v3253 = vadd.f32 %v3235, %v3245
        %v3254 = vadd.f32 %v3236, %v3246
        %s3255 = sld [smem:[#allocation6 + $0x1f]]
        %v3256 = vstv %s3255
        %v3257 = vadd.f32 %v3247, %v3256
        %v3258 = vadd.f32 %v3248, %v3256
        %v3259 = vadd.f32 %v3249, %v3256
        %v3260 = vadd.f32 %v3250, %v3256
        %v3261 = vadd.f32 %v3251, %v3256
        %v3262 = vadd.f32 %v3252, %v3256
        %v3263 = vadd.f32 %v3253, %v3256
        %v3264 = vadd.f32 %v3254, %v3256
        %v3265 = vmax.f32 %v3257, 0.0
        %v3266 = vmax.f32 %v3258, 0.0
        %v3267 = vmax.f32 %v3259, 0.0
        %v3268 = vmax.f32 %v3260, 0.0
        %v3269 = vmax.f32 %v3261, 0.0
        %v3270 = vmax.f32 %v3262, 0.0
        %v3271 = vmax.f32 %v3263, 0.0
        %v3272 = vmax.f32 %v3264, 0.0
        %s3273 = scalar_lea.vmem %s213, 1984
        %3274 = vst.msk [vmem:[%s3273] sm:$0xff] %vm452, %v3265
        %3275 = vst.msk [vmem:[%s3273 + $0x8] sm:$0xff] %vm452, %v3266
        %3276 = vst.msk [vmem:[%s3273 + $0x10] sm:$0xff] %vm452, %v3267
        %3277 = vst.msk [vmem:[%s3273 + $0x18] sm:$0xff] %vm452, %v3268
        %3278 = vst.msk [vmem:[%s3273 + $0x20] sm:$0xff] %vm452, %v3269
        %3279 = vst.msk [vmem:[%s3273 + $0x28] sm:$0xff] %vm452, %v3270
        %3280 = vst.msk [vmem:[%s3273 + $0x30] sm:$0xff] %vm452, %v3271
        %3281 = vst.msk [vmem:[%s3273 + $0x38] sm:$0xff] %vm452, %v3272
        %p3282 = scmp.lt.s32.totalorder %s19, 1
        %s3283 = scalar_select %p3282, %s19, 1
        %s3284 = smul.addr %s3283, 256
        %s3285 = smul.addr %s3284, 8
        %s3286 = scalar_lea.vmem %s3, %s3285
        // Predicated region
        $region45: #{net_forward.4} parent=31 // pred_check
          %p3287 = pneg %p105
        $region46: #{net_forward.4} parent=31 // pred_check_branch
          %3289 = sbr.rel (%p3287) target = $region48
        $region47: #{net_forward.4} parent=31 // pred_region
          _
        $region48: #{net_forward.4} parent=31 // pred_fallthru
          _
      $region32: #{net_forward.4} parent=5 // pred_fallthru
        _
      %p3290 = scmp.le.s32.totalorder 2, %s14
      // Predicated region
      $region49: #{net_forward.4} parent=5 // pred_check
        %p3291 = pneg %p3290
      $region50: #{net_forward.4} parent=5 // pred_check_branch
        %3293 = sbr.rel (%p3291) target = $region52
      $region51: #{net_forward.4} parent=5 // pred_region
        %s3294 = ssub.s32 %s14, 2
        // Predicated region
        $region53: #{net_forward.4} parent=51 // pred_check
          %p3295 = pneg %p111
        $region54: #{net_forward.4} parent=51 // pred_check_branch
          %3297 = sbr.rel (%p3295) target = $region56
        $region55: #{net_forward.4} parent=51 // pred_region
          %p3298 = scmp.lt.s32.totalorder %s20, 1
          %s3299 = scalar_select %p3298, %s20, 1
          %s3300 = smul.addr %s3299, 256
          %s3301 = smul.addr %s3300, 8
          %s3302 = scalar_lea.vmem %s3, %s3301
        $region56: #{net_forward.4} parent=51 // pred_fallthru
          _
      $region52: #{net_forward.4} parent=5 // pred_fallthru
        _
    $region6: #{net_forward.4} parent=1 // loop_footer
      %s18 = sadd.s32 1, %s14
    $region7: #{net_forward.4} parent=1 // loop_footer_branch
      %13 = sbr.rel target = $region3
    $region8: #{net_forward.4} parent=1 // loop_exit
      _
    %3303 = vsyncpa [#allocation3], 1
    %s3304 = scalar_lea.sflag [#allocation3], 1
    %3305 = vsyncpa %s3304, 1
    %3306 = vsyncpa [#allocation4], 1
    %s3307 = scalar_lea.sflag [#allocation4], 1
    %3308 = vsyncpa %s3307, 1
    %3309 = vsyncpa [#allocation7], 1

// kernel: net_forward.5
$region0: #{net_forward.5}
  #allocation0 [shape = 'u32[]', space=smem, size = 0x4, offset = 0x4, fixed_abs, tag = 'smem constant byte address 0x4 - core index']
  #allocation1 [shape = 'u32[144,128]{1,0:T(1,128)}', space=vmem, size = 0x12000, scoped, tag = 'internal scratch']
  %s0 = inlined_call_operand.vmem [shape: f32[2,2048,64], index: 0, kind: input, shape index: {}]
  %s1 = inlined_call_operand.vmem [shape: f32[128,64], index: 1, kind: input, shape index: {}]
  %s2 = inlined_call_operand.vmem [shape: f32[1,64], index: 2, kind: input, shape index: {}]
  %s3 = inlined_call_operand.vmem [shape: f32[2,16,32,64], index: 3, kind: output, shape index: {}]
  %s4 = sld [smem:[#allocation0]]
  $region45: #{net_forward.5} parent=0
    _
  %s6 = ssub.s32 1, %s4
  %s7 = scalar_select 0, %s6, %s4
  loop: start=0, step=1, limit=4
  $region2: #{net_forward.5} parent=0 // loop_pre_header
    _
  $region3: #{net_forward.5} parent=0 // loop_header
    %s9 = sphi 0, %s13
    %p10 = scmp.ge.s32.totalorder %s9, 4
    %s19 = sphi 0, %s21
    %s22 = sphi 0, %s19
    %s23 = sphi 0, %s22
    %s39 = sphi 0, %s23
    %s43 = sphi 0, %s43
    %s45 = sphi 0, %s43
    %s46 = sphi 0, %s45
    %s60 = sphi 0, %s46
    %s64 = sphi 0, %s64
    %s66 = sphi 0, %s64
    %s67 = sphi 0, %s66
    %s81 = sphi 0, %s67
    %s87 = sphi 0, %s89
    %s90 = sphi 0, %s87
    %s91 = sphi 0, %s90
    %s107 = sphi 0, %s91
  $region4: #{net_forward.5} parent=0 // loop_header_branch
    %12 = sbr.rel (%p10) target = $region8
  $region5: #{net_forward.5} parent=0 // loop_body
    %s14 = ssub.s32 %s9, 1
    %s15 = ssub.s32 %s9, 2
    %s16 = sadd.s32 %s9, 1
    %s17 = ssub.s32 %s9, %s16
    %p18 = scmp.eq.s32.totalorder %s17, 0
    %s20 = sadd.s32 %s19, 1
    %s21 = scalar_select %p18, %s19, %s20
    %p24 = pneg %p18
    %p25 = scmp.eq.s32.totalorder %s9, 1
    %p26 = por %p24, %p25
    %p27 = scmp.ne.s32.totalorder %s19, %s22
    %p28 = scmp.eq.s32.totalorder %s9, 0
    %p29 = por %p27, %p28
    %p30 = scmp.ne.s32.totalorder %s19, %s22
    %p31 = scmp.eq.s32.totalorder %s14, 1
    %p32 = por %p30, %p31
    %p33 = scmp.ne.s32.totalorder %s22, %s23
    %p34 = scmp.eq.s32.totalorder %s14, 0
    %p35 = por %p33, %p34
    %p36 = scmp.ne.s32.totalorder %s22, %s23
    %p37 = scmp.eq.s32.totalorder %s15, 1
    %p38 = por %p36, %p37
    %p40 = scmp.ne.s32.totalorder %s23, %s39
    %p41 = scmp.eq.s32.totalorder %s15, 0
    %p42 = por %p40, %p41
    %s44 = sadd.s32 %s43, 1
    %p47 = scmp.eq.s32.totalorder %s9, 1
    %p48 = scmp.ne.s32.totalorder %s43, %s45
    %p49 = scmp.eq.s32.totalorder %s9, 0
    %p50 = por %p48, %p49
    %p51 = scmp.ne.s32.totalorder %s43, %s45
    %p52 = scmp.eq.s32.totalorder %s14, 1
    %p53 = por %p51, %p52
    %p54 = scmp.ne.s32.totalorder %s45, %s46
    %p55 = scmp.eq.s32.totalorder %s14, 0
    %p56 = por %p54, %p55
    %p57 = scmp.ne.s32.totalorder %s45, %s46
    %p58 = scmp.eq.s32.totalorder %s15, 1
    %p59 = por %p57, %p58
    %p61 = scmp.ne.s32.totalorder %s46, %s60
    %p62 = scmp.eq.s32.totalorder %s15, 0
    %p63 = por %p61, %p62
    %s65 = sadd.s32 %s64, 1
    %p68 = scmp.eq.s32.totalorder %s9, 1
    %p69 = scmp.ne.s32.totalorder %s64, %s66
    %p70 = scmp.eq.s32.totalorder %s9, 0
    %p71 = por %p69, %p70
    %p72 = scmp.ne.s32.totalorder %s64, %s66
    %p73 = scmp.eq.s32.totalorder %s14, 1
    %p74 = por %p72, %p73
    %p75 = scmp.ne.s32.totalorder %s66, %s67
    %p76 = scmp.eq.s32.totalorder %s14, 0
    %p77 = por %p75, %p76
    %p78 = scmp.ne.s32.totalorder %s66, %s67
    %p79 = scmp.eq.s32.totalorder %s15, 1
    %p80 = por %p78, %p79
    %p82 = scmp.ne.s32.totalorder %s67, %s81
    %p83 = scmp.eq.s32.totalorder %s15, 0
    %p84 = por %p82, %p83
    %s85 = ssub.s32 %s9, %s16
    %p86 = scmp.eq.s32.totalorder %s85, 0
    %s88 = sadd.s32 %s87, 1
    %s89 = scalar_select %p86, %s87, %s88
    %p92 = pneg %p86
    %p93 = scmp.eq.s32.totalorder %s9, 1
    %p94 = por %p92, %p93
    %p95 = scmp.ne.s32.totalorder %s87, %s90
    %p96 = scmp.eq.s32.totalorder %s9, 0
    %p97 = por %p95, %p96
    %p98 = scmp.ne.s32.totalorder %s87, %s90
    %p99 = scmp.eq.s32.totalorder %s14, 1
    %p100 = por %p98, %p99
    %p101 = scmp.ne.s32.totalorder %s90, %s91
    %p102 = scmp.eq.s32.totalorder %s14, 0
    %p103 = por %p101, %p102
    %p104 = scmp.ne.s32.totalorder %s90, %s91
    %p105 = scmp.eq.s32.totalorder %s15, 1
    %p106 = por %p104, %p105
    %p108 = scmp.ne.s32.totalorder %s91, %s107
    %p109 = scmp.eq.s32.totalorder %s15, 0
    %p110 = por %p108, %p109
    %p111 = scmp.le.s32.totalorder 1, %s9
    %p112 = scmp.lt.s32.totalorder %s9, 3
    %p113 = pnand %p111, %p112
    %p114 = pneg %p113
    // Predicated region
    $region9: #{net_forward.5} parent=5 // pred_check
      _
    $region10: #{net_forward.5} parent=5 // pred_check_branch
      %116 = sbr.rel (%p113) target = $region12
    $region11: #{net_forward.5} parent=5 // pred_region
      %s117 = ssub.s32 %s9, 1
      // Predicated region
      $region13: #{net_forward.5} parent=11 // pred_check
        %p118 = pneg %p56
      $region14: #{net_forward.5} parent=11 // pred_check_branch
        %120 = sbr.rel (%p118) target = $region16
      $region15: #{net_forward.5} parent=11 // pred_region
        _
      $region16: #{net_forward.5} parent=11 // pred_fallthru
        _
      // Predicated region
      $region17: #{net_forward.5} parent=11 // pred_check
        %p121 = pneg %p77
      $region18: #{net_forward.5} parent=11 // pred_check_branch
        %123 = sbr.rel (%p121) target = $region20
      $region19: #{net_forward.5} parent=11 // pred_region
        _
      $region20: #{net_forward.5} parent=11 // pred_fallthru
        _
    $region12: #{net_forward.5} parent=5 // pred_fallthru
      _
    %p124 = scmp.lt.s32.totalorder %s9, 2
    // Predicated region
    $region21: #{net_forward.5} parent=5 // pred_check
      %p125 = pneg %p124
    $region22: #{net_forward.5} parent=5 // pred_check_branch
      %127 = sbr.rel (%p125) target = $region24
    $region23: #{net_forward.5} parent=5 // pred_region
      // Predicated region
      $region25: #{net_forward.5} parent=23 // pred_check
        %p128 = pneg %p29
      $region26: #{net_forward.5} parent=23 // pred_check_branch
        %130 = sbr.rel (%p128) target = $region28
      $region27: #{net_forward.5} parent=23 // pred_region
        %p131 = scmp.lt.s32.totalorder %s9, 1
        %s132 = scalar_select %p131, %s9, 1
        %s133 = smul.addr %s132, 256
        %s134 = smul.addr %s133, 8
        %s135 = scalar_lea.vmem %s0, %s134
      $region28: #{net_forward.5} parent=23 // pred_fallthru
        _
    $region24: #{net_forward.5} parent=5 // pred_fallthru
      _
    %p136 = scmp.le.s32.totalorder 1, %s9
    %p137 = scmp.lt.s32.totalorder %s9, 3
    %p138 = pnand %p136, %p137
    %p139 = pneg %p138
    // Predicated region
    $region29: #{net_forward.5} parent=5 // pred_check
      _
    $region30: #{net_forward.5} parent=5 // pred_check_branch
      %141 = sbr.rel (%p138) target = $region32
    $region31: #{net_forward.5} parent=5 // pred_region
      %s142 = ssub.s32 %s9, 1
      %p143 = scmp.lt.s32.totalorder %s14, 1
      %s144 = scalar_select %p143, %s14, 1
      %s145 = smul.addr %s144, 256
      %s146 = smul.addr %s145, 8
      %s147 = scalar_lea.vmem %s0, %s146
      %p148 = pneg %p35
      %p149 = pneg %p32
      %p150 = pneg %p56
      %p151 = pneg %p53
      %p152 = pneg %p77
      %p153 = pneg %p74
      %p154 = pneg %p103
      %p155 = pneg %p100
      %p156 = scmp.lt.s32.totalorder %s14, 1
      %s157 = scalar_select %p156, %s14, 1
      %s158 = smul.addr %s157, 64
      %s159 = smul.addr %s158, 8
      %s160 = scalar_lea.vmem %s3, %s159
      %p161 = scmp.lt.s32.totalorder %s14, 1
      %s162 = scalar_select %p161, %s14, 1
      %s163 = smul.addr %s162, 256
      %s164 = smul.addr %s163, 8
      %s165 = scalar_lea.vmem %s0, %s164
      %p166 = scmp.lt.s32.totalorder %s14, 1
      %s167 = scalar_select %p166, %s14, 1
      %s168 = smul.addr %s167, 64
      %s169 = smul.addr %s168, 8
      %s170 = scalar_lea.vmem %s3, %s169
      %v171 = vld [vmem:[%s165] sm:$0xff]
      %v172 = vld [vmem:[%s165 + $0x8] sm:$0xff]
      %v173 = vld [vmem:[%s165 + $0x10] sm:$0xff]
      %v174 = vld [vmem:[%s165 + $0x18] sm:$0xff]
      %v175 = vld [vmem:[%s165 + $0x20] sm:$0xff]
      %v176 = vld [vmem:[%s165 + $0x28] sm:$0xff]
      %v177 = vld [vmem:[%s165 + $0x30] sm:$0xff]
      %v178 = vld [vmem:[%s165 + $0x38] sm:$0xff]
      %v179 = vld [vmem:[%s165 + $0x40] sm:$0xff]
      %v180 = vld [vmem:[%s165 + $0x48] sm:$0xff]
      %v181 = vld [vmem:[%s165 + $0x50] sm:$0xff]
      %v182 = vld [vmem:[%s165 + $0x58] sm:$0xff]
      %v183 = vld [vmem:[%s165 + $0x60] sm:$0xff]
      %v184 = vld [vmem:[%s165 + $0x68] sm:$0xff]
      %v185 = vld [vmem:[%s165 + $0x70] sm:$0xff]
      %v186 = vld [vmem:[%s165 + $0x78] sm:$0xff]
      %v187 = vld [vmem:[%s165 + $0x80] sm:$0xff]
      %v188 = vld [vmem:[%s165 + $0x88] sm:$0xff]
      %v189 = vld [vmem:[%s165 + $0x90] sm:$0xff]
      %v190 = vld [vmem:[%s165 + $0x98] sm:$0xff]
      %v191 = vld [vmem:[%s165 + $0xa0] sm:$0xff]
      %v192 = vld [vmem:[%s165 + $0xa8] sm:$0xff]
      %v193 = vld [vmem:[%s165 + $0xb0] sm:$0xff]
      %v194 = vld [vmem:[%s165 + $0xb8] sm:$0xff]
      %v195 = vld [vmem:[%s165 + $0xc0] sm:$0xff]
      %v196 = vld [vmem:[%s165 + $0xc8] sm:$0xff]
      %v197 = vld [vmem:[%s165 + $0xd0] sm:$0xff]
      %v198 = vld [vmem:[%s165 + $0xd8] sm:$0xff]
      %v199 = vld [vmem:[%s165 + $0xe0] sm:$0xff]
      %v200 = vld [vmem:[%s165 + $0xe8] sm:$0xff]
      %v201 = vld [vmem:[%s165 + $0xf0] sm:$0xff]
      %v202 = vld [vmem:[%s165 + $0xf8] sm:$0xff]
      %v203 = vld [vmem:[%s165 + $0x100] sm:$0xff]
      %v204 = vld [vmem:[%s165 + $0x108] sm:$0xff]
      %v205 = vld [vmem:[%s165 + $0x110] sm:$0xff]
      %v206 = vld [vmem:[%s165 + $0x118] sm:$0xff]
      %v207 = vld [vmem:[%s165 + $0x120] sm:$0xff]
      %v208 = vld [vmem:[%s165 + $0x128] sm:$0xff]
      %v209 = vld [vmem:[%s165 + $0x130] sm:$0xff]
      %v210 = vld [vmem:[%s165 + $0x138] sm:$0xff]
      %v211 = vld [vmem:[%s165 + $0x140] sm:$0xff]
      %v212 = vld [vmem:[%s165 + $0x148] sm:$0xff]
      %v213 = vld [vmem:[%s165 + $0x150] sm:$0xff]
      %v214 = vld [vmem:[%s165 + $0x158] sm:$0xff]
      %v215 = vld [vmem:[%s165 + $0x160] sm:$0xff]
      %v216 = vld [vmem:[%s165 + $0x168] sm:$0xff]
      %v217 = vld [vmem:[%s165 + $0x170] sm:$0xff]
      %v218 = vld [vmem:[%s165 + $0x178] sm:$0xff]
      %v219 = vld [vmem:[%s165 + $0x180] sm:$0xff]
      %v220 = vld [vmem:[%s165 + $0x188] sm:$0xff]
      %v221 = vld [vmem:[%s165 + $0x190] sm:$0xff]
      %v222 = vld [vmem:[%s165 + $0x198] sm:$0xff]
      %v223 = vld [vmem:[%s165 + $0x1a0] sm:$0xff]
      %v224 = vld [vmem:[%s165 + $0x1a8] sm:$0xff]
      %v225 = vld [vmem:[%s165 + $0x1b0] sm:$0xff]
      %v226 = vld [vmem:[%s165 + $0x1b8] sm:$0xff]
      %v227 = vld [vmem:[%s165 + $0x1c0] sm:$0xff]
      %v228 = vld [vmem:[%s165 + $0x1c8] sm:$0xff]
      %v229 = vld [vmem:[%s165 + $0x1d0] sm:$0xff]
      %v230 = vld [vmem:[%s165 + $0x1d8] sm:$0xff]
      %v231 = vld [vmem:[%s165 + $0x1e0] sm:$0xff]
      %v232 = vld [vmem:[%s165 + $0x1e8] sm:$0xff]
      %v233 = vld [vmem:[%s165 + $0x1f0] sm:$0xff]
      %v234 = vld [vmem:[%s165 + $0x1f8] sm:$0xff]
      %v235 = vld [vmem:[%s165 + $0x200] sm:$0xff]
      %v236 = vld [vmem:[%s165 + $0x208] sm:$0xff]
      %v237 = vld [vmem:[%s165 + $0x210] sm:$0xff]
      %v238 = vld [vmem:[%s165 + $0x218] sm:$0xff]
      %v239 = vld [vmem:[%s165 + $0x220] sm:$0xff]
      %v240 = vld [vmem:[%s165 + $0x228] sm:$0xff]
      %v241 = vld [vmem:[%s165 + $0x230] sm:$0xff]
      %v242 = vld [vmem:[%s165 + $0x238] sm:$0xff]
      %v243 = vld [vmem:[%s165 + $0x240] sm:$0xff]
      %v244 = vld [vmem:[%s165 + $0x248] sm:$0xff]
      %v245 = vld [vmem:[%s165 + $0x250] sm:$0xff]
      %v246 = vld [vmem:[%s165 + $0x258] sm:$0xff]
      %v247 = vld [vmem:[%s165 + $0x260] sm:$0xff]
      %v248 = vld [vmem:[%s165 + $0x268] sm:$0xff]
      %v249 = vld [vmem:[%s165 + $0x270] sm:$0xff]
      %v250 = vld [vmem:[%s165 + $0x278] sm:$0xff]
      %v251 = vld [vmem:[%s165 + $0x280] sm:$0xff]
      %v252 = vld [vmem:[%s165 + $0x288] sm:$0xff]
      %v253 = vld [vmem:[%s165 + $0x290] sm:$0xff]
      %v254 = vld [vmem:[%s165 + $0x298] sm:$0xff]
      %v255 = vld [vmem:[%s165 + $0x2a0] sm:$0xff]
      %v256 = vld [vmem:[%s165 + $0x2a8] sm:$0xff]
      %v257 = vld [vmem:[%s165 + $0x2b0] sm:$0xff]
      %v258 = vld [vmem:[%s165 + $0x2b8] sm:$0xff]
      %v259 = vld [vmem:[%s165 + $0x2c0] sm:$0xff]
      %v260 = vld [vmem:[%s165 + $0x2c8] sm:$0xff]
      %v261 = vld [vmem:[%s165 + $0x2d0] sm:$0xff]
      %v262 = vld [vmem:[%s165 + $0x2d8] sm:$0xff]
      %v263 = vld [vmem:[%s165 + $0x2e0] sm:$0xff]
      %v264 = vld [vmem:[%s165 + $0x2e8] sm:$0xff]
      %v265 = vld [vmem:[%s165 + $0x2f0] sm:$0xff]
      %v266 = vld [vmem:[%s165 + $0x2f8] sm:$0xff]
      %v267 = vld [vmem:[%s165 + $0x300] sm:$0xff]
      %v268 = vld [vmem:[%s165 + $0x308] sm:$0xff]
      %v269 = vld [vmem:[%s165 + $0x310] sm:$0xff]
      %v270 = vld [vmem:[%s165 + $0x318] sm:$0xff]
      %v271 = vld [vmem:[%s165 + $0x320] sm:$0xff]
      %v272 = vld [vmem:[%s165 + $0x328] sm:$0xff]
      %v273 = vld [vmem:[%s165 + $0x330] sm:$0xff]
      %v274 = vld [vmem:[%s165 + $0x338] sm:$0xff]
      %v275 = vld [vmem:[%s165 + $0x340] sm:$0xff]
      %v276 = vld [vmem:[%s165 + $0x348] sm:$0xff]
      %v277 = vld [vmem:[%s165 + $0x350] sm:$0xff]
      %v278 = vld [vmem:[%s165 + $0x358] sm:$0xff]
      %v279 = vld [vmem:[%s165 + $0x360] sm:$0xff]
      %v280 = vld [vmem:[%s165 + $0x368] sm:$0xff]
      %v281 = vld [vmem:[%s165 + $0x370] sm:$0xff]
      %v282 = vld [vmem:[%s165 + $0x378] sm:$0xff]
      %v283 = vld [vmem:[%s165 + $0x380] sm:$0xff]
      %v284 = vld [vmem:[%s165 + $0x388] sm:$0xff]
      %v285 = vld [vmem:[%s165 + $0x390] sm:$0xff]
      %v286 = vld [vmem:[%s165 + $0x398] sm:$0xff]
      %v287 = vld [vmem:[%s165 + $0x3a0] sm:$0xff]
      %v288 = vld [vmem:[%s165 + $0x3a8] sm:$0xff]
      %v289 = vld [vmem:[%s165 + $0x3b0] sm:$0xff]
      %v290 = vld [vmem:[%s165 + $0x3b8] sm:$0xff]
      %v291 = vld [vmem:[%s165 + $0x3c0] sm:$0xff]
      %v292 = vld [vmem:[%s165 + $0x3c8] sm:$0xff]
      %v293 = vld [vmem:[%s165 + $0x3d0] sm:$0xff]
      %v294 = vld [vmem:[%s165 + $0x3d8] sm:$0xff]
      %v295 = vld [vmem:[%s165 + $0x3e0] sm:$0xff]
      %v296 = vld [vmem:[%s165 + $0x3e8] sm:$0xff]
      %v297 = vld [vmem:[%s165 + $0x3f0] sm:$0xff]
      %v298 = vld [vmem:[%s165 + $0x3f8] sm:$0xff]
      %v299 = vld [vmem:[%s165 + $0x400] sm:$0xff]
      %v300 = vld [vmem:[%s165 + $0x408] sm:$0xff]
      %v301 = vld [vmem:[%s165 + $0x410] sm:$0xff]
      %v302 = vld [vmem:[%s165 + $0x418] sm:$0xff]
      %v303 = vld [vmem:[%s165 + $0x420] sm:$0xff]
      %v304 = vld [vmem:[%s165 + $0x428] sm:$0xff]
      %v305 = vld [vmem:[%s165 + $0x430] sm:$0xff]
      %v306 = vld [vmem:[%s165 + $0x438] sm:$0xff]
      %v307 = vld [vmem:[%s165 + $0x440] sm:$0xff]
      %v308 = vld [vmem:[%s165 + $0x448] sm:$0xff]
      %v309 = vld [vmem:[%s165 + $0x450] sm:$0xff]
      %v310 = vld [vmem:[%s165 + $0x458] sm:$0xff]
      %v311 = vld [vmem:[%s165 + $0x460] sm:$0xff]
      %v312 = vld [vmem:[%s165 + $0x468] sm:$0xff]
      %v313 = vld [vmem:[%s165 + $0x470] sm:$0xff]
      %v314 = vld [vmem:[%s165 + $0x478] sm:$0xff]
      %v315 = vld [vmem:[%s165 + $0x480] sm:$0xff]
      %v316 = vld [vmem:[%s165 + $0x488] sm:$0xff]
      %v317 = vld [vmem:[%s165 + $0x490] sm:$0xff]
      %v318 = vld [vmem:[%s165 + $0x498] sm:$0xff]
      %v319 = vld [vmem:[%s165 + $0x4a0] sm:$0xff]
      %v320 = vld [vmem:[%s165 + $0x4a8] sm:$0xff]
      %v321 = vld [vmem:[%s165 + $0x4b0] sm:$0xff]
      %v322 = vld [vmem:[%s165 + $0x4b8] sm:$0xff]
      %v323 = vld [vmem:[%s165 + $0x4c0] sm:$0xff]
      %v324 = vld [vmem:[%s165 + $0x4c8] sm:$0xff]
      %v325 = vld [vmem:[%s165 + $0x4d0] sm:$0xff]
      %v326 = vld [vmem:[%s165 + $0x4d8] sm:$0xff]
      %v327 = vld [vmem:[%s165 + $0x4e0] sm:$0xff]
      %v328 = vld [vmem:[%s165 + $0x4e8] sm:$0xff]
      %v329 = vld [vmem:[%s165 + $0x4f0] sm:$0xff]
      %v330 = vld [vmem:[%s165 + $0x4f8] sm:$0xff]
      %v331 = vld [vmem:[%s165 + $0x500] sm:$0xff]
      %v332 = vld [vmem:[%s165 + $0x508] sm:$0xff]
      %v333 = vld [vmem:[%s165 + $0x510] sm:$0xff]
      %v334 = vld [vmem:[%s165 + $0x518] sm:$0xff]
      %v335 = vld [vmem:[%s165 + $0x520] sm:$0xff]
      %v336 = vld [vmem:[%s165 + $0x528] sm:$0xff]
      %v337 = vld [vmem:[%s165 + $0x530] sm:$0xff]
      %v338 = vld [vmem:[%s165 + $0x538] sm:$0xff]
      %v339 = vld [vmem:[%s165 + $0x540] sm:$0xff]
      %v340 = vld [vmem:[%s165 + $0x548] sm:$0xff]
      %v341 = vld [vmem:[%s165 + $0x550] sm:$0xff]
      %v342 = vld [vmem:[%s165 + $0x558] sm:$0xff]
      %v343 = vld [vmem:[%s165 + $0x560] sm:$0xff]
      %v344 = vld [vmem:[%s165 + $0x568] sm:$0xff]
      %v345 = vld [vmem:[%s165 + $0x570] sm:$0xff]
      %v346 = vld [vmem:[%s165 + $0x578] sm:$0xff]
      %v347 = vld [vmem:[%s165 + $0x580] sm:$0xff]
      %v348 = vld [vmem:[%s165 + $0x588] sm:$0xff]
      %v349 = vld [vmem:[%s165 + $0x590] sm:$0xff]
      %v350 = vld [vmem:[%s165 + $0x598] sm:$0xff]
      %v351 = vld [vmem:[%s165 + $0x5a0] sm:$0xff]
      %v352 = vld [vmem:[%s165 + $0x5a8] sm:$0xff]
      %v353 = vld [vmem:[%s165 + $0x5b0] sm:$0xff]
      %v354 = vld [vmem:[%s165 + $0x5b8] sm:$0xff]
      %v355 = vld [vmem:[%s165 + $0x5c0] sm:$0xff]
      %v356 = vld [vmem:[%s165 + $0x5c8] sm:$0xff]
      %v357 = vld [vmem:[%s165 + $0x5d0] sm:$0xff]
      %v358 = vld [vmem:[%s165 + $0x5d8] sm:$0xff]
      %v359 = vld [vmem:[%s165 + $0x5e0] sm:$0xff]
      %v360 = vld [vmem:[%s165 + $0x5e8] sm:$0xff]
      %v361 = vld [vmem:[%s165 + $0x5f0] sm:$0xff]
      %v362 = vld [vmem:[%s165 + $0x5f8] sm:$0xff]
      %v363 = vld [vmem:[%s165 + $0x600] sm:$0xff]
      %v364 = vld [vmem:[%s165 + $0x608] sm:$0xff]
      %v365 = vld [vmem:[%s165 + $0x610] sm:$0xff]
      %v366 = vld [vmem:[%s165 + $0x618] sm:$0xff]
      %v367 = vld [vmem:[%s165 + $0x620] sm:$0xff]
      %v368 = vld [vmem:[%s165 + $0x628] sm:$0xff]
      %v369 = vld [vmem:[%s165 + $0x630] sm:$0xff]
      %v370 = vld [vmem:[%s165 + $0x638] sm:$0xff]
      %v371 = vld [vmem:[%s165 + $0x640] sm:$0xff]
      %v372 = vld [vmem:[%s165 + $0x648] sm:$0xff]
      %v373 = vld [vmem:[%s165 + $0x650] sm:$0xff]
      %v374 = vld [vmem:[%s165 + $0x658] sm:$0xff]
      %v375 = vld [vmem:[%s165 + $0x660] sm:$0xff]
      %v376 = vld [vmem:[%s165 + $0x668] sm:$0xff]
      %v377 = vld [vmem:[%s165 + $0x670] sm:$0xff]
      %v378 = vld [vmem:[%s165 + $0x678] sm:$0xff]
      %v379 = vld [vmem:[%s165 + $0x680] sm:$0xff]
      %v380 = vld [vmem:[%s165 + $0x688] sm:$0xff]
      %v381 = vld [vmem:[%s165 + $0x690] sm:$0xff]
      %v382 = vld [vmem:[%s165 + $0x698] sm:$0xff]
      %v383 = vld [vmem:[%s165 + $0x6a0] sm:$0xff]
      %v384 = vld [vmem:[%s165 + $0x6a8] sm:$0xff]
      %v385 = vld [vmem:[%s165 + $0x6b0] sm:$0xff]
      %v386 = vld [vmem:[%s165 + $0x6b8] sm:$0xff]
      %v387 = vld [vmem:[%s165 + $0x6c0] sm:$0xff]
      %v388 = vld [vmem:[%s165 + $0x6c8] sm:$0xff]
      %v389 = vld [vmem:[%s165 + $0x6d0] sm:$0xff]
      %v390 = vld [vmem:[%s165 + $0x6d8] sm:$0xff]
      %v391 = vld [vmem:[%s165 + $0x6e0] sm:$0xff]
      %v392 = vld [vmem:[%s165 + $0x6e8] sm:$0xff]
      %v393 = vld [vmem:[%s165 + $0x6f0] sm:$0xff]
      %v394 = vld [vmem:[%s165 + $0x6f8] sm:$0xff]
      %v395 = vld [vmem:[%s165 + $0x700] sm:$0xff]
      %v396 = vld [vmem:[%s165 + $0x708] sm:$0xff]
      %v397 = vld [vmem:[%s165 + $0x710] sm:$0xff]
      %v398 = vld [vmem:[%s165 + $0x718] sm:$0xff]
      %v399 = vld [vmem:[%s165 + $0x720] sm:$0xff]
      %v400 = vld [vmem:[%s165 + $0x728] sm:$0xff]
      %v401 = vld [vmem:[%s165 + $0x730] sm:$0xff]
      %v402 = vld [vmem:[%s165 + $0x738] sm:$0xff]
      %v403 = vld [vmem:[%s165 + $0x740] sm:$0xff]
      %v404 = vld [vmem:[%s165 + $0x748] sm:$0xff]
      %v405 = vld [vmem:[%s165 + $0x750] sm:$0xff]
      %v406 = vld [vmem:[%s165 + $0x758] sm:$0xff]
      %v407 = vld [vmem:[%s165 + $0x760] sm:$0xff]
      %v408 = vld [vmem:[%s165 + $0x768] sm:$0xff]
      %v409 = vld [vmem:[%s165 + $0x770] sm:$0xff]
      %v410 = vld [vmem:[%s165 + $0x778] sm:$0xff]
      %v411 = vld [vmem:[%s165 + $0x780] sm:$0xff]
      %v412 = vld [vmem:[%s165 + $0x788] sm:$0xff]
      %v413 = vld [vmem:[%s165 + $0x790] sm:$0xff]
      %v414 = vld [vmem:[%s165 + $0x798] sm:$0xff]
      %v415 = vld [vmem:[%s165 + $0x7a0] sm:$0xff]
      %v416 = vld [vmem:[%s165 + $0x7a8] sm:$0xff]
      %v417 = vld [vmem:[%s165 + $0x7b0] sm:$0xff]
      %v418 = vld [vmem:[%s165 + $0x7b8] sm:$0xff]
      %v419 = vld [vmem:[%s165 + $0x7c0] sm:$0xff]
      %v420 = vld [vmem:[%s165 + $0x7c8] sm:$0xff]
      %v421 = vld [vmem:[%s165 + $0x7d0] sm:$0xff]
      %v422 = vld [vmem:[%s165 + $0x7d8] sm:$0xff]
      %v423 = vld [vmem:[%s165 + $0x7e0] sm:$0xff]
      %v424 = vld [vmem:[%s165 + $0x7e8] sm:$0xff]
      %v425 = vld [vmem:[%s165 + $0x7f0] sm:$0xff]
      %v426 = vld [vmem:[%s165 + $0x7f8] sm:$0xff]
      %683 = vrot.lane.b32.xlu0 %v171, 96
      %v684 = vpop.permute.xlu0 %683
      %685 = vrot.lane.b32.xlu0 %v172, 96
      %v686 = vpop.permute.xlu0 %685
      %687 = vrot.lane.b32.xlu0 %v173, 96
      %v688 = vpop.permute.xlu0 %687
      %689 = vrot.lane.b32.xlu0 %v174, 96
      %v690 = vpop.permute.xlu0 %689
      %691 = vrot.lane.b32.xlu0 %v175, 96
      %v692 = vpop.permute.xlu0 %691
      %693 = vrot.lane.b32.xlu0 %v176, 96
      %v694 = vpop.permute.xlu0 %693
      %695 = vrot.lane.b32.xlu0 %v177, 96
      %v696 = vpop.permute.xlu0 %695
      %697 = vrot.lane.b32.xlu0 %v178, 96
      %v698 = vpop.permute.xlu0 %697
      %699 = vrot.lane.b32.xlu0 %v179, 96
      %v700 = vpop.permute.xlu0 %699
      %701 = vrot.lane.b32.xlu0 %v180, 96
      %v702 = vpop.permute.xlu0 %701
      %703 = vrot.lane.b32.xlu0 %v181, 96
      %v704 = vpop.permute.xlu0 %703
      %705 = vrot.lane.b32.xlu0 %v182, 96
      %v706 = vpop.permute.xlu0 %705
      %707 = vrot.lane.b32.xlu0 %v183, 96
      %v708 = vpop.permute.xlu0 %707
      %709 = vrot.lane.b32.xlu0 %v184, 96
      %v710 = vpop.permute.xlu0 %709
      %711 = vrot.lane.b32.xlu0 %v185, 96
      %v712 = vpop.permute.xlu0 %711
      %713 = vrot.lane.b32.xlu0 %v186, 96
      %v714 = vpop.permute.xlu0 %713
      %715 = vrot.lane.b32.xlu0 %v187, 96
      %v716 = vpop.permute.xlu0 %715
      %717 = vrot.lane.b32.xlu0 %v188, 96
      %v718 = vpop.permute.xlu0 %717
      %719 = vrot.lane.b32.xlu0 %v189, 96
      %v720 = vpop.permute.xlu0 %719
      %721 = vrot.lane.b32.xlu0 %v190, 96
      %v722 = vpop.permute.xlu0 %721
      %723 = vrot.lane.b32.xlu0 %v191, 96
      %v724 = vpop.permute.xlu0 %723
      %725 = vrot.lane.b32.xlu0 %v192, 96
      %v726 = vpop.permute.xlu0 %725
      %727 = vrot.lane.b32.xlu0 %v193, 96
      %v728 = vpop.permute.xlu0 %727
      %729 = vrot.lane.b32.xlu0 %v194, 96
      %v730 = vpop.permute.xlu0 %729
      %731 = vrot.lane.b32.xlu0 %v195, 96
      %v732 = vpop.permute.xlu0 %731
      %733 = vrot.lane.b32.xlu0 %v196, 96
      %v734 = vpop.permute.xlu0 %733
      %735 = vrot.lane.b32.xlu0 %v197, 96
      %v736 = vpop.permute.xlu0 %735
      %737 = vrot.lane.b32.xlu0 %v198, 96
      %v738 = vpop.permute.xlu0 %737
      %739 = vrot.lane.b32.xlu0 %v199, 96
      %v740 = vpop.permute.xlu0 %739
      %741 = vrot.lane.b32.xlu0 %v200, 96
      %v742 = vpop.permute.xlu0 %741
      %743 = vrot.lane.b32.xlu0 %v201, 96
      %v744 = vpop.permute.xlu0 %743
      %745 = vrot.lane.b32.xlu0 %v202, 96
      %v746 = vpop.permute.xlu0 %745
      %747 = vrot.lane.b32.xlu0 %v203, 96
      %v748 = vpop.permute.xlu0 %747
      %749 = vrot.lane.b32.xlu0 %v204, 96
      %v750 = vpop.permute.xlu0 %749
      %751 = vrot.lane.b32.xlu0 %v205, 96
      %v752 = vpop.permute.xlu0 %751
      %753 = vrot.lane.b32.xlu0 %v206, 96
      %v754 = vpop.permute.xlu0 %753
      %755 = vrot.lane.b32.xlu0 %v207, 96
      %v756 = vpop.permute.xlu0 %755
      %757 = vrot.lane.b32.xlu0 %v208, 96
      %v758 = vpop.permute.xlu0 %757
      %759 = vrot.lane.b32.xlu0 %v209, 96
      %v760 = vpop.permute.xlu0 %759
      %761 = vrot.lane.b32.xlu0 %v210, 96
      %v762 = vpop.permute.xlu0 %761
      %763 = vrot.lane.b32.xlu0 %v211, 96
      %v764 = vpop.permute.xlu0 %763
      %765 = vrot.lane.b32.xlu0 %v212, 96
      %v766 = vpop.permute.xlu0 %765
      %767 = vrot.lane.b32.xlu0 %v213, 96
      %v768 = vpop.permute.xlu0 %767
      %769 = vrot.lane.b32.xlu0 %v214, 96
      %v770 = vpop.permute.xlu0 %769
      %771 = vrot.lane.b32.xlu0 %v215, 96
      %v772 = vpop.permute.xlu0 %771
      %773 = vrot.lane.b32.xlu0 %v216, 96
      %v774 = vpop.permute.xlu0 %773
      %775 = vrot.lane.b32.xlu0 %v217, 96
      %v776 = vpop.permute.xlu0 %775
      %777 = vrot.lane.b32.xlu0 %v218, 96
      %v778 = vpop.permute.xlu0 %777
      %779 = vrot.lane.b32.xlu0 %v219, 96
      %v780 = vpop.permute.xlu0 %779
      %781 = vrot.lane.b32.xlu0 %v220, 96
      %v782 = vpop.permute.xlu0 %781
      %783 = vrot.lane.b32.xlu0 %v221, 96
      %v784 = vpop.permute.xlu0 %783
      %785 = vrot.lane.b32.xlu0 %v222, 96
      %v786 = vpop.permute.xlu0 %785
      %787 = vrot.lane.b32.xlu0 %v223, 96
      %v788 = vpop.permute.xlu0 %787
      %789 = vrot.lane.b32.xlu0 %v224, 96
      %v790 = vpop.permute.xlu0 %789
      %791 = vrot.lane.b32.xlu0 %v225, 96
      %v792 = vpop.permute.xlu0 %791
      %793 = vrot.lane.b32.xlu0 %v226, 96
      %v794 = vpop.permute.xlu0 %793
      %795 = vrot.lane.b32.xlu0 %v227, 96
      %v796 = vpop.permute.xlu0 %795
      %797 = vrot.lane.b32.xlu0 %v228, 96
      %v798 = vpop.permute.xlu0 %797
      %799 = vrot.lane.b32.xlu0 %v229, 96
      %v800 = vpop.permute.xlu0 %799
      %801 = vrot.lane.b32.xlu0 %v230, 96
      %v802 = vpop.permute.xlu0 %801
      %803 = vrot.lane.b32.xlu0 %v231, 96
      %v804 = vpop.permute.xlu0 %803
      %805 = vrot.lane.b32.xlu0 %v232, 96
      %v806 = vpop.permute.xlu0 %805
      %807 = vrot.lane.b32.xlu0 %v233, 96
      %v808 = vpop.permute.xlu0 %807
      %809 = vrot.lane.b32.xlu0 %v234, 96
      %v810 = vpop.permute.xlu0 %809
      %811 = vrot.lane.b32.xlu0 %v235, 96
      %v812 = vpop.permute.xlu0 %811
      %813 = vrot.lane.b32.xlu0 %v236, 96
      %v814 = vpop.permute.xlu0 %813
      %815 = vrot.lane.b32.xlu0 %v237, 96
      %v816 = vpop.permute.xlu0 %815
      %817 = vrot.lane.b32.xlu0 %v238, 96
      %v818 = vpop.permute.xlu0 %817
      %819 = vrot.lane.b32.xlu0 %v239, 96
      %v820 = vpop.permute.xlu0 %819
      %821 = vrot.lane.b32.xlu0 %v240, 96
      %v822 = vpop.permute.xlu0 %821
      %823 = vrot.lane.b32.xlu0 %v241, 96
      %v824 = vpop.permute.xlu0 %823
      %825 = vrot.lane.b32.xlu0 %v242, 96
      %v826 = vpop.permute.xlu0 %825
      %827 = vrot.lane.b32.xlu0 %v243, 96
      %v828 = vpop.permute.xlu0 %827
      %829 = vrot.lane.b32.xlu0 %v244, 96
      %v830 = vpop.permute.xlu0 %829
      %831 = vrot.lane.b32.xlu0 %v245, 96
      %v832 = vpop.permute.xlu0 %831
      %833 = vrot.lane.b32.xlu0 %v246, 96
      %v834 = vpop.permute.xlu0 %833
      %835 = vrot.lane.b32.xlu0 %v247, 96
      %v836 = vpop.permute.xlu0 %835
      %837 = vrot.lane.b32.xlu0 %v248, 96
      %v838 = vpop.permute.xlu0 %837
      %839 = vrot.lane.b32.xlu0 %v249, 96
      %v840 = vpop.permute.xlu0 %839
      %841 = vrot.lane.b32.xlu0 %v250, 96
      %v842 = vpop.permute.xlu0 %841
      %843 = vrot.lane.b32.xlu0 %v251, 96
      %v844 = vpop.permute.xlu0 %843
      %845 = vrot.lane.b32.xlu0 %v252, 96
      %v846 = vpop.permute.xlu0 %845
      %847 = vrot.lane.b32.xlu0 %v253, 96
      %v848 = vpop.permute.xlu0 %847
      %849 = vrot.lane.b32.xlu0 %v254, 96
      %v850 = vpop.permute.xlu0 %849
      %851 = vrot.lane.b32.xlu0 %v255, 96
      %v852 = vpop.permute.xlu0 %851
      %853 = vrot.lane.b32.xlu0 %v256, 96
      %v854 = vpop.permute.xlu0 %853
      %855 = vrot.lane.b32.xlu0 %v257, 96
      %v856 = vpop.permute.xlu0 %855
      %857 = vrot.lane.b32.xlu0 %v258, 96
      %v858 = vpop.permute.xlu0 %857
      %859 = vrot.lane.b32.xlu0 %v259, 96
      %v860 = vpop.permute.xlu0 %859
      %861 = vrot.lane.b32.xlu0 %v260, 96
      %v862 = vpop.permute.xlu0 %861
      %863 = vrot.lane.b32.xlu0 %v261, 96
      %v864 = vpop.permute.xlu0 %863
      %865 = vrot.lane.b32.xlu0 %v262, 96
      %v866 = vpop.permute.xlu0 %865
      %867 = vrot.lane.b32.xlu0 %v263, 96
      %v868 = vpop.permute.xlu0 %867
      %869 = vrot.lane.b32.xlu0 %v264, 96
      %v870 = vpop.permute.xlu0 %869
      %871 = vrot.lane.b32.xlu0 %v265, 96
      %v872 = vpop.permute.xlu0 %871
      %873 = vrot.lane.b32.xlu0 %v266, 96
      %v874 = vpop.permute.xlu0 %873
      %875 = vrot.lane.b32.xlu0 %v267, 96
      %v876 = vpop.permute.xlu0 %875
      %877 = vrot.lane.b32.xlu0 %v268, 96
      %v878 = vpop.permute.xlu0 %877
      %879 = vrot.lane.b32.xlu0 %v269, 96
      %v880 = vpop.permute.xlu0 %879
      %881 = vrot.lane.b32.xlu0 %v270, 96
      %v882 = vpop.permute.xlu0 %881
      %883 = vrot.lane.b32.xlu0 %v271, 96
      %v884 = vpop.permute.xlu0 %883
      %885 = vrot.lane.b32.xlu0 %v272, 96
      %v886 = vpop.permute.xlu0 %885
      %887 = vrot.lane.b32.xlu0 %v273, 96
      %v888 = vpop.permute.xlu0 %887
      %889 = vrot.lane.b32.xlu0 %v274, 96
      %v890 = vpop.permute.xlu0 %889
      %891 = vrot.lane.b32.xlu0 %v275, 96
      %v892 = vpop.permute.xlu0 %891
      %893 = vrot.lane.b32.xlu0 %v276, 96
      %v894 = vpop.permute.xlu0 %893
      %895 = vrot.lane.b32.xlu0 %v277, 96
      %v896 = vpop.permute.xlu0 %895
      %897 = vrot.lane.b32.xlu0 %v278, 96
      %v898 = vpop.permute.xlu0 %897
      %899 = vrot.lane.b32.xlu0 %v279, 96
      %v900 = vpop.permute.xlu0 %899
      %901 = vrot.lane.b32.xlu0 %v280, 96
      %v902 = vpop.permute.xlu0 %901
      %903 = vrot.lane.b32.xlu0 %v281, 96
      %v904 = vpop.permute.xlu0 %903
      %905 = vrot.lane.b32.xlu0 %v282, 96
      %v906 = vpop.permute.xlu0 %905
      %907 = vrot.lane.b32.xlu0 %v283, 96
      %v908 = vpop.permute.xlu0 %907
      %909 = vrot.lane.b32.xlu0 %v284, 96
      %v910 = vpop.permute.xlu0 %909
      %911 = vrot.lane.b32.xlu0 %v285, 96
      %v912 = vpop.permute.xlu0 %911
      %913 = vrot.lane.b32.xlu0 %v286, 96
      %v914 = vpop.permute.xlu0 %913
      %915 = vrot.lane.b32.xlu0 %v287, 96
      %v916 = vpop.permute.xlu0 %915
      %917 = vrot.lane.b32.xlu0 %v288, 96
      %v918 = vpop.permute.xlu0 %917
      %919 = vrot.lane.b32.xlu0 %v289, 96
      %v920 = vpop.permute.xlu0 %919
      %921 = vrot.lane.b32.xlu0 %v290, 96
      %v922 = vpop.permute.xlu0 %921
      %923 = vrot.lane.b32.xlu0 %v291, 96
      %v924 = vpop.permute.xlu0 %923
      %925 = vrot.lane.b32.xlu0 %v292, 96
      %v926 = vpop.permute.xlu0 %925
      %927 = vrot.lane.b32.xlu0 %v293, 96
      %v928 = vpop.permute.xlu0 %927
      %929 = vrot.lane.b32.xlu0 %v294, 96
      %v930 = vpop.permute.xlu0 %929
      %931 = vrot.lane.b32.xlu0 %v295, 96
      %v932 = vpop.permute.xlu0 %931
      %933 = vrot.lane.b32.xlu0 %v296, 96
      %v934 = vpop.permute.xlu0 %933
      %935 = vrot.lane.b32.xlu0 %v297, 96
      %v936 = vpop.permute.xlu0 %935
      %937 = vrot.lane.b32.xlu0 %v298, 96
      %v938 = vpop.permute.xlu0 %937
      %939 = vrot.lane.b32.xlu0 %v299, 96
      %v940 = vpop.permute.xlu0 %939
      %941 = vrot.lane.b32.xlu0 %v300, 96
      %v942 = vpop.permute.xlu0 %941
      %943 = vrot.lane.b32.xlu0 %v301, 96
      %v944 = vpop.permute.xlu0 %943
      %945 = vrot.lane.b32.xlu0 %v302, 96
      %v946 = vpop.permute.xlu0 %945
      %947 = vrot.lane.b32.xlu0 %v303, 96
      %v948 = vpop.permute.xlu0 %947
      %949 = vrot.lane.b32.xlu0 %v304, 96
      %v950 = vpop.permute.xlu0 %949
      %951 = vrot.lane.b32.xlu0 %v305, 96
      %v952 = vpop.permute.xlu0 %951
      %953 = vrot.lane.b32.xlu0 %v306, 96
      %v954 = vpop.permute.xlu0 %953
      %955 = vrot.lane.b32.xlu0 %v307, 96
      %v956 = vpop.permute.xlu0 %955
      %957 = vrot.lane.b32.xlu0 %v308, 96
      %v958 = vpop.permute.xlu0 %957
      %959 = vrot.lane.b32.xlu0 %v309, 96
      %v960 = vpop.permute.xlu0 %959
      %961 = vrot.lane.b32.xlu0 %v310, 96
      %v962 = vpop.permute.xlu0 %961
      %963 = vrot.lane.b32.xlu0 %v311, 96
      %v964 = vpop.permute.xlu0 %963
      %965 = vrot.lane.b32.xlu0 %v312, 96
      %v966 = vpop.permute.xlu0 %965
      %967 = vrot.lane.b32.xlu0 %v313, 96
      %v968 = vpop.permute.xlu0 %967
      %969 = vrot.lane.b32.xlu0 %v314, 96
      %v970 = vpop.permute.xlu0 %969
      %971 = vrot.lane.b32.xlu0 %v315, 96
      %v972 = vpop.permute.xlu0 %971
      %973 = vrot.lane.b32.xlu0 %v316, 96
      %v974 = vpop.permute.xlu0 %973
      %975 = vrot.lane.b32.xlu0 %v317, 96
      %v976 = vpop.permute.xlu0 %975
      %977 = vrot.lane.b32.xlu0 %v318, 96
      %v978 = vpop.permute.xlu0 %977
      %979 = vrot.lane.b32.xlu0 %v319, 96
      %v980 = vpop.permute.xlu0 %979
      %981 = vrot.lane.b32.xlu0 %v320, 96
      %v982 = vpop.permute.xlu0 %981
      %983 = vrot.lane.b32.xlu0 %v321, 96
      %v984 = vpop.permute.xlu0 %983
      %985 = vrot.lane.b32.xlu0 %v322, 96
      %v986 = vpop.permute.xlu0 %985
      %987 = vrot.lane.b32.xlu0 %v323, 96
      %v988 = vpop.permute.xlu0 %987
      %989 = vrot.lane.b32.xlu0 %v324, 96
      %v990 = vpop.permute.xlu0 %989
      %991 = vrot.lane.b32.xlu0 %v325, 96
      %v992 = vpop.permute.xlu0 %991
      %993 = vrot.lane.b32.xlu0 %v326, 96
      %v994 = vpop.permute.xlu0 %993
      %995 = vrot.lane.b32.xlu0 %v327, 96
      %v996 = vpop.permute.xlu0 %995
      %997 = vrot.lane.b32.xlu0 %v328, 96
      %v998 = vpop.permute.xlu0 %997
      %999 = vrot.lane.b32.xlu0 %v329, 96
      %v1000 = vpop.permute.xlu0 %999
      %1001 = vrot.lane.b32.xlu0 %v330, 96
      %v1002 = vpop.permute.xlu0 %1001
      %1003 = vrot.lane.b32.xlu0 %v331, 96
      %v1004 = vpop.permute.xlu0 %1003
      %1005 = vrot.lane.b32.xlu0 %v332, 96
      %v1006 = vpop.permute.xlu0 %1005
      %1007 = vrot.lane.b32.xlu0 %v333, 96
      %v1008 = vpop.permute.xlu0 %1007
      %1009 = vrot.lane.b32.xlu0 %v334, 96
      %v1010 = vpop.permute.xlu0 %1009
      %1011 = vrot.lane.b32.xlu0 %v335, 96
      %v1012 = vpop.permute.xlu0 %1011
      %1013 = vrot.lane.b32.xlu0 %v336, 96
      %v1014 = vpop.permute.xlu0 %1013
      %1015 = vrot.lane.b32.xlu0 %v337, 96
      %v1016 = vpop.permute.xlu0 %1015
      %1017 = vrot.lane.b32.xlu0 %v338, 96
      %v1018 = vpop.permute.xlu0 %1017
      %1019 = vrot.lane.b32.xlu0 %v339, 96
      %v1020 = vpop.permute.xlu0 %1019
      %1021 = vrot.lane.b32.xlu0 %v340, 96
      %v1022 = vpop.permute.xlu0 %1021
      %1023 = vrot.lane.b32.xlu0 %v341, 96
      %v1024 = vpop.permute.xlu0 %1023
      %1025 = vrot.lane.b32.xlu0 %v342, 96
      %v1026 = vpop.permute.xlu0 %1025
      %1027 = vrot.lane.b32.xlu0 %v343, 96
      %v1028 = vpop.permute.xlu0 %1027
      %1029 = vrot.lane.b32.xlu0 %v344, 96
      %v1030 = vpop.permute.xlu0 %1029
      %1031 = vrot.lane.b32.xlu0 %v345, 96
      %v1032 = vpop.permute.xlu0 %1031
      %1033 = vrot.lane.b32.xlu0 %v346, 96
      %v1034 = vpop.permute.xlu0 %1033
      %1035 = vrot.lane.b32.xlu0 %v347, 96
      %v1036 = vpop.permute.xlu0 %1035
      %1037 = vrot.lane.b32.xlu0 %v348, 96
      %v1038 = vpop.permute.xlu0 %1037
      %1039 = vrot.lane.b32.xlu0 %v349, 96
      %v1040 = vpop.permute.xlu0 %1039
      %1041 = vrot.lane.b32.xlu0 %v350, 96
      %v1042 = vpop.permute.xlu0 %1041
      %1043 = vrot.lane.b32.xlu0 %v351, 96
      %v1044 = vpop.permute.xlu0 %1043
      %1045 = vrot.lane.b32.xlu0 %v352, 96
      %v1046 = vpop.permute.xlu0 %1045
      %1047 = vrot.lane.b32.xlu0 %v353, 96
      %v1048 = vpop.permute.xlu0 %1047
      %1049 = vrot.lane.b32.xlu0 %v354, 96
      %v1050 = vpop.permute.xlu0 %1049
      %1051 = vrot.lane.b32.xlu0 %v355, 96
      %v1052 = vpop.permute.xlu0 %1051
      %1053 = vrot.lane.b32.xlu0 %v356, 96
      %v1054 = vpop.permute.xlu0 %1053
      %1055 = vrot.lane.b32.xlu0 %v357, 96
      %v1056 = vpop.permute.xlu0 %1055
      %1057 = vrot.lane.b32.xlu0 %v358, 96
      %v1058 = vpop.permute.xlu0 %1057
      %1059 = vrot.lane.b32.xlu0 %v359, 96
      %v1060 = vpop.permute.xlu0 %1059
      %1061 = vrot.lane.b32.xlu0 %v360, 96
      %v1062 = vpop.permute.xlu0 %1061
      %1063 = vrot.lane.b32.xlu0 %v361, 96
      %v1064 = vpop.permute.xlu0 %1063
      %1065 = vrot.lane.b32.xlu0 %v362, 96
      %v1066 = vpop.permute.xlu0 %1065
      %1067 = vrot.lane.b32.xlu0 %v363, 96
      %v1068 = vpop.permute.xlu0 %1067
      %1069 = vrot.lane.b32.xlu0 %v364, 96
      %v1070 = vpop.permute.xlu0 %1069
      %1071 = vrot.lane.b32.xlu0 %v365, 96
      %v1072 = vpop.permute.xlu0 %1071
      %1073 = vrot.lane.b32.xlu0 %v366, 96
      %v1074 = vpop.permute.xlu0 %1073
      %1075 = vrot.lane.b32.xlu0 %v367, 96
      %v1076 = vpop.permute.xlu0 %1075
      %1077 = vrot.lane.b32.xlu0 %v368, 96
      %v1078 = vpop.permute.xlu0 %1077
      %1079 = vrot.lane.b32.xlu0 %v369, 96
      %v1080 = vpop.permute.xlu0 %1079
      %1081 = vrot.lane.b32.xlu0 %v370, 96
      %v1082 = vpop.permute.xlu0 %1081
      %1083 = vrot.lane.b32.xlu0 %v371, 96
      %v1084 = vpop.permute.xlu0 %1083
      %1085 = vrot.lane.b32.xlu0 %v372, 96
      %v1086 = vpop.permute.xlu0 %1085
      %1087 = vrot.lane.b32.xlu0 %v373, 96
      %v1088 = vpop.permute.xlu0 %1087
      %1089 = vrot.lane.b32.xlu0 %v374, 96
      %v1090 = vpop.permute.xlu0 %1089
      %1091 = vrot.lane.b32.xlu0 %v375, 96
      %v1092 = vpop.permute.xlu0 %1091
      %1093 = vrot.lane.b32.xlu0 %v376, 96
      %v1094 = vpop.permute.xlu0 %1093
      %1095 = vrot.lane.b32.xlu0 %v377, 96
      %v1096 = vpop.permute.xlu0 %1095
      %1097 = vrot.lane.b32.xlu0 %v378, 96
      %v1098 = vpop.permute.xlu0 %1097
      %1099 = vrot.lane.b32.xlu0 %v379, 96
      %v1100 = vpop.permute.xlu0 %1099
      %1101 = vrot.lane.b32.xlu0 %v380, 96
      %v1102 = vpop.permute.xlu0 %1101
      %1103 = vrot.lane.b32.xlu0 %v381, 96
      %v1104 = vpop.permute.xlu0 %1103
      %1105 = vrot.lane.b32.xlu0 %v382, 96
      %v1106 = vpop.permute.xlu0 %1105
      %1107 = vrot.lane.b32.xlu0 %v383, 96
      %v1108 = vpop.permute.xlu0 %1107
      %1109 = vrot.lane.b32.xlu0 %v384, 96
      %v1110 = vpop.permute.xlu0 %1109
      %1111 = vrot.lane.b32.xlu0 %v385, 96
      %v1112 = vpop.permute.xlu0 %1111
      %1113 = vrot.lane.b32.xlu0 %v386, 96
      %v1114 = vpop.permute.xlu0 %1113
      %1115 = vrot.lane.b32.xlu0 %v387, 96
      %v1116 = vpop.permute.xlu0 %1115
      %1117 = vrot.lane.b32.xlu0 %v388, 96
      %v1118 = vpop.permute.xlu0 %1117
      %1119 = vrot.lane.b32.xlu0 %v389, 96
      %v1120 = vpop.permute.xlu0 %1119
      %1121 = vrot.lane.b32.xlu0 %v390, 96
      %v1122 = vpop.permute.xlu0 %1121
      %1123 = vrot.lane.b32.xlu0 %v391, 96
      %v1124 = vpop.permute.xlu0 %1123
      %1125 = vrot.lane.b32.xlu0 %v392, 96
      %v1126 = vpop.permute.xlu0 %1125
      %1127 = vrot.lane.b32.xlu0 %v393, 96
      %v1128 = vpop.permute.xlu0 %1127
      %1129 = vrot.lane.b32.xlu0 %v394, 96
      %v1130 = vpop.permute.xlu0 %1129
      %1131 = vrot.lane.b32.xlu0 %v395, 96
      %v1132 = vpop.permute.xlu0 %1131
      %1133 = vrot.lane.b32.xlu0 %v396, 96
      %v1134 = vpop.permute.xlu0 %1133
      %1135 = vrot.lane.b32.xlu0 %v397, 96
      %v1136 = vpop.permute.xlu0 %1135
      %1137 = vrot.lane.b32.xlu0 %v398, 96
      %v1138 = vpop.permute.xlu0 %1137
      %1139 = vrot.lane.b32.xlu0 %v399, 96
      %v1140 = vpop.permute.xlu0 %1139
      %1141 = vrot.lane.b32.xlu0 %v400, 96
      %v1142 = vpop.permute.xlu0 %1141
      %1143 = vrot.lane.b32.xlu0 %v401, 96
      %v1144 = vpop.permute.xlu0 %1143
      %1145 = vrot.lane.b32.xlu0 %v402, 96
      %v1146 = vpop.permute.xlu0 %1145
      %1147 = vrot.lane.b32.xlu0 %v403, 96
      %v1148 = vpop.permute.xlu0 %1147
      %1149 = vrot.lane.b32.xlu0 %v404, 96
      %v1150 = vpop.permute.xlu0 %1149
      %1151 = vrot.lane.b32.xlu0 %v405, 96
      %v1152 = vpop.permute.xlu0 %1151
      %1153 = vrot.lane.b32.xlu0 %v406, 96
      %v1154 = vpop.permute.xlu0 %1153
      %1155 = vrot.lane.b32.xlu0 %v407, 96
      %v1156 = vpop.permute.xlu0 %1155
      %1157 = vrot.lane.b32.xlu0 %v408, 96
      %v1158 = vpop.permute.xlu0 %1157
      %1159 = vrot.lane.b32.xlu0 %v409, 96
      %v1160 = vpop.permute.xlu0 %1159
      %1161 = vrot.lane.b32.xlu0 %v410, 96
      %v1162 = vpop.permute.xlu0 %1161
      %1163 = vrot.lane.b32.xlu0 %v411, 96
      %v1164 = vpop.permute.xlu0 %1163
      %1165 = vrot.lane.b32.xlu0 %v412, 96
      %v1166 = vpop.permute.xlu0 %1165
      %1167 = vrot.lane.b32.xlu0 %v413, 96
      %v1168 = vpop.permute.xlu0 %1167
      %1169 = vrot.lane.b32.xlu0 %v414, 96
      %v1170 = vpop.permute.xlu0 %1169
      %1171 = vrot.lane.b32.xlu0 %v415, 96
      %v1172 = vpop.permute.xlu0 %1171
      %1173 = vrot.lane.b32.xlu0 %v416, 96
      %v1174 = vpop.permute.xlu0 %1173
      %1175 = vrot.lane.b32.xlu0 %v417, 96
      %v1176 = vpop.permute.xlu0 %1175
      %1177 = vrot.lane.b32.xlu0 %v418, 96
      %v1178 = vpop.permute.xlu0 %1177
      %1179 = vrot.lane.b32.xlu0 %v419, 96
      %v1180 = vpop.permute.xlu0 %1179
      %1181 = vrot.lane.b32.xlu0 %v420, 96
      %v1182 = vpop.permute.xlu0 %1181
      %1183 = vrot.lane.b32.xlu0 %v421, 96
      %v1184 = vpop.permute.xlu0 %1183
      %1185 = vrot.lane.b32.xlu0 %v422, 96
      %v1186 = vpop.permute.xlu0 %1185
      %1187 = vrot.lane.b32.xlu0 %v423, 96
      %v1188 = vpop.permute.xlu0 %1187
      %1189 = vrot.lane.b32.xlu0 %v424, 96
      %v1190 = vpop.permute.xlu0 %1189
      %1191 = vrot.lane.b32.xlu0 %v425, 96
      %v1192 = vpop.permute.xlu0 %1191
      %1193 = vrot.lane.b32.xlu0 %v426, 96
      %v1194 = vpop.permute.xlu0 %1193
      %v1451 = vmax.f32 %v171, %v684
      %v1452 = vmax.f32 %v172, %v686
      %v1453 = vmax.f32 %v173, %v688
      %v1454 = vmax.f32 %v174, %v690
      %v1455 = vmax.f32 %v175, %v692
      %v1456 = vmax.f32 %v176, %v694
      %v1457 = vmax.f32 %v177, %v696
      %v1458 = vmax.f32 %v178, %v698
      %v1459 = vmax.f32 %v179, %v700
      %v1460 = vmax.f32 %v180, %v702
      %v1461 = vmax.f32 %v181, %v704
      %v1462 = vmax.f32 %v182, %v706
      %v1463 = vmax.f32 %v183, %v708
      %v1464 = vmax.f32 %v184, %v710
      %v1465 = vmax.f32 %v185, %v712
      %v1466 = vmax.f32 %v186, %v714
      %v1467 = vmax.f32 %v187, %v716
      %v1468 = vmax.f32 %v188, %v718
      %v1469 = vmax.f32 %v189, %v720
      %v1470 = vmax.f32 %v190, %v722
      %v1471 = vmax.f32 %v191, %v724
      %v1472 = vmax.f32 %v192, %v726
      %v1473 = vmax.f32 %v193, %v728
      %v1474 = vmax.f32 %v194, %v730
      %v1475 = vmax.f32 %v195, %v732
      %v1476 = vmax.f32 %v196, %v734
      %v1477 = vmax.f32 %v197, %v736
      %v1478 = vmax.f32 %v198, %v738
      %v1479 = vmax.f32 %v199, %v740
      %v1480 = vmax.f32 %v200, %v742
      %v1481 = vmax.f32 %v201, %v744
      %v1482 = vmax.f32 %v202, %v746
      %v1483 = vmax.f32 %v203, %v748
      %v1484 = vmax.f32 %v204, %v750
      %v1485 = vmax.f32 %v205, %v752
      %v1486 = vmax.f32 %v206, %v754
      %v1487 = vmax.f32 %v207, %v756
      %v1488 = vmax.f32 %v208, %v758
      %v1489 = vmax.f32 %v209, %v760
      %v1490 = vmax.f32 %v210, %v762
      %v1491 = vmax.f32 %v211, %v764
      %v1492 = vmax.f32 %v212, %v766
      %v1493 = vmax.f32 %v213, %v768
      %v1494 = vmax.f32 %v214, %v770
      %v1495 = vmax.f32 %v215, %v772
      %v1496 = vmax.f32 %v216, %v774
      %v1497 = vmax.f32 %v217, %v776
      %v1498 = vmax.f32 %v218, %v778
      %v1499 = vmax.f32 %v219, %v780
      %v1500 = vmax.f32 %v220, %v782
      %v1501 = vmax.f32 %v221, %v784
      %v1502 = vmax.f32 %v222, %v786
      %v1503 = vmax.f32 %v223, %v788
      %v1504 = vmax.f32 %v224, %v790
      %v1505 = vmax.f32 %v225, %v792
      %v1506 = vmax.f32 %v226, %v794
      %v1507 = vmax.f32 %v227, %v796
      %v1508 = vmax.f32 %v228, %v798
      %v1509 = vmax.f32 %v229, %v800
      %v1510 = vmax.f32 %v230, %v802
      %v1511 = vmax.f32 %v231, %v804
      %v1512 = vmax.f32 %v232, %v806
      %v1513 = vmax.f32 %v233, %v808
      %v1514 = vmax.f32 %v234, %v810
      %v1515 = vmax.f32 %v235, %v812
      %v1516 = vmax.f32 %v236, %v814
      %v1517 = vmax.f32 %v237, %v816
      %v1518 = vmax.f32 %v238, %v818
      %v1519 = vmax.f32 %v239, %v820
      %v1520 = vmax.f32 %v240, %v822
      %v1521 = vmax.f32 %v241, %v824
      %v1522 = vmax.f32 %v242, %v826
      %v1523 = vmax.f32 %v243, %v828
      %v1524 = vmax.f32 %v244, %v830
      %v1525 = vmax.f32 %v245, %v832
      %v1526 = vmax.f32 %v246, %v834
      %v1527 = vmax.f32 %v247, %v836
      %v1528 = vmax.f32 %v248, %v838
      %v1529 = vmax.f32 %v249, %v840
      %v1530 = vmax.f32 %v250, %v842
      %v1531 = vmax.f32 %v251, %v844
      %v1532 = vmax.f32 %v252, %v846
      %v1533 = vmax.f32 %v253, %v848
      %v1534 = vmax.f32 %v254, %v850
      %v1535 = vmax.f32 %v255, %v852
      %v1536 = vmax.f32 %v256, %v854
      %v1537 = vmax.f32 %v257, %v856
      %v1538 = vmax.f32 %v258, %v858
      %v1539 = vmax.f32 %v259, %v860
      %v1540 = vmax.f32 %v260, %v862
      %v1541 = vmax.f32 %v261, %v864
      %v1542 = vmax.f32 %v262, %v866
      %v1543 = vmax.f32 %v263, %v868
      %v1544 = vmax.f32 %v264, %v870
      %v1545 = vmax.f32 %v265, %v872
      %v1546 = vmax.f32 %v266, %v874
      %v1547 = vmax.f32 %v267, %v876
      %v1548 = vmax.f32 %v268, %v878
      %v1549 = vmax.f32 %v269, %v880
      %v1550 = vmax.f32 %v270, %v882
      %v1551 = vmax.f32 %v271, %v884
      %v1552 = vmax.f32 %v272, %v886
      %v1553 = vmax.f32 %v273, %v888
      %v1554 = vmax.f32 %v274, %v890
      %v1555 = vmax.f32 %v275, %v892
      %v1556 = vmax.f32 %v276, %v894
      %v1557 = vmax.f32 %v277, %v896
      %v1558 = vmax.f32 %v278, %v898
      %v1559 = vmax.f32 %v279, %v900
      %v1560 = vmax.f32 %v280, %v902
      %v1561 = vmax.f32 %v281, %v904
      %v1562 = vmax.f32 %v282, %v906
      %v1563 = vmax.f32 %v283, %v908
      %v1564 = vmax.f32 %v284, %v910
      %v1565 = vmax.f32 %v285, %v912
      %v1566 = vmax.f32 %v286, %v914
      %v1567 = vmax.f32 %v287, %v916
      %v1568 = vmax.f32 %v288, %v918
      %v1569 = vmax.f32 %v289, %v920
      %v1570 = vmax.f32 %v290, %v922
      %v1571 = vmax.f32 %v291, %v924
      %v1572 = vmax.f32 %v292, %v926
      %v1573 = vmax.f32 %v293, %v928
      %v1574 = vmax.f32 %v294, %v930
      %v1575 = vmax.f32 %v295, %v932
      %v1576 = vmax.f32 %v296, %v934
      %v1577 = vmax.f32 %v297, %v936
      %v1578 = vmax.f32 %v298, %v938
      %v1579 = vmax.f32 %v299, %v940
      %v1580 = vmax.f32 %v300, %v942
      %v1581 = vmax.f32 %v301, %v944
      %v1582 = vmax.f32 %v302, %v946
      %v1583 = vmax.f32 %v303, %v948
      %v1584 = vmax.f32 %v304, %v950
      %v1585 = vmax.f32 %v305, %v952
      %v1586 = vmax.f32 %v306, %v954
      %v1587 = vmax.f32 %v307, %v956
      %v1588 = vmax.f32 %v308, %v958
      %v1589 = vmax.f32 %v309, %v960
      %v1590 = vmax.f32 %v310, %v962
      %v1591 = vmax.f32 %v311, %v964
      %v1592 = vmax.f32 %v312, %v966
      %v1593 = vmax.f32 %v313, %v968
      %v1594 = vmax.f32 %v314, %v970
      %v1595 = vmax.f32 %v315, %v972
      %v1596 = vmax.f32 %v316, %v974
      %v1597 = vmax.f32 %v317, %v976
      %v1598 = vmax.f32 %v318, %v978
      %v1599 = vmax.f32 %v319, %v980
      %v1600 = vmax.f32 %v320, %v982
      %v1601 = vmax.f32 %v321, %v984
      %v1602 = vmax.f32 %v322, %v986
      %v1603 = vmax.f32 %v323, %v988
      %v1604 = vmax.f32 %v324, %v990
      %v1605 = vmax.f32 %v325, %v992
      %v1606 = vmax.f32 %v326, %v994
      %v1607 = vmax.f32 %v327, %v996
      %v1608 = vmax.f32 %v328, %v998
      %v1609 = vmax.f32 %v329, %v1000
      %v1610 = vmax.f32 %v330, %v1002
      %v1611 = vmax.f32 %v331, %v1004
      %v1612 = vmax.f32 %v332, %v1006
      %v1613 = vmax.f32 %v333, %v1008
      %v1614 = vmax.f32 %v334, %v1010
      %v1615 = vmax.f32 %v335, %v1012
      %v1616 = vmax.f32 %v336, %v1014
      %v1617 = vmax.f32 %v337, %v1016
      %v1618 = vmax.f32 %v338, %v1018
      %v1619 = vmax.f32 %v339, %v1020
      %v1620 = vmax.f32 %v340, %v1022
      %v1621 = vmax.f32 %v341, %v1024
      %v1622 = vmax.f32 %v342, %v1026
      %v1623 = vmax.f32 %v343, %v1028
      %v1624 = vmax.f32 %v344, %v1030
      %v1625 = vmax.f32 %v345, %v1032
      %v1626 = vmax.f32 %v346, %v1034
      %v1627 = vmax.f32 %v347, %v1036
      %v1628 = vmax.f32 %v348, %v1038
      %v1629 = vmax.f32 %v349, %v1040
      %v1630 = vmax.f32 %v350, %v1042
      %v1631 = vmax.f32 %v351, %v1044
      %v1632 = vmax.f32 %v352, %v1046
      %v1633 = vmax.f32 %v353, %v1048
      %v1634 = vmax.f32 %v354, %v1050
      %v1635 = vmax.f32 %v355, %v1052
      %v1636 = vmax.f32 %v356, %v1054
      %v1637 = vmax.f32 %v357, %v1056
      %v1638 = vmax.f32 %v358, %v1058
      %v1639 = vmax.f32 %v359, %v1060
      %v1640 = vmax.f32 %v360, %v1062
      %v1641 = vmax.f32 %v361, %v1064
      %v1642 = vmax.f32 %v362, %v1066
      %v1643 = vmax.f32 %v363, %v1068
      %v1644 = vmax.f32 %v364, %v1070
      %v1645 = vmax.f32 %v365, %v1072
      %v1646 = vmax.f32 %v366, %v1074
      %v1647 = vmax.f32 %v367, %v1076
      %v1648 = vmax.f32 %v368, %v1078
      %v1649 = vmax.f32 %v369, %v1080
      %v1650 = vmax.f32 %v370, %v1082
      %v1651 = vmax.f32 %v371, %v1084
      %v1652 = vmax.f32 %v372, %v1086
      %v1653 = vmax.f32 %v373, %v1088
      %v1654 = vmax.f32 %v374, %v1090
      %v1655 = vmax.f32 %v375, %v1092
      %v1656 = vmax.f32 %v376, %v1094
      %v1657 = vmax.f32 %v377, %v1096
      %v1658 = vmax.f32 %v378, %v1098
      %v1659 = vmax.f32 %v379, %v1100
      %v1660 = vmax.f32 %v380, %v1102
      %v1661 = vmax.f32 %v381, %v1104
      %v1662 = vmax.f32 %v382, %v1106
      %v1663 = vmax.f32 %v383, %v1108
      %v1664 = vmax.f32 %v384, %v1110
      %v1665 = vmax.f32 %v385, %v1112
      %v1666 = vmax.f32 %v386, %v1114
      %v1667 = vmax.f32 %v387, %v1116
      %v1668 = vmax.f32 %v388, %v1118
      %v1669 = vmax.f32 %v389, %v1120
      %v1670 = vmax.f32 %v390, %v1122
      %v1671 = vmax.f32 %v391, %v1124
      %v1672 = vmax.f32 %v392, %v1126
      %v1673 = vmax.f32 %v393, %v1128
      %v1674 = vmax.f32 %v394, %v1130
      %v1675 = vmax.f32 %v395, %v1132
      %v1676 = vmax.f32 %v396, %v1134
      %v1677 = vmax.f32 %v397, %v1136
      %v1678 = vmax.f32 %v398, %v1138
      %v1679 = vmax.f32 %v399, %v1140
      %v1680 = vmax.f32 %v400, %v1142
      %v1681 = vmax.f32 %v401, %v1144
      %v1682 = vmax.f32 %v402, %v1146
      %v1683 = vmax.f32 %v403, %v1148
      %v1684 = vmax.f32 %v404, %v1150
      %v1685 = vmax.f32 %v405, %v1152
      %v1686 = vmax.f32 %v406, %v1154
      %v1687 = vmax.f32 %v407, %v1156
      %v1688 = vmax.f32 %v408, %v1158
      %v1689 = vmax.f32 %v409, %v1160
      %v1690 = vmax.f32 %v410, %v1162
      %v1691 = vmax.f32 %v411, %v1164
      %v1692 = vmax.f32 %v412, %v1166
      %v1693 = vmax.f32 %v413, %v1168
      %v1694 = vmax.f32 %v414, %v1170
      %v1695 = vmax.f32 %v415, %v1172
      %v1696 = vmax.f32 %v416, %v1174
      %v1697 = vmax.f32 %v417, %v1176
      %v1698 = vmax.f32 %v418, %v1178
      %v1699 = vmax.f32 %v419, %v1180
      %v1700 = vmax.f32 %v420, %v1182
      %v1701 = vmax.f32 %v421, %v1184
      %v1702 = vmax.f32 %v422, %v1186
      %v1703 = vmax.f32 %v423, %v1188
      %v1704 = vmax.f32 %v424, %v1190
      %v1705 = vmax.f32 %v425, %v1192
      %v1706 = vmax.f32 %v426, %v1194
      %v1707 = vmax.f32 %v1451, %v1455
      %v1708 = vmax.f32 %v1452, %v1456
      %v1709 = vmax.f32 %v1453, %v1457
      %v1710 = vmax.f32 %v1454, %v1458
      %v1711 = vmax.f32 %v1459, %v1463
      %v1712 = vmax.f32 %v1460, %v1464
      %v1713 = vmax.f32 %v1461, %v1465
      %v1714 = vmax.f32 %v1462, %v1466
      %v1715 = vmax.f32 %v1467, %v1471
      %v1716 = vmax.f32 %v1468, %v1472
      %v1717 = vmax.f32 %v1469, %v1473
      %v1718 = vmax.f32 %v1470, %v1474
      %v1719 = vmax.f32 %v1475, %v1479
      %v1720 = vmax.f32 %v1476, %v1480
      %v1721 = vmax.f32 %v1477, %v1481
      %v1722 = vmax.f32 %v1478, %v1482
      %v1723 = vmax.f32 %v1483, %v1487
      %v1724 = vmax.f32 %v1484, %v1488
      %v1725 = vmax.f32 %v1485, %v1489
      %v1726 = vmax.f32 %v1486, %v1490
      %v1727 = vmax.f32 %v1491, %v1495
      %v1728 = vmax.f32 %v1492, %v1496
      %v1729 = vmax.f32 %v1493, %v1497
      %v1730 = vmax.f32 %v1494, %v1498
      %v1731 = vmax.f32 %v1499, %v1503
      %v1732 = vmax.f32 %v1500, %v1504
      %v1733 = vmax.f32 %v1501, %v1505
      %v1734 = vmax.f32 %v1502, %v1506
      %v1735 = vmax.f32 %v1507, %v1511
      %v1736 = vmax.f32 %v1508, %v1512
      %v1737 = vmax.f32 %v1509, %v1513
      %v1738 = vmax.f32 %v1510, %v1514
      %v1739 = vmax.f32 %v1515, %v1519
      %v1740 = vmax.f32 %v1516, %v1520
      %v1741 = vmax.f32 %v1517, %v1521
      %v1742 = vmax.f32 %v1518, %v1522
      %v1743 = vmax.f32 %v1523, %v1527
      %v1744 = vmax.f32 %v1524, %v1528
      %v1745 = vmax.f32 %v1525, %v1529
      %v1746 = vmax.f32 %v1526, %v1530
      %v1747 = vmax.f32 %v1531, %v1535
      %v1748 = vmax.f32 %v1532, %v1536
      %v1749 = vmax.f32 %v1533, %v1537
      %v1750 = vmax.f32 %v1534, %v1538
      %v1751 = vmax.f32 %v1539, %v1543
      %v1752 = vmax.f32 %v1540, %v1544
      %v1753 = vmax.f32 %v1541, %v1545
      %v1754 = vmax.f32 %v1542, %v1546
      %v1755 = vmax.f32 %v1547, %v1551
      %v1756 = vmax.f32 %v1548, %v1552
      %v1757 = vmax.f32 %v1549, %v1553
      %v1758 = vmax.f32 %v1550, %v1554
      %v1759 = vmax.f32 %v1555, %v1559
      %v1760 = vmax.f32 %v1556, %v1560
      %v1761 = vmax.f32 %v1557, %v1561
      %v1762 = vmax.f32 %v1558, %v1562
      %v1763 = vmax.f32 %v1563, %v1567
      %v1764 = vmax.f32 %v1564, %v1568
      %v1765 = vmax.f32 %v1565, %v1569
      %v1766 = vmax.f32 %v1566, %v1570
      %v1767 = vmax.f32 %v1571, %v1575
      %v1768 = vmax.f32 %v1572, %v1576
      %v1769 = vmax.f32 %v1573, %v1577
      %v1770 = vmax.f32 %v1574, %v1578
      %v1771 = vmax.f32 %v1579, %v1583
      %v1772 = vmax.f32 %v1580, %v1584
      %v1773 = vmax.f32 %v1581, %v1585
      %v1774 = vmax.f32 %v1582, %v1586
      %v1775 = vmax.f32 %v1587, %v1591
      %v1776 = vmax.f32 %v1588, %v1592
      %v1777 = vmax.f32 %v1589, %v1593
      %v1778 = vmax.f32 %v1590, %v1594
      %v1779 = vmax.f32 %v1595, %v1599
      %v1780 = vmax.f32 %v1596, %v1600
      %v1781 = vmax.f32 %v1597, %v1601
      %v1782 = vmax.f32 %v1598, %v1602
      %v1783 = vmax.f32 %v1603, %v1607
      %v1784 = vmax.f32 %v1604, %v1608
      %v1785 = vmax.f32 %v1605, %v1609
      %v1786 = vmax.f32 %v1606, %v1610
      %v1787 = vmax.f32 %v1611, %v1615
      %v1788 = vmax.f32 %v1612, %v1616
      %v1789 = vmax.f32 %v1613, %v1617
      %v1790 = vmax.f32 %v1614, %v1618
      %v1791 = vmax.f32 %v1619, %v1623
      %v1792 = vmax.f32 %v1620, %v1624
      %v1793 = vmax.f32 %v1621, %v1625
      %v1794 = vmax.f32 %v1622, %v1626
      %v1795 = vmax.f32 %v1627, %v1631
      %v1796 = vmax.f32 %v1628, %v1632
      %v1797 = vmax.f32 %v1629, %v1633
      %v1798 = vmax.f32 %v1630, %v1634
      %v1799 = vmax.f32 %v1635, %v1639
      %v1800 = vmax.f32 %v1636, %v1640
      %v1801 = vmax.f32 %v1637, %v1641
      %v1802 = vmax.f32 %v1638, %v1642
      %v1803 = vmax.f32 %v1643, %v1647
      %v1804 = vmax.f32 %v1644, %v1648
      %v1805 = vmax.f32 %v1645, %v1649
      %v1806 = vmax.f32 %v1646, %v1650
      %v1807 = vmax.f32 %v1651, %v1655
      %v1808 = vmax.f32 %v1652, %v1656
      %v1809 = vmax.f32 %v1653, %v1657
      %v1810 = vmax.f32 %v1654, %v1658
      %v1811 = vmax.f32 %v1659, %v1663
      %v1812 = vmax.f32 %v1660, %v1664
      %v1813 = vmax.f32 %v1661, %v1665
      %v1814 = vmax.f32 %v1662, %v1666
      %v1815 = vmax.f32 %v1667, %v1671
      %v1816 = vmax.f32 %v1668, %v1672
      %v1817 = vmax.f32 %v1669, %v1673
      %v1818 = vmax.f32 %v1670, %v1674
      %v1819 = vmax.f32 %v1675, %v1679
      %v1820 = vmax.f32 %v1676, %v1680
      %v1821 = vmax.f32 %v1677, %v1681
      %v1822 = vmax.f32 %v1678, %v1682
      %v1823 = vmax.f32 %v1683, %v1687
      %v1824 = vmax.f32 %v1684, %v1688
      %v1825 = vmax.f32 %v1685, %v1689
      %v1826 = vmax.f32 %v1686, %v1690
      %v1827 = vmax.f32 %v1691, %v1695
      %v1828 = vmax.f32 %v1692, %v1696
      %v1829 = vmax.f32 %v1693, %v1697
      %v1830 = vmax.f32 %v1694, %v1698
      %v1831 = vmax.f32 %v1699, %v1703
      %v1832 = vmax.f32 %v1700, %v1704
      %v1833 = vmax.f32 %v1701, %v1705
      %v1834 = vmax.f32 %v1702, %v1706
      %1963 = vrot.lane.b32.xlu0 %v1711, 32
      %v1964 = vpop.permute.xlu0 %1963
      %1965 = vrot.lane.b32.xlu0 %v1712, 32
      %v1966 = vpop.permute.xlu0 %1965
      %1967 = vrot.lane.b32.xlu0 %v1713, 32
      %v1968 = vpop.permute.xlu0 %1967
      %1969 = vrot.lane.b32.xlu0 %v1714, 32
      %v1970 = vpop.permute.xlu0 %1969
      %1971 = vrot.lane.b32.xlu0 %v1715, 32
      %v1972 = vpop.permute.xlu0 %1971
      %1973 = vrot.lane.b32.xlu0 %v1716, 32
      %v1974 = vpop.permute.xlu0 %1973
      %1975 = vrot.lane.b32.xlu0 %v1717, 32
      %v1976 = vpop.permute.xlu0 %1975
      %1977 = vrot.lane.b32.xlu0 %v1718, 32
      %v1978 = vpop.permute.xlu0 %1977
      %1979 = vrot.lane.b32.xlu0 %v1719, 32
      %v1980 = vpop.permute.xlu0 %1979
      %1981 = vrot.lane.b32.xlu0 %v1720, 32
      %v1982 = vpop.permute.xlu0 %1981
      %1983 = vrot.lane.b32.xlu0 %v1721, 32
      %v1984 = vpop.permute.xlu0 %1983
      %1985 = vrot.lane.b32.xlu0 %v1722, 32
      %v1986 = vpop.permute.xlu0 %1985
      %1987 = vrot.lane.b32.xlu0 %v1723, 32
      %v1988 = vpop.permute.xlu0 %1987
      %1989 = vrot.lane.b32.xlu0 %v1724, 32
      %v1990 = vpop.permute.xlu0 %1989
      %1991 = vrot.lane.b32.xlu0 %v1725, 32
      %v1992 = vpop.permute.xlu0 %1991
      %1993 = vrot.lane.b32.xlu0 %v1726, 32
      %v1994 = vpop.permute.xlu0 %1993
      %1995 = vrot.lane.b32.xlu0 %v1727, 32
      %v1996 = vpop.permute.xlu0 %1995
      %1997 = vrot.lane.b32.xlu0 %v1728, 32
      %v1998 = vpop.permute.xlu0 %1997
      %1999 = vrot.lane.b32.xlu0 %v1729, 32
      %v2000 = vpop.permute.xlu0 %1999
      %2001 = vrot.lane.b32.xlu0 %v1730, 32
      %v2002 = vpop.permute.xlu0 %2001
      %2003 = vrot.lane.b32.xlu0 %v1731, 32
      %v2004 = vpop.permute.xlu0 %2003
      %2005 = vrot.lane.b32.xlu0 %v1732, 32
      %v2006 = vpop.permute.xlu0 %2005
      %2007 = vrot.lane.b32.xlu0 %v1733, 32
      %v2008 = vpop.permute.xlu0 %2007
      %2009 = vrot.lane.b32.xlu0 %v1734, 32
      %v2010 = vpop.permute.xlu0 %2009
      %2011 = vrot.lane.b32.xlu0 %v1735, 32
      %v2012 = vpop.permute.xlu0 %2011
      %2013 = vrot.lane.b32.xlu0 %v1736, 32
      %v2014 = vpop.permute.xlu0 %2013
      %2015 = vrot.lane.b32.xlu0 %v1737, 32
      %v2016 = vpop.permute.xlu0 %2015
      %2017 = vrot.lane.b32.xlu0 %v1738, 32
      %v2018 = vpop.permute.xlu0 %2017
      %2019 = vrot.lane.b32.xlu0 %v1739, 32
      %v2020 = vpop.permute.xlu0 %2019
      %2021 = vrot.lane.b32.xlu0 %v1740, 32
      %v2022 = vpop.permute.xlu0 %2021
      %2023 = vrot.lane.b32.xlu0 %v1741, 32
      %v2024 = vpop.permute.xlu0 %2023
      %2025 = vrot.lane.b32.xlu0 %v1742, 32
      %v2026 = vpop.permute.xlu0 %2025
      %2027 = vrot.lane.b32.xlu0 %v1743, 32
      %v2028 = vpop.permute.xlu0 %2027
      %2029 = vrot.lane.b32.xlu0 %v1744, 32
      %v2030 = vpop.permute.xlu0 %2029
      %2031 = vrot.lane.b32.xlu0 %v1745, 32
      %v2032 = vpop.permute.xlu0 %2031
      %2033 = vrot.lane.b32.xlu0 %v1746, 32
      %v2034 = vpop.permute.xlu0 %2033
      %2035 = vrot.lane.b32.xlu0 %v1747, 32
      %v2036 = vpop.permute.xlu0 %2035
      %2037 = vrot.lane.b32.xlu0 %v1748, 32
      %v2038 = vpop.permute.xlu0 %2037
      %2039 = vrot.lane.b32.xlu0 %v1749, 32
      %v2040 = vpop.permute.xlu0 %2039
      %2041 = vrot.lane.b32.xlu0 %v1750, 32
      %v2042 = vpop.permute.xlu0 %2041
      %2043 = vrot.lane.b32.xlu0 %v1751, 32
      %v2044 = vpop.permute.xlu0 %2043
      %2045 = vrot.lane.b32.xlu0 %v1752, 32
      %v2046 = vpop.permute.xlu0 %2045
      %2047 = vrot.lane.b32.xlu0 %v1753, 32
      %v2048 = vpop.permute.xlu0 %2047
      %2049 = vrot.lane.b32.xlu0 %v1754, 32
      %v2050 = vpop.permute.xlu0 %2049
      %2051 = vrot.lane.b32.xlu0 %v1755, 32
      %v2052 = vpop.permute.xlu0 %2051
      %2053 = vrot.lane.b32.xlu0 %v1756, 32
      %v2054 = vpop.permute.xlu0 %2053
      %2055 = vrot.lane.b32.xlu0 %v1757, 32
      %v2056 = vpop.permute.xlu0 %2055
      %2057 = vrot.lane.b32.xlu0 %v1758, 32
      %v2058 = vpop.permute.xlu0 %2057
      %2059 = vrot.lane.b32.xlu0 %v1759, 32
      %v2060 = vpop.permute.xlu0 %2059
      %2061 = vrot.lane.b32.xlu0 %v1760, 32
      %v2062 = vpop.permute.xlu0 %2061
      %2063 = vrot.lane.b32.xlu0 %v1761, 32
      %v2064 = vpop.permute.xlu0 %2063
      %2065 = vrot.lane.b32.xlu0 %v1762, 32
      %v2066 = vpop.permute.xlu0 %2065
      %2067 = vrot.lane.b32.xlu0 %v1763, 32
      %v2068 = vpop.permute.xlu0 %2067
      %2069 = vrot.lane.b32.xlu0 %v1764, 32
      %v2070 = vpop.permute.xlu0 %2069
      %2071 = vrot.lane.b32.xlu0 %v1765, 32
      %v2072 = vpop.permute.xlu0 %2071
      %2073 = vrot.lane.b32.xlu0 %v1766, 32
      %v2074 = vpop.permute.xlu0 %2073
      %2075 = vrot.lane.b32.xlu0 %v1767, 32
      %v2076 = vpop.permute.xlu0 %2075
      %2077 = vrot.lane.b32.xlu0 %v1768, 32
      %v2078 = vpop.permute.xlu0 %2077
      %2079 = vrot.lane.b32.xlu0 %v1769, 32
      %v2080 = vpop.permute.xlu0 %2079
      %2081 = vrot.lane.b32.xlu0 %v1770, 32
      %v2082 = vpop.permute.xlu0 %2081
      %2083 = vrot.lane.b32.xlu0 %v1771, 32
      %v2084 = vpop.permute.xlu0 %2083
      %2085 = vrot.lane.b32.xlu0 %v1772, 32
      %v2086 = vpop.permute.xlu0 %2085
      %2087 = vrot.lane.b32.xlu0 %v1773, 32
      %v2088 = vpop.permute.xlu0 %2087
      %2089 = vrot.lane.b32.xlu0 %v1774, 32
      %v2090 = vpop.permute.xlu0 %2089
      %2091 = vrot.lane.b32.xlu0 %v1775, 32
      %v2092 = vpop.permute.xlu0 %2091
      %2093 = vrot.lane.b32.xlu0 %v1776, 32
      %v2094 = vpop.permute.xlu0 %2093
      %2095 = vrot.lane.b32.xlu0 %v1777, 32
      %v2096 = vpop.permute.xlu0 %2095
      %2097 = vrot.lane.b32.xlu0 %v1778, 32
      %v2098 = vpop.permute.xlu0 %2097
      %2099 = vrot.lane.b32.xlu0 %v1779, 32
      %v2100 = vpop.permute.xlu0 %2099
      %2101 = vrot.lane.b32.xlu0 %v1780, 32
      %v2102 = vpop.permute.xlu0 %2101
      %2103 = vrot.lane.b32.xlu0 %v1781, 32
      %v2104 = vpop.permute.xlu0 %2103
      %2105 = vrot.lane.b32.xlu0 %v1782, 32
      %v2106 = vpop.permute.xlu0 %2105
      %2107 = vrot.lane.b32.xlu0 %v1783, 32
      %v2108 = vpop.permute.xlu0 %2107
      %2109 = vrot.lane.b32.xlu0 %v1784, 32
      %v2110 = vpop.permute.xlu0 %2109
      %2111 = vrot.lane.b32.xlu0 %v1785, 32
      %v2112 = vpop.permute.xlu0 %2111
      %2113 = vrot.lane.b32.xlu0 %v1786, 32
      %v2114 = vpop.permute.xlu0 %2113
      %2115 = vrot.lane.b32.xlu0 %v1787, 32
      %v2116 = vpop.permute.xlu0 %2115
      %2117 = vrot.lane.b32.xlu0 %v1788, 32
      %v2118 = vpop.permute.xlu0 %2117
      %2119 = vrot.lane.b32.xlu0 %v1789, 32
      %v2120 = vpop.permute.xlu0 %2119
      %2121 = vrot.lane.b32.xlu0 %v1790, 32
      %v2122 = vpop.permute.xlu0 %2121
      %2123 = vrot.lane.b32.xlu0 %v1791, 32
      %v2124 = vpop.permute.xlu0 %2123
      %2125 = vrot.lane.b32.xlu0 %v1792, 32
      %v2126 = vpop.permute.xlu0 %2125
      %2127 = vrot.lane.b32.xlu0 %v1793, 32
      %v2128 = vpop.permute.xlu0 %2127
      %2129 = vrot.lane.b32.xlu0 %v1794, 32
      %v2130 = vpop.permute.xlu0 %2129
      %2131 = vrot.lane.b32.xlu0 %v1795, 32
      %v2132 = vpop.permute.xlu0 %2131
      %2133 = vrot.lane.b32.xlu0 %v1796, 32
      %v2134 = vpop.permute.xlu0 %2133
      %2135 = vrot.lane.b32.xlu0 %v1797, 32
      %v2136 = vpop.permute.xlu0 %2135
      %2137 = vrot.lane.b32.xlu0 %v1798, 32
      %v2138 = vpop.permute.xlu0 %2137
      %2139 = vrot.lane.b32.xlu0 %v1799, 32
      %v2140 = vpop.permute.xlu0 %2139
      %2141 = vrot.lane.b32.xlu0 %v1800, 32
      %v2142 = vpop.permute.xlu0 %2141
      %2143 = vrot.lane.b32.xlu0 %v1801, 32
      %v2144 = vpop.permute.xlu0 %2143
      %2145 = vrot.lane.b32.xlu0 %v1802, 32
      %v2146 = vpop.permute.xlu0 %2145
      %2147 = vrot.lane.b32.xlu0 %v1803, 32
      %v2148 = vpop.permute.xlu0 %2147
      %2149 = vrot.lane.b32.xlu0 %v1804, 32
      %v2150 = vpop.permute.xlu0 %2149
      %2151 = vrot.lane.b32.xlu0 %v1805, 32
      %v2152 = vpop.permute.xlu0 %2151
      %2153 = vrot.lane.b32.xlu0 %v1806, 32
      %v2154 = vpop.permute.xlu0 %2153
      %2155 = vrot.lane.b32.xlu0 %v1807, 32
      %v2156 = vpop.permute.xlu0 %2155
      %2157 = vrot.lane.b32.xlu0 %v1808, 32
      %v2158 = vpop.permute.xlu0 %2157
      %2159 = vrot.lane.b32.xlu0 %v1809, 32
      %v2160 = vpop.permute.xlu0 %2159
      %2161 = vrot.lane.b32.xlu0 %v1810, 32
      %v2162 = vpop.permute.xlu0 %2161
      %2163 = vrot.lane.b32.xlu0 %v1811, 32
      %v2164 = vpop.permute.xlu0 %2163
      %2165 = vrot.lane.b32.xlu0 %v1812, 32
      %v2166 = vpop.permute.xlu0 %2165
      %2167 = vrot.lane.b32.xlu0 %v1813, 32
      %v2168 = vpop.permute.xlu0 %2167
      %2169 = vrot.lane.b32.xlu0 %v1814, 32
      %v2170 = vpop.permute.xlu0 %2169
      %2171 = vrot.lane.b32.xlu0 %v1815, 32
      %v2172 = vpop.permute.xlu0 %2171
      %2173 = vrot.lane.b32.xlu0 %v1816, 32
      %v2174 = vpop.permute.xlu0 %2173
      %2175 = vrot.lane.b32.xlu0 %v1817, 32
      %v2176 = vpop.permute.xlu0 %2175
      %2177 = vrot.lane.b32.xlu0 %v1818, 32
      %v2178 = vpop.permute.xlu0 %2177
      %2179 = vrot.lane.b32.xlu0 %v1819, 32
      %v2180 = vpop.permute.xlu0 %2179
      %2181 = vrot.lane.b32.xlu0 %v1820, 32
      %v2182 = vpop.permute.xlu0 %2181
      %2183 = vrot.lane.b32.xlu0 %v1821, 32
      %v2184 = vpop.permute.xlu0 %2183
      %2185 = vrot.lane.b32.xlu0 %v1822, 32
      %v2186 = vpop.permute.xlu0 %2185
      %2187 = vrot.lane.b32.xlu0 %v1823, 32
      %v2188 = vpop.permute.xlu0 %2187
      %2189 = vrot.lane.b32.xlu0 %v1824, 32
      %v2190 = vpop.permute.xlu0 %2189
      %2191 = vrot.lane.b32.xlu0 %v1825, 32
      %v2192 = vpop.permute.xlu0 %2191
      %2193 = vrot.lane.b32.xlu0 %v1826, 32
      %v2194 = vpop.permute.xlu0 %2193
      %2195 = vrot.lane.b32.xlu0 %v1827, 32
      %v2196 = vpop.permute.xlu0 %2195
      %2197 = vrot.lane.b32.xlu0 %v1828, 32
      %v2198 = vpop.permute.xlu0 %2197
      %2199 = vrot.lane.b32.xlu0 %v1829, 32
      %v2200 = vpop.permute.xlu0 %2199
      %2201 = vrot.lane.b32.xlu0 %v1830, 32
      %v2202 = vpop.permute.xlu0 %2201
      %2203 = vrot.lane.b32.xlu0 %v1831, 32
      %v2204 = vpop.permute.xlu0 %2203
      %2205 = vrot.lane.b32.xlu0 %v1832, 32
      %v2206 = vpop.permute.xlu0 %2205
      %2207 = vrot.lane.b32.xlu0 %v1833, 32
      %v2208 = vpop.permute.xlu0 %2207
      %2209 = vrot.lane.b32.xlu0 %v1834, 32
      %v2210 = vpop.permute.xlu0 %2209
      %2211 = vrot.lane.b32.xlu0 %v1707, 32
      %v2212 = vpop.permute.xlu0 %2211
      %2213 = vrot.lane.b32.xlu0 %v1708, 32
      %v2214 = vpop.permute.xlu0 %2213
      %2215 = vrot.lane.b32.xlu0 %v1709, 32
      %v2216 = vpop.permute.xlu0 %2215
      %2217 = vrot.lane.b32.xlu0 %v1710, 32
      %v2218 = vpop.permute.xlu0 %2217
      %vm2347 = vcmask 261120
      %v2348 = vsel %vm2347, %v1707, %v1964
      %v2349 = vsel %vm2347, %v1708, %v1966
      %v2350 = vsel %vm2347, %v1709, %v1968
      %v2351 = vsel %vm2347, %v1710, %v1970
      %v2352 = vsel %vm2347, %v1711, %v1972
      %v2353 = vsel %vm2347, %v1712, %v1974
      %v2354 = vsel %vm2347, %v1713, %v1976
      %v2355 = vsel %vm2347, %v1714, %v1978
      %v2356 = vsel %vm2347, %v1715, %v1980
      %v2357 = vsel %vm2347, %v1716, %v1982
      %v2358 = vsel %vm2347, %v1717, %v1984
      %v2359 = vsel %vm2347, %v1718, %v1986
      %v2360 = vsel %vm2347, %v1719, %v1988
      %v2361 = vsel %vm2347, %v1720, %v1990
      %v2362 = vsel %vm2347, %v1721, %v1992
      %v2363 = vsel %vm2347, %v1722, %v1994
      %v2364 = vsel %vm2347, %v1723, %v1996
      %v2365 = vsel %vm2347, %v1724, %v1998
      %v2366 = vsel %vm2347, %v1725, %v2000
      %v2367 = vsel %vm2347, %v1726, %v2002
      %v2368 = vsel %vm2347, %v1727, %v2004
      %v2369 = vsel %vm2347, %v1728, %v2006
      %v2370 = vsel %vm2347, %v1729, %v2008
      %v2371 = vsel %vm2347, %v1730, %v2010
      %v2372 = vsel %vm2347, %v1731, %v2012
      %v2373 = vsel %vm2347, %v1732, %v2014
      %v2374 = vsel %vm2347, %v1733, %v2016
      %v2375 = vsel %vm2347, %v1734, %v2018
      %v2376 = vsel %vm2347, %v1735, %v2020
      %v2377 = vsel %vm2347, %v1736, %v2022
      %v2378 = vsel %vm2347, %v1737, %v2024
      %v2379 = vsel %vm2347, %v1738, %v2026
      %v2380 = vsel %vm2347, %v1739, %v2028
      %v2381 = vsel %vm2347, %v1740, %v2030
      %v2382 = vsel %vm2347, %v1741, %v2032
      %v2383 = vsel %vm2347, %v1742, %v2034
      %v2384 = vsel %vm2347, %v1743, %v2036
      %v2385 = vsel %vm2347, %v1744, %v2038
      %v2386 = vsel %vm2347, %v1745, %v2040
      %v2387 = vsel %vm2347, %v1746, %v2042
      %v2388 = vsel %vm2347, %v1747, %v2044
      %v2389 = vsel %vm2347, %v1748, %v2046
      %v2390 = vsel %vm2347, %v1749, %v2048
      %v2391 = vsel %vm2347, %v1750, %v2050
      %v2392 = vsel %vm2347, %v1751, %v2052
      %v2393 = vsel %vm2347, %v1752, %v2054
      %v2394 = vsel %vm2347, %v1753, %v2056
      %v2395 = vsel %vm2347, %v1754, %v2058
      %v2396 = vsel %vm2347, %v1755, %v2060
      %v2397 = vsel %vm2347, %v1756, %v2062
      %v2398 = vsel %vm2347, %v1757, %v2064
      %v2399 = vsel %vm2347, %v1758, %v2066
      %v2400 = vsel %vm2347, %v1759, %v2068
      %v2401 = vsel %vm2347, %v1760, %v2070
      %v2402 = vsel %vm2347, %v1761, %v2072
      %v2403 = vsel %vm2347, %v1762, %v2074
      %v2404 = vsel %vm2347, %v1763, %v2076
      %v2405 = vsel %vm2347, %v1764, %v2078
      %v2406 = vsel %vm2347, %v1765, %v2080
      %v2407 = vsel %vm2347, %v1766, %v2082
      %v2408 = vsel %vm2347, %v1767, %v2084
      %v2409 = vsel %vm2347, %v1768, %v2086
      %v2410 = vsel %vm2347, %v1769, %v2088
      %v2411 = vsel %vm2347, %v1770, %v2090
      %v2412 = vsel %vm2347, %v1771, %v2092
      %v2413 = vsel %vm2347, %v1772, %v2094
      %v2414 = vsel %vm2347, %v1773, %v2096
      %v2415 = vsel %vm2347, %v1774, %v2098
      %v2416 = vsel %vm2347, %v1775, %v2100
      %v2417 = vsel %vm2347, %v1776, %v2102
      %v2418 = vsel %vm2347, %v1777, %v2104
      %v2419 = vsel %vm2347, %v1778, %v2106
      %v2420 = vsel %vm2347, %v1779, %v2108
      %v2421 = vsel %vm2347, %v1780, %v2110
      %v2422 = vsel %vm2347, %v1781, %v2112
      %v2423 = vsel %vm2347, %v1782, %v2114
      %v2424 = vsel %vm2347, %v1783, %v2116
      %v2425 = vsel %vm2347, %v1784, %v2118
      %v2426 = vsel %vm2347, %v1785, %v2120
      %v2427 = vsel %vm2347, %v1786, %v2122
      %v2428 = vsel %vm2347, %v1787, %v2124
      %v2429 = vsel %vm2347, %v1788, %v2126
      %v2430 = vsel %vm2347, %v1789, %v2128
      %v2431 = vsel %vm2347, %v1790, %v2130
      %v2432 = vsel %vm2347, %v1791, %v2132
      %v2433 = vsel %vm2347, %v1792, %v2134
      %v2434 = vsel %vm2347, %v1793, %v2136
      %v2435 = vsel %vm2347, %v1794, %v2138
      %v2436 = vsel %vm2347, %v1795, %v2140
      %v2437 = vsel %vm2347, %v1796, %v2142
      %v2438 = vsel %vm2347, %v1797, %v2144
      %v2439 = vsel %vm2347, %v1798, %v2146
      %v2440 = vsel %vm2347, %v1799, %v2148
      %v2441 = vsel %vm2347, %v1800, %v2150
      %v2442 = vsel %vm2347, %v1801, %v2152
      %v2443 = vsel %vm2347, %v1802, %v2154
      %v2444 = vsel %vm2347, %v1803, %v2156
      %v2445 = vsel %vm2347, %v1804, %v2158
      %v2446 = vsel %vm2347, %v1805, %v2160
      %v2447 = vsel %vm2347, %v1806, %v2162
      %v2448 = vsel %vm2347, %v1807, %v2164
      %v2449 = vsel %vm2347, %v1808, %v2166
      %v2450 = vsel %vm2347, %v1809, %v2168
      %v2451 = vsel %vm2347, %v1810, %v2170
      %v2452 = vsel %vm2347, %v1811, %v2172
      %v2453 = vsel %vm2347, %v1812, %v2174
      %v2454 = vsel %vm2347, %v1813, %v2176
      %v2455 = vsel %vm2347, %v1814, %v2178
      %v2456 = vsel %vm2347, %v1815, %v2180
      %v2457 = vsel %vm2347, %v1816, %v2182
      %v2458 = vsel %vm2347, %v1817, %v2184
      %v2459 = vsel %vm2347, %v1818, %v2186
      %v2460 = vsel %vm2347, %v1819, %v2188
      %v2461 = vsel %vm2347, %v1820, %v2190
      %v2462 = vsel %vm2347, %v1821, %v2192
      %v2463 = vsel %vm2347, %v1822, %v2194
      %v2464 = vsel %vm2347, %v1823, %v2196
      %v2465 = vsel %vm2347, %v1824, %v2198
      %v2466 = vsel %vm2347, %v1825, %v2200
      %v2467 = vsel %vm2347, %v1826, %v2202
      %v2468 = vsel %vm2347, %v1827, %v2204
      %v2469 = vsel %vm2347, %v1828, %v2206
      %v2470 = vsel %vm2347, %v1829, %v2208
      %v2471 = vsel %vm2347, %v1830, %v2210
      %v2472 = vsel %vm2347, %v1831, %v2212
      %v2473 = vsel %vm2347, %v1832, %v2214
      %v2474 = vsel %vm2347, %v1833, %v2216
      %v2475 = vsel %vm2347, %v1834, %v2218
      %vm2604 = vcmask 1046528
      %v2605 = vrot.slane %v2348, 1
      %v2606 = vrot.slane %v2349, 1
      %v2607 = vsel %vm2604, %v2605, %v2606
      %v2608 = vrot.slane %v2350, 1
      %v2609 = vsel %vm2604, %v2606, %v2608
      %v2610 = vrot.slane %v2351, 1
      %v2611 = vsel %vm2604, %v2608, %v2610
      %v2612 = vrot.slane %v2352, 1
      %v2613 = vsel %vm2604, %v2610, %v2612
      %v2614 = vrot.slane %v2353, 1
      %v2615 = vsel %vm2604, %v2612, %v2614
      %v2616 = vrot.slane %v2354, 1
      %v2617 = vsel %vm2604, %v2614, %v2616
      %v2618 = vrot.slane %v2355, 1
      %v2619 = vsel %vm2604, %v2616, %v2618
      %v2620 = vrot.slane %v2356, 1
      %v2621 = vsel %vm2604, %v2618, %v2620
      %v2622 = vrot.slane %v2357, 1
      %v2623 = vsel %vm2604, %v2620, %v2622
      %v2624 = vrot.slane %v2358, 1
      %v2625 = vsel %vm2604, %v2622, %v2624
      %v2626 = vrot.slane %v2359, 1
      %v2627 = vsel %vm2604, %v2624, %v2626
      %v2628 = vrot.slane %v2360, 1
      %v2629 = vsel %vm2604, %v2626, %v2628
      %v2630 = vrot.slane %v2361, 1
      %v2631 = vsel %vm2604, %v2628, %v2630
      %v2632 = vrot.slane %v2362, 1
      %v2633 = vsel %vm2604, %v2630, %v2632
      %v2634 = vrot.slane %v2363, 1
      %v2635 = vsel %vm2604, %v2632, %v2634
      %v2636 = vrot.slane %v2364, 1
      %v2637 = vsel %vm2604, %v2634, %v2636
      %v2638 = vrot.slane %v2365, 1
      %v2639 = vsel %vm2604, %v2636, %v2638
      %v2640 = vrot.slane %v2366, 1
      %v2641 = vsel %vm2604, %v2638, %v2640
      %v2642 = vrot.slane %v2367, 1
      %v2643 = vsel %vm2604, %v2640, %v2642
      %v2644 = vrot.slane %v2368, 1
      %v2645 = vsel %vm2604, %v2642, %v2644
      %v2646 = vrot.slane %v2369, 1
      %v2647 = vsel %vm2604, %v2644, %v2646
      %v2648 = vrot.slane %v2370, 1
      %v2649 = vsel %vm2604, %v2646, %v2648
      %v2650 = vrot.slane %v2371, 1
      %v2651 = vsel %vm2604, %v2648, %v2650
      %v2652 = vrot.slane %v2372, 1
      %v2653 = vsel %vm2604, %v2650, %v2652
      %v2654 = vrot.slane %v2373, 1
      %v2655 = vsel %vm2604, %v2652, %v2654
      %v2656 = vrot.slane %v2374, 1
      %v2657 = vsel %vm2604, %v2654, %v2656
      %v2658 = vrot.slane %v2375, 1
      %v2659 = vsel %vm2604, %v2656, %v2658
      %v2660 = vrot.slane %v2376, 1
      %v2661 = vsel %vm2604, %v2658, %v2660
      %v2662 = vrot.slane %v2377, 1
      %v2663 = vsel %vm2604, %v2660, %v2662
      %v2664 = vrot.slane %v2378, 1
      %v2665 = vsel %vm2604, %v2662, %v2664
      %v2666 = vrot.slane %v2379, 1
      %v2667 = vsel %vm2604, %v2664, %v2666
      %v2668 = vrot.slane %v2380, 1
      %v2669 = vsel %vm2604, %v2666, %v2668
      %v2670 = vrot.slane %v2381, 1
      %v2671 = vsel %vm2604, %v2668, %v2670
      %v2672 = vrot.slane %v2382, 1
      %v2673 = vsel %vm2604, %v2670, %v2672
      %v2674 = vrot.slane %v2383, 1
      %v2675 = vsel %vm2604, %v2672, %v2674
      %v2676 = vrot.slane %v2384, 1
      %v2677 = vsel %vm2604, %v2674, %v2676
      %v2678 = vrot.slane %v2385, 1
      %v2679 = vsel %vm2604, %v2676, %v2678
      %v2680 = vrot.slane %v2386, 1
      %v2681 = vsel %vm2604, %v2678, %v2680
      %v2682 = vrot.slane %v2387, 1
      %v2683 = vsel %vm2604, %v2680, %v2682
      %v2684 = vrot.slane %v2388, 1
      %v2685 = vsel %vm2604, %v2682, %v2684
      %v2686 = vrot.slane %v2389, 1
      %v2687 = vsel %vm2604, %v2684, %v2686
      %v2688 = vrot.slane %v2390, 1
      %v2689 = vsel %vm2604, %v2686, %v2688
      %v2690 = vrot.slane %v2391, 1
      %v2691 = vsel %vm2604, %v2688, %v2690
      %v2692 = vrot.slane %v2392, 1
      %v2693 = vsel %vm2604, %v2690, %v2692
      %v2694 = vrot.slane %v2393, 1
      %v2695 = vsel %vm2604, %v2692, %v2694
      %v2696 = vrot.slane %v2394, 1
      %v2697 = vsel %vm2604, %v2694, %v2696
      %v2698 = vrot.slane %v2395, 1
      %v2699 = vsel %vm2604, %v2696, %v2698
      %v2700 = vrot.slane %v2396, 1
      %v2701 = vsel %vm2604, %v2698, %v2700
      %v2702 = vrot.slane %v2397, 1
      %v2703 = vsel %vm2604, %v2700, %v2702
      %v2704 = vrot.slane %v2398, 1
      %v2705 = vsel %vm2604, %v2702, %v2704
      %v2706 = vrot.slane %v2399, 1
      %v2707 = vsel %vm2604, %v2704, %v2706
      %v2708 = vrot.slane %v2400, 1
      %v2709 = vsel %vm2604, %v2706, %v2708
      %v2710 = vrot.slane %v2401, 1
      %v2711 = vsel %vm2604, %v2708, %v2710
      %v2712 = vrot.slane %v2402, 1
      %v2713 = vsel %vm2604, %v2710, %v2712
      %v2714 = vrot.slane %v2403, 1
      %v2715 = vsel %vm2604, %v2712, %v2714
      %v2716 = vrot.slane %v2404, 1
      %v2717 = vsel %vm2604, %v2714, %v2716
      %v2718 = vrot.slane %v2405, 1
      %v2719 = vsel %vm2604, %v2716, %v2718
      %v2720 = vrot.slane %v2406, 1
      %v2721 = vsel %vm2604, %v2718, %v2720
      %v2722 = vrot.slane %v2407, 1
      %v2723 = vsel %vm2604, %v2720, %v2722
      %v2724 = vrot.slane %v2408, 1
      %v2725 = vsel %vm2604, %v2722, %v2724
      %v2726 = vrot.slane %v2409, 1
      %v2727 = vsel %vm2604, %v2724, %v2726
      %v2728 = vrot.slane %v2410, 1
      %v2729 = vsel %vm2604, %v2726, %v2728
      %v2730 = vrot.slane %v2411, 1
      %v2731 = vsel %vm2604, %v2728, %v2730
      %v2732 = vrot.slane %v2412, 1
      %v2733 = vsel %vm2604, %v2730, %v2732
      %v2734 = vrot.slane %v2413, 1
      %v2735 = vsel %vm2604, %v2732, %v2734
      %v2736 = vrot.slane %v2414, 1
      %v2737 = vsel %vm2604, %v2734, %v2736
      %v2738 = vrot.slane %v2415, 1
      %v2739 = vsel %vm2604, %v2736, %v2738
      %v2740 = vrot.slane %v2416, 1
      %v2741 = vsel %vm2604, %v2738, %v2740
      %v2742 = vrot.slane %v2417, 1
      %v2743 = vsel %vm2604, %v2740, %v2742
      %v2744 = vrot.slane %v2418, 1
      %v2745 = vsel %vm2604, %v2742, %v2744
      %v2746 = vrot.slane %v2419, 1
      %v2747 = vsel %vm2604, %v2744, %v2746
      %v2748 = vrot.slane %v2420, 1
      %v2749 = vsel %vm2604, %v2746, %v2748
      %v2750 = vrot.slane %v2421, 1
      %v2751 = vsel %vm2604, %v2748, %v2750
      %v2752 = vrot.slane %v2422, 1
      %v2753 = vsel %vm2604, %v2750, %v2752
      %v2754 = vrot.slane %v2423, 1
      %v2755 = vsel %vm2604, %v2752, %v2754
      %v2756 = vrot.slane %v2424, 1
      %v2757 = vsel %vm2604, %v2754, %v2756
      %v2758 = vrot.slane %v2425, 1
      %v2759 = vsel %vm2604, %v2756, %v2758
      %v2760 = vrot.slane %v2426, 1
      %v2761 = vsel %vm2604, %v2758, %v2760
      %v2762 = vrot.slane %v2427, 1
      %v2763 = vsel %vm2604, %v2760, %v2762
      %v2764 = vrot.slane %v2428, 1
      %v2765 = vsel %vm2604, %v2762, %v2764
      %v2766 = vrot.slane %v2429, 1
      %v2767 = vsel %vm2604, %v2764, %v2766
      %v2768 = vrot.slane %v2430, 1
      %v2769 = vsel %vm2604, %v2766, %v2768
      %v2770 = vrot.slane %v2431, 1
      %v2771 = vsel %vm2604, %v2768, %v2770
      %v2772 = vrot.slane %v2432, 1
      %v2773 = vsel %vm2604, %v2770, %v2772
      %v2774 = vrot.slane %v2433, 1
      %v2775 = vsel %vm2604, %v2772, %v2774
      %v2776 = vrot.slane %v2434, 1
      %v2777 = vsel %vm2604, %v2774, %v2776
      %v2778 = vrot.slane %v2435, 1
      %v2779 = vsel %vm2604, %v2776, %v2778
      %v2780 = vrot.slane %v2436, 1
      %v2781 = vsel %vm2604, %v2778, %v2780
      %v2782 = vrot.slane %v2437, 1
      %v2783 = vsel %vm2604, %v2780, %v2782
      %v2784 = vrot.slane %v2438, 1
      %v2785 = vsel %vm2604, %v2782, %v2784
      %v2786 = vrot.slane %v2439, 1
      %v2787 = vsel %vm2604, %v2784, %v2786
      %v2788 = vrot.slane %v2440, 1
      %v2789 = vsel %vm2604, %v2786, %v2788
      %v2790 = vrot.slane %v2441, 1
      %v2791 = vsel %vm2604, %v2788, %v2790
      %v2792 = vrot.slane %v2442, 1
      %v2793 = vsel %vm2604, %v2790, %v2792
      %v2794 = vrot.slane %v2443, 1
      %v2795 = vsel %vm2604, %v2792, %v2794
      %v2796 = vrot.slane %v2444, 1
      %v2797 = vsel %vm2604, %v2794, %v2796
      %v2798 = vrot.slane %v2445, 1
      %v2799 = vsel %vm2604, %v2796, %v2798
      %v2800 = vrot.slane %v2446, 1
      %v2801 = vsel %vm2604, %v2798, %v2800
      %v2802 = vrot.slane %v2447, 1
      %v2803 = vsel %vm2604, %v2800, %v2802
      %v2804 = vrot.slane %v2448, 1
      %v2805 = vsel %vm2604, %v2802, %v2804
      %v2806 = vrot.slane %v2449, 1
      %v2807 = vsel %vm2604, %v2804, %v2806
      %v2808 = vrot.slane %v2450, 1
      %v2809 = vsel %vm2604, %v2806, %v2808
      %v2810 = vrot.slane %v2451, 1
      %v2811 = vsel %vm2604, %v2808, %v2810
      %v2812 = vrot.slane %v2452, 1
      %v2813 = vsel %vm2604, %v2810, %v2812
      %v2814 = vrot.slane %v2453, 1
      %v2815 = vsel %vm2604, %v2812, %v2814
      %v2816 = vrot.slane %v2454, 1
      %v2817 = vsel %vm2604, %v2814, %v2816
      %v2818 = vrot.slane %v2455, 1
      %v2819 = vsel %vm2604, %v2816, %v2818
      %v2820 = vrot.slane %v2456, 1
      %v2821 = vsel %vm2604, %v2818, %v2820
      %v2822 = vrot.slane %v2457, 1
      %v2823 = vsel %vm2604, %v2820, %v2822
      %v2824 = vrot.slane %v2458, 1
      %v2825 = vsel %vm2604, %v2822, %v2824
      %v2826 = vrot.slane %v2459, 1
      %v2827 = vsel %vm2604, %v2824, %v2826
      %v2828 = vrot.slane %v2460, 1
      %v2829 = vsel %vm2604, %v2826, %v2828
      %v2830 = vrot.slane %v2461, 1
      %v2831 = vsel %vm2604, %v2828, %v2830
      %v2832 = vrot.slane %v2462, 1
      %v2833 = vsel %vm2604, %v2830, %v2832
      %v2834 = vrot.slane %v2463, 1
      %v2835 = vsel %vm2604, %v2832, %v2834
      %v2836 = vrot.slane %v2464, 1
      %v2837 = vsel %vm2604, %v2834, %v2836
      %v2838 = vrot.slane %v2465, 1
      %v2839 = vsel %vm2604, %v2836, %v2838
      %v2840 = vrot.slane %v2466, 1
      %v2841 = vsel %vm2604, %v2838, %v2840
      %v2842 = vrot.slane %v2467, 1
      %v2843 = vsel %vm2604, %v2840, %v2842
      %v2844 = vrot.slane %v2468, 1
      %v2845 = vsel %vm2604, %v2842, %v2844
      %v2846 = vrot.slane %v2469, 1
      %v2847 = vsel %vm2604, %v2844, %v2846
      %v2848 = vrot.slane %v2470, 1
      %v2849 = vsel %vm2604, %v2846, %v2848
      %v2850 = vrot.slane %v2471, 1
      %v2851 = vsel %vm2604, %v2848, %v2850
      %v2852 = vrot.slane %v2472, 1
      %v2853 = vsel %vm2604, %v2850, %v2852
      %v2854 = vrot.slane %v2473, 1
      %v2855 = vsel %vm2604, %v2852, %v2854
      %v2856 = vrot.slane %v2474, 1
      %v2857 = vsel %vm2604, %v2854, %v2856
      %v2858 = vrot.slane %v2475, 1
      %v2859 = vsel %vm2604, %v2856, %v2858
      %v2862 = vsel %vm2604, %v2858, %v2605
      %2864 = vrot.lane.b32.xlu0 %v2607, 64
      %v2865 = vpop.permute.xlu0 %2864
      %2866 = vrot.lane.b32.xlu0 %v2609, 64
      %v2867 = vpop.permute.xlu0 %2866
      %2868 = vrot.lane.b32.xlu0 %v2611, 64
      %v2869 = vpop.permute.xlu0 %2868
      %2870 = vrot.lane.b32.xlu0 %v2613, 64
      %v2871 = vpop.permute.xlu0 %2870
      %2872 = vrot.lane.b32.xlu0 %v2615, 64
      %v2873 = vpop.permute.xlu0 %2872
      %2874 = vrot.lane.b32.xlu0 %v2617, 64
      %v2875 = vpop.permute.xlu0 %2874
      %2876 = vrot.lane.b32.xlu0 %v2619, 64
      %v2877 = vpop.permute.xlu0 %2876
      %2878 = vrot.lane.b32.xlu0 %v2621, 64
      %v2879 = vpop.permute.xlu0 %2878
      %2880 = vrot.lane.b32.xlu0 %v2623, 64
      %v2881 = vpop.permute.xlu0 %2880
      %2882 = vrot.lane.b32.xlu0 %v2625, 64
      %v2883 = vpop.permute.xlu0 %2882
      %2884 = vrot.lane.b32.xlu0 %v2627, 64
      %v2885 = vpop.permute.xlu0 %2884
      %2886 = vrot.lane.b32.xlu0 %v2629, 64
      %v2887 = vpop.permute.xlu0 %2886
      %2888 = vrot.lane.b32.xlu0 %v2631, 64
      %v2889 = vpop.permute.xlu0 %2888
      %2890 = vrot.lane.b32.xlu0 %v2633, 64
      %v2891 = vpop.permute.xlu0 %2890
      %2892 = vrot.lane.b32.xlu0 %v2635, 64
      %v2893 = vpop.permute.xlu0 %2892
      %2894 = vrot.lane.b32.xlu0 %v2637, 64
      %v2895 = vpop.permute.xlu0 %2894
      %2896 = vrot.lane.b32.xlu0 %v2639, 64
      %v2897 = vpop.permute.xlu0 %2896
      %2898 = vrot.lane.b32.xlu0 %v2641, 64
      %v2899 = vpop.permute.xlu0 %2898
      %2900 = vrot.lane.b32.xlu0 %v2643, 64
      %v2901 = vpop.permute.xlu0 %2900
      %2902 = vrot.lane.b32.xlu0 %v2645, 64
      %v2903 = vpop.permute.xlu0 %2902
      %2904 = vrot.lane.b32.xlu0 %v2647, 64
      %v2905 = vpop.permute.xlu0 %2904
      %2906 = vrot.lane.b32.xlu0 %v2649, 64
      %v2907 = vpop.permute.xlu0 %2906
      %2908 = vrot.lane.b32.xlu0 %v2651, 64
      %v2909 = vpop.permute.xlu0 %2908
      %2910 = vrot.lane.b32.xlu0 %v2653, 64
      %v2911 = vpop.permute.xlu0 %2910
      %2912 = vrot.lane.b32.xlu0 %v2655, 64
      %v2913 = vpop.permute.xlu0 %2912
      %2914 = vrot.lane.b32.xlu0 %v2657, 64
      %v2915 = vpop.permute.xlu0 %2914
      %2916 = vrot.lane.b32.xlu0 %v2659, 64
      %v2917 = vpop.permute.xlu0 %2916
      %2918 = vrot.lane.b32.xlu0 %v2661, 64
      %v2919 = vpop.permute.xlu0 %2918
      %2920 = vrot.lane.b32.xlu0 %v2663, 64
      %v2921 = vpop.permute.xlu0 %2920
      %2922 = vrot.lane.b32.xlu0 %v2665, 64
      %v2923 = vpop.permute.xlu0 %2922
      %2924 = vrot.lane.b32.xlu0 %v2667, 64
      %v2925 = vpop.permute.xlu0 %2924
      %2926 = vrot.lane.b32.xlu0 %v2669, 64
      %v2927 = vpop.permute.xlu0 %2926
      %2928 = vrot.lane.b32.xlu0 %v2671, 64
      %v2929 = vpop.permute.xlu0 %2928
      %2930 = vrot.lane.b32.xlu0 %v2673, 64
      %v2931 = vpop.permute.xlu0 %2930
      %2932 = vrot.lane.b32.xlu0 %v2675, 64
      %v2933 = vpop.permute.xlu0 %2932
      %2934 = vrot.lane.b32.xlu0 %v2677, 64
      %v2935 = vpop.permute.xlu0 %2934
      %2936 = vrot.lane.b32.xlu0 %v2679, 64
      %v2937 = vpop.permute.xlu0 %2936
      %2938 = vrot.lane.b32.xlu0 %v2681, 64
      %v2939 = vpop.permute.xlu0 %2938
      %2940 = vrot.lane.b32.xlu0 %v2683, 64
      %v2941 = vpop.permute.xlu0 %2940
      %2942 = vrot.lane.b32.xlu0 %v2685, 64
      %v2943 = vpop.permute.xlu0 %2942
      %2944 = vrot.lane.b32.xlu0 %v2687, 64
      %v2945 = vpop.permute.xlu0 %2944
      %2946 = vrot.lane.b32.xlu0 %v2689, 64
      %v2947 = vpop.permute.xlu0 %2946
      %2948 = vrot.lane.b32.xlu0 %v2691, 64
      %v2949 = vpop.permute.xlu0 %2948
      %2950 = vrot.lane.b32.xlu0 %v2693, 64
      %v2951 = vpop.permute.xlu0 %2950
      %2952 = vrot.lane.b32.xlu0 %v2695, 64
      %v2953 = vpop.permute.xlu0 %2952
      %2954 = vrot.lane.b32.xlu0 %v2697, 64
      %v2955 = vpop.permute.xlu0 %2954
      %2956 = vrot.lane.b32.xlu0 %v2699, 64
      %v2957 = vpop.permute.xlu0 %2956
      %2958 = vrot.lane.b32.xlu0 %v2701, 64
      %v2959 = vpop.permute.xlu0 %2958
      %2960 = vrot.lane.b32.xlu0 %v2703, 64
      %v2961 = vpop.permute.xlu0 %2960
      %2962 = vrot.lane.b32.xlu0 %v2705, 64
      %v2963 = vpop.permute.xlu0 %2962
      %2964 = vrot.lane.b32.xlu0 %v2707, 64
      %v2965 = vpop.permute.xlu0 %2964
      %2966 = vrot.lane.b32.xlu0 %v2709, 64
      %v2967 = vpop.permute.xlu0 %2966
      %2968 = vrot.lane.b32.xlu0 %v2711, 64
      %v2969 = vpop.permute.xlu0 %2968
      %2970 = vrot.lane.b32.xlu0 %v2713, 64
      %v2971 = vpop.permute.xlu0 %2970
      %2972 = vrot.lane.b32.xlu0 %v2715, 64
      %v2973 = vpop.permute.xlu0 %2972
      %2974 = vrot.lane.b32.xlu0 %v2717, 64
      %v2975 = vpop.permute.xlu0 %2974
      %2976 = vrot.lane.b32.xlu0 %v2719, 64
      %v2977 = vpop.permute.xlu0 %2976
      %2978 = vrot.lane.b32.xlu0 %v2721, 64
      %v2979 = vpop.permute.xlu0 %2978
      %2980 = vrot.lane.b32.xlu0 %v2723, 64
      %v2981 = vpop.permute.xlu0 %2980
      %2982 = vrot.lane.b32.xlu0 %v2725, 64
      %v2983 = vpop.permute.xlu0 %2982
      %2984 = vrot.lane.b32.xlu0 %v2727, 64
      %v2985 = vpop.permute.xlu0 %2984
      %2986 = vrot.lane.b32.xlu0 %v2729, 64
      %v2987 = vpop.permute.xlu0 %2986
      %2988 = vrot.lane.b32.xlu0 %v2731, 64
      %v2989 = vpop.permute.xlu0 %2988
      %2990 = vrot.lane.b32.xlu0 %v2733, 64
      %v2991 = vpop.permute.xlu0 %2990
      %2992 = vrot.lane.b32.xlu0 %v2735, 64
      %v2993 = vpop.permute.xlu0 %2992
      %2994 = vrot.lane.b32.xlu0 %v2737, 64
      %v2995 = vpop.permute.xlu0 %2994
      %2996 = vrot.lane.b32.xlu0 %v2739, 64
      %v2997 = vpop.permute.xlu0 %2996
      %2998 = vrot.lane.b32.xlu0 %v2741, 64
      %v2999 = vpop.permute.xlu0 %2998
      %3000 = vrot.lane.b32.xlu0 %v2743, 64
      %v3001 = vpop.permute.xlu0 %3000
      %3002 = vrot.lane.b32.xlu0 %v2745, 64
      %v3003 = vpop.permute.xlu0 %3002
      %3004 = vrot.lane.b32.xlu0 %v2747, 64
      %v3005 = vpop.permute.xlu0 %3004
      %3006 = vrot.lane.b32.xlu0 %v2749, 64
      %v3007 = vpop.permute.xlu0 %3006
      %3008 = vrot.lane.b32.xlu0 %v2751, 64
      %v3009 = vpop.permute.xlu0 %3008
      %3010 = vrot.lane.b32.xlu0 %v2753, 64
      %v3011 = vpop.permute.xlu0 %3010
      %3012 = vrot.lane.b32.xlu0 %v2755, 64
      %v3013 = vpop.permute.xlu0 %3012
      %3014 = vrot.lane.b32.xlu0 %v2757, 64
      %v3015 = vpop.permute.xlu0 %3014
      %3016 = vrot.lane.b32.xlu0 %v2759, 64
      %v3017 = vpop.permute.xlu0 %3016
      %3018 = vrot.lane.b32.xlu0 %v2761, 64
      %v3019 = vpop.permute.xlu0 %3018
      %3020 = vrot.lane.b32.xlu0 %v2763, 64
      %v3021 = vpop.permute.xlu0 %3020
      %3022 = vrot.lane.b32.xlu0 %v2765, 64
      %v3023 = vpop.permute.xlu0 %3022
      %3024 = vrot.lane.b32.xlu0 %v2767, 64
      %v3025 = vpop.permute.xlu0 %3024
      %3026 = vrot.lane.b32.xlu0 %v2769, 64
      %v3027 = vpop.permute.xlu0 %3026
      %3028 = vrot.lane.b32.xlu0 %v2771, 64
      %v3029 = vpop.permute.xlu0 %3028
      %3030 = vrot.lane.b32.xlu0 %v2773, 64
      %v3031 = vpop.permute.xlu0 %3030
      %3032 = vrot.lane.b32.xlu0 %v2775, 64
      %v3033 = vpop.permute.xlu0 %3032
      %3034 = vrot.lane.b32.xlu0 %v2777, 64
      %v3035 = vpop.permute.xlu0 %3034
      %3036 = vrot.lane.b32.xlu0 %v2779, 64
      %v3037 = vpop.permute.xlu0 %3036
      %3038 = vrot.lane.b32.xlu0 %v2781, 64
      %v3039 = vpop.permute.xlu0 %3038
      %3040 = vrot.lane.b32.xlu0 %v2783, 64
      %v3041 = vpop.permute.xlu0 %3040
      %3042 = vrot.lane.b32.xlu0 %v2785, 64
      %v3043 = vpop.permute.xlu0 %3042
      %3044 = vrot.lane.b32.xlu0 %v2787, 64
      %v3045 = vpop.permute.xlu0 %3044
      %3046 = vrot.lane.b32.xlu0 %v2789, 64
      %v3047 = vpop.permute.xlu0 %3046
      %3048 = vrot.lane.b32.xlu0 %v2791, 64
      %v3049 = vpop.permute.xlu0 %3048
      %3050 = vrot.lane.b32.xlu0 %v2793, 64
      %v3051 = vpop.permute.xlu0 %3050
      %3052 = vrot.lane.b32.xlu0 %v2795, 64
      %v3053 = vpop.permute.xlu0 %3052
      %3054 = vrot.lane.b32.xlu0 %v2797, 64
      %v3055 = vpop.permute.xlu0 %3054
      %3056 = vrot.lane.b32.xlu0 %v2799, 64
      %v3057 = vpop.permute.xlu0 %3056
      %3058 = vrot.lane.b32.xlu0 %v2801, 64
      %v3059 = vpop.permute.xlu0 %3058
      %3060 = vrot.lane.b32.xlu0 %v2803, 64
      %v3061 = vpop.permute.xlu0 %3060
      %3062 = vrot.lane.b32.xlu0 %v2805, 64
      %v3063 = vpop.permute.xlu0 %3062
      %3064 = vrot.lane.b32.xlu0 %v2807, 64
      %v3065 = vpop.permute.xlu0 %3064
      %3066 = vrot.lane.b32.xlu0 %v2809, 64
      %v3067 = vpop.permute.xlu0 %3066
      %3068 = vrot.lane.b32.xlu0 %v2811, 64
      %v3069 = vpop.permute.xlu0 %3068
      %3070 = vrot.lane.b32.xlu0 %v2813, 64
      %v3071 = vpop.permute.xlu0 %3070
      %3072 = vrot.lane.b32.xlu0 %v2815, 64
      %v3073 = vpop.permute.xlu0 %3072
      %3074 = vrot.lane.b32.xlu0 %v2817, 64
      %v3075 = vpop.permute.xlu0 %3074
      %3076 = vrot.lane.b32.xlu0 %v2819, 64
      %v3077 = vpop.permute.xlu0 %3076
      %3078 = vrot.lane.b32.xlu0 %v2821, 64
      %v3079 = vpop.permute.xlu0 %3078
      %3080 = vrot.lane.b32.xlu0 %v2823, 64
      %v3081 = vpop.permute.xlu0 %3080
      %3082 = vrot.lane.b32.xlu0 %v2825, 64
      %v3083 = vpop.permute.xlu0 %3082
      %3084 = vrot.lane.b32.xlu0 %v2827, 64
      %v3085 = vpop.permute.xlu0 %3084
      %3086 = vrot.lane.b32.xlu0 %v2829, 64
      %v3087 = vpop.permute.xlu0 %3086
      %3088 = vrot.lane.b32.xlu0 %v2831, 64
      %v3089 = vpop.permute.xlu0 %3088
      %3090 = vrot.lane.b32.xlu0 %v2833, 64
      %v3091 = vpop.permute.xlu0 %3090
      %3092 = vrot.lane.b32.xlu0 %v2835, 64
      %v3093 = vpop.permute.xlu0 %3092
      %3094 = vrot.lane.b32.xlu0 %v2837, 64
      %v3095 = vpop.permute.xlu0 %3094
      %3096 = vrot.lane.b32.xlu0 %v2839, 64
      %v3097 = vpop.permute.xlu0 %3096
      %3098 = vrot.lane.b32.xlu0 %v2841, 64
      %v3099 = vpop.permute.xlu0 %3098
      %3100 = vrot.lane.b32.xlu0 %v2843, 64
      %v3101 = vpop.permute.xlu0 %3100
      %3102 = vrot.lane.b32.xlu0 %v2845, 64
      %v3103 = vpop.permute.xlu0 %3102
      %3104 = vrot.lane.b32.xlu0 %v2847, 64
      %v3105 = vpop.permute.xlu0 %3104
      %3106 = vrot.lane.b32.xlu0 %v2849, 64
      %v3107 = vpop.permute.xlu0 %3106
      %3108 = vrot.lane.b32.xlu0 %v2851, 64
      %v3109 = vpop.permute.xlu0 %3108
      %3110 = vrot.lane.b32.xlu0 %v2853, 64
      %v3111 = vpop.permute.xlu0 %3110
      %3112 = vrot.lane.b32.xlu0 %v2855, 64
      %v3113 = vpop.permute.xlu0 %3112
      %3114 = vrot.lane.b32.xlu0 %v2857, 64
      %v3115 = vpop.permute.xlu0 %3114
      %3116 = vrot.lane.b32.xlu0 %v2859, 64
      %v3117 = vpop.permute.xlu0 %3116
      %3118 = vrot.lane.b32.xlu0 %v2862, 64
      %v3119 = vpop.permute.xlu0 %3118
      %vm3248 = vcmask 523264
      %v3249 = vsel %vm3248, %v2348, %v2865
      %v3250 = vsel %vm3248, %v2349, %v2867
      %v3251 = vsel %vm3248, %v2350, %v2869
      %v3252 = vsel %vm3248, %v2351, %v2871
      %v3253 = vsel %vm3248, %v2352, %v2873
      %v3254 = vsel %vm3248, %v2353, %v2875
      %v3255 = vsel %vm3248, %v2354, %v2877
      %v3256 = vsel %vm3248, %v2355, %v2879
      %v3257 = vsel %vm3248, %v2356, %v2881
      %v3258 = vsel %vm3248, %v2357, %v2883
      %v3259 = vsel %vm3248, %v2358, %v2885
      %v3260 = vsel %vm3248, %v2359, %v2887
      %v3261 = vsel %vm3248, %v2360, %v2889
      %v3262 = vsel %vm3248, %v2361, %v2891
      %v3263 = vsel %vm3248, %v2362, %v2893
      %v3264 = vsel %vm3248, %v2363, %v2895
      %v3265 = vsel %vm3248, %v2364, %v2897
      %v3266 = vsel %vm3248, %v2365, %v2899
      %v3267 = vsel %vm3248, %v2366, %v2901
      %v3268 = vsel %vm3248, %v2367, %v2903
      %v3269 = vsel %vm3248, %v2368, %v2905
      %v3270 = vsel %vm3248, %v2369, %v2907
      %v3271 = vsel %vm3248, %v2370, %v2909
      %v3272 = vsel %vm3248, %v2371, %v2911
      %v3273 = vsel %vm3248, %v2372, %v2913
      %v3274 = vsel %vm3248, %v2373, %v2915
      %v3275 = vsel %vm3248, %v2374, %v2917
      %v3276 = vsel %vm3248, %v2375, %v2919
      %v3277 = vsel %vm3248, %v2376, %v2921
      %v3278 = vsel %vm3248, %v2377, %v2923
      %v3279 = vsel %vm3248, %v2378, %v2925
      %v3280 = vsel %vm3248, %v2379, %v2927
      %v3281 = vsel %vm3248, %v2380, %v2929
      %v3282 = vsel %vm3248, %v2381, %v2931
      %v3283 = vsel %vm3248, %v2382, %v2933
      %v3284 = vsel %vm3248, %v2383, %v2935
      %v3285 = vsel %vm3248, %v2384, %v2937
      %v3286 = vsel %vm3248, %v2385, %v2939
      %v3287 = vsel %vm3248, %v2386, %v2941
      %v3288 = vsel %vm3248, %v2387, %v2943
      %v3289 = vsel %vm3248, %v2388, %v2945
      %v3290 = vsel %vm3248, %v2389, %v2947
      %v3291 = vsel %vm3248, %v2390, %v2949
      %v3292 = vsel %vm3248, %v2391, %v2951
      %v3293 = vsel %vm3248, %v2392, %v2953
      %v3294 = vsel %vm3248, %v2393, %v2955
      %v3295 = vsel %vm3248, %v2394, %v2957
      %v3296 = vsel %vm3248, %v2395, %v2959
      %v3297 = vsel %vm3248, %v2396, %v2961
      %v3298 = vsel %vm3248, %v2397, %v2963
      %v3299 = vsel %vm3248, %v2398, %v2965
      %v3300 = vsel %vm3248, %v2399, %v2967
      %v3301 = vsel %vm3248, %v2400, %v2969
      %v3302 = vsel %vm3248, %v2401, %v2971
      %v3303 = vsel %vm3248, %v2402, %v2973
      %v3304 = vsel %vm3248, %v2403, %v2975
      %v3305 = vsel %vm3248, %v2404, %v2977
      %v3306 = vsel %vm3248, %v2405, %v2979
      %v3307 = vsel %vm3248, %v2406, %v2981
      %v3308 = vsel %vm3248, %v2407, %v2983
      %v3309 = vsel %vm3248, %v2408, %v2985
      %v3310 = vsel %vm3248, %v2409, %v2987
      %v3311 = vsel %vm3248, %v2410, %v2989
      %v3312 = vsel %vm3248, %v2411, %v2991
      %v3313 = vsel %vm3248, %v2412, %v2993
      %v3314 = vsel %vm3248, %v2413, %v2995
      %v3315 = vsel %vm3248, %v2414, %v2997
      %v3316 = vsel %vm3248, %v2415, %v2999
      %v3317 = vsel %vm3248, %v2416, %v3001
      %v3318 = vsel %vm3248, %v2417, %v3003
      %v3319 = vsel %vm3248, %v2418, %v3005
      %v3320 = vsel %vm3248, %v2419, %v3007
      %v3321 = vsel %vm3248, %v2420, %v3009
      %v3322 = vsel %vm3248, %v2421, %v3011
      %v3323 = vsel %vm3248, %v2422, %v3013
      %v3324 = vsel %vm3248, %v2423, %v3015
      %v3325 = vsel %vm3248, %v2424, %v3017
      %v3326 = vsel %vm3248, %v2425, %v3019
      %v3327 = vsel %vm3248, %v2426, %v3021
      %v3328 = vsel %vm3248, %v2427, %v3023
      %v3329 = vsel %vm3248, %v2428, %v3025
      %v3330 = vsel %vm3248, %v2429, %v3027
      %v3331 = vsel %vm3248, %v2430, %v3029
      %v3332 = vsel %vm3248, %v2431, %v3031
      %v3333 = vsel %vm3248, %v2432, %v3033
      %v3334 = vsel %vm3248, %v2433, %v3035
      %v3335 = vsel %vm3248, %v2434, %v3037
      %v3336 = vsel %vm3248, %v2435, %v3039
      %v3337 = vsel %vm3248, %v2436, %v3041
      %v3338 = vsel %vm3248, %v2437, %v3043
      %v3339 = vsel %vm3248, %v2438, %v3045
      %v3340 = vsel %vm3248, %v2439, %v3047
      %v3341 = vsel %vm3248, %v2440, %v3049
      %v3342 = vsel %vm3248, %v2441, %v3051
      %v3343 = vsel %vm3248, %v2442, %v3053
      %v3344 = vsel %vm3248, %v2443, %v3055
      %v3345 = vsel %vm3248, %v2444, %v3057
      %v3346 = vsel %vm3248, %v2445, %v3059
      %v3347 = vsel %vm3248, %v2446, %v3061
      %v3348 = vsel %vm3248, %v2447, %v3063
      %v3349 = vsel %vm3248, %v2448, %v3065
      %v3350 = vsel %vm3248, %v2449, %v3067
      %v3351 = vsel %vm3248, %v2450, %v3069
      %v3352 = vsel %vm3248, %v2451, %v3071
      %v3353 = vsel %vm3248, %v2452, %v3073
      %v3354 = vsel %vm3248, %v2453, %v3075
      %v3355 = vsel %vm3248, %v2454, %v3077
      %v3356 = vsel %vm3248, %v2455, %v3079
      %v3357 = vsel %vm3248, %v2456, %v3081
      %v3358 = vsel %vm3248, %v2457, %v3083
      %v3359 = vsel %vm3248, %v2458, %v3085
      %v3360 = vsel %vm3248, %v2459, %v3087
      %v3361 = vsel %vm3248, %v2460, %v3089
      %v3362 = vsel %vm3248, %v2461, %v3091
      %v3363 = vsel %vm3248, %v2462, %v3093
      %v3364 = vsel %vm3248, %v2463, %v3095
      %v3365 = vsel %vm3248, %v2464, %v3097
      %v3366 = vsel %vm3248, %v2465, %v3099
      %v3367 = vsel %vm3248, %v2466, %v3101
      %v3368 = vsel %vm3248, %v2467, %v3103
      %v3369 = vsel %vm3248, %v2468, %v3105
      %v3370 = vsel %vm3248, %v2469, %v3107
      %v3371 = vsel %vm3248, %v2470, %v3109
      %v3372 = vsel %vm3248, %v2471, %v3111
      %v3373 = vsel %vm3248, %v2472, %v3113
      %v3374 = vsel %vm3248, %v2473, %v3115
      %v3375 = vsel %vm3248, %v2474, %v3117
      %v3376 = vsel %vm3248, %v2475, %v3119
      %v3377 = vld [vmem:[%s1] sm:$0xff]
      %v3378 = vld [vmem:[%s1 + $0x8] sm:$0xff]
      %v3379 = vld [vmem:[%s1 + $0x10] sm:$0xff]
      %v3380 = vld [vmem:[%s1 + $0x18] sm:$0xff]
      %v3381 = vld [vmem:[%s1 + $0x20] sm:$0xff]
      %v3382 = vld [vmem:[%s1 + $0x28] sm:$0xff]
      %v3383 = vld [vmem:[%s1 + $0x30] sm:$0xff]
      %v3384 = vld [vmem:[%s1 + $0x38] sm:$0xff]
      %v3385 = vld [vmem:[%s1 + $0x40] sm:$0xff]
      %v3386 = vld [vmem:[%s1 + $0x48] sm:$0xff]
      %v3387 = vld [vmem:[%s1 + $0x50] sm:$0xff]
      %v3388 = vld [vmem:[%s1 + $0x58] sm:$0xff]
      %v3389 = vld [vmem:[%s1 + $0x60] sm:$0xff]
      %v3390 = vld [vmem:[%s1 + $0x68] sm:$0xff]
      %v3391 = vld [vmem:[%s1 + $0x70] sm:$0xff]
      %v3392 = vld [vmem:[%s1 + $0x78] sm:$0xff]
      %v3393 = vld [vmem:[%s2] sm:$0x1]
      %v3395 = vlaneseq
      %v3396 = vshrl.u32 %v3395, 7
      %v3397 = vsub.s32 0, %v3396
      %v3398 = vrot.slane %v3393, %v3397
      %3400 = vmatprep.subr.mxu0 0.0
      %3401 = vmatpush1.msra.mxu0 %v3377
      %3402 = vmatprep.subr.mxu0 0.0
      %3403 = vmatpush1.msra.mxu0 %v3378
      %3404 = vmatprep.subr.mxu0 0.0
      %3405 = vmatpush1.msra.mxu0 %v3379
      %3406 = vmatprep.subr.mxu0 0.0
      %3407 = vmatpush1.msra.mxu0 %v3380
      %3408 = vmatprep.subr.mxu0 0.0
      %3409 = vmatpush1.msra.mxu0 %v3381
      %3410 = vmatprep.subr.mxu0 0.0
      %3411 = vmatpush1.msra.mxu0 %v3382
      %3412 = vmatprep.subr.mxu0 0.0
      %3413 = vmatpush1.msra.mxu0 %v3383
      %3414 = vmatprep.subr.mxu0 0.0
      %3415 = vmatpush1.msra.mxu0 %v3384
      %3416 = vmatprep.subr.mxu0 0.0
      %3417 = vmatpush1.msra.mxu0 %v3385
      %3418 = vmatprep.subr.mxu0 0.0
      %3419 = vmatpush1.msra.mxu0 %v3386
      %3420 = vmatprep.subr.mxu0 0.0
      %3421 = vmatpush1.msra.mxu0 %v3387
      %3422 = vmatprep.subr.mxu0 0.0
      %3423 = vmatpush1.msra.mxu0 %v3388
      %3424 = vmatprep.subr.mxu0 0.0
      %3425 = vmatpush1.msra.mxu0 %v3389
      %3426 = vmatprep.subr.mxu0 0.0
      %3427 = vmatpush1.msra.mxu0 %v3390
      %3428 = vmatprep.subr.mxu0 0.0
      %3429 = vmatpush1.msra.mxu0 %v3391
      %3430 = vmatprep.subr.mxu0 0.0
      %3431 = vmatpush1.msra.mxu0 %v3392
      %3432 = vmatprep.subr.mxu0 0.0
      %3433 = vmatpush1.msra.mxu0 0.0
      %3434 = vmatprep.subr.mxu0 0.0
      %3435 = vmatpush1.msra.mxu0 0.0
      %3436 = vmatprep.subr.mxu0 0.0
      %3437 = vmatpush1.msra.mxu0 0.0
      %3438 = vmatprep.subr.mxu0 0.0
      %3439 = vmatpush1.msra.mxu0 0.0
      %3440 = vmatprep.subr.mxu0 0.0
      %3441 = vmatpush1.msra.mxu0 0.0
      %3442 = vmatprep.subr.mxu0 0.0
      %3443 = vmatpush1.msra.mxu0 0.0
      %3444 = vmatprep.subr.mxu0 0.0
      %3445 = vmatpush1.msra.mxu0 0.0
      %3446 = vmatprep.subr.mxu0 0.0
      %3447 = vmatpush1.msra.mxu0 0.0
      %3448 = vmatprep.subr.mxu0 0.0
      %3449 = vmatpush1.msra.mxu0 0.0
      %3450 = vmatprep.subr.mxu0 0.0
      %3451 = vmatpush1.msra.mxu0 0.0
      %3452 = vmatprep.subr.mxu0 0.0
      %3453 = vmatpush1.msra.mxu0 0.0
      %3454 = vmatprep.subr.mxu0 0.0
      %3455 = vmatpush1.msra.mxu0 0.0
      %3456 = vmatprep.subr.mxu0 0.0
      %3457 = vmatpush1.msra.mxu0 0.0
      %3458 = vmatprep.subr.mxu0 0.0
      %3459 = vmatpush1.msra.mxu0 0.0
      %3460 = vmatprep.subr.mxu0 0.0
      %3461 = vmatpush1.msra.mxu0 0.0
      %3462 = vmatprep.subr.mxu0 0.0
      %3463 = vmatpush1.msra.mxu0 0.0
      %3464 = vmatprep.mubr.f32.mxu0 0.0
      %3465 = vmatmul.mubr.f32.gmra.mrb[0].mxu0 %v3249
      %v3466 = vpop.f32.mrb[0].mxu0
      %v3467 = vadd.f32 %v3398, %v3466
      %v3468 = vpop.f32.mrb[0].mxu0
      %3469 = vmatprep.mubr.f32.mxu0 0.0
      %3470 = vmatmul.mubr.f32.gmra.mrb[0].mxu0 %v3250
      %v3471 = vpop.f32.mrb[0].mxu0
      %v3472 = vadd.f32 %v3398, %v3471
      %v3473 = vpop.f32.mrb[0].mxu0
      %3474 = vmatprep.mubr.f32.mxu0 0.0
      %3475 = vmatmul.mubr.f32.gmra.mrb[0].mxu0 %v3251
      %v3476 = vpop.f32.mrb[0].mxu0
      %v3477 = vadd.f32 %v3398, %v3476
      %v3478 = vpop.f32.mrb[0].mxu0
      %3479 = vmatprep.mubr.f32.mxu0 0.0
      %3480 = vmatmul.mubr.f32.gmra.mrb[0].mxu0 %v3252
      %v3481 = vpop.f32.mrb[0].mxu0
      %v3482 = vadd.f32 %v3398, %v3481
      %v3483 = vpop.f32.mrb[0].mxu0
      %3484 = vmatprep.mubr.f32.mxu0 0.0
      %3485 = vmatmul.mubr.f32.gmra.mrb[0].mxu0 %v3253
      %v3486 = vpop.f32.mrb[0].mxu0
      %v3487 = vadd.f32 %v3398, %v3486
      %v3488 = vpop.f32.mrb[0].mxu0
      %3489 = vmatprep.mubr.f32.mxu0 0.0
      %3490 = vmatmul.mubr.f32.gmra.mrb[0].mxu0 %v3254
      %v3491 = vpop.f32.mrb[0].mxu0
      %v3492 = vadd.f32 %v3398, %v3491
      %v3493 = vpop.f32.mrb[0].mxu0
      %3494 = vmatprep.mubr.f32.mxu0 0.0
      %3495 = vmatmul.mubr.f32.gmra.mrb[0].mxu0 %v3255
      %v3496 = vpop.f32.mrb[0].mxu0
      %v3497 = vadd.f32 %v3398, %v3496
      %v3498 = vpop.f32.mrb[0].mxu0
      %3499 = vmatprep.mubr.f32.mxu0 0.0
      %3500 = vmatmul.mubr.f32.gmra.mrb[0].mxu0 %v3256
      %v3501 = vpop.f32.mrb[0].mxu0
      %v3502 = vadd.f32 %v3398, %v3501
      %v3503 = vpop.f32.mrb[0].mxu0
      %3504 = vmatprep.mubr.f32.mxu0 0.0
      %3505 = vmatmul.mubr.f32.gmra.mrb[0].mxu0 %v3257
      %v3506 = vpop.f32.mrb[0].mxu0
      %v3507 = vadd.f32 %v3398, %v3506
      %v3508 = vpop.f32.mrb[0].mxu0
      %3509 = vmatprep.mubr.f32.mxu0 0.0
      %3510 = vmatmul.mubr.f32.gmra.mrb[0].mxu0 %v3258
      %v3511 = vpop.f32.mrb[0].mxu0
      %v3512 = vadd.f32 %v3398, %v3511
      %v3513 = vpop.f32.mrb[0].mxu0
      %3514 = vmatprep.mubr.f32.mxu0 0.0
      %3515 = vmatmul.mubr.f32.gmra.mrb[0].mxu0 %v3259
      %v3516 = vpop.f32.mrb[0].mxu0
      %v3517 = vadd.f32 %v3398, %v3516
      %v3518 = vpop.f32.mrb[0].mxu0
      %3519 = vmatprep.mubr.f32.mxu0 0.0
      %3520 = vmatmul.mubr.f32.gmra.mrb[0].mxu0 %v3260
      %v3521 = vpop.f32.mrb[0].mxu0
      %v3522 = vadd.f32 %v3398, %v3521
      %v3523 = vpop.f32.mrb[0].mxu0
      %3524 = vmatprep.mubr.f32.mxu0 0.0
      %3525 = vmatmul.mubr.f32.gmra.mrb[0].mxu0 %v3261
      %v3526 = vpop.f32.mrb[0].mxu0
      %v3527 = vadd.f32 %v3398, %v3526
      %v3528 = vpop.f32.mrb[0].mxu0
      %3529 = vmatprep.mubr.f32.mxu0 0.0
      %3530 = vmatmul.mubr.f32.gmra.mrb[0].mxu0 %v3262
      %v3531 = vpop.f32.mrb[0].mxu0
      %v3532 = vadd.f32 %v3398, %v3531
      %v3533 = vpop.f32.mrb[0].mxu0
      %3534 = vmatprep.mubr.f32.mxu0 0.0
      %3535 = vmatmul.mubr.f32.gmra.mrb[0].mxu0 %v3263
      %v3536 = vpop.f32.mrb[0].mxu0
      %v3537 = vadd.f32 %v3398, %v3536
      %v3538 = vpop.f32.mrb[0].mxu0
      %3539 = vmatprep.mubr.f32.mxu0 0.0
      %3540 = vmatmul.mubr.f32.gmra.mrb[0].mxu0 %v3264
      %v3541 = vpop.f32.mrb[0].mxu0
      %v3542 = vadd.f32 %v3398, %v3541
      %v3543 = vpop.f32.mrb[0].mxu0
      %3544 = vmatprep.mubr.f32.mxu0 0.0
      %3545 = vmatmul.mubr.f32.gmra.mrb[0].mxu0 %v3265
      %v3546 = vpop.f32.mrb[0].mxu0
      %v3547 = vadd.f32 %v3398, %v3546
      %v3548 = vpop.f32.mrb[0].mxu0
      %3549 = vmatprep.mubr.f32.mxu0 0.0
      %3550 = vmatmul.mubr.f32.gmra.mrb[0].mxu0 %v3266
      %v3551 = vpop.f32.mrb[0].mxu0
      %v3552 = vadd.f32 %v3398, %v3551
      %v3553 = vpop.f32.mrb[0].mxu0
      %3554 = vmatprep.mubr.f32.mxu0 0.0
      %3555 = vmatmul.mubr.f32.gmra.mrb[0].mxu0 %v3267
      %v3556 = vpop.f32.mrb[0].mxu0
      %v3557 = vadd.f32 %v3398, %v3556
      %v3558 = vpop.f32.mrb[0].mxu0
      %3559 = vmatprep.mubr.f32.mxu0 0.0
      %3560 = vmatmul.mubr.f32.gmra.mrb[0].mxu0 %v3268
      %v3561 = vpop.f32.mrb[0].mxu0
      %v3562 = vadd.f32 %v3398, %v3561
      %v3563 = vpop.f32.mrb[0].mxu0
      %3564 = vmatprep.mubr.f32.mxu0 0.0
      %3565 = vmatmul.mubr.f32.gmra.mrb[0].mxu0 %v3269
      %v3566 = vpop.f32.mrb[0].mxu0
      %v3567 = vadd.f32 %v3398, %v3566
      %v3568 = vpop.f32.mrb[0].mxu0
      %3569 = vmatprep.mubr.f32.mxu0 0.0
      %3570 = vmatmul.mubr.f32.gmra.mrb[0].mxu0 %v3270
      %v3571 = vpop.f32.mrb[0].mxu0
      %v3572 = vadd.f32 %v3398, %v3571
      %v3573 = vpop.f32.mrb[0].mxu0
      %3574 = vmatprep.mubr.f32.mxu0 0.0
      %3575 = vmatmul.mubr.f32.gmra.mrb[0].mxu0 %v3271
      %v3576 = vpop.f32.mrb[0].mxu0
      %v3577 = vadd.f32 %v3398, %v3576
      %v3578 = vpop.f32.mrb[0].mxu0
      %3579 = vmatprep.mubr.f32.mxu0 0.0
      %3580 = vmatmul.mubr.f32.gmra.mrb[0].mxu0 %v3272
      %v3581 = vpop.f32.mrb[0].mxu0
      %v3582 = vadd.f32 %v3398, %v3581
      %v3583 = vpop.f32.mrb[0].mxu0
      %3584 = vmatprep.mubr.f32.mxu0 0.0
      %3585 = vmatmul.mubr.f32.gmra.mrb[0].mxu0 %v3273
      %v3586 = vpop.f32.mrb[0].mxu0
      %v3587 = vadd.f32 %v3398, %v3586
      %v3588 = vpop.f32.mrb[0].mxu0
      %3589 = vmatprep.mubr.f32.mxu0 0.0
      %3590 = vmatmul.mubr.f32.gmra.mrb[0].mxu0 %v3274
      %v3591 = vpop.f32.mrb[0].mxu0
      %v3592 = vadd.f32 %v3398, %v3591
      %v3593 = vpop.f32.mrb[0].mxu0
      %3594 = vmatprep.mubr.f32.mxu0 0.0
      %3595 = vmatmul.mubr.f32.gmra.mrb[0].mxu0 %v3275
      %v3596 = vpop.f32.mrb[0].mxu0
      %v3597 = vadd.f32 %v3398, %v3596
      %v3598 = vpop.f32.mrb[0].mxu0
      %3599 = vmatprep.mubr.f32.mxu0 0.0
      %3600 = vmatmul.mubr.f32.gmra.mrb[0].mxu0 %v3276
      %v3601 = vpop.f32.mrb[0].mxu0
      %v3602 = vadd.f32 %v3398, %v3601
      %v3603 = vpop.f32.mrb[0].mxu0
      %3604 = vmatprep.mubr.f32.mxu0 0.0
      %3605 = vmatmul.mubr.f32.gmra.mrb[0].mxu0 %v3277
      %v3606 = vpop.f32.mrb[0].mxu0
      %v3607 = vadd.f32 %v3398, %v3606
      %v3608 = vpop.f32.mrb[0].mxu0
      %3609 = vmatprep.mubr.f32.mxu0 0.0
      %3610 = vmatmul.mubr.f32.gmra.mrb[0].mxu0 %v3278
      %v3611 = vpop.f32.mrb[0].mxu0
      %v3612 = vadd.f32 %v3398, %v3611
      %v3613 = vpop.f32.mrb[0].mxu0
      %3614 = vmatprep.mubr.f32.mxu0 0.0
      %3615 = vmatmul.mubr.f32.gmra.mrb[0].mxu0 %v3279
      %v3616 = vpop.f32.mrb[0].mxu0
      %v3617 = vadd.f32 %v3398, %v3616
      %v3618 = vpop.f32.mrb[0].mxu0
      %3619 = vmatprep.mubr.f32.mxu0 0.0
      %3620 = vmatmul.mubr.f32.gmra.mrb[0].mxu0 %v3280
      %v3621 = vpop.f32.mrb[0].mxu0
      %v3622 = vadd.f32 %v3398, %v3621
      %v3623 = vpop.f32.mrb[0].mxu0
      %3624 = vmatprep.mubr.f32.mxu0 0.0
      %3625 = vmatmul.mubr.f32.gmra.mrb[0].mxu0 %v3281
      %v3626 = vpop.f32.mrb[0].mxu0
      %v3627 = vadd.f32 %v3398, %v3626
      %v3628 = vpop.f32.mrb[0].mxu0
      %3629 = vmatprep.mubr.f32.mxu0 0.0
      %3630 = vmatmul.mubr.f32.gmra.mrb[0].mxu0 %v3282
      %v3631 = vpop.f32.mrb[0].mxu0
      %v3632 = vadd.f32 %v3398, %v3631
      %v3633 = vpop.f32.mrb[0].mxu0
      %3634 = vmatprep.mubr.f32.mxu0 0.0
      %3635 = vmatmul.mubr.f32.gmra.mrb[0].mxu0 %v3283
      %v3636 = vpop.f32.mrb[0].mxu0
      %v3637 = vadd.f32 %v3398, %v3636
      %v3638 = vpop.f32.mrb[0].mxu0
      %3639 = vmatprep.mubr.f32.mxu0 0.0
      %3640 = vmatmul.mubr.f32.gmra.mrb[0].mxu0 %v3284
      %v3641 = vpop.f32.mrb[0].mxu0
      %v3642 = vadd.f32 %v3398, %v3641
      %v3643 = vpop.f32.mrb[0].mxu0
      %3644 = vmatprep.mubr.f32.mxu0 0.0
      %3645 = vmatmul.mubr.f32.gmra.mrb[0].mxu0 %v3285
      %v3646 = vpop.f32.mrb[0].mxu0
      %v3647 = vadd.f32 %v3398, %v3646
      %v3648 = vpop.f32.mrb[0].mxu0
      %3649 = vmatprep.mubr.f32.mxu0 0.0
      %3650 = vmatmul.mubr.f32.gmra.mrb[0].mxu0 %v3286
      %v3651 = vpop.f32.mrb[0].mxu0
      %v3652 = vadd.f32 %v3398, %v3651
      %v3653 = vpop.f32.mrb[0].mxu0
      %3654 = vmatprep.mubr.f32.mxu0 0.0
      %3655 = vmatmul.mubr.f32.gmra.mrb[0].mxu0 %v3287
      %v3656 = vpop.f32.mrb[0].mxu0
      %v3657 = vadd.f32 %v3398, %v3656
      %v3658 = vpop.f32.mrb[0].mxu0
      %3659 = vmatprep.mubr.f32.mxu0 0.0
      %3660 = vmatmul.mubr.f32.gmra.mrb[0].mxu0 %v3288
      %v3661 = vpop.f32.mrb[0].mxu0
      %v3662 = vadd.f32 %v3398, %v3661
      %v3663 = vpop.f32.mrb[0].mxu0
      %3664 = vmatprep.mubr.f32.mxu0 0.0
      %3665 = vmatmul.mubr.f32.gmra.mrb[0].mxu0 %v3289
      %v3666 = vpop.f32.mrb[0].mxu0
      %v3667 = vadd.f32 %v3398, %v3666
      %v3668 = vpop.f32.mrb[0].mxu0
      %3669 = vmatprep.mubr.f32.mxu0 0.0
      %3670 = vmatmul.mubr.f32.gmra.mrb[0].mxu0 %v3290
      %v3671 = vpop.f32.mrb[0].mxu0
      %v3672 = vadd.f32 %v3398, %v3671
      %v3673 = vpop.f32.mrb[0].mxu0
      %3674 = vmatprep.mubr.f32.mxu0 0.0
      %3675 = vmatmul.mubr.f32.gmra.mrb[0].mxu0 %v3291
      %v3676 = vpop.f32.mrb[0].mxu0
      %v3677 = vadd.f32 %v3398, %v3676
      %v3678 = vpop.f32.mrb[0].mxu0
      %3679 = vmatprep.mubr.f32.mxu0 0.0
      %3680 = vmatmul.mubr.f32.gmra.mrb[0].mxu0 %v3292
      %v3681 = vpop.f32.mrb[0].mxu0
      %v3682 = vadd.f32 %v3398, %v3681
      %v3683 = vpop.f32.mrb[0].mxu0
      %3684 = vmatprep.mubr.f32.mxu0 0.0
      %3685 = vmatmul.mubr.f32.gmra.mrb[0].mxu0 %v3293
      %v3686 = vpop.f32.mrb[0].mxu0
      %v3687 = vadd.f32 %v3398, %v3686
      %v3688 = vpop.f32.mrb[0].mxu0
      %3689 = vmatprep.mubr.f32.mxu0 0.0
      %3690 = vmatmul.mubr.f32.gmra.mrb[0].mxu0 %v3294
      %v3691 = vpop.f32.mrb[0].mxu0
      %v3692 = vadd.f32 %v3398, %v3691
      %v3693 = vpop.f32.mrb[0].mxu0
      %3694 = vmatprep.mubr.f32.mxu0 0.0
      %3695 = vmatmul.mubr.f32.gmra.mrb[0].mxu0 %v3295
      %v3696 = vpop.f32.mrb[0].mxu0
      %v3697 = vadd.f32 %v3398, %v3696
      %v3698 = vpop.f32.mrb[0].mxu0
      %3699 = vmatprep.mubr.f32.mxu0 0.0
      %3700 = vmatmul.mubr.f32.gmra.mrb[0].mxu0 %v3296
      %v3701 = vpop.f32.mrb[0].mxu0
      %v3702 = vadd.f32 %v3398, %v3701
      %v3703 = vpop.f32.mrb[0].mxu0
      %3704 = vmatprep.mubr.f32.mxu0 0.0
      %3705 = vmatmul.mubr.f32.gmra.mrb[0].mxu0 %v3297
      %v3706 = vpop.f32.mrb[0].mxu0
      %v3707 = vadd.f32 %v3398, %v3706
      %v3708 = vpop.f32.mrb[0].mxu0
      %3709 = vmatprep.mubr.f32.mxu0 0.0
      %3710 = vmatmul.mubr.f32.gmra.mrb[0].mxu0 %v3298
      %v3711 = vpop.f32.mrb[0].mxu0
      %v3712 = vadd.f32 %v3398, %v3711
      %v3713 = vpop.f32.mrb[0].mxu0
      %3714 = vmatprep.mubr.f32.mxu0 0.0
      %3715 = vmatmul.mubr.f32.gmra.mrb[0].mxu0 %v3299
      %v3716 = vpop.f32.mrb[0].mxu0
      %v3717 = vadd.f32 %v3398, %v3716
      %v3718 = vpop.f32.mrb[0].mxu0
      %3719 = vmatprep.mubr.f32.mxu0 0.0
      %3720 = vmatmul.mubr.f32.gmra.mrb[0].mxu0 %v3300
      %v3721 = vpop.f32.mrb[0].mxu0
      %v3722 = vadd.f32 %v3398, %v3721
      %v3723 = vpop.f32.mrb[0].mxu0
      %3724 = vmatprep.mubr.f32.mxu0 0.0
      %3725 = vmatmul.mubr.f32.gmra.mrb[0].mxu0 %v3301
      %v3726 = vpop.f32.mrb[0].mxu0
      %v3727 = vadd.f32 %v3398, %v3726
      %v3728 = vpop.f32.mrb[0].mxu0
      %3729 = vmatprep.mubr.f32.mxu0 0.0
      %3730 = vmatmul.mubr.f32.gmra.mrb[0].mxu0 %v3302
      %v3731 = vpop.f32.mrb[0].mxu0
      %v3732 = vadd.f32 %v3398, %v3731
      %v3733 = vpop.f32.mrb[0].mxu0
      %3734 = vmatprep.mubr.f32.mxu0 0.0
      %3735 = vmatmul.mubr.f32.gmra.mrb[0].mxu0 %v3303
      %v3736 = vpop.f32.mrb[0].mxu0
      %v3737 = vadd.f32 %v3398, %v3736
      %v3738 = vpop.f32.mrb[0].mxu0
      %3739 = vmatprep.mubr.f32.mxu0 0.0
      %3740 = vmatmul.mubr.f32.gmra.mrb[0].mxu0 %v3304
      %v3741 = vpop.f32.mrb[0].mxu0
      %v3742 = vadd.f32 %v3398, %v3741
      %v3743 = vpop.f32.mrb[0].mxu0
      %3744 = vmatprep.mubr.f32.mxu0 0.0
      %3745 = vmatmul.mubr.f32.gmra.mrb[0].mxu0 %v3305
      %v3746 = vpop.f32.mrb[0].mxu0
      %v3747 = vadd.f32 %v3398, %v3746
      %v3748 = vpop.f32.mrb[0].mxu0
      %3749 = vmatprep.mubr.f32.mxu0 0.0
      %3750 = vmatmul.mubr.f32.gmra.mrb[0].mxu0 %v3306
      %v3751 = vpop.f32.mrb[0].mxu0
      %v3752 = vadd.f32 %v3398, %v3751
      %v3753 = vpop.f32.mrb[0].mxu0
      %3754 = vmatprep.mubr.f32.mxu0 0.0
      %3755 = vmatmul.mubr.f32.gmra.mrb[0].mxu0 %v3307
      %v3756 = vpop.f32.mrb[0].mxu0
      %v3757 = vadd.f32 %v3398, %v3756
      %v3758 = vpop.f32.mrb[0].mxu0
      %3759 = vmatprep.mubr.f32.mxu0 0.0
      %3760 = vmatmul.mubr.f32.gmra.mrb[0].mxu0 %v3308
      %v3761 = vpop.f32.mrb[0].mxu0
      %v3762 = vadd.f32 %v3398, %v3761
      %v3763 = vpop.f32.mrb[0].mxu0
      %3764 = vmatprep.mubr.f32.mxu0 0.0
      %3765 = vmatmul.mubr.f32.gmra.mrb[0].mxu0 %v3309
      %v3766 = vpop.f32.mrb[0].mxu0
      %v3767 = vadd.f32 %v3398, %v3766
      %v3768 = vpop.f32.mrb[0].mxu0
      %3769 = vmatprep.mubr.f32.mxu0 0.0
      %3770 = vmatmul.mubr.f32.gmra.mrb[0].mxu0 %v3310
      %v3771 = vpop.f32.mrb[0].mxu0
      %v3772 = vadd.f32 %v3398, %v3771
      %v3773 = vpop.f32.mrb[0].mxu0
      %3774 = vmatprep.mubr.f32.mxu0 0.0
      %3775 = vmatmul.mubr.f32.gmra.mrb[0].mxu0 %v3311
      %v3776 = vpop.f32.mrb[0].mxu0
      %v3777 = vadd.f32 %v3398, %v3776
      %v3778 = vpop.f32.mrb[0].mxu0
      %3779 = vmatprep.mubr.f32.mxu0 0.0
      %3780 = vmatmul.mubr.f32.gmra.mrb[0].mxu0 %v3312
      %v3781 = vpop.f32.mrb[0].mxu0
      %v3782 = vadd.f32 %v3398, %v3781
      %v3783 = vpop.f32.mrb[0].mxu0
      %3784 = vmatprep.mubr.f32.mxu0 0.0
      %3785 = vmatmul.mubr.f32.gmra.mrb[0].mxu0 %v3313
      %v3786 = vpop.f32.mrb[0].mxu0
      %v3787 = vadd.f32 %v3398, %v3786
      %v3788 = vpop.f32.mrb[0].mxu0
      %3789 = vmatprep.mubr.f32.mxu0 0.0
      %3790 = vmatmul.mubr.f32.gmra.mrb[0].mxu0 %v3314
      %v3791 = vpop.f32.mrb[0].mxu0
      %v3792 = vadd.f32 %v3398, %v3791
      %v3793 = vpop.f32.mrb[0].mxu0
      %3794 = vmatprep.mubr.f32.mxu0 0.0
      %3795 = vmatmul.mubr.f32.gmra.mrb[0].mxu0 %v3315
      %v3796 = vpop.f32.mrb[0].mxu0
      %v3797 = vadd.f32 %v3398, %v3796
      %v3798 = vpop.f32.mrb[0].mxu0
      %3799 = vmatprep.mubr.f32.mxu0 0.0
      %3800 = vmatmul.mubr.f32.gmra.mrb[0].mxu0 %v3316
      %v3801 = vpop.f32.mrb[0].mxu0
      %v3802 = vadd.f32 %v3398, %v3801
      %v3803 = vpop.f32.mrb[0].mxu0
      %3804 = vmatprep.mubr.f32.mxu0 0.0
      %3805 = vmatmul.mubr.f32.gmra.mrb[0].mxu0 %v3317
      %v3806 = vpop.f32.mrb[0].mxu0
      %v3807 = vadd.f32 %v3398, %v3806
      %v3808 = vpop.f32.mrb[0].mxu0
      %3809 = vmatprep.mubr.f32.mxu0 0.0
      %3810 = vmatmul.mubr.f32.gmra.mrb[0].mxu0 %v3318
      %v3811 = vpop.f32.mrb[0].mxu0
      %v3812 = vadd.f32 %v3398, %v3811
      %v3813 = vpop.f32.mrb[0].mxu0
      %3814 = vmatprep.mubr.f32.mxu0 0.0
      %3815 = vmatmul.mubr.f32.gmra.mrb[0].mxu0 %v3319
      %v3816 = vpop.f32.mrb[0].mxu0
      %v3817 = vadd.f32 %v3398, %v3816
      %v3818 = vpop.f32.mrb[0].mxu0
      %3819 = vmatprep.mubr.f32.mxu0 0.0
      %3820 = vmatmul.mubr.f32.gmra.mrb[0].mxu0 %v3320
      %v3821 = vpop.f32.mrb[0].mxu0
      %v3822 = vadd.f32 %v3398, %v3821
      %v3823 = vpop.f32.mrb[0].mxu0
      %3824 = vmatprep.mubr.f32.mxu0 0.0
      %3825 = vmatmul.mubr.f32.gmra.mrb[0].mxu0 %v3321
      %v3826 = vpop.f32.mrb[0].mxu0
      %v3827 = vadd.f32 %v3398, %v3826
      %v3828 = vpop.f32.mrb[0].mxu0
      %3829 = vmatprep.mubr.f32.mxu0 0.0
      %3830 = vmatmul.mubr.f32.gmra.mrb[0].mxu0 %v3322
      %v3831 = vpop.f32.mrb[0].mxu0
      %v3832 = vadd.f32 %v3398, %v3831
      %v3833 = vpop.f32.mrb[0].mxu0
      %3834 = vmatprep.mubr.f32.mxu0 0.0
      %3835 = vmatmul.mubr.f32.gmra.mrb[0].mxu0 %v3323
      %v3836 = vpop.f32.mrb[0].mxu0
      %v3837 = vadd.f32 %v3398, %v3836
      %v3838 = vpop.f32.mrb[0].mxu0
      %3839 = vmatprep.mubr.f32.mxu0 0.0
      %3840 = vmatmul.mubr.f32.gmra.mrb[0].mxu0 %v3324
      %v3841 = vpop.f32.mrb[0].mxu0
      %v3842 = vadd.f32 %v3398, %v3841
      %v3843 = vpop.f32.mrb[0].mxu0
      %3844 = vmatprep.mubr.f32.mxu0 0.0
      %3845 = vmatmul.mubr.f32.gmra.mrb[0].mxu0 %v3325
      %v3846 = vpop.f32.mrb[0].mxu0
      %v3847 = vadd.f32 %v3398, %v3846
      %v3848 = vpop.f32.mrb[0].mxu0
      %3849 = vmatprep.mubr.f32.mxu0 0.0
      %3850 = vmatmul.mubr.f32.gmra.mrb[0].mxu0 %v3326
      %v3851 = vpop.f32.mrb[0].mxu0
      %v3852 = vadd.f32 %v3398, %v3851
      %v3853 = vpop.f32.mrb[0].mxu0
      %3854 = vmatprep.mubr.f32.mxu0 0.0
      %3855 = vmatmul.mubr.f32.gmra.mrb[0].mxu0 %v3327
      %v3856 = vpop.f32.mrb[0].mxu0
      %v3857 = vadd.f32 %v3398, %v3856
      %v3858 = vpop.f32.mrb[0].mxu0
      %3859 = vmatprep.mubr.f32.mxu0 0.0
      %3860 = vmatmul.mubr.f32.gmra.mrb[0].mxu0 %v3328
      %v3861 = vpop.f32.mrb[0].mxu0
      %v3862 = vadd.f32 %v3398, %v3861
      %v3863 = vpop.f32.mrb[0].mxu0
      %3864 = vmatprep.mubr.f32.mxu0 0.0
      %3865 = vmatmul.mubr.f32.gmra.mrb[0].mxu0 %v3329
      %v3866 = vpop.f32.mrb[0].mxu0
      %v3867 = vadd.f32 %v3398, %v3866
      %v3868 = vpop.f32.mrb[0].mxu0
      %3869 = vmatprep.mubr.f32.mxu0 0.0
      %3870 = vmatmul.mubr.f32.gmra.mrb[0].mxu0 %v3330
      %v3871 = vpop.f32.mrb[0].mxu0
      %v3872 = vadd.f32 %v3398, %v3871
      %v3873 = vpop.f32.mrb[0].mxu0
      %3874 = vmatprep.mubr.f32.mxu0 0.0
      %3875 = vmatmul.mubr.f32.gmra.mrb[0].mxu0 %v3331
      %v3876 = vpop.f32.mrb[0].mxu0
      %v3877 = vadd.f32 %v3398, %v3876
      %v3878 = vpop.f32.mrb[0].mxu0
      %3879 = vmatprep.mubr.f32.mxu0 0.0
      %3880 = vmatmul.mubr.f32.gmra.mrb[0].mxu0 %v3332
      %v3881 = vpop.f32.mrb[0].mxu0
      %v3882 = vadd.f32 %v3398, %v3881
      %v3883 = vpop.f32.mrb[0].mxu0
      %3884 = vmatprep.mubr.f32.mxu0 0.0
      %3885 = vmatmul.mubr.f32.gmra.mrb[0].mxu0 %v3333
      %v3886 = vpop.f32.mrb[0].mxu0
      %v3887 = vadd.f32 %v3398, %v3886
      %v3888 = vpop.f32.mrb[0].mxu0
      %3889 = vmatprep.mubr.f32.mxu0 0.0
      %3890 = vmatmul.mubr.f32.gmra.mrb[0].mxu0 %v3334
      %v3891 = vpop.f32.mrb[0].mxu0
      %v3892 = vadd.f32 %v3398, %v3891
      %v3893 = vpop.f32.mrb[0].mxu0
      %3894 = vmatprep.mubr.f32.mxu0 0.0
      %3895 = vmatmul.mubr.f32.gmra.mrb[0].mxu0 %v3335
      %v3896 = vpop.f32.mrb[0].mxu0
      %v3897 = vadd.f32 %v3398, %v3896
      %v3898 = vpop.f32.mrb[0].mxu0
      %3899 = vmatprep.mubr.f32.mxu0 0.0
      %3900 = vmatmul.mubr.f32.gmra.mrb[0].mxu0 %v3336
      %v3901 = vpop.f32.mrb[0].mxu0
      %v3902 = vadd.f32 %v3398, %v3901
      %v3903 = vpop.f32.mrb[0].mxu0
      %3904 = vmatprep.mubr.f32.mxu0 0.0
      %3905 = vmatmul.mubr.f32.gmra.mrb[0].mxu0 %v3337
      %v3906 = vpop.f32.mrb[0].mxu0
      %v3907 = vadd.f32 %v3398, %v3906
      %v3908 = vpop.f32.mrb[0].mxu0
      %3909 = vmatprep.mubr.f32.mxu0 0.0
      %3910 = vmatmul.mubr.f32.gmra.mrb[0].mxu0 %v3338
      %v3911 = vpop.f32.mrb[0].mxu0
      %v3912 = vadd.f32 %v3398, %v3911
      %v3913 = vpop.f32.mrb[0].mxu0
      %3914 = vmatprep.mubr.f32.mxu0 0.0
      %3915 = vmatmul.mubr.f32.gmra.mrb[0].mxu0 %v3339
      %v3916 = vpop.f32.mrb[0].mxu0
      %v3917 = vadd.f32 %v3398, %v3916
      %v3918 = vpop.f32.mrb[0].mxu0
      %3919 = vmatprep.mubr.f32.mxu0 0.0
      %3920 = vmatmul.mubr.f32.gmra.mrb[0].mxu0 %v3340
      %v3921 = vpop.f32.mrb[0].mxu0
      %v3922 = vadd.f32 %v3398, %v3921
      %v3923 = vpop.f32.mrb[0].mxu0
      %3924 = vmatprep.mubr.f32.mxu0 0.0
      %3925 = vmatmul.mubr.f32.gmra.mrb[0].mxu0 %v3341
      %v3926 = vpop.f32.mrb[0].mxu0
      %v3927 = vadd.f32 %v3398, %v3926
      %v3928 = vpop.f32.mrb[0].mxu0
      %3929 = vmatprep.mubr.f32.mxu0 0.0
      %3930 = vmatmul.mubr.f32.gmra.mrb[0].mxu0 %v3342
      %v3931 = vpop.f32.mrb[0].mxu0
      %v3932 = vadd.f32 %v3398, %v3931
      %v3933 = vpop.f32.mrb[0].mxu0
      %3934 = vmatprep.mubr.f32.mxu0 0.0
      %3935 = vmatmul.mubr.f32.gmra.mrb[0].mxu0 %v3343
      %v3936 = vpop.f32.mrb[0].mxu0
      %v3937 = vadd.f32 %v3398, %v3936
      %v3938 = vpop.f32.mrb[0].mxu0
      %3939 = vmatprep.mubr.f32.mxu0 0.0
      %3940 = vmatmul.mubr.f32.gmra.mrb[0].mxu0 %v3344
      %v3941 = vpop.f32.mrb[0].mxu0
      %v3942 = vadd.f32 %v3398, %v3941
      %v3943 = vpop.f32.mrb[0].mxu0
      %3944 = vmatprep.mubr.f32.mxu0 0.0
      %3945 = vmatmul.mubr.f32.gmra.mrb[0].mxu0 %v3345
      %v3946 = vpop.f32.mrb[0].mxu0
      %v3947 = vadd.f32 %v3398, %v3946
      %v3948 = vpop.f32.mrb[0].mxu0
      %3949 = vmatprep.mubr.f32.mxu0 0.0
      %3950 = vmatmul.mubr.f32.gmra.mrb[0].mxu0 %v3346
      %v3951 = vpop.f32.mrb[0].mxu0
      %v3952 = vadd.f32 %v3398, %v3951
      %v3953 = vpop.f32.mrb[0].mxu0
      %3954 = vmatprep.mubr.f32.mxu0 0.0
      %3955 = vmatmul.mubr.f32.gmra.mrb[0].mxu0 %v3347
      %v3956 = vpop.f32.mrb[0].mxu0
      %v3957 = vadd.f32 %v3398, %v3956
      %v3958 = vpop.f32.mrb[0].mxu0
      %3959 = vmatprep.mubr.f32.mxu0 0.0
      %3960 = vmatmul.mubr.f32.gmra.mrb[0].mxu0 %v3348
      %v3961 = vpop.f32.mrb[0].mxu0
      %v3962 = vadd.f32 %v3398, %v3961
      %v3963 = vpop.f32.mrb[0].mxu0
      %3964 = vmatprep.mubr.f32.mxu0 0.0
      %3965 = vmatmul.mubr.f32.gmra.mrb[0].mxu0 %v3349
      %v3966 = vpop.f32.mrb[0].mxu0
      %v3967 = vadd.f32 %v3398, %v3966
      %v3968 = vpop.f32.mrb[0].mxu0
      %3969 = vmatprep.mubr.f32.mxu0 0.0
      %3970 = vmatmul.mubr.f32.gmra.mrb[0].mxu0 %v3350
      %v3971 = vpop.f32.mrb[0].mxu0
      %v3972 = vadd.f32 %v3398, %v3971
      %v3973 = vpop.f32.mrb[0].mxu0
      %3974 = vmatprep.mubr.f32.mxu0 0.0
      %3975 = vmatmul.mubr.f32.gmra.mrb[0].mxu0 %v3351
      %v3976 = vpop.f32.mrb[0].mxu0
      %v3977 = vadd.f32 %v3398, %v3976
      %v3978 = vpop.f32.mrb[0].mxu0
      %3979 = vmatprep.mubr.f32.mxu0 0.0
      %3980 = vmatmul.mubr.f32.gmra.mrb[0].mxu0 %v3352
      %v3981 = vpop.f32.mrb[0].mxu0
      %v3982 = vadd.f32 %v3398, %v3981
      %v3983 = vpop.f32.mrb[0].mxu0
      %3984 = vmatprep.mubr.f32.mxu0 0.0
      %3985 = vmatmul.mubr.f32.gmra.mrb[0].mxu0 %v3353
      %v3986 = vpop.f32.mrb[0].mxu0
      %v3987 = vadd.f32 %v3398, %v3986
      %v3988 = vpop.f32.mrb[0].mxu0
      %3989 = vmatprep.mubr.f32.mxu0 0.0
      %3990 = vmatmul.mubr.f32.gmra.mrb[0].mxu0 %v3354
      %v3991 = vpop.f32.mrb[0].mxu0
      %v3992 = vadd.f32 %v3398, %v3991
      %v3993 = vpop.f32.mrb[0].mxu0
      %3994 = vmatprep.mubr.f32.mxu0 0.0
      %3995 = vmatmul.mubr.f32.gmra.mrb[0].mxu0 %v3355
      %v3996 = vpop.f32.mrb[0].mxu0
      %v3997 = vadd.f32 %v3398, %v3996
      %v3998 = vpop.f32.mrb[0].mxu0
      %3999 = vmatprep.mubr.f32.mxu0 0.0
      %4000 = vmatmul.mubr.f32.gmra.mrb[0].mxu0 %v3356
      %v4001 = vpop.f32.mrb[0].mxu0
      %v4002 = vadd.f32 %v3398, %v4001
      %v4003 = vpop.f32.mrb[0].mxu0
      %4004 = vmatprep.mubr.f32.mxu0 0.0
      %4005 = vmatmul.mubr.f32.gmra.mrb[0].mxu0 %v3357
      %v4006 = vpop.f32.mrb[0].mxu0
      %v4007 = vadd.f32 %v3398, %v4006
      %v4008 = vpop.f32.mrb[0].mxu0
      %4009 = vmatprep.mubr.f32.mxu0 0.0
      %4010 = vmatmul.mubr.f32.gmra.mrb[0].mxu0 %v3358
      %v4011 = vpop.f32.mrb[0].mxu0
      %v4012 = vadd.f32 %v3398, %v4011
      %v4013 = vpop.f32.mrb[0].mxu0
      %4014 = vmatprep.mubr.f32.mxu0 0.0
      %4015 = vmatmul.mubr.f32.gmra.mrb[0].mxu0 %v3359
      %v4016 = vpop.f32.mrb[0].mxu0
      %v4017 = vadd.f32 %v3398, %v4016
      %v4018 = vpop.f32.mrb[0].mxu0
      %4019 = vmatprep.mubr.f32.mxu0 0.0
      %4020 = vmatmul.mubr.f32.gmra.mrb[0].mxu0 %v3360
      %v4021 = vpop.f32.mrb[0].mxu0
      %v4022 = vadd.f32 %v3398, %v4021
      %v4023 = vpop.f32.mrb[0].mxu0
      %4024 = vmatprep.mubr.f32.mxu0 0.0
      %4025 = vmatmul.mubr.f32.gmra.mrb[0].mxu0 %v3361
      %v4026 = vpop.f32.mrb[0].mxu0
      %v4027 = vadd.f32 %v3398, %v4026
      %v4028 = vpop.f32.mrb[0].mxu0
      %4029 = vmatprep.mubr.f32.mxu0 0.0
      %4030 = vmatmul.mubr.f32.gmra.mrb[0].mxu0 %v3362
      %v4031 = vpop.f32.mrb[0].mxu0
      %v4032 = vadd.f32 %v3398, %v4031
      %v4033 = vpop.f32.mrb[0].mxu0
      %4034 = vmatprep.mubr.f32.mxu0 0.0
      %4035 = vmatmul.mubr.f32.gmra.mrb[0].mxu0 %v3363
      %v4036 = vpop.f32.mrb[0].mxu0
      %v4037 = vadd.f32 %v3398, %v4036
      %v4038 = vpop.f32.mrb[0].mxu0
      %4039 = vmatprep.mubr.f32.mxu0 0.0
      %4040 = vmatmul.mubr.f32.gmra.mrb[0].mxu0 %v3364
      %v4041 = vpop.f32.mrb[0].mxu0
      %v4042 = vadd.f32 %v3398, %v4041
      %v4043 = vpop.f32.mrb[0].mxu0
      %4044 = vmatprep.mubr.f32.mxu0 0.0
      %4045 = vmatmul.mubr.f32.gmra.mrb[0].mxu0 %v3365
      %v4046 = vpop.f32.mrb[0].mxu0
      %v4047 = vadd.f32 %v3398, %v4046
      %v4048 = vpop.f32.mrb[0].mxu0
      %4049 = vmatprep.mubr.f32.mxu0 0.0
      %4050 = vmatmul.mubr.f32.gmra.mrb[0].mxu0 %v3366
      %v4051 = vpop.f32.mrb[0].mxu0
      %v4052 = vadd.f32 %v3398, %v4051
      %v4053 = vpop.f32.mrb[0].mxu0
      %4054 = vmatprep.mubr.f32.mxu0 0.0
      %4055 = vmatmul.mubr.f32.gmra.mrb[0].mxu0 %v3367
      %v4056 = vpop.f32.mrb[0].mxu0
      %v4057 = vadd.f32 %v3398, %v4056
      %v4058 = vpop.f32.mrb[0].mxu0
      %4059 = vmatprep.mubr.f32.mxu0 0.0
      %4060 = vmatmul.mubr.f32.gmra.mrb[0].mxu0 %v3368
      %v4061 = vpop.f32.mrb[0].mxu0
      %v4062 = vadd.f32 %v3398, %v4061
      %v4063 = vpop.f32.mrb[0].mxu0
      %4064 = vmatprep.mubr.f32.mxu0 0.0
      %4065 = vmatmul.mubr.f32.gmra.mrb[0].mxu0 %v3369
      %v4066 = vpop.f32.mrb[0].mxu0
      %v4067 = vadd.f32 %v3398, %v4066
      %v4068 = vpop.f32.mrb[0].mxu0
      %4069 = vmatprep.mubr.f32.mxu0 0.0
      %4070 = vmatmul.mubr.f32.gmra.mrb[0].mxu0 %v3370
      %v4071 = vpop.f32.mrb[0].mxu0
      %v4072 = vadd.f32 %v3398, %v4071
      %v4073 = vpop.f32.mrb[0].mxu0
      %4074 = vmatprep.mubr.f32.mxu0 0.0
      %4075 = vmatmul.mubr.f32.gmra.mrb[0].mxu0 %v3371
      %v4076 = vpop.f32.mrb[0].mxu0
      %v4077 = vadd.f32 %v3398, %v4076
      %v4078 = vpop.f32.mrb[0].mxu0
      %4079 = vmatprep.mubr.f32.mxu0 0.0
      %4080 = vmatmul.mubr.f32.gmra.mrb[0].mxu0 %v3372
      %v4081 = vpop.f32.mrb[0].mxu0
      %v4082 = vadd.f32 %v3398, %v4081
      %v4083 = vpop.f32.mrb[0].mxu0
      %4084 = vmatprep.mubr.f32.mxu0 0.0
      %4085 = vmatmul.mubr.f32.gmra.mrb[0].mxu0 %v3373
      %v4086 = vpop.f32.mrb[0].mxu0
      %v4087 = vadd.f32 %v3398, %v4086
      %v4088 = vpop.f32.mrb[0].mxu0
      %4089 = vmatprep.mubr.f32.mxu0 0.0
      %4090 = vmatmul.mubr.f32.gmra.mrb[0].mxu0 %v3374
      %v4091 = vpop.f32.mrb[0].mxu0
      %v4092 = vadd.f32 %v3398, %v4091
      %v4093 = vpop.f32.mrb[0].mxu0
      %4094 = vmatprep.mubr.f32.mxu0 0.0
      %4095 = vmatmul.mubr.f32.gmra.mrb[0].mxu0 %v3375
      %v4096 = vpop.f32.mrb[0].mxu0
      %v4097 = vadd.f32 %v3398, %v4096
      %v4098 = vpop.f32.mrb[0].mxu0
      %4099 = vmatprep.mubr.f32.mxu0 0.0
      %4100 = vmatmul.mubr.f32.gmra.mrb[0].mxu0 %v3376
      %v4101 = vpop.f32.mrb[0].mxu0
      %v4102 = vadd.f32 %v3398, %v4101
      %v4103 = vpop.f32.mrb[0].mxu0
      %4104 = vdwg.mxu0
      %v4105 = vmax.f32 %v3467, 0.0
      %v4106 = vmax.f32 %v3472, 0.0
      %v4107 = vmax.f32 %v3477, 0.0
      %v4108 = vmax.f32 %v3482, 0.0
      %v4109 = vmax.f32 %v3487, 0.0
      %v4110 = vmax.f32 %v3492, 0.0
      %v4111 = vmax.f32 %v3497, 0.0
      %v4112 = vmax.f32 %v3502, 0.0
      %v4113 = vmax.f32 %v3507, 0.0
      %v4114 = vmax.f32 %v3512, 0.0
      %v4115 = vmax.f32 %v3517, 0.0
      %v4116 = vmax.f32 %v3522, 0.0
      %v4117 = vmax.f32 %v3527, 0.0
      %v4118 = vmax.f32 %v3532, 0.0
      %v4119 = vmax.f32 %v3537, 0.0
      %v4120 = vmax.f32 %v3542, 0.0
      %v4121 = vmax.f32 %v3547, 0.0
      %v4122 = vmax.f32 %v3552, 0.0
      %v4123 = vmax.f32 %v3557, 0.0
      %v4124 = vmax.f32 %v3562, 0.0
      %v4125 = vmax.f32 %v3567, 0.0
      %v4126 = vmax.f32 %v3572, 0.0
      %v4127 = vmax.f32 %v3577, 0.0
      %v4128 = vmax.f32 %v3582, 0.0
      %v4129 = vmax.f32 %v3587, 0.0
      %v4130 = vmax.f32 %v3592, 0.0
      %v4131 = vmax.f32 %v3597, 0.0
      %v4132 = vmax.f32 %v3602, 0.0
      %v4133 = vmax.f32 %v3607, 0.0
      %v4134 = vmax.f32 %v3612, 0.0
      %v4135 = vmax.f32 %v3617, 0.0
      %v4136 = vmax.f32 %v3622, 0.0
      %v4137 = vmax.f32 %v3627, 0.0
      %v4138 = vmax.f32 %v3632, 0.0
      %v4139 = vmax.f32 %v3637, 0.0
      %v4140 = vmax.f32 %v3642, 0.0
      %v4141 = vmax.f32 %v3647, 0.0
      %v4142 = vmax.f32 %v3652, 0.0
      %v4143 = vmax.f32 %v3657, 0.0
      %v4144 = vmax.f32 %v3662, 0.0
      %v4145 = vmax.f32 %v3667, 0.0
      %v4146 = vmax.f32 %v3672, 0.0
      %v4147 = vmax.f32 %v3677, 0.0
      %v4148 = vmax.f32 %v3682, 0.0
      %v4149 = vmax.f32 %v3687, 0.0
      %v4150 = vmax.f32 %v3692, 0.0
      %v4151 = vmax.f32 %v3697, 0.0
      %v4152 = vmax.f32 %v3702, 0.0
      %v4153 = vmax.f32 %v3707, 0.0
      %v4154 = vmax.f32 %v3712, 0.0
      %v4155 = vmax.f32 %v3717, 0.0
      %v4156 = vmax.f32 %v3722, 0.0
      %v4157 = vmax.f32 %v3727, 0.0
      %v4158 = vmax.f32 %v3732, 0.0
      %v4159 = vmax.f32 %v3737, 0.0
      %v4160 = vmax.f32 %v3742, 0.0
      %v4161 = vmax.f32 %v3747, 0.0
      %v4162 = vmax.f32 %v3752, 0.0
      %v4163 = vmax.f32 %v3757, 0.0
      %v4164 = vmax.f32 %v3762, 0.0
      %v4165 = vmax.f32 %v3767, 0.0
      %v4166 = vmax.f32 %v3772, 0.0
      %v4167 = vmax.f32 %v3777, 0.0
      %v4168 = vmax.f32 %v3782, 0.0
      %v4169 = vmax.f32 %v3787, 0.0
      %v4170 = vmax.f32 %v3792, 0.0
      %v4171 = vmax.f32 %v3797, 0.0
      %v4172 = vmax.f32 %v3802, 0.0
      %v4173 = vmax.f32 %v3807, 0.0
      %v4174 = vmax.f32 %v3812, 0.0
      %v4175 = vmax.f32 %v3817, 0.0
      %v4176 = vmax.f32 %v3822, 0.0
      %v4177 = vmax.f32 %v3827, 0.0
      %v4178 = vmax.f32 %v3832, 0.0
      %v4179 = vmax.f32 %v3837, 0.0
      %v4180 = vmax.f32 %v3842, 0.0
      %v4181 = vmax.f32 %v3847, 0.0
      %v4182 = vmax.f32 %v3852, 0.0
      %v4183 = vmax.f32 %v3857, 0.0
      %v4184 = vmax.f32 %v3862, 0.0
      %v4185 = vmax.f32 %v3867, 0.0
      %v4186 = vmax.f32 %v3872, 0.0
      %v4187 = vmax.f32 %v3877, 0.0
      %v4188 = vmax.f32 %v3882, 0.0
      %v4189 = vmax.f32 %v3887, 0.0
      %v4190 = vmax.f32 %v3892, 0.0
      %v4191 = vmax.f32 %v3897, 0.0
      %v4192 = vmax.f32 %v3902, 0.0
      %v4193 = vmax.f32 %v3907, 0.0
      %v4194 = vmax.f32 %v3912, 0.0
      %v4195 = vmax.f32 %v3917, 0.0
      %v4196 = vmax.f32 %v3922, 0.0
      %v4197 = vmax.f32 %v3927, 0.0
      %v4198 = vmax.f32 %v3932, 0.0
      %v4199 = vmax.f32 %v3937, 0.0
      %v4200 = vmax.f32 %v3942, 0.0
      %v4201 = vmax.f32 %v3947, 0.0
      %v4202 = vmax.f32 %v3952, 0.0
      %v4203 = vmax.f32 %v3957, 0.0
      %v4204 = vmax.f32 %v3962, 0.0
      %v4205 = vmax.f32 %v3967, 0.0
      %v4206 = vmax.f32 %v3972, 0.0
      %v4207 = vmax.f32 %v3977, 0.0
      %v4208 = vmax.f32 %v3982, 0.0
      %v4209 = vmax.f32 %v3987, 0.0
      %v4210 = vmax.f32 %v3992, 0.0
      %v4211 = vmax.f32 %v3997, 0.0
      %v4212 = vmax.f32 %v4002, 0.0
      %v4213 = vmax.f32 %v4007, 0.0
      %v4214 = vmax.f32 %v4012, 0.0
      %v4215 = vmax.f32 %v4017, 0.0
      %v4216 = vmax.f32 %v4022, 0.0
      %v4217 = vmax.f32 %v4027, 0.0
      %v4218 = vmax.f32 %v4032, 0.0
      %v4219 = vmax.f32 %v4037, 0.0
      %v4220 = vmax.f32 %v4042, 0.0
      %v4221 = vmax.f32 %v4047, 0.0
      %v4222 = vmax.f32 %v4052, 0.0
      %v4223 = vmax.f32 %v4057, 0.0
      %v4224 = vmax.f32 %v4062, 0.0
      %v4225 = vmax.f32 %v4067, 0.0
      %v4226 = vmax.f32 %v4072, 0.0
      %v4227 = vmax.f32 %v4077, 0.0
      %v4228 = vmax.f32 %v4082, 0.0
      %v4229 = vmax.f32 %v4087, 0.0
      %v4230 = vmax.f32 %v4092, 0.0
      %v4231 = vmax.f32 %v4097, 0.0
      %v4232 = vmax.f32 %v4102, 0.0
      %v4233 = vmax.f32 %v4105, %v4109
      %v4234 = vmax.f32 %v4106, %v4110
      %v4235 = vmax.f32 %v4107, %v4111
      %v4236 = vmax.f32 %v4108, %v4112
      %v4237 = vmax.f32 %v4113, %v4117
      %v4238 = vmax.f32 %v4114, %v4118
      %v4239 = vmax.f32 %v4115, %v4119
      %v4240 = vmax.f32 %v4116, %v4120
      %v4241 = vmax.f32 %v4121, %v4125
      %v4242 = vmax.f32 %v4122, %v4126
      %v4243 = vmax.f32 %v4123, %v4127
      %v4244 = vmax.f32 %v4124, %v4128
      %v4245 = vmax.f32 %v4129, %v4133
      %v4246 = vmax.f32 %v4130, %v4134
      %v4247 = vmax.f32 %v4131, %v4135
      %v4248 = vmax.f32 %v4132, %v4136
      %v4249 = vmax.f32 %v4137, %v4141
      %v4250 = vmax.f32 %v4138, %v4142
      %v4251 = vmax.f32 %v4139, %v4143
      %v4252 = vmax.f32 %v4140, %v4144
      %v4253 = vmax.f32 %v4145, %v4149
      %v4254 = vmax.f32 %v4146, %v4150
      %v4255 = vmax.f32 %v4147, %v4151
      %v4256 = vmax.f32 %v4148, %v4152
      %v4257 = vmax.f32 %v4153, %v4157
      %v4258 = vmax.f32 %v4154, %v4158
      %v4259 = vmax.f32 %v4155, %v4159
      %v4260 = vmax.f32 %v4156, %v4160
      %v4261 = vmax.f32 %v4161, %v4165
      %v4262 = vmax.f32 %v4162, %v4166
      %v4263 = vmax.f32 %v4163, %v4167
      %v4264 = vmax.f32 %v4164, %v4168
      %v4265 = vmax.f32 %v4169, %v4173
      %v4266 = vmax.f32 %v4170, %v4174
      %v4267 = vmax.f32 %v4171, %v4175
      %v4268 = vmax.f32 %v4172, %v4176
      %v4269 = vmax.f32 %v4177, %v4181
      %v4270 = vmax.f32 %v4178, %v4182
      %v4271 = vmax.f32 %v4179, %v4183
      %v4272 = vmax.f32 %v4180, %v4184
      %v4273 = vmax.f32 %v4185, %v4189
      %v4274 = vmax.f32 %v4186, %v4190
      %v4275 = vmax.f32 %v4187, %v4191
      %v4276 = vmax.f32 %v4188, %v4192
      %v4277 = vmax.f32 %v4193, %v4197
      %v4278 = vmax.f32 %v4194, %v4198
      %v4279 = vmax.f32 %v4195, %v4199
      %v4280 = vmax.f32 %v4196, %v4200
      %v4281 = vmax.f32 %v4201, %v4205
      %v4282 = vmax.f32 %v4202, %v4206
      %v4283 = vmax.f32 %v4203, %v4207
      %v4284 = vmax.f32 %v4204, %v4208
      %v4285 = vmax.f32 %v4209, %v4213
      %v4286 = vmax.f32 %v4210, %v4214
      %v4287 = vmax.f32 %v4211, %v4215
      %v4288 = vmax.f32 %v4212, %v4216
      %v4289 = vmax.f32 %v4217, %v4221
      %v4290 = vmax.f32 %v4218, %v4222
      %v4291 = vmax.f32 %v4219, %v4223
      %v4292 = vmax.f32 %v4220, %v4224
      %v4293 = vmax.f32 %v4225, %v4229
      %v4294 = vmax.f32 %v4226, %v4230
      %v4295 = vmax.f32 %v4227, %v4231
      %v4296 = vmax.f32 %v4228, %v4232
      %4297 = vst.msk [vmem:[%s170] sm:$0xff] %vm3248, %v4233
      %4298 = vst.msk [vmem:[%s170 + $0x8] sm:$0xff] %vm3248, %v4234
      %4299 = vst.msk [vmem:[%s170 + $0x10] sm:$0xff] %vm3248, %v4235
      %4300 = vst.msk [vmem:[%s170 + $0x18] sm:$0xff] %vm3248, %v4236
      %4301 = vst.msk [vmem:[%s170 + $0x20] sm:$0xff] %vm3248, %v4237
      %4302 = vst.msk [vmem:[%s170 + $0x28] sm:$0xff] %vm3248, %v4238
      %4303 = vst.msk [vmem:[%s170 + $0x30] sm:$0xff] %vm3248, %v4239
      %4304 = vst.msk [vmem:[%s170 + $0x38] sm:$0xff] %vm3248, %v4240
      %4305 = vst.msk [vmem:[%s170 + $0x40] sm:$0xff] %vm3248, %v4241
      %4306 = vst.msk [vmem:[%s170 + $0x48] sm:$0xff] %vm3248, %v4242
      %4307 = vst.msk [vmem:[%s170 + $0x50] sm:$0xff] %vm3248, %v4243
      %4308 = vst.msk [vmem:[%s170 + $0x58] sm:$0xff] %vm3248, %v4244
      %4309 = vst.msk [vmem:[%s170 + $0x60] sm:$0xff] %vm3248, %v4245
      %4310 = vst.msk [vmem:[%s170 + $0x68] sm:$0xff] %vm3248, %v4246
      %4311 = vst.msk [vmem:[%s170 + $0x70] sm:$0xff] %vm3248, %v4247
      %4312 = vst.msk [vmem:[%s170 + $0x78] sm:$0xff] %vm3248, %v4248
      %4313 = vst.msk [vmem:[%s170 + $0x80] sm:$0xff] %vm3248, %v4249
      %4314 = vst.msk [vmem:[%s170 + $0x88] sm:$0xff] %vm3248, %v4250
      %4315 = vst.msk [vmem:[%s170 + $0x90] sm:$0xff] %vm3248, %v4251
      %4316 = vst.msk [vmem:[%s170 + $0x98] sm:$0xff] %vm3248, %v4252
      %4317 = vst.msk [vmem:[%s170 + $0xa0] sm:$0xff] %vm3248, %v4253
      %4318 = vst.msk [vmem:[%s170 + $0xa8] sm:$0xff] %vm3248, %v4254
      %4319 = vst.msk [vmem:[%s170 + $0xb0] sm:$0xff] %vm3248, %v4255
      %4320 = vst.msk [vmem:[%s170 + $0xb8] sm:$0xff] %vm3248, %v4256
      %4321 = vst.msk [vmem:[%s170 + $0xc0] sm:$0xff] %vm3248, %v4257
      %4322 = vst.msk [vmem:[%s170 + $0xc8] sm:$0xff] %vm3248, %v4258
      %4323 = vst.msk [vmem:[%s170 + $0xd0] sm:$0xff] %vm3248, %v4259
      %4324 = vst.msk [vmem:[%s170 + $0xd8] sm:$0xff] %vm3248, %v4260
      %4325 = vst.msk [vmem:[%s170 + $0xe0] sm:$0xff] %vm3248, %v4261
      %4326 = vst.msk [vmem:[%s170 + $0xe8] sm:$0xff] %vm3248, %v4262
      %4327 = vst.msk [vmem:[%s170 + $0xf0] sm:$0xff] %vm3248, %v4263
      %4328 = vst.msk [vmem:[%s170 + $0xf8] sm:$0xff] %vm3248, %v4264
      %4329 = vst.msk [vmem:[%s170 + $0x100] sm:$0xff] %vm3248, %v4265
      %4330 = vst.msk [vmem:[%s170 + $0x108] sm:$0xff] %vm3248, %v4266
      %4331 = vst.msk [vmem:[%s170 + $0x110] sm:$0xff] %vm3248, %v4267
      %4332 = vst.msk [vmem:[%s170 + $0x118] sm:$0xff] %vm3248, %v4268
      %4333 = vst.msk [vmem:[%s170 + $0x120] sm:$0xff] %vm3248, %v4269
      %4334 = vst.msk [vmem:[%s170 + $0x128] sm:$0xff] %vm3248, %v4270
      %4335 = vst.msk [vmem:[%s170 + $0x130] sm:$0xff] %vm3248, %v4271
      %4336 = vst.msk [vmem:[%s170 + $0x138] sm:$0xff] %vm3248, %v4272
      %4337 = vst.msk [vmem:[%s170 + $0x140] sm:$0xff] %vm3248, %v4273
      %4338 = vst.msk [vmem:[%s170 + $0x148] sm:$0xff] %vm3248, %v4274
      %4339 = vst.msk [vmem:[%s170 + $0x150] sm:$0xff] %vm3248, %v4275
      %4340 = vst.msk [vmem:[%s170 + $0x158] sm:$0xff] %vm3248, %v4276
      %4341 = vst.msk [vmem:[%s170 + $0x160] sm:$0xff] %vm3248, %v4277
      %4342 = vst.msk [vmem:[%s170 + $0x168] sm:$0xff] %vm3248, %v4278
      %4343 = vst.msk [vmem:[%s170 + $0x170] sm:$0xff] %vm3248, %v4279
      %4344 = vst.msk [vmem:[%s170 + $0x178] sm:$0xff] %vm3248, %v4280
      %4345 = vst.msk [vmem:[%s170 + $0x180] sm:$0xff] %vm3248, %v4281
      %4346 = vst.msk [vmem:[%s170 + $0x188] sm:$0xff] %vm3248, %v4282
      %4347 = vst.msk [vmem:[%s170 + $0x190] sm:$0xff] %vm3248, %v4283
      %4348 = vst.msk [vmem:[%s170 + $0x198] sm:$0xff] %vm3248, %v4284
      %4349 = vst.msk [vmem:[%s170 + $0x1a0] sm:$0xff] %vm3248, %v4285
      %4350 = vst.msk [vmem:[%s170 + $0x1a8] sm:$0xff] %vm3248, %v4286
      %4351 = vst.msk [vmem:[%s170 + $0x1b0] sm:$0xff] %vm3248, %v4287
      %4352 = vst.msk [vmem:[%s170 + $0x1b8] sm:$0xff] %vm3248, %v4288
      %4353 = vst.msk [vmem:[%s170 + $0x1c0] sm:$0xff] %vm3248, %v4289
      %4354 = vst.msk [vmem:[%s170 + $0x1c8] sm:$0xff] %vm3248, %v4290
      %4355 = vst.msk [vmem:[%s170 + $0x1d0] sm:$0xff] %vm3248, %v4291
      %4356 = vst.msk [vmem:[%s170 + $0x1d8] sm:$0xff] %vm3248, %v4292
      %4357 = vst.msk [vmem:[%s170 + $0x1e0] sm:$0xff] %vm3248, %v4293
      %4358 = vst.msk [vmem:[%s170 + $0x1e8] sm:$0xff] %vm3248, %v4294
      %4359 = vst.msk [vmem:[%s170 + $0x1f0] sm:$0xff] %vm3248, %v4295
      %4360 = vst.msk [vmem:[%s170 + $0x1f8] sm:$0xff] %vm3248, %v4296
      %p4361 = scmp.lt.s32.totalorder %s14, 1
      %s4362 = scalar_select %p4361, %s14, 1
      %s4363 = smul.addr %s4362, 64
      %s4364 = smul.addr %s4363, 8
      %s4365 = scalar_lea.vmem %s3, %s4364
      // Predicated region
      $region33: #{net_forward.5} parent=31 // pred_check
        %p4366 = pneg %p100
      $region34: #{net_forward.5} parent=31 // pred_check_branch
        %4368 = sbr.rel (%p4366) target = $region36
      $region35: #{net_forward.5} parent=31 // pred_region
        _
      $region36: #{net_forward.5} parent=31 // pred_fallthru
        _
    $region32: #{net_forward.5} parent=5 // pred_fallthru
      _
    %p4369 = scmp.le.s32.totalorder 2, %s9
    // Predicated region
    $region37: #{net_forward.5} parent=5 // pred_check
      %p4370 = pneg %p4369
    $region38: #{net_forward.5} parent=5 // pred_check_branch
      %4372 = sbr.rel (%p4370) target = $region40
    $region39: #{net_forward.5} parent=5 // pred_region
      %s4373 = ssub.s32 %s9, 2
      // Predicated region
      $region41: #{net_forward.5} parent=39 // pred_check
        %p4374 = pneg %p106
      $region42: #{net_forward.5} parent=39 // pred_check_branch
        %4376 = sbr.rel (%p4374) target = $region44
      $region43: #{net_forward.5} parent=39 // pred_region
        %p4377 = scmp.lt.s32.totalorder %s15, 1
        %s4378 = scalar_select %p4377, %s15, 1
        %s4379 = smul.addr %s4378, 64
        %s4380 = smul.addr %s4379, 8
        %s4381 = scalar_lea.vmem %s3, %s4380
      $region44: #{net_forward.5} parent=39 // pred_fallthru
        _
    $region40: #{net_forward.5} parent=5 // pred_fallthru
      _
  $region6: #{net_forward.5} parent=0 // loop_footer
    %s13 = sadd.s32 1, %s9
  $region7: #{net_forward.5} parent=0 // loop_footer_branch
    %8 = sbr.rel target = $region3
  $region8: #{net_forward.5} parent=0 // loop_exit
    _

// kernel: net_forward.7
$region0: #{net_forward.7}
  #allocation0 [shape = 'u32[]', space=smem, size = 0x4, offset = 0x4, fixed_abs, tag = 'smem constant byte address 0x4 - core index']
  #allocation1 [shape = 'u32[144,128]{1,0:T(1,128)}', space=vmem, size = 0x12000, scoped, tag = 'internal scratch']
  %s0 = inlined_call_operand.vmem [shape: f32[2,1024], index: 0, kind: input, shape index: {}]
  %s1 = inlined_call_operand.vmem [shape: f32[1024,128], index: 1, kind: input, shape index: {}]
  %s2 = inlined_call_operand.vmem [shape: f32[1,128], index: 2, kind: input, shape index: {}]
  %s3 = inlined_call_operand.vmem [shape: f32[128,128], index: 3, kind: input, shape index: {}]
  %s4 = inlined_call_operand.vmem [shape: f32[1,128], index: 4, kind: input, shape index: {}]
  %s5 = inlined_call_operand.hbm [shape: f32[2,128], index: 5, kind: output, shape index: {}]
  %s6 = sld [smem:[#allocation0]]
  $region30: #{net_forward.7} parent=0
    _
  %s8 = ssub.s32 1, %s6
  %s9 = scalar_select 0, %s8, %s6
  $region1: #{net_forward.7} parent=0
    #allocation2 [shape = 'u8[1024]{0}', space=vmem, size = 0x400, scoped, tag = 'output window, operand 0, single buffered']
    #allocation3 [shape = 's32[1]{0}', space=sflag, size = 0x4, scoped, tag = 'scoped memory for net_forward.7']
    %10 = vsyncpa [#allocation3], 0
    // Predicated region
    $region2: #{net_forward.7} parent=1 // pred_check
      _
    $region3: #{net_forward.7} parent=1 // pred_check_branch
      %12 = sbr.rel (0) target = $region5
    $region4: #{net_forward.7} parent=1 // pred_region
      _
    $region5: #{net_forward.7} parent=1 // pred_fallthru
      _
    // Predicated region
    $region6: #{net_forward.7} parent=1 // pred_check
      _
    $region7: #{net_forward.7} parent=1 // pred_check_branch
      %14 = sbr.rel (0) target = $region9
    $region8: #{net_forward.7} parent=1 // pred_region
      _
    $region9: #{net_forward.7} parent=1 // pred_fallthru
      _
    // Predicated region
    $region10: #{net_forward.7} parent=1 // pred_check
      _
    $region11: #{net_forward.7} parent=1 // pred_check_branch
      %16 = sbr.rel (0) target = $region13
    $region12: #{net_forward.7} parent=1 // pred_region
      _
    $region13: #{net_forward.7} parent=1 // pred_fallthru
      _
    // Predicated region
    $region14: #{net_forward.7} parent=1 // pred_check
      _
    $region15: #{net_forward.7} parent=1 // pred_check_branch
      %18 = sbr.rel (0) target = $region17
    $region16: #{net_forward.7} parent=1 // pred_region
      _
    $region17: #{net_forward.7} parent=1 // pred_fallthru
      _
    // Predicated region
    $region18: #{net_forward.7} parent=1 // pred_check
      _
    $region19: #{net_forward.7} parent=1 // pred_check_branch
      %20 = sbr.rel (0) target = $region21
    $region20: #{net_forward.7} parent=1 // pred_region
      _
    $region21: #{net_forward.7} parent=1 // pred_fallthru
      _
    %v21 = vld [vmem:[%s0] sm:$0xff]
    %v22 = vld [vmem:[%s0 + $0x8] sm:$0xff]
    %v23 = vld [vmem:[%s1] sm:$0xff]
    %v24 = vld [vmem:[%s1 + $0x8] sm:$0xff]
    %v25 = vld [vmem:[%s1 + $0x10] sm:$0xff]
    %v26 = vld [vmem:[%s1 + $0x18] sm:$0xff]
    %v27 = vld [vmem:[%s1 + $0x20] sm:$0xff]
    %v28 = vld [vmem:[%s1 + $0x28] sm:$0xff]
    %v29 = vld [vmem:[%s1 + $0x30] sm:$0xff]
    %v30 = vld [vmem:[%s1 + $0x38] sm:$0xff]
    %v31 = vld [vmem:[%s1 + $0x40] sm:$0xff]
    %v32 = vld [vmem:[%s1 + $0x48] sm:$0xff]
    %v33 = vld [vmem:[%s1 + $0x50] sm:$0xff]
    %v34 = vld [vmem:[%s1 + $0x58] sm:$0xff]
    %v35 = vld [vmem:[%s1 + $0x60] sm:$0xff]
    %v36 = vld [vmem:[%s1 + $0x68] sm:$0xff]
    %v37 = vld [vmem:[%s1 + $0x70] sm:$0xff]
    %v38 = vld [vmem:[%s1 + $0x78] sm:$0xff]
    %v39 = vld [vmem:[%s1 + $0x80] sm:$0xff]
    %v40 = vld [vmem:[%s1 + $0x88] sm:$0xff]
    %v41 = vld [vmem:[%s1 + $0x90] sm:$0xff]
    %v42 = vld [vmem:[%s1 + $0x98] sm:$0xff]
    %v43 = vld [vmem:[%s1 + $0xa0] sm:$0xff]
    %v44 = vld [vmem:[%s1 + $0xa8] sm:$0xff]
    %v45 = vld [vmem:[%s1 + $0xb0] sm:$0xff]
    %v46 = vld [vmem:[%s1 + $0xb8] sm:$0xff]
    %v47 = vld [vmem:[%s1 + $0xc0] sm:$0xff]
    %v48 = vld [vmem:[%s1 + $0xc8] sm:$0xff]
    %v49 = vld [vmem:[%s1 + $0xd0] sm:$0xff]
    %v50 = vld [vmem:[%s1 + $0xd8] sm:$0xff]
    %v51 = vld [vmem:[%s1 + $0xe0] sm:$0xff]
    %v52 = vld [vmem:[%s1 + $0xe8] sm:$0xff]
    %v53 = vld [vmem:[%s1 + $0xf0] sm:$0xff]
    %v54 = vld [vmem:[%s1 + $0xf8] sm:$0xff]
    %v55 = vld [vmem:[%s1 + $0x100] sm:$0xff]
    %v56 = vld [vmem:[%s1 + $0x108] sm:$0xff]
    %v57 = vld [vmem:[%s1 + $0x110] sm:$0xff]
    %v58 = vld [vmem:[%s1 + $0x118] sm:$0xff]
    %v59 = vld [vmem:[%s1 + $0x120] sm:$0xff]
    %v60 = vld [vmem:[%s1 + $0x128] sm:$0xff]
    %v61 = vld [vmem:[%s1 + $0x130] sm:$0xff]
    %v62 = vld [vmem:[%s1 + $0x138] sm:$0xff]
    %v63 = vld [vmem:[%s1 + $0x140] sm:$0xff]
    %v64 = vld [vmem:[%s1 + $0x148] sm:$0xff]
    %v65 = vld [vmem:[%s1 + $0x150] sm:$0xff]
    %v66 = vld [vmem:[%s1 + $0x158] sm:$0xff]
    %v67 = vld [vmem:[%s1 + $0x160] sm:$0xff]
    %v68 = vld [vmem:[%s1 + $0x168] sm:$0xff]
    %v69 = vld [vmem:[%s1 + $0x170] sm:$0xff]
    %v70 = vld [vmem:[%s1 + $0x178] sm:$0xff]
    %v71 = vld [vmem:[%s1 + $0x180] sm:$0xff]
    %v72 = vld [vmem:[%s1 + $0x188] sm:$0xff]
    %v73 = vld [vmem:[%s1 + $0x190] sm:$0xff]
    %v74 = vld [vmem:[%s1 + $0x198] sm:$0xff]
    %v75 = vld [vmem:[%s1 + $0x1a0] sm:$0xff]
    %v76 = vld [vmem:[%s1 + $0x1a8] sm:$0xff]
    %v77 = vld [vmem:[%s1 + $0x1b0] sm:$0xff]
    %v78 = vld [vmem:[%s1 + $0x1b8] sm:$0xff]
    %v79 = vld [vmem:[%s1 + $0x1c0] sm:$0xff]
    %v80 = vld [vmem:[%s1 + $0x1c8] sm:$0xff]
    %v81 = vld [vmem:[%s1 + $0x1d0] sm:$0xff]
    %v82 = vld [vmem:[%s1 + $0x1d8] sm:$0xff]
    %v83 = vld [vmem:[%s1 + $0x1e0] sm:$0xff]
    %v84 = vld [vmem:[%s1 + $0x1e8] sm:$0xff]
    %v85 = vld [vmem:[%s1 + $0x1f0] sm:$0xff]
    %v86 = vld [vmem:[%s1 + $0x1f8] sm:$0xff]
    %v87 = vld [vmem:[%s1 + $0x200] sm:$0xff]
    %v88 = vld [vmem:[%s1 + $0x208] sm:$0xff]
    %v89 = vld [vmem:[%s1 + $0x210] sm:$0xff]
    %v90 = vld [vmem:[%s1 + $0x218] sm:$0xff]
    %v91 = vld [vmem:[%s1 + $0x220] sm:$0xff]
    %v92 = vld [vmem:[%s1 + $0x228] sm:$0xff]
    %v93 = vld [vmem:[%s1 + $0x230] sm:$0xff]
    %v94 = vld [vmem:[%s1 + $0x238] sm:$0xff]
    %v95 = vld [vmem:[%s1 + $0x240] sm:$0xff]
    %v96 = vld [vmem:[%s1 + $0x248] sm:$0xff]
    %v97 = vld [vmem:[%s1 + $0x250] sm:$0xff]
    %v98 = vld [vmem:[%s1 + $0x258] sm:$0xff]
    %v99 = vld [vmem:[%s1 + $0x260] sm:$0xff]
    %v100 = vld [vmem:[%s1 + $0x268] sm:$0xff]
    %v101 = vld [vmem:[%s1 + $0x270] sm:$0xff]
    %v102 = vld [vmem:[%s1 + $0x278] sm:$0xff]
    %v103 = vld [vmem:[%s1 + $0x280] sm:$0xff]
    %v104 = vld [vmem:[%s1 + $0x288] sm:$0xff]
    %v105 = vld [vmem:[%s1 + $0x290] sm:$0xff]
    %v106 = vld [vmem:[%s1 + $0x298] sm:$0xff]
    %v107 = vld [vmem:[%s1 + $0x2a0] sm:$0xff]
    %v108 = vld [vmem:[%s1 + $0x2a8] sm:$0xff]
    %v109 = vld [vmem:[%s1 + $0x2b0] sm:$0xff]
    %v110 = vld [vmem:[%s1 + $0x2b8] sm:$0xff]
    %v111 = vld [vmem:[%s1 + $0x2c0] sm:$0xff]
    %v112 = vld [vmem:[%s1 + $0x2c8] sm:$0xff]
    %v113 = vld [vmem:[%s1 + $0x2d0] sm:$0xff]
    %v114 = vld [vmem:[%s1 + $0x2d8] sm:$0xff]
    %v115 = vld [vmem:[%s1 + $0x2e0] sm:$0xff]
    %v116 = vld [vmem:[%s1 + $0x2e8] sm:$0xff]
    %v117 = vld [vmem:[%s1 + $0x2f0] sm:$0xff]
    %v118 = vld [vmem:[%s1 + $0x2f8] sm:$0xff]
    %v119 = vld [vmem:[%s1 + $0x300] sm:$0xff]
    %v120 = vld [vmem:[%s1 + $0x308] sm:$0xff]
    %v121 = vld [vmem:[%s1 + $0x310] sm:$0xff]
    %v122 = vld [vmem:[%s1 + $0x318] sm:$0xff]
    %v123 = vld [vmem:[%s1 + $0x320] sm:$0xff]
    %v124 = vld [vmem:[%s1 + $0x328] sm:$0xff]
    %v125 = vld [vmem:[%s1 + $0x330] sm:$0xff]
    %v126 = vld [vmem:[%s1 + $0x338] sm:$0xff]
    %v127 = vld [vmem:[%s1 + $0x340] sm:$0xff]
    %v128 = vld [vmem:[%s1 + $0x348] sm:$0xff]
    %v129 = vld [vmem:[%s1 + $0x350] sm:$0xff]
    %v130 = vld [vmem:[%s1 + $0x358] sm:$0xff]
    %v131 = vld [vmem:[%s1 + $0x360] sm:$0xff]
    %v132 = vld [vmem:[%s1 + $0x368] sm:$0xff]
    %v133 = vld [vmem:[%s1 + $0x370] sm:$0xff]
    %v134 = vld [vmem:[%s1 + $0x378] sm:$0xff]
    %v135 = vld [vmem:[%s1 + $0x380] sm:$0xff]
    %v136 = vld [vmem:[%s1 + $0x388] sm:$0xff]
    %v137 = vld [vmem:[%s1 + $0x390] sm:$0xff]
    %v138 = vld [vmem:[%s1 + $0x398] sm:$0xff]
    %v139 = vld [vmem:[%s1 + $0x3a0] sm:$0xff]
    %v140 = vld [vmem:[%s1 + $0x3a8] sm:$0xff]
    %v141 = vld [vmem:[%s1 + $0x3b0] sm:$0xff]
    %v142 = vld [vmem:[%s1 + $0x3b8] sm:$0xff]
    %v143 = vld [vmem:[%s1 + $0x3c0] sm:$0xff]
    %v144 = vld [vmem:[%s1 + $0x3c8] sm:$0xff]
    %v145 = vld [vmem:[%s1 + $0x3d0] sm:$0xff]
    %v146 = vld [vmem:[%s1 + $0x3d8] sm:$0xff]
    %v147 = vld [vmem:[%s1 + $0x3e0] sm:$0xff]
    %v148 = vld [vmem:[%s1 + $0x3e8] sm:$0xff]
    %v149 = vld [vmem:[%s1 + $0x3f0] sm:$0xff]
    %v150 = vld [vmem:[%s1 + $0x3f8] sm:$0xff]
    %v151 = vld [vmem:[%s2] sm:$0x1]
    %v153 = vlaneseq
    %v154 = vshrl.u32 %v153, 7
    %v155 = vsub.s32 0, %v154
    %v156 = vrot.slane %v151, %v155
    %v160 = vcombine.high %v21, %v21
    %v162 = vunpack.c.l.s4 1983009808
    %v163 = vunpack.c.0.s8 %v162
    %v164 = vlaneseq
    %v165 = vshrl.u32 %v164, 7
    %v166 = vsub.s32 %v163, %v165
    %v167 = vrot.slane %v21, %v166
    %v169 = vunpack.c.l.s4 1983009808
    %v170 = vunpack.c.0.s8 %v169
    %v171 = vlaneseq
    %v172 = vshrl.u32 %v171, 7
    %v173 = vsub.s32 %v170, %v172
    %v174 = vrot.slane %v160, %v173
    %v175 = vcombine.high %v167, %v167
    %v176 = vcombine.high %v174, %v174
    %v177 = vcombine.high %v22, %v22
    %v179 = vunpack.c.l.s4 1983009808
    %v180 = vunpack.c.0.s8 %v179
    %v181 = vlaneseq
    %v182 = vshrl.u32 %v181, 7
    %v183 = vsub.s32 %v180, %v182
    %v184 = vrot.slane %v22, %v183
    %v186 = vunpack.c.l.s4 1983009808
    %v187 = vunpack.c.0.s8 %v186
    %v188 = vlaneseq
    %v189 = vshrl.u32 %v188, 7
    %v190 = vsub.s32 %v187, %v189
    %v191 = vrot.slane %v177, %v190
    %v192 = vcombine.high %v184, %v184
    %v193 = vcombine.high %v191, %v191
    %202 = vmatprep.subr.mxu0 0.0
    %203 = vmatpush1.msra.mxu0 %v23
    %204 = vmatprep.subr.mxu0 0.0
    %205 = vmatpush1.msra.mxu0 %v24
    %206 = vmatprep.subr.mxu0 0.0
    %207 = vmatpush1.msra.mxu0 %v25
    %208 = vmatprep.subr.mxu0 0.0
    %209 = vmatpush1.msra.mxu0 %v26
    %210 = vmatprep.subr.mxu0 0.0
    %211 = vmatpush1.msra.mxu0 %v27
    %212 = vmatprep.subr.mxu0 0.0
    %213 = vmatpush1.msra.mxu0 %v28
    %214 = vmatprep.subr.mxu0 0.0
    %215 = vmatpush1.msra.mxu0 %v29
    %216 = vmatprep.subr.mxu0 0.0
    %217 = vmatpush1.msra.mxu0 %v30
    %218 = vmatprep.subr.mxu0 0.0
    %219 = vmatpush1.msra.mxu0 %v31
    %220 = vmatprep.subr.mxu0 0.0
    %221 = vmatpush1.msra.mxu0 %v32
    %222 = vmatprep.subr.mxu0 0.0
    %223 = vmatpush1.msra.mxu0 %v33
    %224 = vmatprep.subr.mxu0 0.0
    %225 = vmatpush1.msra.mxu0 %v34
    %226 = vmatprep.subr.mxu0 0.0
    %227 = vmatpush1.msra.mxu0 %v35
    %228 = vmatprep.subr.mxu0 0.0
    %229 = vmatpush1.msra.mxu0 %v36
    %230 = vmatprep.subr.mxu0 0.0
    %231 = vmatpush1.msra.mxu0 %v37
    %232 = vmatprep.subr.mxu0 0.0
    %233 = vmatpush1.msra.mxu0 %v38
    %234 = vmatprep.subr.mxu0 0.0
    %235 = vmatpush1.msra.mxu0 %v39
    %236 = vmatprep.subr.mxu0 0.0
    %237 = vmatpush1.msra.mxu0 %v40
    %238 = vmatprep.subr.mxu0 0.0
    %239 = vmatpush1.msra.mxu0 %v41
    %240 = vmatprep.subr.mxu0 0.0
    %241 = vmatpush1.msra.mxu0 %v42
    %242 = vmatprep.subr.mxu0 0.0
    %243 = vmatpush1.msra.mxu0 %v43
    %244 = vmatprep.subr.mxu0 0.0
    %245 = vmatpush1.msra.mxu0 %v44
    %246 = vmatprep.subr.mxu0 0.0
    %247 = vmatpush1.msra.mxu0 %v45
    %248 = vmatprep.subr.mxu0 0.0
    %249 = vmatpush1.msra.mxu0 %v46
    %250 = vmatprep.subr.mxu0 0.0
    %251 = vmatpush1.msra.mxu0 %v47
    %252 = vmatprep.subr.mxu0 0.0
    %253 = vmatpush1.msra.mxu0 %v48
    %254 = vmatprep.subr.mxu0 0.0
    %255 = vmatpush1.msra.mxu0 %v49
    %256 = vmatprep.subr.mxu0 0.0
    %257 = vmatpush1.msra.mxu0 %v50
    %258 = vmatprep.subr.mxu0 0.0
    %259 = vmatpush1.msra.mxu0 %v51
    %260 = vmatprep.subr.mxu0 0.0
    %261 = vmatpush1.msra.mxu0 %v52
    %262 = vmatprep.subr.mxu0 0.0
    %263 = vmatpush1.msra.mxu0 %v53
    %264 = vmatprep.subr.mxu0 0.0
    %265 = vmatpush1.msra.mxu0 %v54
    %266 = vmatprep.mubr.f32.mxu0 %v175
    %267 = vmatmul.mubr.f32.gmra.mrb[0].mxu0 %v167
    %v268 = vpop.f32.mrb[0].mxu0
    %v269 = vadd.f32 %v156, %v268
    %v270 = vpop.f32.mrb[0].mxu0
    %271 = vdwg.mxu0
    %272 = vmatprep.subr.mxu0 0.0
    %273 = vmatpush1.msra.mxu0 %v55
    %274 = vmatprep.subr.mxu0 0.0
    %275 = vmatpush1.msra.mxu0 %v56
    %276 = vmatprep.subr.mxu0 0.0
    %277 = vmatpush1.msra.mxu0 %v57
    %278 = vmatprep.subr.mxu0 0.0
    %279 = vmatpush1.msra.mxu0 %v58
    %280 = vmatprep.subr.mxu0 0.0
    %281 = vmatpush1.msra.mxu0 %v59
    %282 = vmatprep.subr.mxu0 0.0
    %283 = vmatpush1.msra.mxu0 %v60
    %284 = vmatprep.subr.mxu0 0.0
    %285 = vmatpush1.msra.mxu0 %v61
    %286 = vmatprep.subr.mxu0 0.0
    %287 = vmatpush1.msra.mxu0 %v62
    %288 = vmatprep.subr.mxu0 0.0
    %289 = vmatpush1.msra.mxu0 %v63
    %290 = vmatprep.subr.mxu0 0.0
    %291 = vmatpush1.msra.mxu0 %v64
    %292 = vmatprep.subr.mxu0 0.0
    %293 = vmatpush1.msra.mxu0 %v65
    %294 = vmatprep.subr.mxu0 0.0
    %295 = vmatpush1.msra.mxu0 %v66
    %296 = vmatprep.subr.mxu0 0.0
    %297 = vmatpush1.msra.mxu0 %v67
    %298 = vmatprep.subr.mxu0 0.0
    %299 = vmatpush1.msra.mxu0 %v68
    %300 = vmatprep.subr.mxu0 0.0
    %301 = vmatpush1.msra.mxu0 %v69
    %302 = vmatprep.subr.mxu0 0.0
    %303 = vmatpush1.msra.mxu0 %v70
    %304 = vmatprep.subr.mxu0 0.0
    %305 = vmatpush1.msra.mxu0 %v71
    %306 = vmatprep.subr.mxu0 0.0
    %307 = vmatpush1.msra.mxu0 %v72
    %308 = vmatprep.subr.mxu0 0.0
    %309 = vmatpush1.msra.mxu0 %v73
    %310 = vmatprep.subr.mxu0 0.0
    %311 = vmatpush1.msra.mxu0 %v74
    %312 = vmatprep.subr.mxu0 0.0
    %313 = vmatpush1.msra.mxu0 %v75
    %314 = vmatprep.subr.mxu0 0.0
    %315 = vmatpush1.msra.mxu0 %v76
    %316 = vmatprep.subr.mxu0 0.0
    %317 = vmatpush1.msra.mxu0 %v77
    %318 = vmatprep.subr.mxu0 0.0
    %319 = vmatpush1.msra.mxu0 %v78
    %320 = vmatprep.subr.mxu0 0.0
    %321 = vmatpush1.msra.mxu0 %v79
    %322 = vmatprep.subr.mxu0 0.0
    %323 = vmatpush1.msra.mxu0 %v80
    %324 = vmatprep.subr.mxu0 0.0
    %325 = vmatpush1.msra.mxu0 %v81
    %326 = vmatprep.subr.mxu0 0.0
    %327 = vmatpush1.msra.mxu0 %v82
    %328 = vmatprep.subr.mxu0 0.0
    %329 = vmatpush1.msra.mxu0 %v83
    %330 = vmatprep.subr.mxu0 0.0
    %331 = vmatpush1.msra.mxu0 %v84
    %332 = vmatprep.subr.mxu0 0.0
    %333 = vmatpush1.msra.mxu0 %v85
    %334 = vmatprep.subr.mxu0 0.0
    %335 = vmatpush1.msra.mxu0 %v86
    %336 = vmatprep.mubr.f32.mxu0 %v176
    %337 = vmatmul.mubr.f32.gmra.mrb[0].mxu0 %v174
    %v338 = vpop.f32.mrb[0].mxu0
    %v339 = vadd.f32 %v269, %v338
    %v340 = vpop.f32.mrb[0].mxu0
    %341 = vdwg.mxu0
    %342 = vmatprep.subr.mxu0 0.0
    %343 = vmatpush1.msra.mxu0 %v87
    %344 = vmatprep.subr.mxu0 0.0
    %345 = vmatpush1.msra.mxu0 %v88
    %346 = vmatprep.subr.mxu0 0.0
    %347 = vmatpush1.msra.mxu0 %v89
    %348 = vmatprep.subr.mxu0 0.0
    %349 = vmatpush1.msra.mxu0 %v90
    %350 = vmatprep.subr.mxu0 0.0
    %351 = vmatpush1.msra.mxu0 %v91
    %352 = vmatprep.subr.mxu0 0.0
    %353 = vmatpush1.msra.mxu0 %v92
    %354 = vmatprep.subr.mxu0 0.0
    %355 = vmatpush1.msra.mxu0 %v93
    %356 = vmatprep.subr.mxu0 0.0
    %357 = vmatpush1.msra.mxu0 %v94
    %358 = vmatprep.subr.mxu0 0.0
    %359 = vmatpush1.msra.mxu0 %v95
    %360 = vmatprep.subr.mxu0 0.0
    %361 = vmatpush1.msra.mxu0 %v96
    %362 = vmatprep.subr.mxu0 0.0
    %363 = vmatpush1.msra.mxu0 %v97
    %364 = vmatprep.subr.mxu0 0.0
    %365 = vmatpush1.msra.mxu0 %v98
    %366 = vmatprep.subr.mxu0 0.0
    %367 = vmatpush1.msra.mxu0 %v99
    %368 = vmatprep.subr.mxu0 0.0
    %369 = vmatpush1.msra.mxu0 %v100
    %370 = vmatprep.subr.mxu0 0.0
    %371 = vmatpush1.msra.mxu0 %v101
    %372 = vmatprep.subr.mxu0 0.0
    %373 = vmatpush1.msra.mxu0 %v102
    %374 = vmatprep.subr.mxu0 0.0
    %375 = vmatpush1.msra.mxu0 %v103
    %376 = vmatprep.subr.mxu0 0.0
    %377 = vmatpush1.msra.mxu0 %v104
    %378 = vmatprep.subr.mxu0 0.0
    %379 = vmatpush1.msra.mxu0 %v105
    %380 = vmatprep.subr.mxu0 0.0
    %381 = vmatpush1.msra.mxu0 %v106
    %382 = vmatprep.subr.mxu0 0.0
    %383 = vmatpush1.msra.mxu0 %v107
    %384 = vmatprep.subr.mxu0 0.0
    %385 = vmatpush1.msra.mxu0 %v108
    %386 = vmatprep.subr.mxu0 0.0
    %387 = vmatpush1.msra.mxu0 %v109
    %388 = vmatprep.subr.mxu0 0.0
    %389 = vmatpush1.msra.mxu0 %v110
    %390 = vmatprep.subr.mxu0 0.0
    %391 = vmatpush1.msra.mxu0 %v111
    %392 = vmatprep.subr.mxu0 0.0
    %393 = vmatpush1.msra.mxu0 %v112
    %394 = vmatprep.subr.mxu0 0.0
    %395 = vmatpush1.msra.mxu0 %v113
    %396 = vmatprep.subr.mxu0 0.0
    %397 = vmatpush1.msra.mxu0 %v114
    %398 = vmatprep.subr.mxu0 0.0
    %399 = vmatpush1.msra.mxu0 %v115
    %400 = vmatprep.subr.mxu0 0.0
    %401 = vmatpush1.msra.mxu0 %v116
    %402 = vmatprep.subr.mxu0 0.0
    %403 = vmatpush1.msra.mxu0 %v117
    %404 = vmatprep.subr.mxu0 0.0
    %405 = vmatpush1.msra.mxu0 %v118
    %406 = vmatprep.mubr.f32.mxu0 %v192
    %407 = vmatmul.mubr.f32.gmra.mrb[0].mxu0 %v184
    %v408 = vpop.f32.mrb[0].mxu0
    %v409 = vadd.f32 %v339, %v408
    %v410 = vpop.f32.mrb[0].mxu0
    %411 = vdwg.mxu0
    %412 = vmatprep.subr.mxu0 0.0
    %413 = vmatpush1.msra.mxu0 %v119
    %414 = vmatprep.subr.mxu0 0.0
    %415 = vmatpush1.msra.mxu0 %v120
    %416 = vmatprep.subr.mxu0 0.0
    %417 = vmatpush1.msra.mxu0 %v121
    %418 = vmatprep.subr.mxu0 0.0
    %419 = vmatpush1.msra.mxu0 %v122
    %420 = vmatprep.subr.mxu0 0.0
    %421 = vmatpush1.msra.mxu0 %v123
    %422 = vmatprep.subr.mxu0 0.0
    %423 = vmatpush1.msra.mxu0 %v124
    %424 = vmatprep.subr.mxu0 0.0
    %425 = vmatpush1.msra.mxu0 %v125
    %426 = vmatprep.subr.mxu0 0.0
    %427 = vmatpush1.msra.mxu0 %v126
    %428 = vmatprep.subr.mxu0 0.0
    %429 = vmatpush1.msra.mxu0 %v127
    %430 = vmatprep.subr.mxu0 0.0
    %431 = vmatpush1.msra.mxu0 %v128
    %432 = vmatprep.subr.mxu0 0.0
    %433 = vmatpush1.msra.mxu0 %v129
    %434 = vmatprep.subr.mxu0 0.0
    %435 = vmatpush1.msra.mxu0 %v130
    %436 = vmatprep.subr.mxu0 0.0
    %437 = vmatpush1.msra.mxu0 %v131
    %438 = vmatprep.subr.mxu0 0.0
    %439 = vmatpush1.msra.mxu0 %v132
    %440 = vmatprep.subr.mxu0 0.0
    %441 = vmatpush1.msra.mxu0 %v133
    %442 = vmatprep.subr.mxu0 0.0
    %443 = vmatpush1.msra.mxu0 %v134
    %444 = vmatprep.subr.mxu0 0.0
    %445 = vmatpush1.msra.mxu0 %v135
    %446 = vmatprep.subr.mxu0 0.0
    %447 = vmatpush1.msra.mxu0 %v136
    %448 = vmatprep.subr.mxu0 0.0
    %449 = vmatpush1.msra.mxu0 %v137
    %450 = vmatprep.subr.mxu0 0.0
    %451 = vmatpush1.msra.mxu0 %v138
    %452 = vmatprep.subr.mxu0 0.0
    %453 = vmatpush1.msra.mxu0 %v139
    %454 = vmatprep.subr.mxu0 0.0
    %455 = vmatpush1.msra.mxu0 %v140
    %456 = vmatprep.subr.mxu0 0.0
    %457 = vmatpush1.msra.mxu0 %v141
    %458 = vmatprep.subr.mxu0 0.0
    %459 = vmatpush1.msra.mxu0 %v142
    %460 = vmatprep.subr.mxu0 0.0
    %461 = vmatpush1.msra.mxu0 %v143
    %462 = vmatprep.subr.mxu0 0.0
    %463 = vmatpush1.msra.mxu0 %v144
    %464 = vmatprep.subr.mxu0 0.0
    %465 = vmatpush1.msra.mxu0 %v145
    %466 = vmatprep.subr.mxu0 0.0
    %467 = vmatpush1.msra.mxu0 %v146
    %468 = vmatprep.subr.mxu0 0.0
    %469 = vmatpush1.msra.mxu0 %v147
    %470 = vmatprep.subr.mxu0 0.0
    %471 = vmatpush1.msra.mxu0 %v148
    %472 = vmatprep.subr.mxu0 0.0
    %473 = vmatpush1.msra.mxu0 %v149
    %474 = vmatprep.subr.mxu0 0.0
    %475 = vmatpush1.msra.mxu0 %v150
    %476 = vmatprep.mubr.f32.mxu0 %v193
    %477 = vmatmul.mubr.f32.gmra.mrb[0].mxu0 %v191
    %v478 = vpop.f32.mrb[0].mxu0
    %v479 = vadd.f32 %v409, %v478
    %v480 = vpop.f32.mrb[0].mxu0
    %481 = vdwg.mxu0
    %v482 = vmax.f32 %v479, 0.0
    %v483 = vld [vmem:[%s3] sm:$0xff]
    %v484 = vld [vmem:[%s3 + $0x8] sm:$0xff]
    %v485 = vld [vmem:[%s3 + $0x10] sm:$0xff]
    %v486 = vld [vmem:[%s3 + $0x18] sm:$0xff]
    %v487 = vld [vmem:[%s3 + $0x20] sm:$0xff]
    %v488 = vld [vmem:[%s3 + $0x28] sm:$0xff]
    %v489 = vld [vmem:[%s3 + $0x30] sm:$0xff]
    %v490 = vld [vmem:[%s3 + $0x38] sm:$0xff]
    %v491 = vld [vmem:[%s3 + $0x40] sm:$0xff]
    %v492 = vld [vmem:[%s3 + $0x48] sm:$0xff]
    %v493 = vld [vmem:[%s3 + $0x50] sm:$0xff]
    %v494 = vld [vmem:[%s3 + $0x58] sm:$0xff]
    %v495 = vld [vmem:[%s3 + $0x60] sm:$0xff]
    %v496 = vld [vmem:[%s3 + $0x68] sm:$0xff]
    %v497 = vld [vmem:[%s3 + $0x70] sm:$0xff]
    %v498 = vld [vmem:[%s3 + $0x78] sm:$0xff]
    %v499 = vld [vmem:[%s4] sm:$0x1]
    %v501 = vlaneseq
    %v502 = vshrl.u32 %v501, 7
    %v503 = vsub.s32 0, %v502
    %v504 = vrot.slane %v499, %v503
    %506 = vmatprep.subr.mxu0 0.0
    %507 = vmatpush1.msra.mxu0 %v483
    %508 = vmatprep.subr.mxu0 0.0
    %509 = vmatpush1.msra.mxu0 %v484
    %510 = vmatprep.subr.mxu0 0.0
    %511 = vmatpush1.msra.mxu0 %v485
    %512 = vmatprep.subr.mxu0 0.0
    %513 = vmatpush1.msra.mxu0 %v486
    %514 = vmatprep.subr.mxu0 0.0
    %515 = vmatpush1.msra.mxu0 %v487
    %516 = vmatprep.subr.mxu0 0.0
    %517 = vmatpush1.msra.mxu0 %v488
    %518 = vmatprep.subr.mxu0 0.0
    %519 = vmatpush1.msra.mxu0 %v489
    %520 = vmatprep.subr.mxu0 0.0
    %521 = vmatpush1.msra.mxu0 %v490
    %522 = vmatprep.subr.mxu0 0.0
    %523 = vmatpush1.msra.mxu0 %v491
    %524 = vmatprep.subr.mxu0 0.0
    %525 = vmatpush1.msra.mxu0 %v492
    %526 = vmatprep.subr.mxu0 0.0
    %527 = vmatpush1.msra.mxu0 %v493
    %528 = vmatprep.subr.mxu0 0.0
    %529 = vmatpush1.msra.mxu0 %v494
    %530 = vmatprep.subr.mxu0 0.0
    %531 = vmatpush1.msra.mxu0 %v495
    %532 = vmatprep.subr.mxu0 0.0
    %533 = vmatpush1.msra.mxu0 %v496
    %534 = vmatprep.subr.mxu0 0.0
    %535 = vmatpush1.msra.mxu0 %v497
    %536 = vmatprep.subr.mxu0 0.0
    %537 = vmatpush1.msra.mxu0 %v498
    %538 = vmatprep.subr.mxu0 0.0
    %539 = vmatpush1.msra.mxu0 0.0
    %540 = vmatprep.subr.mxu0 0.0
    %541 = vmatpush1.msra.mxu0 0.0
    %542 = vmatprep.subr.mxu0 0.0
    %543 = vmatpush1.msra.mxu0 0.0
    %544 = vmatprep.subr.mxu0 0.0
    %545 = vmatpush1.msra.mxu0 0.0
    %546 = vmatprep.subr.mxu0 0.0
    %547 = vmatpush1.msra.mxu0 0.0
    %548 = vmatprep.subr.mxu0 0.0
    %549 = vmatpush1.msra.mxu0 0.0
    %550 = vmatprep.subr.mxu0 0.0
    %551 = vmatpush1.msra.mxu0 0.0
    %552 = vmatprep.subr.mxu0 0.0
    %553 = vmatpush1.msra.mxu0 0.0
    %554 = vmatprep.subr.mxu0 0.0
    %555 = vmatpush1.msra.mxu0 0.0
    %556 = vmatprep.subr.mxu0 0.0
    %557 = vmatpush1.msra.mxu0 0.0
    %558 = vmatprep.subr.mxu0 0.0
    %559 = vmatpush1.msra.mxu0 0.0
    %560 = vmatprep.subr.mxu0 0.0
    %561 = vmatpush1.msra.mxu0 0.0
    %562 = vmatprep.subr.mxu0 0.0
    %563 = vmatpush1.msra.mxu0 0.0
    %564 = vmatprep.subr.mxu0 0.0
    %565 = vmatpush1.msra.mxu0 0.0
    %566 = vmatprep.subr.mxu0 0.0
    %567 = vmatpush1.msra.mxu0 0.0
    %568 = vmatprep.subr.mxu0 0.0
    %569 = vmatpush1.msra.mxu0 0.0
    %570 = vmatprep.mubr.f32.mxu0 0.0
    %571 = vmatmul.mubr.f32.gmra.mrb[0].mxu0 %v482
    %v572 = vpop.f32.mrb[0].mxu0
    %v573 = vadd.f32 %v504, %v572
    %v574 = vpop.f32.mrb[0].mxu0
    %575 = vdwg.mxu0
    %576 = vst [vmem:[#allocation2] sm:$0x3] %v573
    // Predicated region
    $region22: #{net_forward.7} parent=1 // pred_check
      _
    $region23: #{net_forward.7} parent=1 // pred_check_branch
      %578 = sbr.rel (0) target = $region25
    $region24: #{net_forward.7} parent=1 // pred_region
      %s580 = ssub.s32 32, 32
      %581 = vsyncadd [#allocation3], %s580
      %s583 = sshll.u32 [#allocation2], 4
      %s584 = int_to_ptr.vmem [resolvable:$true] %s583
      %586 = dma.vmem_to_hbm [thread:$0]  %s584, 32, %s5, [#allocation3]
    $region25: #{net_forward.7} parent=1 // pred_fallthru
      _
    // Predicated region
    $region26: #{net_forward.7} parent=1 // pred_check
      _
    $region27: #{net_forward.7} parent=1 // pred_check_branch
      %588 = sbr.rel (0) target = $region29
    $region28: #{net_forward.7} parent=1 // pred_region
      %589 = dma.done [#allocation3], 32
    $region29: #{net_forward.7} parent=1 // pred_fallthru
      _
    %590 = vsyncpa [#allocation3], 1

</llo_original>
